<compile_context>
chip_gen: v6e
topology: v6e:2x2x1
jax: 0.10.0
libtpu: 0.0.40
codegen_flags: <defaults>
</compile_context>

<pallas_src>
import functools
import math

import jax
import jax.numpy as jnp
from jax.experimental import pallas as pl
from jax.experimental.pallas import tpu as pltpu


# ----------------------------------------------------------------------------
# In-kernel helpers.  Activations are laid out as (H*W, C): flat spatial on
# sublanes, channels on lanes, so the +-1 / +-W tap shifts are sublane rolls.
# ----------------------------------------------------------------------------
_TAPS = tuple((dy, dx) for dy in (-1, 0, 1) for dx in (-1, 0, 1))


def _conv3x3(x, w_mat, mask_ref, H, W):
    """'same' 3x3 cross-correlation (== F.conv2d, padding=1), no bias.

    x: (H*W, Ci) f32.  w_mat: (9*Ci, Co) bf16 packed in (ky, kx, ci) order.
    mask_ref: (9, H*W, 1) f32 tap-validity masks (precomputed host-side).
    """
    M = H * W
    taps = []
    for j, (dy, dx) in enumerate(_TAPS):
        s = dy * W + dx                         # tap[m] = x[m + s] (when valid)
        if s == 0:
            taps.append(x.astype(jnp.bfloat16))
        else:
            rolled = pltpu.roll(x, (-s) % M, axis=0)   # rolled[m] = x[(m+s)%M]
            taps.append((rolled * mask_ref[j]).astype(jnp.bfloat16))
    patches = jnp.concatenate(taps, axis=-1)                  # (M, 9*Ci) bf16
    return jnp.dot(patches, w_mat, preferred_element_type=jnp.float32)


def _blur121(y, mask_ref, H, W):
    """BlurLayer([1,2,1], normalize=True, stride=1): separable ([1,2,1]/4)^2."""
    M = H * W
    up = pltpu.roll(y, W, axis=0) * mask_ref[1]        # y[m-W], valid h-1 >= 0
    dn = pltpu.roll(y, M - W, axis=0) * mask_ref[7]    # y[m+W], valid h+1 <  H
    t = 0.25 * (up + 2.0 * y + dn)
    lf = pltpu.roll(t, 1, axis=0) * mask_ref[3]        # t[m-1], valid w-1 >= 0
    rt = pltpu.roll(t, M - 1, axis=0) * mask_ref[5]    # t[m+1], valid w+1 <  W
    return 0.25 * (lf + 2.0 * t + rt)


def _epilogue(x, noise, nw, s_mul, s_add, slope=0.2, eps=1e-5):
    """NoiseLayer -> LeakyReLU(0.2) -> InstanceNorm2d -> StyleMod (per sample).

    x: (M, C); noise: (M, 1); nw: (1, C); s_mul = style_scale + 1: (1, C);
    s_add = style_shift: (1, C).  (The style projection itself is hoisted to
    the wrapper.)
    """
    y = x + nw * noise
    y = jnp.where(y >= 0.0, y, slope * y)
    mean = jnp.mean(y, axis=0, keepdims=True)
    var = jnp.mean(jnp.square(y - mean), axis=0, keepdims=True)
    y = (y - mean) * jax.lax.rsqrt(var + eps)
    return y * s_mul + s_add


# ----------------------------------------------------------------------------
# Fused whole-network kernel (one sample per grid step).
# ----------------------------------------------------------------------------
def _g_synthesis_kernel(*refs, resolutions):
    n_res = len(resolutions)
    it = iter(refs)
    smul_ref = next(it)                                 # (1, L, 1, C) scale+1
    sadd_ref = next(it)                                 # (1, L, 1, C) shift
    noise_refs = [next(it) for _ in range(n_res)]       # (1, 2, M_r, 1) each
    const_ref = next(it)                                # (16, C) const + bias
    nw_ref = next(it)                                   # (L, 1, C)
    cw_ref = next(it)                                   # (n_conv, 9C, C) bf16
    cb_ref = next(it)                                   # (n_conv, 1, C)
    trgbw_ref = next(it)                                # (C, 3) bf16
    trgbb_ref = next(it)                                # (1, 3)
    sel_refs = [next(it) for _ in range(n_res - 1)]     # (4*M_r, M_r) bf16
    mask_refs = [next(it) for _ in range(n_res)]        # (9, M_r, 1)
    out_refs = [next(it) for _ in range(2 * n_res)]     # x / x2 per resolution
    rgb_ref = next(it)

    layer = 0
    conv = 0
    x = None
    for r, res in enumerate(resolutions):
        H = W = res
        masks = mask_refs[r]
        if r == 0:
            # InputBlock: learned constant with its bias folded host-side.
            y = const_ref[...]
        else:
            # conv0_up: nearest 2x upsample (precomputed 0/1 selection matmul)
            #           -> 3x3 conv (no bias) -> [1,2,1] blur -> + bias
            xu = jnp.dot(sel_refs[r - 1][...], x.astype(jnp.bfloat16),
                         preferred_element_type=jnp.float32)
            y = _conv3x3(xu, cw_ref[conv], masks, H, W)
            y = _blur121(y, masks, H, W) + cb_ref[conv]
            conv += 1
        y = _epilogue(y, noise_refs[r][0, 0], nw_ref[layer],
                      smul_ref[0, layer], sadd_ref[0, layer])
        layer += 1
        # conv (InputBlock) / conv1 (GSynthesisBlock), bias fused.
        y2 = _conv3x3(y, cw_ref[conv], masks, H, W) + cb_ref[conv]
        conv += 1
        out_refs[2 * r + 1][0] = y2                     # "x2" (pre-epilogue)
        x = _epilogue(y2, noise_refs[r][0, 1], nw_ref[layer],
                      smul_ref[0, layer], sadd_ref[0, layer])
        layer += 1
        out_refs[2 * r][0] = x                          # "x"  (post-epilogue)

    # toRGB: fused 1x1 conv on the final activation.
    rgb_ref[0] = (jnp.dot(x.astype(jnp.bfloat16), trgbw_ref[...],
                          preferred_element_type=jnp.float32) + trgbb_ref[...])


# ----------------------------------------------------------------------------
# pallas_call wrapper
# ----------------------------------------------------------------------------
def _const_spec(a):
    n = a.ndim
    return pl.BlockSpec(tuple(a.shape), lambda b, n=n: (0,) * n)


def _batch_spec(a):
    n = a.ndim
    return pl.BlockSpec((1,) + tuple(a.shape[1:]),
                        lambda b, n=n: (b,) + (0,) * (n - 1))


def g_synthesis_forward(params, dlatents, noises):
    """dlatents: (B, L, D); noises: list of L arrays, each (B, H_l*W_l, 1)."""
    B, L, _ = dlatents.shape
    n_res = L // 2
    resolutions = [int(round(math.sqrt(noises[2 * i].shape[1])))
                   for i in range(n_res)]
    C = params['nw_all'].shape[-1]

    # Hoisted StyleMod: one batched matmul for every layer's style; +1 folded.
    styles = (jnp.einsum('bld,ldc->blc', dlatents, params['sw_all'])
              + params['sb_all'][None])                         # (B, L, 2C)
    smul = (styles[..., :C] + 1.0)[:, :, None, :]               # (B, L, 1, C)
    sadd = styles[..., C:][:, :, None, :]                       # (B, L, 1, C)

    # Pair the two per-block noise maps: (B, 2, H*W, 1) per resolution.
    noise_stacks = [jnp.stack([noises[2 * i], noises[2 * i + 1]], axis=1)
                    for i in range(n_res)]

    inputs = ([smul, sadd] + noise_stacks +
              [params['const_pb'], params['nw_all'],
               params['cw_all'], params['cb_all'],
               params['trgb_w'], params['trgb_b']] +
              list(params['sels']) + list(params['masks']))
    in_specs = ([_batch_spec(smul), _batch_spec(sadd)] +
                [_batch_spec(n) for n in noise_stacks] +
                [_const_spec(a) for a in inputs[2 + n_res:]])

    out_shape, out_specs = [], []
    for res in resolutions:
        M = res * res
        for _ in range(2):                                      # x, x2
            out_shape.append(jax.ShapeDtypeStruct((B, M, C), jnp.float32))
            out_specs.append(pl.BlockSpec((1, M, C), lambda b: (b, 0, 0)))
    M_last = resolutions[-1] ** 2
    nrgb = params['trgb_w'].shape[-1]
    out_shape.append(jax.ShapeDtypeStruct((B, M_last, nrgb), jnp.float32))
    out_specs.append(pl.BlockSpec((1, M_last, nrgb), lambda b: (b, 0, 0)))

    kernel = functools.partial(_g_synthesis_kernel,
                               resolutions=tuple(resolutions))
    outs = pl.pallas_call(
        kernel,
        grid=(B,),
        in_specs=in_specs,
        out_specs=tuple(out_specs),
        out_shape=tuple(out_shape),
        compiler_params=pltpu.CompilerParams(
            dimension_semantics=("parallel",)),
    )(*inputs)

    # Back to PyTorch NCHW convention (layout glue on final outputs only).
    def to_nchw(a, h):
        b, _, c = a.shape
        return jnp.transpose(a.reshape(b, h, h, c), (0, 3, 1, 2))

    *xs, rgb_flat = outs
    result_list = []
    for i, res in enumerate(resolutions):
        result_list.append(to_nchw(xs[2 * i], res))        # x
        result_list.append(to_nchw(xs[2 * i + 1], res))    # x2
    rgb = to_nchw(rgb_flat, resolutions[-1])
    return rgb, result_list


# ----------------------------------------------------------------------------
# Deterministic parameter construction (shapes from the module __init__);
# equalized-lr w_mul folded into the effective weights, conv weights packed as
# (9*Ci, Co) matrices in (ky, kx, ci) order, style weights as (D, 2C).
# ----------------------------------------------------------------------------
def _conv_packed(key, cin, cout, ksize, gain):
    he_std = gain * (cin * ksize * ksize) ** -0.5    # use_wscale=True, lrmul=1
    kw, kb = jax.random.split(key)
    w = jax.random.normal(kw, (cout, cin, ksize, ksize), jnp.float32) * he_std
    b = jax.random.normal(kb, (cout,), jnp.float32) * 0.1
    if ksize == 1:
        w_mat = w.reshape(cout, cin).T
    else:
        w_mat = jnp.transpose(w, (2, 3, 1, 0)).reshape(ksize * ksize * cin,
                                                       cout)
    return w_mat, b.reshape(1, cout)


def _style_params(key, dlatent, channels):
    kw, kb = jax.random.split(key)
    w_mul = dlatent ** -0.5                          # StyleMod MyLinear gain=1
    w = jax.random.normal(kw, (2 * channels, dlatent), jnp.float32) * w_mul
    b = jax.random.normal(kb, (2 * channels,), jnp.float32) * 0.1
    return w.T, b                                    # (D, 2C), (2C,)


def _upsample_sel(hin):
    """Nearest-neighbour 2x Upscale2d as a (4*hin^2, hin^2) 0/1 matrix."""
    ho = 2 * hin
    r = jnp.arange(ho * ho)
    src = (r // ho // 2) * hin + (r % ho) // 2
    return jax.nn.one_hot(src, hin * hin, dtype=jnp.float32).astype(jnp.bfloat16)


def _tap_masks(res):
    """(9, res*res, 1) validity masks for the 'same' 3x3 taps."""
    H = W = res
    m = jnp.arange(H * W)
    h, w = m // W, m % W
    rows = []
    for dy, dx in _TAPS:
        valid = (h + dy >= 0) & (h + dy < H) & (w + dx >= 0) & (w + dx < W)
        rows.append(valid.astype(jnp.float32))
    return jnp.stack(rows)[:, :, None]


def init_params(key, dlatent_size, resolution, fmap_base, fmap_max,
                num_channels, gain):
    res_log2 = int(math.log2(resolution))

    def nf(stage):
        return min(int(fmap_base / 2.0 ** stage), fmap_max)

    resolutions = [2 ** r for r in range(2, res_log2 + 1)]
    channels = [nf(r - 1) for r in range(2, res_log2 + 1)]
    # TODO(synk): the packed-parameter layout assumes a uniform channel width;
    # full StyleGAN configs with per-block widths need per-block weight inputs.
    assert len(set(channels)) == 1, "packed params assume uniform channels"
    C = channels[0]

    keys = iter(jax.random.split(key, 16 * len(resolutions) + 8))

    const = jax.random.normal(next(keys), (C, 4, 4), jnp.float32)
    cbias = jax.random.normal(next(keys), (C,), jnp.float32) * 0.1
    const_pb = jnp.transpose(const, (1, 2, 0)).reshape(16, C) + cbias[None, :]

    conv_ws, conv_bs, nw_l, sw_l, sb_l = [], [], [], [], []

    def add_epilogue():
        nw_l.append(jax.random.normal(next(keys), (1, C), jnp.float32) * 0.1)
        sw, sb = _style_params(next(keys), dlatent_size, C)
        sw_l.append(sw)
        sb_l.append(sb)

    # InputBlock (4x4): epi1 -> conv -> epi2
    w, b = _conv_packed(next(keys), C, C, 3, gain)
    conv_ws.append(w)
    conv_bs.append(b)
    add_epilogue()
    add_epilogue()

    # GSynthesisBlocks: conv0_up -> epi1 -> conv1 -> epi2
    for _ in resolutions[1:]:
        w0, b0 = _conv_packed(next(keys), C, C, 3, gain)
        w1, b1 = _conv_packed(next(keys), C, C, 3, gain)
        conv_ws += [w0, w1]
        conv_bs += [b0, b1]
        add_epilogue()
        add_epilogue()

    trgb_w, trgb_b = _conv_packed(next(keys), C, num_channels, 1, 1.0)

    return dict(
        const_pb=const_pb,                                      # (16, C)
        cw_all=jnp.stack(conv_ws).astype(jnp.bfloat16),         # (n_conv,9C,C)
        cb_all=jnp.stack(conv_bs),                              # (n_conv,1,C)
        nw_all=jnp.stack(nw_l),                                 # (L, 1, C)
        sw_all=jnp.stack(sw_l),                                 # (L, D, 2C)
        sb_all=jnp.stack(sb_l),                                 # (L, 2C)
        trgb_w=trgb_w.astype(jnp.bfloat16),                     # (C, 3)
        trgb_b=trgb_b,                                          # (1, 3)
        sels=[_upsample_sel(r // 2) for r in resolutions[1:]],  # (4M, M) bf16
        masks=[_tap_masks(r) for r in resolutions],             # (9, M, 1)
    )


if __name__ == "__main__":
    B = 2
    dlatent_size = 32
    resolution = 16
    num_layers = int(math.log2(resolution)) * 2 - 2             # 6

    key = jax.random.PRNGKey(0)
    kp, kd, kn = jax.random.split(key, 3)

    params = init_params(kp, dlatent_size, resolution, fmap_base=512,
                         fmap_max=32, num_channels=3, gain=2 ** 0.5)

    dlatents_in = jax.random.normal(kd, (B, num_layers, dlatent_size),
                                    jnp.float32)

    # randomize_noise=True draws fresh per-pixel noise inside the module; here
    # deterministic noise of the same shape (B, 1, H, W) -> (B, H*W, 1) is
    # passed explicitly.
    spatial = [4, 4, 8, 8, 16, 16]
    noise_keys = jax.random.split(kn, num_layers)
    noises = [jax.random.normal(noise_keys[i],
                                (B, spatial[i] * spatial[i], 1), jnp.float32)
              for i in range(num_layers)]

    fwd = jax.jit(g_synthesis_forward)
    rgb, result_list = fwd(params, dlatents_in, noises)
    jax.block_until_ready((rgb, result_list))

    assert rgb.shape == (B, 3, resolution, resolution)
    assert len(result_list) == num_layers
    print("KERNEL_OK")
</pallas_src>

<mosaic_0001>
module attributes {stable_mosaic.version = 11 : i64} {
  func.func @_g_synthesis_kernel(%arg0: i32, %arg1: memref<1x6x1x32xf32, #tpu.memory_space<vmem>>, %arg2: memref<1x6x1x32xf32, #tpu.memory_space<vmem>>, %arg3: memref<1x2x16x1xf32, #tpu.memory_space<vmem>>, %arg4: memref<1x2x64x1xf32, #tpu.memory_space<vmem>>, %arg5: memref<1x2x256x1xf32, #tpu.memory_space<vmem>>, %arg6: memref<16x32xf32, #tpu.memory_space<vmem>>, %arg7: memref<6x1x32xf32, #tpu.memory_space<vmem>>, %arg8: memref<5x288x32xbf16, #tpu.memory_space<vmem>>, %arg9: memref<5x1x32xf32, #tpu.memory_space<vmem>>, %arg10: memref<32x3xbf16, #tpu.memory_space<vmem>>, %arg11: memref<1x3xf32, #tpu.memory_space<vmem>>, %arg12: memref<64x16xbf16, #tpu.memory_space<vmem>>, %arg13: memref<256x64xbf16, #tpu.memory_space<vmem>>, %arg14: memref<9x16x1xf32, #tpu.memory_space<vmem>>, %arg15: memref<9x64x1xf32, #tpu.memory_space<vmem>>, %arg16: memref<9x256x1xf32, #tpu.memory_space<vmem>>, %arg17: memref<1x16x32xf32, #tpu.memory_space<vmem>>, %arg18: memref<1x16x32xf32, #tpu.memory_space<vmem>>, %arg19: memref<1x64x32xf32, #tpu.memory_space<vmem>>, %arg20: memref<1x64x32xf32, #tpu.memory_space<vmem>>, %arg21: memref<1x256x32xf32, #tpu.memory_space<vmem>>, %arg22: memref<1x256x32xf32, #tpu.memory_space<vmem>>, %arg23: memref<1x256x3xf32, #tpu.memory_space<vmem>>) attributes {dimension_semantics = [#tpu.dimension_semantics<parallel>], iteration_bounds = array<i64: 2>, scalar_prefetch = 0 : i64, scratch_operands = 0 : i64, tpu.core_type = #tpu.core_type<tc>, window_params = [{transform_indices = @transform_0, window_bounds = array<i64: 1, 6, 1, 32>}, {transform_indices = @transform_1, window_bounds = array<i64: 1, 6, 1, 32>}, {transform_indices = @transform_2, window_bounds = array<i64: 1, 2, 16, 1>}, {transform_indices = @transform_3, window_bounds = array<i64: 1, 2, 64, 1>}, {transform_indices = @transform_4, window_bounds = array<i64: 1, 2, 256, 1>}, {pipeline_mode = #tpu.pipeline_mode<synchronous>, transform_indices = @transform_5, window_bounds = array<i64: 16, 32>}, {pipeline_mode = #tpu.pipeline_mode<synchronous>, transform_indices = @transform_6, window_bounds = array<i64: 6, 1, 32>}, {pipeline_mode = #tpu.pipeline_mode<synchronous>, transform_indices = @transform_7, window_bounds = array<i64: 5, 288, 32>}, {pipeline_mode = #tpu.pipeline_mode<synchronous>, transform_indices = @transform_8, window_bounds = array<i64: 5, 1, 32>}, {pipeline_mode = #tpu.pipeline_mode<synchronous>, transform_indices = @transform_9, window_bounds = array<i64: 32, 3>}, {pipeline_mode = #tpu.pipeline_mode<synchronous>, transform_indices = @transform_10, window_bounds = array<i64: 1, 3>}, {pipeline_mode = #tpu.pipeline_mode<synchronous>, transform_indices = @transform_11, window_bounds = array<i64: 64, 16>}, {pipeline_mode = #tpu.pipeline_mode<synchronous>, transform_indices = @transform_12, window_bounds = array<i64: 256, 64>}, {pipeline_mode = #tpu.pipeline_mode<synchronous>, transform_indices = @transform_13, window_bounds = array<i64: 9, 16, 1>}, {pipeline_mode = #tpu.pipeline_mode<synchronous>, transform_indices = @transform_14, window_bounds = array<i64: 9, 64, 1>}, {pipeline_mode = #tpu.pipeline_mode<synchronous>, transform_indices = @transform_15, window_bounds = array<i64: 9, 256, 1>}, {transform_indices = @transform_16, window_bounds = array<i64: 1, 16, 32>}, {transform_indices = @transform_17, window_bounds = array<i64: 1, 16, 32>}, {transform_indices = @transform_18, window_bounds = array<i64: 1, 64, 32>}, {transform_indices = @transform_19, window_bounds = array<i64: 1, 64, 32>}, {transform_indices = @transform_20, window_bounds = array<i64: 1, 256, 32>}, {transform_indices = @transform_21, window_bounds = array<i64: 1, 256, 32>}, {transform_indices = @transform_22, window_bounds = array<i64: 1, 256, 3>}]} {
    %c0 = arith.constant 0 : index
    %c0_0 = arith.constant 0 : index
    %0 = vector.load %arg6[%c0, %c0_0] : memref<16x32xf32, #tpu.memory_space<vmem>>, vector<16x32xf32>
    %c0_1 = arith.constant 0 : index
    %c0_2 = arith.constant 0 : index
    %c0_3 = arith.constant 0 : index
    %c0_4 = arith.constant 0 : index
    %1 = vector.load %arg3[%c0_1, %c0_2, %c0_3, %c0_4] : memref<1x2x16x1xf32, #tpu.memory_space<vmem>>, vector<1x1x16x1xf32>
    %2 = vector.shape_cast %1 : vector<1x1x16x1xf32> to vector<16x1xf32>
    %c0_5 = arith.constant 0 : index
    %c0_6 = arith.constant 0 : index
    %c0_7 = arith.constant 0 : index
    %3 = vector.load %arg7[%c0_5, %c0_6, %c0_7] : memref<6x1x32xf32, #tpu.memory_space<vmem>>, vector<1x1x32xf32>
    %4 = vector.shape_cast %3 : vector<1x1x32xf32> to vector<1x32xf32>
    %c0_8 = arith.constant 0 : index
    %c0_9 = arith.constant 0 : index
    %c0_10 = arith.constant 0 : index
    %c0_11 = arith.constant 0 : index
    %5 = vector.load %arg1[%c0_8, %c0_9, %c0_10, %c0_11] : memref<1x6x1x32xf32, #tpu.memory_space<vmem>>, vector<1x1x1x32xf32>
    %6 = vector.shape_cast %5 : vector<1x1x1x32xf32> to vector<1x32xf32>
    %c0_12 = arith.constant 0 : index
    %c0_13 = arith.constant 0 : index
    %c0_14 = arith.constant 0 : index
    %c0_15 = arith.constant 0 : index
    %7 = vector.load %arg2[%c0_12, %c0_13, %c0_14, %c0_15] : memref<1x6x1x32xf32, #tpu.memory_space<vmem>>, vector<1x1x1x32xf32>
    %8 = vector.shape_cast %7 : vector<1x1x1x32xf32> to vector<1x32xf32>
    %9 = vector.broadcast %4 : vector<1x32xf32> to vector<16x32xf32>
    %10 = vector.broadcast %2 : vector<16x1xf32> to vector<16x32xf32>
    %11 = arith.mulf %9, %10 : vector<16x32xf32>
    %12 = arith.addf %0, %11 : vector<16x32xf32>
    %cst = arith.constant 0.000000e+00 : f32
    %13 = vector.broadcast %cst : f32 to vector<16x32xf32>
    %14 = arith.cmpf oge, %12, %13 : vector<16x32xf32>
    %cst_16 = arith.constant 2.000000e-01 : f32
    %15 = vector.broadcast %cst_16 : f32 to vector<16x32xf32>
    %16 = arith.mulf %15, %12 : vector<16x32xf32>
    %17 = arith.select %14, %12, %16 : vector<16x32xi1>, vector<16x32xf32>
    %cst_17 = arith.constant dense<0.000000e+00> : vector<32xf32>
    %18 = vector.multi_reduction <add>, %17, %cst_17 [0] : vector<16x32xf32> to vector<32xf32>
    %19 = vector.shape_cast %18 : vector<32xf32> to vector<1x32xf32>
    %cst_18 = arith.constant 1.600000e+01 : f32
    %20 = vector.broadcast %cst_18 : f32 to vector<1x32xf32>
    %21 = arith.divf %19, %20 : vector<1x32xf32>
    %22 = vector.broadcast %21 : vector<1x32xf32> to vector<16x32xf32>
    %23 = arith.subf %17, %22 : vector<16x32xf32>
    %24 = arith.mulf %23, %23 : vector<16x32xf32>
    %cst_19 = arith.constant dense<0.000000e+00> : vector<32xf32>
    %25 = vector.multi_reduction <add>, %24, %cst_19 [0] : vector<16x32xf32> to vector<32xf32>
    %26 = vector.shape_cast %25 : vector<32xf32> to vector<1x32xf32>
    %cst_20 = arith.constant 1.600000e+01 : f32
    %27 = vector.broadcast %cst_20 : f32 to vector<1x32xf32>
    %28 = arith.divf %26, %27 : vector<1x32xf32>
    %29 = vector.broadcast %21 : vector<1x32xf32> to vector<16x32xf32>
    %30 = arith.subf %17, %29 : vector<16x32xf32>
    %cst_21 = arith.constant 9.99999974E-6 : f32
    %31 = vector.broadcast %cst_21 : f32 to vector<1x32xf32>
    %32 = arith.addf %28, %31 : vector<1x32xf32>
    %33 = math.rsqrt %32 : vector<1x32xf32>
    %34 = vector.broadcast %33 : vector<1x32xf32> to vector<16x32xf32>
    %35 = arith.mulf %30, %34 : vector<16x32xf32>
    %36 = vector.broadcast %6 : vector<1x32xf32> to vector<16x32xf32>
    %37 = arith.mulf %35, %36 : vector<16x32xf32>
    %38 = vector.broadcast %8 : vector<1x32xf32> to vector<16x32xf32>
    %39 = arith.addf %37, %38 : vector<16x32xf32>
    %c0_22 = arith.constant 0 : index
    %c0_23 = arith.constant 0 : index
    %c0_24 = arith.constant 0 : index
    %40 = vector.load %arg8[%c0_22, %c0_23, %c0_24] : memref<5x288x32xbf16, #tpu.memory_space<vmem>>, vector<1x288x32xbf16>
    %41 = vector.shape_cast %40 : vector<1x288x32xbf16> to vector<288x32xbf16>
    %c5_i32 = arith.constant 5 : i32
    %42 = tpu.dynamic_rotate %39 by %c5_i32 dim 0 : vector<16x32xf32>, i32 -> vector<16x32xf32>
    %c0_25 = arith.constant 0 : index
    %c0_26 = arith.constant 0 : index
    %c0_27 = arith.constant 0 : index
    %43 = vector.load %arg14[%c0_25, %c0_26, %c0_27] : memref<9x16x1xf32, #tpu.memory_space<vmem>>, vector<1x16x1xf32>
    %44 = vector.shape_cast %43 : vector<1x16x1xf32> to vector<16x1xf32>
    %45 = vector.broadcast %44 : vector<16x1xf32> to vector<16x32xf32>
    %46 = arith.mulf %42, %45 : vector<16x32xf32>
    %47 = arith.truncf %46 : vector<16x32xf32> to vector<16x32xbf16>
    %c4_i32 = arith.constant 4 : i32
    %48 = tpu.dynamic_rotate %39 by %c4_i32 dim 0 : vector<16x32xf32>, i32 -> vector<16x32xf32>
    %c1 = arith.constant 1 : index
    %c0_28 = arith.constant 0 : index
    %c0_29 = arith.constant 0 : index
    %49 = vector.load %arg14[%c1, %c0_28, %c0_29] : memref<9x16x1xf32, #tpu.memory_space<vmem>>, vector<1x16x1xf32>
    %50 = vector.shape_cast %49 : vector<1x16x1xf32> to vector<16x1xf32>
    %51 = vector.broadcast %50 : vector<16x1xf32> to vector<16x32xf32>
    %52 = arith.mulf %48, %51 : vector<16x32xf32>
    %53 = arith.truncf %52 : vector<16x32xf32> to vector<16x32xbf16>
    %c3_i32 = arith.constant 3 : i32
    %54 = tpu.dynamic_rotate %39 by %c3_i32 dim 0 : vector<16x32xf32>, i32 -> vector<16x32xf32>
    %c2 = arith.constant 2 : index
    %c0_30 = arith.constant 0 : index
    %c0_31 = arith.constant 0 : index
    %55 = vector.load %arg14[%c2, %c0_30, %c0_31] : memref<9x16x1xf32, #tpu.memory_space<vmem>>, vector<1x16x1xf32>
    %56 = vector.shape_cast %55 : vector<1x16x1xf32> to vector<16x1xf32>
    %57 = vector.broadcast %56 : vector<16x1xf32> to vector<16x32xf32>
    %58 = arith.mulf %54, %57 : vector<16x32xf32>
    %59 = arith.truncf %58 : vector<16x32xf32> to vector<16x32xbf16>
    %c1_i32 = arith.constant 1 : i32
    %60 = tpu.dynamic_rotate %39 by %c1_i32 dim 0 : vector<16x32xf32>, i32 -> vector<16x32xf32>
    %c3 = arith.constant 3 : index
    %c0_32 = arith.constant 0 : index
    %c0_33 = arith.constant 0 : index
    %61 = vector.load %arg14[%c3, %c0_32, %c0_33] : memref<9x16x1xf32, #tpu.memory_space<vmem>>, vector<1x16x1xf32>
    %62 = vector.shape_cast %61 : vector<1x16x1xf32> to vector<16x1xf32>
    %63 = vector.broadcast %62 : vector<16x1xf32> to vector<16x32xf32>
    %64 = arith.mulf %60, %63 : vector<16x32xf32>
    %65 = arith.truncf %64 : vector<16x32xf32> to vector<16x32xbf16>
    %66 = arith.truncf %39 : vector<16x32xf32> to vector<16x32xbf16>
    %c15_i32 = arith.constant 15 : i32
    %67 = tpu.dynamic_rotate %39 by %c15_i32 dim 0 : vector<16x32xf32>, i32 -> vector<16x32xf32>
    %c5 = arith.constant 5 : index
    %c0_34 = arith.constant 0 : index
    %c0_35 = arith.constant 0 : index
    %68 = vector.load %arg14[%c5, %c0_34, %c0_35] : memref<9x16x1xf32, #tpu.memory_space<vmem>>, vector<1x16x1xf32>
    %69 = vector.shape_cast %68 : vector<1x16x1xf32> to vector<16x1xf32>
    %70 = vector.broadcast %69 : vector<16x1xf32> to vector<16x32xf32>
    %71 = arith.mulf %67, %70 : vector<16x32xf32>
    %72 = arith.truncf %71 : vector<16x32xf32> to vector<16x32xbf16>
    %c13_i32 = arith.constant 13 : i32
    %73 = tpu.dynamic_rotate %39 by %c13_i32 dim 0 : vector<16x32xf32>, i32 -> vector<16x32xf32>
    %c6 = arith.constant 6 : index
    %c0_36 = arith.constant 0 : index
    %c0_37 = arith.constant 0 : index
    %74 = vector.load %arg14[%c6, %c0_36, %c0_37] : memref<9x16x1xf32, #tpu.memory_space<vmem>>, vector<1x16x1xf32>
    %75 = vector.shape_cast %74 : vector<1x16x1xf32> to vector<16x1xf32>
    %76 = vector.broadcast %75 : vector<16x1xf32> to vector<16x32xf32>
    %77 = arith.mulf %73, %76 : vector<16x32xf32>
    %78 = arith.truncf %77 : vector<16x32xf32> to vector<16x32xbf16>
    %c12_i32 = arith.constant 12 : i32
    %79 = tpu.dynamic_rotate %39 by %c12_i32 dim 0 : vector<16x32xf32>, i32 -> vector<16x32xf32>
    %c7 = arith.constant 7 : index
    %c0_38 = arith.constant 0 : index
    %c0_39 = arith.constant 0 : index
    %80 = vector.load %arg14[%c7, %c0_38, %c0_39] : memref<9x16x1xf32, #tpu.memory_space<vmem>>, vector<1x16x1xf32>
    %81 = vector.shape_cast %80 : vector<1x16x1xf32> to vector<16x1xf32>
    %82 = vector.broadcast %81 : vector<16x1xf32> to vector<16x32xf32>
    %83 = arith.mulf %79, %82 : vector<16x32xf32>
    %84 = arith.truncf %83 : vector<16x32xf32> to vector<16x32xbf16>
    %c11_i32 = arith.constant 11 : i32
    %85 = tpu.dynamic_rotate %39 by %c11_i32 dim 0 : vector<16x32xf32>, i32 -> vector<16x32xf32>
    %c8 = arith.constant 8 : index
    %c0_40 = arith.constant 0 : index
    %c0_41 = arith.constant 0 : index
    %86 = vector.load %arg14[%c8, %c0_40, %c0_41] : memref<9x16x1xf32, #tpu.memory_space<vmem>>, vector<1x16x1xf32>
    %87 = vector.shape_cast %86 : vector<1x16x1xf32> to vector<16x1xf32>
    %88 = vector.broadcast %87 : vector<16x1xf32> to vector<16x32xf32>
    %89 = arith.mulf %85, %88 : vector<16x32xf32>
    %90 = arith.truncf %89 : vector<16x32xf32> to vector<16x32xbf16>
    %91 = tpu.concatenate %47, %53, %59, %65, %66, %72, %78, %84, %90 in 1 : vector<16x32xbf16>, vector<16x32xbf16>, vector<16x32xbf16>, vector<16x32xbf16>, vector<16x32xbf16>, vector<16x32xbf16>, vector<16x32xbf16>, vector<16x32xbf16>, vector<16x32xbf16> -> vector<16x288xbf16>
    %cst_42 = arith.constant dense<0.000000e+00> : vector<16x32xf32>
    %92 = tpu.matmul %91, %41, %cst_42 {dimension_numbers = #tpu.dot_dimension_numbers<[1], [0], [0], [1], [0, 0, 1, 1], [], []>} : vector<16x288xbf16>, vector<288x32xbf16>, vector<16x32xf32> -> vector<16x32xf32>
    %c0_43 = arith.constant 0 : index
    %c0_44 = arith.constant 0 : index
    %c0_45 = arith.constant 0 : index
    %93 = vector.load %arg9[%c0_43, %c0_44, %c0_45] : memref<5x1x32xf32, #tpu.memory_space<vmem>>, vector<1x1x32xf32>
    %94 = vector.shape_cast %93 : vector<1x1x32xf32> to vector<1x32xf32>
    %95 = vector.broadcast %94 : vector<1x32xf32> to vector<16x32xf32>
    %96 = arith.addf %92, %95 : vector<16x32xf32>
    %c0_46 = arith.constant 0 : index
    %c0_47 = arith.constant 0 : index
    %c0_48 = arith.constant 0 : index
    %97 = vector.load %arg18[%c0_46, %c0_47, %c0_48] : memref<1x16x32xf32, #tpu.memory_space<vmem>>, vector<1x16x32xf32>
    %98 = vector.shape_cast %97 : vector<1x16x32xf32> to vector<16x32xf32>
    %99 = vector.shape_cast %96 : vector<16x32xf32> to vector<1x16x32xf32>
    tpu.vector_store %arg18[%c0_46, %c0_47, %c0_48], %99 {strides = array<i32>} : memref<1x16x32xf32, #tpu.memory_space<vmem>>, vector<1x16x32xf32>,
    %c0_49 = arith.constant 0 : index
    %c1_50 = arith.constant 1 : index
    %c0_51 = arith.constant 0 : index
    %c0_52 = arith.constant 0 : index
    %100 = vector.load %arg3[%c0_49, %c1_50, %c0_51, %c0_52] : memref<1x2x16x1xf32, #tpu.memory_space<vmem>>, vector<1x1x16x1xf32>
    %101 = vector.shape_cast %100 : vector<1x1x16x1xf32> to vector<16x1xf32>
    %c1_53 = arith.constant 1 : index
    %c0_54 = arith.constant 0 : index
    %c0_55 = arith.constant 0 : index
    %102 = vector.load %arg7[%c1_53, %c0_54, %c0_55] : memref<6x1x32xf32, #tpu.memory_space<vmem>>, vector<1x1x32xf32>
    %103 = vector.shape_cast %102 : vector<1x1x32xf32> to vector<1x32xf32>
    %c0_56 = arith.constant 0 : index
    %c1_57 = arith.constant 1 : index
    %c0_58 = arith.constant 0 : index
    %c0_59 = arith.constant 0 : index
    %104 = vector.load %arg1[%c0_56, %c1_57, %c0_58, %c0_59] : memref<1x6x1x32xf32, #tpu.memory_space<vmem>>, vector<1x1x1x32xf32>
    %105 = vector.shape_cast %104 : vector<1x1x1x32xf32> to vector<1x32xf32>
    %c0_60 = arith.constant 0 : index
    %c1_61 = arith.constant 1 : index
    %c0_62 = arith.constant 0 : index
    %c0_63 = arith.constant 0 : index
    %106 = vector.load %arg2[%c0_60, %c1_61, %c0_62, %c0_63] : memref<1x6x1x32xf32, #tpu.memory_space<vmem>>, vector<1x1x1x32xf32>
    %107 = vector.shape_cast %106 : vector<1x1x1x32xf32> to vector<1x32xf32>
    %108 = vector.broadcast %103 : vector<1x32xf32> to vector<16x32xf32>
    %109 = vector.broadcast %101 : vector<16x1xf32> to vector<16x32xf32>
    %110 = arith.mulf %108, %109 : vector<16x32xf32>
    %111 = arith.addf %96, %110 : vector<16x32xf32>
    %cst_64 = arith.constant 0.000000e+00 : f32
    %112 = vector.broadcast %cst_64 : f32 to vector<16x32xf32>
    %113 = arith.cmpf oge, %111, %112 : vector<16x32xf32>
    %cst_65 = arith.constant 2.000000e-01 : f32
    %114 = vector.broadcast %cst_65 : f32 to vector<16x32xf32>
    %115 = arith.mulf %114, %111 : vector<16x32xf32>
    %116 = arith.select %113, %111, %115 : vector<16x32xi1>, vector<16x32xf32>
    %cst_66 = arith.constant dense<0.000000e+00> : vector<32xf32>
    %117 = vector.multi_reduction <add>, %116, %cst_66 [0] : vector<16x32xf32> to vector<32xf32>
    %118 = vector.shape_cast %117 : vector<32xf32> to vector<1x32xf32>
    %cst_67 = arith.constant 1.600000e+01 : f32
    %119 = vector.broadcast %cst_67 : f32 to vector<1x32xf32>
    %120 = arith.divf %118, %119 : vector<1x32xf32>
    %121 = vector.broadcast %120 : vector<1x32xf32> to vector<16x32xf32>
    %122 = arith.subf %116, %121 : vector<16x32xf32>
    %123 = arith.mulf %122, %122 : vector<16x32xf32>
    %cst_68 = arith.constant dense<0.000000e+00> : vector<32xf32>
    %124 = vector.multi_reduction <add>, %123, %cst_68 [0] : vector<16x32xf32> to vector<32xf32>
    %125 = vector.shape_cast %124 : vector<32xf32> to vector<1x32xf32>
    %cst_69 = arith.constant 1.600000e+01 : f32
    %126 = vector.broadcast %cst_69 : f32 to vector<1x32xf32>
    %127 = arith.divf %125, %126 : vector<1x32xf32>
    %128 = vector.broadcast %120 : vector<1x32xf32> to vector<16x32xf32>
    %129 = arith.subf %116, %128 : vector<16x32xf32>
    %cst_70 = arith.constant 9.99999974E-6 : f32
    %130 = vector.broadcast %cst_70 : f32 to vector<1x32xf32>
    %131 = arith.addf %127, %130 : vector<1x32xf32>
    %132 = math.rsqrt %131 : vector<1x32xf32>
    %133 = vector.broadcast %132 : vector<1x32xf32> to vector<16x32xf32>
    %134 = arith.mulf %129, %133 : vector<16x32xf32>
    %135 = vector.broadcast %105 : vector<1x32xf32> to vector<16x32xf32>
    %136 = arith.mulf %134, %135 : vector<16x32xf32>
    %137 = vector.broadcast %107 : vector<1x32xf32> to vector<16x32xf32>
    %138 = arith.addf %136, %137 : vector<16x32xf32>
    %c0_71 = arith.constant 0 : index
    %c0_72 = arith.constant 0 : index
    %c0_73 = arith.constant 0 : index
    %139 = vector.load %arg17[%c0_71, %c0_72, %c0_73] : memref<1x16x32xf32, #tpu.memory_space<vmem>>, vector<1x16x32xf32>
    %140 = vector.shape_cast %139 : vector<1x16x32xf32> to vector<16x32xf32>
    %141 = vector.shape_cast %138 : vector<16x32xf32> to vector<1x16x32xf32>
    tpu.vector_store %arg17[%c0_71, %c0_72, %c0_73], %141 {strides = array<i32>} : memref<1x16x32xf32, #tpu.memory_space<vmem>>, vector<1x16x32xf32>,
    %c0_74 = arith.constant 0 : index
    %c0_75 = arith.constant 0 : index
    %142 = vector.load %arg12[%c0_74, %c0_75] : memref<64x16xbf16, #tpu.memory_space<vmem>>, vector<64x16xbf16>
    %143 = arith.truncf %138 : vector<16x32xf32> to vector<16x32xbf16>
    %cst_76 = arith.constant dense<0.000000e+00> : vector<64x32xf32>
    %144 = tpu.matmul %142, %143, %cst_76 {dimension_numbers = #tpu.dot_dimension_numbers<[1], [0], [0], [1], [0, 0, 1, 1], [], []>} : vector<64x16xbf16>, vector<16x32xbf16>, vector<64x32xf32> -> vector<64x32xf32>
    %c1_77 = arith.constant 1 : index
    %c0_78 = arith.constant 0 : index
    %c0_79 = arith.constant 0 : index
    %145 = vector.load %arg8[%c1_77, %c0_78, %c0_79] : memref<5x288x32xbf16, #tpu.memory_space<vmem>>, vector<1x288x32xbf16>
    %146 = vector.shape_cast %145 : vector<1x288x32xbf16> to vector<288x32xbf16>
    %c9_i32 = arith.constant 9 : i32
    %147 = tpu.dynamic_rotate %144 by %c9_i32 dim 0 : vector<64x32xf32>, i32 -> vector<64x32xf32>
    %c0_80 = arith.constant 0 : index
    %c0_81 = arith.constant 0 : index
    %c0_82 = arith.constant 0 : index
    %148 = vector.load %arg15[%c0_80, %c0_81, %c0_82] : memref<9x64x1xf32, #tpu.memory_space<vmem>>, vector<1x64x1xf32>
    %149 = vector.shape_cast %148 : vector<1x64x1xf32> to vector<64x1xf32>
    %150 = vector.broadcast %149 : vector<64x1xf32> to vector<64x32xf32>
    %151 = arith.mulf %147, %150 : vector<64x32xf32>
    %152 = arith.truncf %151 : vector<64x32xf32> to vector<64x32xbf16>
    %c8_i32 = arith.constant 8 : i32
    %153 = tpu.dynamic_rotate %144 by %c8_i32 dim 0 : vector<64x32xf32>, i32 -> vector<64x32xf32>
    %c1_83 = arith.constant 1 : index
    %c0_84 = arith.constant 0 : index
    %c0_85 = arith.constant 0 : index
    %154 = vector.load %arg15[%c1_83, %c0_84, %c0_85] : memref<9x64x1xf32, #tpu.memory_space<vmem>>, vector<1x64x1xf32>
    %155 = vector.shape_cast %154 : vector<1x64x1xf32> to vector<64x1xf32>
    %156 = vector.broadcast %155 : vector<64x1xf32> to vector<64x32xf32>
    %157 = arith.mulf %153, %156 : vector<64x32xf32>
    %158 = arith.truncf %157 : vector<64x32xf32> to vector<64x32xbf16>
    %c7_i32 = arith.constant 7 : i32
    %159 = tpu.dynamic_rotate %144 by %c7_i32 dim 0 : vector<64x32xf32>, i32 -> vector<64x32xf32>
    %c2_86 = arith.constant 2 : index
    %c0_87 = arith.constant 0 : index
    %c0_88 = arith.constant 0 : index
    %160 = vector.load %arg15[%c2_86, %c0_87, %c0_88] : memref<9x64x1xf32, #tpu.memory_space<vmem>>, vector<1x64x1xf32>
    %161 = vector.shape_cast %160 : vector<1x64x1xf32> to vector<64x1xf32>
    %162 = vector.broadcast %161 : vector<64x1xf32> to vector<64x32xf32>
    %163 = arith.mulf %159, %162 : vector<64x32xf32>
    %164 = arith.truncf %163 : vector<64x32xf32> to vector<64x32xbf16>
    %c1_i32_89 = arith.constant 1 : i32
    %165 = tpu.dynamic_rotate %144 by %c1_i32_89 dim 0 : vector<64x32xf32>, i32 -> vector<64x32xf32>
    %c3_90 = arith.constant 3 : index
    %c0_91 = arith.constant 0 : index
    %c0_92 = arith.constant 0 : index
    %166 = vector.load %arg15[%c3_90, %c0_91, %c0_92] : memref<9x64x1xf32, #tpu.memory_space<vmem>>, vector<1x64x1xf32>
    %167 = vector.shape_cast %166 : vector<1x64x1xf32> to vector<64x1xf32>
    %168 = vector.broadcast %167 : vector<64x1xf32> to vector<64x32xf32>
    %169 = arith.mulf %165, %168 : vector<64x32xf32>
    %170 = arith.truncf %169 : vector<64x32xf32> to vector<64x32xbf16>
    %171 = arith.truncf %144 : vector<64x32xf32> to vector<64x32xbf16>
    %c63_i32 = arith.constant 63 : i32
    %172 = tpu.dynamic_rotate %144 by %c63_i32 dim 0 : vector<64x32xf32>, i32 -> vector<64x32xf32>
    %c5_93 = arith.constant 5 : index
    %c0_94 = arith.constant 0 : index
    %c0_95 = arith.constant 0 : index
    %173 = vector.load %arg15[%c5_93, %c0_94, %c0_95] : memref<9x64x1xf32, #tpu.memory_space<vmem>>, vector<1x64x1xf32>
    %174 = vector.shape_cast %173 : vector<1x64x1xf32> to vector<64x1xf32>
    %175 = vector.broadcast %174 : vector<64x1xf32> to vector<64x32xf32>
    %176 = arith.mulf %172, %175 : vector<64x32xf32>
    %177 = arith.truncf %176 : vector<64x32xf32> to vector<64x32xbf16>
    %c57_i32 = arith.constant 57 : i32
    %178 = tpu.dynamic_rotate %144 by %c57_i32 dim 0 : vector<64x32xf32>, i32 -> vector<64x32xf32>
    %c6_96 = arith.constant 6 : index
    %c0_97 = arith.constant 0 : index
    %c0_98 = arith.constant 0 : index
    %179 = vector.load %arg15[%c6_96, %c0_97, %c0_98] : memref<9x64x1xf32, #tpu.memory_space<vmem>>, vector<1x64x1xf32>
    %180 = vector.shape_cast %179 : vector<1x64x1xf32> to vector<64x1xf32>
    %181 = vector.broadcast %180 : vector<64x1xf32> to vector<64x32xf32>
    %182 = arith.mulf %178, %181 : vector<64x32xf32>
    %183 = arith.truncf %182 : vector<64x32xf32> to vector<64x32xbf16>
    %c56_i32 = arith.constant 56 : i32
    %184 = tpu.dynamic_rotate %144 by %c56_i32 dim 0 : vector<64x32xf32>, i32 -> vector<64x32xf32>
    %c7_99 = arith.constant 7 : index
    %c0_100 = arith.constant 0 : index
    %c0_101 = arith.constant 0 : index
    %185 = vector.load %arg15[%c7_99, %c0_100, %c0_101] : memref<9x64x1xf32, #tpu.memory_space<vmem>>, vector<1x64x1xf32>
    %186 = vector.shape_cast %185 : vector<1x64x1xf32> to vector<64x1xf32>
    %187 = vector.broadcast %186 : vector<64x1xf32> to vector<64x32xf32>
    %188 = arith.mulf %184, %187 : vector<64x32xf32>
    %189 = arith.truncf %188 : vector<64x32xf32> to vector<64x32xbf16>
    %c55_i32 = arith.constant 55 : i32
    %190 = tpu.dynamic_rotate %144 by %c55_i32 dim 0 : vector<64x32xf32>, i32 -> vector<64x32xf32>
    %c8_102 = arith.constant 8 : index
    %c0_103 = arith.constant 0 : index
    %c0_104 = arith.constant 0 : index
    %191 = vector.load %arg15[%c8_102, %c0_103, %c0_104] : memref<9x64x1xf32, #tpu.memory_space<vmem>>, vector<1x64x1xf32>
    %192 = vector.shape_cast %191 : vector<1x64x1xf32> to vector<64x1xf32>
    %193 = vector.broadcast %192 : vector<64x1xf32> to vector<64x32xf32>
    %194 = arith.mulf %190, %193 : vector<64x32xf32>
    %195 = arith.truncf %194 : vector<64x32xf32> to vector<64x32xbf16>
    %196 = tpu.concatenate %152, %158, %164, %170, %171, %177, %183, %189, %195 in 1 : vector<64x32xbf16>, vector<64x32xbf16>, vector<64x32xbf16>, vector<64x32xbf16>, vector<64x32xbf16>, vector<64x32xbf16>, vector<64x32xbf16>, vector<64x32xbf16>, vector<64x32xbf16> -> vector<64x288xbf16>
    %cst_105 = arith.constant dense<0.000000e+00> : vector<64x32xf32>
    %197 = tpu.matmul %196, %146, %cst_105 {dimension_numbers = #tpu.dot_dimension_numbers<[1], [0], [0], [1], [0, 0, 1, 1], [], []>} : vector<64x288xbf16>, vector<288x32xbf16>, vector<64x32xf32> -> vector<64x32xf32>
    %c8_i32_106 = arith.constant 8 : i32
    %198 = tpu.dynamic_rotate %197 by %c8_i32_106 dim 0 : vector<64x32xf32>, i32 -> vector<64x32xf32>
    %c1_107 = arith.constant 1 : index
    %c0_108 = arith.constant 0 : index
    %c0_109 = arith.constant 0 : index
    %199 = vector.load %arg15[%c1_107, %c0_108, %c0_109] : memref<9x64x1xf32, #tpu.memory_space<vmem>>, vector<1x64x1xf32>
    %200 = vector.shape_cast %199 : vector<1x64x1xf32> to vector<64x1xf32>
    %201 = vector.broadcast %200 : vector<64x1xf32> to vector<64x32xf32>
    %202 = arith.mulf %198, %201 : vector<64x32xf32>
    %c56_i32_110 = arith.constant 56 : i32
    %203 = tpu.dynamic_rotate %197 by %c56_i32_110 dim 0 : vector<64x32xf32>, i32 -> vector<64x32xf32>
    %c7_111 = arith.constant 7 : index
    %c0_112 = arith.constant 0 : index
    %c0_113 = arith.constant 0 : index
    %204 = vector.load %arg15[%c7_111, %c0_112, %c0_113] : memref<9x64x1xf32, #tpu.memory_space<vmem>>, vector<1x64x1xf32>
    %205 = vector.shape_cast %204 : vector<1x64x1xf32> to vector<64x1xf32>
    %206 = vector.broadcast %205 : vector<64x1xf32> to vector<64x32xf32>
    %207 = arith.mulf %203, %206 : vector<64x32xf32>
    %cst_114 = arith.constant 2.000000e+00 : f32
    %208 = vector.broadcast %cst_114 : f32 to vector<64x32xf32>
    %209 = arith.mulf %208, %197 : vector<64x32xf32>
    %210 = arith.addf %202, %209 : vector<64x32xf32>
    %211 = arith.addf %210, %207 : vector<64x32xf32>
    %cst_115 = arith.constant 2.500000e-01 : f32
    %212 = vector.broadcast %cst_115 : f32 to vector<64x32xf32>
    %213 = arith.mulf %212, %211 : vector<64x32xf32>
    %c1_i32_116 = arith.constant 1 : i32
    %214 = tpu.dynamic_rotate %213 by %c1_i32_116 dim 0 : vector<64x32xf32>, i32 -> vector<64x32xf32>
    %c3_117 = arith.constant 3 : index
    %c0_118 = arith.constant 0 : index
    %c0_119 = arith.constant 0 : index
    %215 = vector.load %arg15[%c3_117, %c0_118, %c0_119] : memref<9x64x1xf32, #tpu.memory_space<vmem>>, vector<1x64x1xf32>
    %216 = vector.shape_cast %215 : vector<1x64x1xf32> to vector<64x1xf32>
    %217 = vector.broadcast %216 : vector<64x1xf32> to vector<64x32xf32>
    %218 = arith.mulf %214, %217 : vector<64x32xf32>
    %c63_i32_120 = arith.constant 63 : i32
    %219 = tpu.dynamic_rotate %213 by %c63_i32_120 dim 0 : vector<64x32xf32>, i32 -> vector<64x32xf32>
    %c5_121 = arith.constant 5 : index
    %c0_122 = arith.constant 0 : index
    %c0_123 = arith.constant 0 : index
    %220 = vector.load %arg15[%c5_121, %c0_122, %c0_123] : memref<9x64x1xf32, #tpu.memory_space<vmem>>, vector<1x64x1xf32>
    %221 = vector.shape_cast %220 : vector<1x64x1xf32> to vector<64x1xf32>
    %222 = vector.broadcast %221 : vector<64x1xf32> to vector<64x32xf32>
    %223 = arith.mulf %219, %222 : vector<64x32xf32>
    %cst_124 = arith.constant 2.000000e+00 : f32
    %224 = vector.broadcast %cst_124 : f32 to vector<64x32xf32>
    %225 = arith.mulf %224, %213 : vector<64x32xf32>
    %226 = arith.addf %218, %225 : vector<64x32xf32>
    %227 = arith.addf %226, %223 : vector<64x32xf32>
    %cst_125 = arith.constant 2.500000e-01 : f32
    %228 = vector.broadcast %cst_125 : f32 to vector<64x32xf32>
    %229 = arith.mulf %228, %227 : vector<64x32xf32>
    %c1_126 = arith.constant 1 : index
    %c0_127 = arith.constant 0 : index
    %c0_128 = arith.constant 0 : index
    %230 = vector.load %arg9[%c1_126, %c0_127, %c0_128] : memref<5x1x32xf32, #tpu.memory_space<vmem>>, vector<1x1x32xf32>
    %231 = vector.shape_cast %230 : vector<1x1x32xf32> to vector<1x32xf32>
    %232 = vector.broadcast %231 : vector<1x32xf32> to vector<64x32xf32>
    %233 = arith.addf %229, %232 : vector<64x32xf32>
    %c0_129 = arith.constant 0 : index
    %c0_130 = arith.constant 0 : index
    %c0_131 = arith.constant 0 : index
    %c0_132 = arith.constant 0 : index
    %234 = vector.load %arg4[%c0_129, %c0_130, %c0_131, %c0_132] : memref<1x2x64x1xf32, #tpu.memory_space<vmem>>, vector<1x1x64x1xf32>
    %235 = vector.shape_cast %234 : vector<1x1x64x1xf32> to vector<64x1xf32>
    %c2_133 = arith.constant 2 : index
    %c0_134 = arith.constant 0 : index
    %c0_135 = arith.constant 0 : index
    %236 = vector.load %arg7[%c2_133, %c0_134, %c0_135] : memref<6x1x32xf32, #tpu.memory_space<vmem>>, vector<1x1x32xf32>
    %237 = vector.shape_cast %236 : vector<1x1x32xf32> to vector<1x32xf32>
    %c0_136 = arith.constant 0 : index
    %c2_137 = arith.constant 2 : index
    %c0_138 = arith.constant 0 : index
    %c0_139 = arith.constant 0 : index
    %238 = vector.load %arg1[%c0_136, %c2_137, %c0_138, %c0_139] : memref<1x6x1x32xf32, #tpu.memory_space<vmem>>, vector<1x1x1x32xf32>
    %239 = vector.shape_cast %238 : vector<1x1x1x32xf32> to vector<1x32xf32>
    %c0_140 = arith.constant 0 : index
    %c2_141 = arith.constant 2 : index
    %c0_142 = arith.constant 0 : index
    %c0_143 = arith.constant 0 : index
    %240 = vector.load %arg2[%c0_140, %c2_141, %c0_142, %c0_143] : memref<1x6x1x32xf32, #tpu.memory_space<vmem>>, vector<1x1x1x32xf32>
    %241 = vector.shape_cast %240 : vector<1x1x1x32xf32> to vector<1x32xf32>
    %242 = vector.broadcast %237 : vector<1x32xf32> to vector<64x32xf32>
    %243 = vector.broadcast %235 : vector<64x1xf32> to vector<64x32xf32>
    %244 = arith.mulf %242, %243 : vector<64x32xf32>
    %245 = arith.addf %233, %244 : vector<64x32xf32>
    %cst_144 = arith.constant 0.000000e+00 : f32
    %246 = vector.broadcast %cst_144 : f32 to vector<64x32xf32>
    %247 = arith.cmpf oge, %245, %246 : vector<64x32xf32>
    %cst_145 = arith.constant 2.000000e-01 : f32
    %248 = vector.broadcast %cst_145 : f32 to vector<64x32xf32>
    %249 = arith.mulf %248, %245 : vector<64x32xf32>
    %250 = arith.select %247, %245, %249 : vector<64x32xi1>, vector<64x32xf32>
    %cst_146 = arith.constant dense<0.000000e+00> : vector<32xf32>
    %251 = vector.multi_reduction <add>, %250, %cst_146 [0] : vector<64x32xf32> to vector<32xf32>
    %252 = vector.shape_cast %251 : vector<32xf32> to vector<1x32xf32>
    %cst_147 = arith.constant 6.400000e+01 : f32
    %253 = vector.broadcast %cst_147 : f32 to vector<1x32xf32>
    %254 = arith.divf %252, %253 : vector<1x32xf32>
    %255 = vector.broadcast %254 : vector<1x32xf32> to vector<64x32xf32>
    %256 = arith.subf %250, %255 : vector<64x32xf32>
    %257 = arith.mulf %256, %256 : vector<64x32xf32>
    %cst_148 = arith.constant dense<0.000000e+00> : vector<32xf32>
    %258 = vector.multi_reduction <add>, %257, %cst_148 [0] : vector<64x32xf32> to vector<32xf32>
    %259 = vector.shape_cast %258 : vector<32xf32> to vector<1x32xf32>
    %cst_149 = arith.constant 6.400000e+01 : f32
    %260 = vector.broadcast %cst_149 : f32 to vector<1x32xf32>
    %261 = arith.divf %259, %260 : vector<1x32xf32>
    %262 = vector.broadcast %254 : vector<1x32xf32> to vector<64x32xf32>
    %263 = arith.subf %250, %262 : vector<64x32xf32>
    %cst_150 = arith.constant 9.99999974E-6 : f32
    %264 = vector.broadcast %cst_150 : f32 to vector<1x32xf32>
    %265 = arith.addf %261, %264 : vector<1x32xf32>
    %266 = math.rsqrt %265 : vector<1x32xf32>
    %267 = vector.broadcast %266 : vector<1x32xf32> to vector<64x32xf32>
    %268 = arith.mulf %263, %267 : vector<64x32xf32>
    %269 = vector.broadcast %239 : vector<1x32xf32> to vector<64x32xf32>
    %270 = arith.mulf %268, %269 : vector<64x32xf32>
    %271 = vector.broadcast %241 : vector<1x32xf32> to vector<64x32xf32>
    %272 = arith.addf %270, %271 : vector<64x32xf32>
    %c2_151 = arith.constant 2 : index
    %c0_152 = arith.constant 0 : index
    %c0_153 = arith.constant 0 : index
    %273 = vector.load %arg8[%c2_151, %c0_152, %c0_153] : memref<5x288x32xbf16, #tpu.memory_space<vmem>>, vector<1x288x32xbf16>
    %274 = vector.shape_cast %273 : vector<1x288x32xbf16> to vector<288x32xbf16>
    %c9_i32_154 = arith.constant 9 : i32
    %275 = tpu.dynamic_rotate %272 by %c9_i32_154 dim 0 : vector<64x32xf32>, i32 -> vector<64x32xf32>
    %c0_155 = arith.constant 0 : index
    %c0_156 = arith.constant 0 : index
    %c0_157 = arith.constant 0 : index
    %276 = vector.load %arg15[%c0_155, %c0_156, %c0_157] : memref<9x64x1xf32, #tpu.memory_space<vmem>>, vector<1x64x1xf32>
    %277 = vector.shape_cast %276 : vector<1x64x1xf32> to vector<64x1xf32>
    %278 = vector.broadcast %277 : vector<64x1xf32> to vector<64x32xf32>
    %279 = arith.mulf %275, %278 : vector<64x32xf32>
    %280 = arith.truncf %279 : vector<64x32xf32> to vector<64x32xbf16>
    %c8_i32_158 = arith.constant 8 : i32
    %281 = tpu.dynamic_rotate %272 by %c8_i32_158 dim 0 : vector<64x32xf32>, i32 -> vector<64x32xf32>
    %c1_159 = arith.constant 1 : index
    %c0_160 = arith.constant 0 : index
    %c0_161 = arith.constant 0 : index
    %282 = vector.load %arg15[%c1_159, %c0_160, %c0_161] : memref<9x64x1xf32, #tpu.memory_space<vmem>>, vector<1x64x1xf32>
    %283 = vector.shape_cast %282 : vector<1x64x1xf32> to vector<64x1xf32>
    %284 = vector.broadcast %283 : vector<64x1xf32> to vector<64x32xf32>
    %285 = arith.mulf %281, %284 : vector<64x32xf32>
    %286 = arith.truncf %285 : vector<64x32xf32> to vector<64x32xbf16>
    %c7_i32_162 = arith.constant 7 : i32
    %287 = tpu.dynamic_rotate %272 by %c7_i32_162 dim 0 : vector<64x32xf32>, i32 -> vector<64x32xf32>
    %c2_163 = arith.constant 2 : index
    %c0_164 = arith.constant 0 : index
    %c0_165 = arith.constant 0 : index
    %288 = vector.load %arg15[%c2_163, %c0_164, %c0_165] : memref<9x64x1xf32, #tpu.memory_space<vmem>>, vector<1x64x1xf32>
    %289 = vector.shape_cast %288 : vector<1x64x1xf32> to vector<64x1xf32>
    %290 = vector.broadcast %289 : vector<64x1xf32> to vector<64x32xf32>
    %291 = arith.mulf %287, %290 : vector<64x32xf32>
    %292 = arith.truncf %291 : vector<64x32xf32> to vector<64x32xbf16>
    %c1_i32_166 = arith.constant 1 : i32
    %293 = tpu.dynamic_rotate %272 by %c1_i32_166 dim 0 : vector<64x32xf32>, i32 -> vector<64x32xf32>
    %c3_167 = arith.constant 3 : index
    %c0_168 = arith.constant 0 : index
    %c0_169 = arith.constant 0 : index
    %294 = vector.load %arg15[%c3_167, %c0_168, %c0_169] : memref<9x64x1xf32, #tpu.memory_space<vmem>>, vector<1x64x1xf32>
    %295 = vector.shape_cast %294 : vector<1x64x1xf32> to vector<64x1xf32>
    %296 = vector.broadcast %295 : vector<64x1xf32> to vector<64x32xf32>
    %297 = arith.mulf %293, %296 : vector<64x32xf32>
    %298 = arith.truncf %297 : vector<64x32xf32> to vector<64x32xbf16>
    %299 = arith.truncf %272 : vector<64x32xf32> to vector<64x32xbf16>
    %c63_i32_170 = arith.constant 63 : i32
    %300 = tpu.dynamic_rotate %272 by %c63_i32_170 dim 0 : vector<64x32xf32>, i32 -> vector<64x32xf32>
    %c5_171 = arith.constant 5 : index
    %c0_172 = arith.constant 0 : index
    %c0_173 = arith.constant 0 : index
    %301 = vector.load %arg15[%c5_171, %c0_172, %c0_173] : memref<9x64x1xf32, #tpu.memory_space<vmem>>, vector<1x64x1xf32>
    %302 = vector.shape_cast %301 : vector<1x64x1xf32> to vector<64x1xf32>
    %303 = vector.broadcast %302 : vector<64x1xf32> to vector<64x32xf32>
    %304 = arith.mulf %300, %303 : vector<64x32xf32>
    %305 = arith.truncf %304 : vector<64x32xf32> to vector<64x32xbf16>
    %c57_i32_174 = arith.constant 57 : i32
    %306 = tpu.dynamic_rotate %272 by %c57_i32_174 dim 0 : vector<64x32xf32>, i32 -> vector<64x32xf32>
    %c6_175 = arith.constant 6 : index
    %c0_176 = arith.constant 0 : index
    %c0_177 = arith.constant 0 : index
    %307 = vector.load %arg15[%c6_175, %c0_176, %c0_177] : memref<9x64x1xf32, #tpu.memory_space<vmem>>, vector<1x64x1xf32>
    %308 = vector.shape_cast %307 : vector<1x64x1xf32> to vector<64x1xf32>
    %309 = vector.broadcast %308 : vector<64x1xf32> to vector<64x32xf32>
    %310 = arith.mulf %306, %309 : vector<64x32xf32>
    %311 = arith.truncf %310 : vector<64x32xf32> to vector<64x32xbf16>
    %c56_i32_178 = arith.constant 56 : i32
    %312 = tpu.dynamic_rotate %272 by %c56_i32_178 dim 0 : vector<64x32xf32>, i32 -> vector<64x32xf32>
    %c7_179 = arith.constant 7 : index
    %c0_180 = arith.constant 0 : index
    %c0_181 = arith.constant 0 : index
    %313 = vector.load %arg15[%c7_179, %c0_180, %c0_181] : memref<9x64x1xf32, #tpu.memory_space<vmem>>, vector<1x64x1xf32>
    %314 = vector.shape_cast %313 : vector<1x64x1xf32> to vector<64x1xf32>
    %315 = vector.broadcast %314 : vector<64x1xf32> to vector<64x32xf32>
    %316 = arith.mulf %312, %315 : vector<64x32xf32>
    %317 = arith.truncf %316 : vector<64x32xf32> to vector<64x32xbf16>
    %c55_i32_182 = arith.constant 55 : i32
    %318 = tpu.dynamic_rotate %272 by %c55_i32_182 dim 0 : vector<64x32xf32>, i32 -> vector<64x32xf32>
    %c8_183 = arith.constant 8 : index
    %c0_184 = arith.constant 0 : index
    %c0_185 = arith.constant 0 : index
    %319 = vector.load %arg15[%c8_183, %c0_184, %c0_185] : memref<9x64x1xf32, #tpu.memory_space<vmem>>, vector<1x64x1xf32>
    %320 = vector.shape_cast %319 : vector<1x64x1xf32> to vector<64x1xf32>
    %321 = vector.broadcast %320 : vector<64x1xf32> to vector<64x32xf32>
    %322 = arith.mulf %318, %321 : vector<64x32xf32>
    %323 = arith.truncf %322 : vector<64x32xf32> to vector<64x32xbf16>
    %324 = tpu.concatenate %280, %286, %292, %298, %299, %305, %311, %317, %323 in 1 : vector<64x32xbf16>, vector<64x32xbf16>, vector<64x32xbf16>, vector<64x32xbf16>, vector<64x32xbf16>, vector<64x32xbf16>, vector<64x32xbf16>, vector<64x32xbf16>, vector<64x32xbf16> -> vector<64x288xbf16>
    %cst_186 = arith.constant dense<0.000000e+00> : vector<64x32xf32>
    %325 = tpu.matmul %324, %274, %cst_186 {dimension_numbers = #tpu.dot_dimension_numbers<[1], [0], [0], [1], [0, 0, 1, 1], [], []>} : vector<64x288xbf16>, vector<288x32xbf16>, vector<64x32xf32> -> vector<64x32xf32>
    %c2_187 = arith.constant 2 : index
    %c0_188 = arith.constant 0 : index
    %c0_189 = arith.constant 0 : index
    %326 = vector.load %arg9[%c2_187, %c0_188, %c0_189] : memref<5x1x32xf32, #tpu.memory_space<vmem>>, vector<1x1x32xf32>
    %327 = vector.shape_cast %326 : vector<1x1x32xf32> to vector<1x32xf32>
    %328 = vector.broadcast %327 : vector<1x32xf32> to vector<64x32xf32>
    %329 = arith.addf %325, %328 : vector<64x32xf32>
    %c0_190 = arith.constant 0 : index
    %c0_191 = arith.constant 0 : index
    %c0_192 = arith.constant 0 : index
    %330 = vector.load %arg20[%c0_190, %c0_191, %c0_192] : memref<1x64x32xf32, #tpu.memory_space<vmem>>, vector<1x64x32xf32>
    %331 = vector.shape_cast %330 : vector<1x64x32xf32> to vector<64x32xf32>
    %332 = vector.shape_cast %329 : vector<64x32xf32> to vector<1x64x32xf32>
    tpu.vector_store %arg20[%c0_190, %c0_191, %c0_192], %332 {strides = array<i32>} : memref<1x64x32xf32, #tpu.memory_space<vmem>>, vector<1x64x32xf32>,
    %c0_193 = arith.constant 0 : index
    %c1_194 = arith.constant 1 : index
    %c0_195 = arith.constant 0 : index
    %c0_196 = arith.constant 0 : index
    %333 = vector.load %arg4[%c0_193, %c1_194, %c0_195, %c0_196] : memref<1x2x64x1xf32, #tpu.memory_space<vmem>>, vector<1x1x64x1xf32>
    %334 = vector.shape_cast %333 : vector<1x1x64x1xf32> to vector<64x1xf32>
    %c3_197 = arith.constant 3 : index
    %c0_198 = arith.constant 0 : index
    %c0_199 = arith.constant 0 : index
    %335 = vector.load %arg7[%c3_197, %c0_198, %c0_199] : memref<6x1x32xf32, #tpu.memory_space<vmem>>, vector<1x1x32xf32>
    %336 = vector.shape_cast %335 : vector<1x1x32xf32> to vector<1x32xf32>
    %c0_200 = arith.constant 0 : index
    %c3_201 = arith.constant 3 : index
    %c0_202 = arith.constant 0 : index
    %c0_203 = arith.constant 0 : index
    %337 = vector.load %arg1[%c0_200, %c3_201, %c0_202, %c0_203] : memref<1x6x1x32xf32, #tpu.memory_space<vmem>>, vector<1x1x1x32xf32>
    %338 = vector.shape_cast %337 : vector<1x1x1x32xf32> to vector<1x32xf32>
    %c0_204 = arith.constant 0 : index
    %c3_205 = arith.constant 3 : index
    %c0_206 = arith.constant 0 : index
    %c0_207 = arith.constant 0 : index
    %339 = vector.load %arg2[%c0_204, %c3_205, %c0_206, %c0_207] : memref<1x6x1x32xf32, #tpu.memory_space<vmem>>, vector<1x1x1x32xf32>
    %340 = vector.shape_cast %339 : vector<1x1x1x32xf32> to vector<1x32xf32>
    %341 = vector.broadcast %336 : vector<1x32xf32> to vector<64x32xf32>
    %342 = vector.broadcast %334 : vector<64x1xf32> to vector<64x32xf32>
    %343 = arith.mulf %341, %342 : vector<64x32xf32>
    %344 = arith.addf %329, %343 : vector<64x32xf32>
    %cst_208 = arith.constant 0.000000e+00 : f32
    %345 = vector.broadcast %cst_208 : f32 to vector<64x32xf32>
    %346 = arith.cmpf oge, %344, %345 : vector<64x32xf32>
    %cst_209 = arith.constant 2.000000e-01 : f32
    %347 = vector.broadcast %cst_209 : f32 to vector<64x32xf32>
    %348 = arith.mulf %347, %344 : vector<64x32xf32>
    %349 = arith.select %346, %344, %348 : vector<64x32xi1>, vector<64x32xf32>
    %cst_210 = arith.constant dense<0.000000e+00> : vector<32xf32>
    %350 = vector.multi_reduction <add>, %349, %cst_210 [0] : vector<64x32xf32> to vector<32xf32>
    %351 = vector.shape_cast %350 : vector<32xf32> to vector<1x32xf32>
    %cst_211 = arith.constant 6.400000e+01 : f32
    %352 = vector.broadcast %cst_211 : f32 to vector<1x32xf32>
    %353 = arith.divf %351, %352 : vector<1x32xf32>
    %354 = vector.broadcast %353 : vector<1x32xf32> to vector<64x32xf32>
    %355 = arith.subf %349, %354 : vector<64x32xf32>
    %356 = arith.mulf %355, %355 : vector<64x32xf32>
    %cst_212 = arith.constant dense<0.000000e+00> : vector<32xf32>
    %357 = vector.multi_reduction <add>, %356, %cst_212 [0] : vector<64x32xf32> to vector<32xf32>
    %358 = vector.shape_cast %357 : vector<32xf32> to vector<1x32xf32>
    %cst_213 = arith.constant 6.400000e+01 : f32
    %359 = vector.broadcast %cst_213 : f32 to vector<1x32xf32>
    %360 = arith.divf %358, %359 : vector<1x32xf32>
    %361 = vector.broadcast %353 : vector<1x32xf32> to vector<64x32xf32>
    %362 = arith.subf %349, %361 : vector<64x32xf32>
    %cst_214 = arith.constant 9.99999974E-6 : f32
    %363 = vector.broadcast %cst_214 : f32 to vector<1x32xf32>
    %364 = arith.addf %360, %363 : vector<1x32xf32>
    %365 = math.rsqrt %364 : vector<1x32xf32>
    %366 = vector.broadcast %365 : vector<1x32xf32> to vector<64x32xf32>
    %367 = arith.mulf %362, %366 : vector<64x32xf32>
    %368 = vector.broadcast %338 : vector<1x32xf32> to vector<64x32xf32>
    %369 = arith.mulf %367, %368 : vector<64x32xf32>
    %370 = vector.broadcast %340 : vector<1x32xf32> to vector<64x32xf32>
    %371 = arith.addf %369, %370 : vector<64x32xf32>
    %c0_215 = arith.constant 0 : index
    %c0_216 = arith.constant 0 : index
    %c0_217 = arith.constant 0 : index
    %372 = vector.load %arg19[%c0_215, %c0_216, %c0_217] : memref<1x64x32xf32, #tpu.memory_space<vmem>>, vector<1x64x32xf32>
    %373 = vector.shape_cast %372 : vector<1x64x32xf32> to vector<64x32xf32>
    %374 = vector.shape_cast %371 : vector<64x32xf32> to vector<1x64x32xf32>
    tpu.vector_store %arg19[%c0_215, %c0_216, %c0_217], %374 {strides = array<i32>} : memref<1x64x32xf32, #tpu.memory_space<vmem>>, vector<1x64x32xf32>,
    %c0_218 = arith.constant 0 : index
    %c0_219 = arith.constant 0 : index
    %375 = vector.load %arg13[%c0_218, %c0_219] : memref<256x64xbf16, #tpu.memory_space<vmem>>, vector<256x64xbf16>
    %376 = arith.truncf %371 : vector<64x32xf32> to vector<64x32xbf16>
    %cst_220 = arith.constant dense<0.000000e+00> : vector<256x32xf32>
    %377 = tpu.matmul %375, %376, %cst_220 {dimension_numbers = #tpu.dot_dimension_numbers<[1], [0], [0], [1], [0, 0, 1, 1], [], []>} : vector<256x64xbf16>, vector<64x32xbf16>, vector<256x32xf32> -> vector<256x32xf32>
    %c3_221 = arith.constant 3 : index
    %c0_222 = arith.constant 0 : index
    %c0_223 = arith.constant 0 : index
    %378 = vector.load %arg8[%c3_221, %c0_222, %c0_223] : memref<5x288x32xbf16, #tpu.memory_space<vmem>>, vector<1x288x32xbf16>
    %379 = vector.shape_cast %378 : vector<1x288x32xbf16> to vector<288x32xbf16>
    %c17_i32 = arith.constant 17 : i32
    %380 = tpu.dynamic_rotate %377 by %c17_i32 dim 0 : vector<256x32xf32>, i32 -> vector<256x32xf32>
    %c0_224 = arith.constant 0 : index
    %c0_225 = arith.constant 0 : index
    %c0_226 = arith.constant 0 : index
    %381 = vector.load %arg16[%c0_224, %c0_225, %c0_226] : memref<9x256x1xf32, #tpu.memory_space<vmem>>, vector<1x256x1xf32>
    %382 = vector.shape_cast %381 : vector<1x256x1xf32> to vector<256x1xf32>
    %383 = vector.broadcast %382 : vector<256x1xf32> to vector<256x32xf32>
    %384 = arith.mulf %380, %383 : vector<256x32xf32>
    %385 = arith.truncf %384 : vector<256x32xf32> to vector<256x32xbf16>
    %c16_i32 = arith.constant 16 : i32
    %386 = tpu.dynamic_rotate %377 by %c16_i32 dim 0 : vector<256x32xf32>, i32 -> vector<256x32xf32>
    %c1_227 = arith.constant 1 : index
    %c0_228 = arith.constant 0 : index
    %c0_229 = arith.constant 0 : index
    %387 = vector.load %arg16[%c1_227, %c0_228, %c0_229] : memref<9x256x1xf32, #tpu.memory_space<vmem>>, vector<1x256x1xf32>
    %388 = vector.shape_cast %387 : vector<1x256x1xf32> to vector<256x1xf32>
    %389 = vector.broadcast %388 : vector<256x1xf32> to vector<256x32xf32>
    %390 = arith.mulf %386, %389 : vector<256x32xf32>
    %391 = arith.truncf %390 : vector<256x32xf32> to vector<256x32xbf16>
    %c15_i32_230 = arith.constant 15 : i32
    %392 = tpu.dynamic_rotate %377 by %c15_i32_230 dim 0 : vector<256x32xf32>, i32 -> vector<256x32xf32>
    %c2_231 = arith.constant 2 : index
    %c0_232 = arith.constant 0 : index
    %c0_233 = arith.constant 0 : index
    %393 = vector.load %arg16[%c2_231, %c0_232, %c0_233] : memref<9x256x1xf32, #tpu.memory_space<vmem>>, vector<1x256x1xf32>
    %394 = vector.shape_cast %393 : vector<1x256x1xf32> to vector<256x1xf32>
    %395 = vector.broadcast %394 : vector<256x1xf32> to vector<256x32xf32>
    %396 = arith.mulf %392, %395 : vector<256x32xf32>
    %397 = arith.truncf %396 : vector<256x32xf32> to vector<256x32xbf16>
    %c1_i32_234 = arith.constant 1 : i32
    %398 = tpu.dynamic_rotate %377 by %c1_i32_234 dim 0 : vector<256x32xf32>, i32 -> vector<256x32xf32>
    %c3_235 = arith.constant 3 : index
    %c0_236 = arith.constant 0 : index
    %c0_237 = arith.constant 0 : index
    %399 = vector.load %arg16[%c3_235, %c0_236, %c0_237] : memref<9x256x1xf32, #tpu.memory_space<vmem>>, vector<1x256x1xf32>
    %400 = vector.shape_cast %399 : vector<1x256x1xf32> to vector<256x1xf32>
    %401 = vector.broadcast %400 : vector<256x1xf32> to vector<256x32xf32>
    %402 = arith.mulf %398, %401 : vector<256x32xf32>
    %403 = arith.truncf %402 : vector<256x32xf32> to vector<256x32xbf16>
    %404 = arith.truncf %377 : vector<256x32xf32> to vector<256x32xbf16>
    %c255_i32 = arith.constant 255 : i32
    %405 = tpu.dynamic_rotate %377 by %c255_i32 dim 0 : vector<256x32xf32>, i32 -> vector<256x32xf32>
    %c5_238 = arith.constant 5 : index
    %c0_239 = arith.constant 0 : index
    %c0_240 = arith.constant 0 : index
    %406 = vector.load %arg16[%c5_238, %c0_239, %c0_240] : memref<9x256x1xf32, #tpu.memory_space<vmem>>, vector<1x256x1xf32>
    %407 = vector.shape_cast %406 : vector<1x256x1xf32> to vector<256x1xf32>
    %408 = vector.broadcast %407 : vector<256x1xf32> to vector<256x32xf32>
    %409 = arith.mulf %405, %408 : vector<256x32xf32>
    %410 = arith.truncf %409 : vector<256x32xf32> to vector<256x32xbf16>
    %c241_i32 = arith.constant 241 : i32
    %411 = tpu.dynamic_rotate %377 by %c241_i32 dim 0 : vector<256x32xf32>, i32 -> vector<256x32xf32>
    %c6_241 = arith.constant 6 : index
    %c0_242 = arith.constant 0 : index
    %c0_243 = arith.constant 0 : index
    %412 = vector.load %arg16[%c6_241, %c0_242, %c0_243] : memref<9x256x1xf32, #tpu.memory_space<vmem>>, vector<1x256x1xf32>
    %413 = vector.shape_cast %412 : vector<1x256x1xf32> to vector<256x1xf32>
    %414 = vector.broadcast %413 : vector<256x1xf32> to vector<256x32xf32>
    %415 = arith.mulf %411, %414 : vector<256x32xf32>
    %416 = arith.truncf %415 : vector<256x32xf32> to vector<256x32xbf16>
    %c240_i32 = arith.constant 240 : i32
    %417 = tpu.dynamic_rotate %377 by %c240_i32 dim 0 : vector<256x32xf32>, i32 -> vector<256x32xf32>
    %c7_244 = arith.constant 7 : index
    %c0_245 = arith.constant 0 : index
    %c0_246 = arith.constant 0 : index
    %418 = vector.load %arg16[%c7_244, %c0_245, %c0_246] : memref<9x256x1xf32, #tpu.memory_space<vmem>>, vector<1x256x1xf32>
    %419 = vector.shape_cast %418 : vector<1x256x1xf32> to vector<256x1xf32>
    %420 = vector.broadcast %419 : vector<256x1xf32> to vector<256x32xf32>
    %421 = arith.mulf %417, %420 : vector<256x32xf32>
    %422 = arith.truncf %421 : vector<256x32xf32> to vector<256x32xbf16>
    %c239_i32 = arith.constant 239 : i32
    %423 = tpu.dynamic_rotate %377 by %c239_i32 dim 0 : vector<256x32xf32>, i32 -> vector<256x32xf32>
    %c8_247 = arith.constant 8 : index
    %c0_248 = arith.constant 0 : index
    %c0_249 = arith.constant 0 : index
    %424 = vector.load %arg16[%c8_247, %c0_248, %c0_249] : memref<9x256x1xf32, #tpu.memory_space<vmem>>, vector<1x256x1xf32>
    %425 = vector.shape_cast %424 : vector<1x256x1xf32> to vector<256x1xf32>
    %426 = vector.broadcast %425 : vector<256x1xf32> to vector<256x32xf32>
    %427 = arith.mulf %423, %426 : vector<256x32xf32>
    %428 = arith.truncf %427 : vector<256x32xf32> to vector<256x32xbf16>
    %429 = tpu.concatenate %385, %391, %397, %403, %404, %410, %416, %422, %428 in 1 : vector<256x32xbf16>, vector<256x32xbf16>, vector<256x32xbf16>, vector<256x32xbf16>, vector<256x32xbf16>, vector<256x32xbf16>, vector<256x32xbf16>, vector<256x32xbf16>, vector<256x32xbf16> -> vector<256x288xbf16>
    %cst_250 = arith.constant dense<0.000000e+00> : vector<256x32xf32>
    %430 = tpu.matmul %429, %379, %cst_250 {dimension_numbers = #tpu.dot_dimension_numbers<[1], [0], [0], [1], [0, 0, 1, 1], [], []>} : vector<256x288xbf16>, vector<288x32xbf16>, vector<256x32xf32> -> vector<256x32xf32>
    %c16_i32_251 = arith.constant 16 : i32
    %431 = tpu.dynamic_rotate %430 by %c16_i32_251 dim 0 : vector<256x32xf32>, i32 -> vector<256x32xf32>
    %c1_252 = arith.constant 1 : index
    %c0_253 = arith.constant 0 : index
    %c0_254 = arith.constant 0 : index
    %432 = vector.load %arg16[%c1_252, %c0_253, %c0_254] : memref<9x256x1xf32, #tpu.memory_space<vmem>>, vector<1x256x1xf32>
    %433 = vector.shape_cast %432 : vector<1x256x1xf32> to vector<256x1xf32>
    %434 = vector.broadcast %433 : vector<256x1xf32> to vector<256x32xf32>
    %435 = arith.mulf %431, %434 : vector<256x32xf32>
    %c240_i32_255 = arith.constant 240 : i32
    %436 = tpu.dynamic_rotate %430 by %c240_i32_255 dim 0 : vector<256x32xf32>, i32 -> vector<256x32xf32>
    %c7_256 = arith.constant 7 : index
    %c0_257 = arith.constant 0 : index
    %c0_258 = arith.constant 0 : index
    %437 = vector.load %arg16[%c7_256, %c0_257, %c0_258] : memref<9x256x1xf32, #tpu.memory_space<vmem>>, vector<1x256x1xf32>
    %438 = vector.shape_cast %437 : vector<1x256x1xf32> to vector<256x1xf32>
    %439 = vector.broadcast %438 : vector<256x1xf32> to vector<256x32xf32>
    %440 = arith.mulf %436, %439 : vector<256x32xf32>
    %cst_259 = arith.constant 2.000000e+00 : f32
    %441 = vector.broadcast %cst_259 : f32 to vector<256x32xf32>
    %442 = arith.mulf %441, %430 : vector<256x32xf32>
    %443 = arith.addf %435, %442 : vector<256x32xf32>
    %444 = arith.addf %443, %440 : vector<256x32xf32>
    %cst_260 = arith.constant 2.500000e-01 : f32
    %445 = vector.broadcast %cst_260 : f32 to vector<256x32xf32>
    %446 = arith.mulf %445, %444 : vector<256x32xf32>
    %c1_i32_261 = arith.constant 1 : i32
    %447 = tpu.dynamic_rotate %446 by %c1_i32_261 dim 0 : vector<256x32xf32>, i32 -> vector<256x32xf32>
    %c3_262 = arith.constant 3 : index
    %c0_263 = arith.constant 0 : index
    %c0_264 = arith.constant 0 : index
    %448 = vector.load %arg16[%c3_262, %c0_263, %c0_264] : memref<9x256x1xf32, #tpu.memory_space<vmem>>, vector<1x256x1xf32>
    %449 = vector.shape_cast %448 : vector<1x256x1xf32> to vector<256x1xf32>
    %450 = vector.broadcast %449 : vector<256x1xf32> to vector<256x32xf32>
    %451 = arith.mulf %447, %450 : vector<256x32xf32>
    %c255_i32_265 = arith.constant 255 : i32
    %452 = tpu.dynamic_rotate %446 by %c255_i32_265 dim 0 : vector<256x32xf32>, i32 -> vector<256x32xf32>
    %c5_266 = arith.constant 5 : index
    %c0_267 = arith.constant 0 : index
    %c0_268 = arith.constant 0 : index
    %453 = vector.load %arg16[%c5_266, %c0_267, %c0_268] : memref<9x256x1xf32, #tpu.memory_space<vmem>>, vector<1x256x1xf32>
    %454 = vector.shape_cast %453 : vector<1x256x1xf32> to vector<256x1xf32>
    %455 = vector.broadcast %454 : vector<256x1xf32> to vector<256x32xf32>
    %456 = arith.mulf %452, %455 : vector<256x32xf32>
    %cst_269 = arith.constant 2.000000e+00 : f32
    %457 = vector.broadcast %cst_269 : f32 to vector<256x32xf32>
    %458 = arith.mulf %457, %446 : vector<256x32xf32>
    %459 = arith.addf %451, %458 : vector<256x32xf32>
    %460 = arith.addf %459, %456 : vector<256x32xf32>
    %cst_270 = arith.constant 2.500000e-01 : f32
    %461 = vector.broadcast %cst_270 : f32 to vector<256x32xf32>
    %462 = arith.mulf %461, %460 : vector<256x32xf32>
    %c3_271 = arith.constant 3 : index
    %c0_272 = arith.constant 0 : index
    %c0_273 = arith.constant 0 : index
    %463 = vector.load %arg9[%c3_271, %c0_272, %c0_273] : memref<5x1x32xf32, #tpu.memory_space<vmem>>, vector<1x1x32xf32>
    %464 = vector.shape_cast %463 : vector<1x1x32xf32> to vector<1x32xf32>
    %465 = vector.broadcast %464 : vector<1x32xf32> to vector<256x32xf32>
    %466 = arith.addf %462, %465 : vector<256x32xf32>
    %c0_274 = arith.constant 0 : index
    %c0_275 = arith.constant 0 : index
    %c0_276 = arith.constant 0 : index
    %c0_277 = arith.constant 0 : index
    %467 = vector.load %arg5[%c0_274, %c0_275, %c0_276, %c0_277] : memref<1x2x256x1xf32, #tpu.memory_space<vmem>>, vector<1x1x256x1xf32>
    %468 = vector.shape_cast %467 : vector<1x1x256x1xf32> to vector<256x1xf32>
    %c4 = arith.constant 4 : index
    %c0_278 = arith.constant 0 : index
    %c0_279 = arith.constant 0 : index
    %469 = vector.load %arg7[%c4, %c0_278, %c0_279] : memref<6x1x32xf32, #tpu.memory_space<vmem>>, vector<1x1x32xf32>
    %470 = vector.shape_cast %469 : vector<1x1x32xf32> to vector<1x32xf32>
    %c0_280 = arith.constant 0 : index
    %c4_281 = arith.constant 4 : index
    %c0_282 = arith.constant 0 : index
    %c0_283 = arith.constant 0 : index
    %471 = vector.load %arg1[%c0_280, %c4_281, %c0_282, %c0_283] : memref<1x6x1x32xf32, #tpu.memory_space<vmem>>, vector<1x1x1x32xf32>
    %472 = vector.shape_cast %471 : vector<1x1x1x32xf32> to vector<1x32xf32>
    %c0_284 = arith.constant 0 : index
    %c4_285 = arith.constant 4 : index
    %c0_286 = arith.constant 0 : index
    %c0_287 = arith.constant 0 : index
    %473 = vector.load %arg2[%c0_284, %c4_285, %c0_286, %c0_287] : memref<1x6x1x32xf32, #tpu.memory_space<vmem>>, vector<1x1x1x32xf32>
    %474 = vector.shape_cast %473 : vector<1x1x1x32xf32> to vector<1x32xf32>
    %475 = vector.broadcast %470 : vector<1x32xf32> to vector<256x32xf32>
    %476 = vector.broadcast %468 : vector<256x1xf32> to vector<256x32xf32>
    %477 = arith.mulf %475, %476 : vector<256x32xf32>
    %478 = arith.addf %466, %477 : vector<256x32xf32>
    %cst_288 = arith.constant 0.000000e+00 : f32
    %479 = vector.broadcast %cst_288 : f32 to vector<256x32xf32>
    %480 = arith.cmpf oge, %478, %479 : vector<256x32xf32>
    %cst_289 = arith.constant 2.000000e-01 : f32
    %481 = vector.broadcast %cst_289 : f32 to vector<256x32xf32>
    %482 = arith.mulf %481, %478 : vector<256x32xf32>
    %483 = arith.select %480, %478, %482 : vector<256x32xi1>, vector<256x32xf32>
    %cst_290 = arith.constant dense<0.000000e+00> : vector<32xf32>
    %484 = vector.multi_reduction <add>, %483, %cst_290 [0] : vector<256x32xf32> to vector<32xf32>
    %485 = vector.shape_cast %484 : vector<32xf32> to vector<1x32xf32>
    %cst_291 = arith.constant 2.560000e+02 : f32
    %486 = vector.broadcast %cst_291 : f32 to vector<1x32xf32>
    %487 = arith.divf %485, %486 : vector<1x32xf32>
    %488 = vector.broadcast %487 : vector<1x32xf32> to vector<256x32xf32>
    %489 = arith.subf %483, %488 : vector<256x32xf32>
    %490 = arith.mulf %489, %489 : vector<256x32xf32>
    %cst_292 = arith.constant dense<0.000000e+00> : vector<32xf32>
    %491 = vector.multi_reduction <add>, %490, %cst_292 [0] : vector<256x32xf32> to vector<32xf32>
    %492 = vector.shape_cast %491 : vector<32xf32> to vector<1x32xf32>
    %cst_293 = arith.constant 2.560000e+02 : f32
    %493 = vector.broadcast %cst_293 : f32 to vector<1x32xf32>
    %494 = arith.divf %492, %493 : vector<1x32xf32>
    %495 = vector.broadcast %487 : vector<1x32xf32> to vector<256x32xf32>
    %496 = arith.subf %483, %495 : vector<256x32xf32>
    %cst_294 = arith.constant 9.99999974E-6 : f32
    %497 = vector.broadcast %cst_294 : f32 to vector<1x32xf32>
    %498 = arith.addf %494, %497 : vector<1x32xf32>
    %499 = math.rsqrt %498 : vector<1x32xf32>
    %500 = vector.broadcast %499 : vector<1x32xf32> to vector<256x32xf32>
    %501 = arith.mulf %496, %500 : vector<256x32xf32>
    %502 = vector.broadcast %472 : vector<1x32xf32> to vector<256x32xf32>
    %503 = arith.mulf %501, %502 : vector<256x32xf32>
    %504 = vector.broadcast %474 : vector<1x32xf32> to vector<256x32xf32>
    %505 = arith.addf %503, %504 : vector<256x32xf32>
    %c4_295 = arith.constant 4 : index
    %c0_296 = arith.constant 0 : index
    %c0_297 = arith.constant 0 : index
    %506 = vector.load %arg8[%c4_295, %c0_296, %c0_297] : memref<5x288x32xbf16, #tpu.memory_space<vmem>>, vector<1x288x32xbf16>
    %507 = vector.shape_cast %506 : vector<1x288x32xbf16> to vector<288x32xbf16>
    %c17_i32_298 = arith.constant 17 : i32
    %508 = tpu.dynamic_rotate %505 by %c17_i32_298 dim 0 : vector<256x32xf32>, i32 -> vector<256x32xf32>
    %c0_299 = arith.constant 0 : index
    %c0_300 = arith.constant 0 : index
    %c0_301 = arith.constant 0 : index
    %509 = vector.load %arg16[%c0_299, %c0_300, %c0_301] : memref<9x256x1xf32, #tpu.memory_space<vmem>>, vector<1x256x1xf32>
    %510 = vector.shape_cast %509 : vector<1x256x1xf32> to vector<256x1xf32>
    %511 = vector.broadcast %510 : vector<256x1xf32> to vector<256x32xf32>
    %512 = arith.mulf %508, %511 : vector<256x32xf32>
    %513 = arith.truncf %512 : vector<256x32xf32> to vector<256x32xbf16>
    %c16_i32_302 = arith.constant 16 : i32
    %514 = tpu.dynamic_rotate %505 by %c16_i32_302 dim 0 : vector<256x32xf32>, i32 -> vector<256x32xf32>
    %c1_303 = arith.constant 1 : index
    %c0_304 = arith.constant 0 : index
    %c0_305 = arith.constant 0 : index
    %515 = vector.load %arg16[%c1_303, %c0_304, %c0_305] : memref<9x256x1xf32, #tpu.memory_space<vmem>>, vector<1x256x1xf32>
    %516 = vector.shape_cast %515 : vector<1x256x1xf32> to vector<256x1xf32>
    %517 = vector.broadcast %516 : vector<256x1xf32> to vector<256x32xf32>
    %518 = arith.mulf %514, %517 : vector<256x32xf32>
    %519 = arith.truncf %518 : vector<256x32xf32> to vector<256x32xbf16>
    %c15_i32_306 = arith.constant 15 : i32
    %520 = tpu.dynamic_rotate %505 by %c15_i32_306 dim 0 : vector<256x32xf32>, i32 -> vector<256x32xf32>
    %c2_307 = arith.constant 2 : index
    %c0_308 = arith.constant 0 : index
    %c0_309 = arith.constant 0 : index
    %521 = vector.load %arg16[%c2_307, %c0_308, %c0_309] : memref<9x256x1xf32, #tpu.memory_space<vmem>>, vector<1x256x1xf32>
    %522 = vector.shape_cast %521 : vector<1x256x1xf32> to vector<256x1xf32>
    %523 = vector.broadcast %522 : vector<256x1xf32> to vector<256x32xf32>
    %524 = arith.mulf %520, %523 : vector<256x32xf32>
    %525 = arith.truncf %524 : vector<256x32xf32> to vector<256x32xbf16>
    %c1_i32_310 = arith.constant 1 : i32
    %526 = tpu.dynamic_rotate %505 by %c1_i32_310 dim 0 : vector<256x32xf32>, i32 -> vector<256x32xf32>
    %c3_311 = arith.constant 3 : index
    %c0_312 = arith.constant 0 : index
    %c0_313 = arith.constant 0 : index
    %527 = vector.load %arg16[%c3_311, %c0_312, %c0_313] : memref<9x256x1xf32, #tpu.memory_space<vmem>>, vector<1x256x1xf32>
    %528 = vector.shape_cast %527 : vector<1x256x1xf32> to vector<256x1xf32>
    %529 = vector.broadcast %528 : vector<256x1xf32> to vector<256x32xf32>
    %530 = arith.mulf %526, %529 : vector<256x32xf32>
    %531 = arith.truncf %530 : vector<256x32xf32> to vector<256x32xbf16>
    %532 = arith.truncf %505 : vector<256x32xf32> to vector<256x32xbf16>
    %c255_i32_314 = arith.constant 255 : i32
    %533 = tpu.dynamic_rotate %505 by %c255_i32_314 dim 0 : vector<256x32xf32>, i32 -> vector<256x32xf32>
    %c5_315 = arith.constant 5 : index
    %c0_316 = arith.constant 0 : index
    %c0_317 = arith.constant 0 : index
    %534 = vector.load %arg16[%c5_315, %c0_316, %c0_317] : memref<9x256x1xf32, #tpu.memory_space<vmem>>, vector<1x256x1xf32>
    %535 = vector.shape_cast %534 : vector<1x256x1xf32> to vector<256x1xf32>
    %536 = vector.broadcast %535 : vector<256x1xf32> to vector<256x32xf32>
    %537 = arith.mulf %533, %536 : vector<256x32xf32>
    %538 = arith.truncf %537 : vector<256x32xf32> to vector<256x32xbf16>
    %c241_i32_318 = arith.constant 241 : i32
    %539 = tpu.dynamic_rotate %505 by %c241_i32_318 dim 0 : vector<256x32xf32>, i32 -> vector<256x32xf32>
    %c6_319 = arith.constant 6 : index
    %c0_320 = arith.constant 0 : index
    %c0_321 = arith.constant 0 : index
    %540 = vector.load %arg16[%c6_319, %c0_320, %c0_321] : memref<9x256x1xf32, #tpu.memory_space<vmem>>, vector<1x256x1xf32>
    %541 = vector.shape_cast %540 : vector<1x256x1xf32> to vector<256x1xf32>
    %542 = vector.broadcast %541 : vector<256x1xf32> to vector<256x32xf32>
    %543 = arith.mulf %539, %542 : vector<256x32xf32>
    %544 = arith.truncf %543 : vector<256x32xf32> to vector<256x32xbf16>
    %c240_i32_322 = arith.constant 240 : i32
    %545 = tpu.dynamic_rotate %505 by %c240_i32_322 dim 0 : vector<256x32xf32>, i32 -> vector<256x32xf32>
    %c7_323 = arith.constant 7 : index
    %c0_324 = arith.constant 0 : index
    %c0_325 = arith.constant 0 : index
    %546 = vector.load %arg16[%c7_323, %c0_324, %c0_325] : memref<9x256x1xf32, #tpu.memory_space<vmem>>, vector<1x256x1xf32>
    %547 = vector.shape_cast %546 : vector<1x256x1xf32> to vector<256x1xf32>
    %548 = vector.broadcast %547 : vector<256x1xf32> to vector<256x32xf32>
    %549 = arith.mulf %545, %548 : vector<256x32xf32>
    %550 = arith.truncf %549 : vector<256x32xf32> to vector<256x32xbf16>
    %c239_i32_326 = arith.constant 239 : i32
    %551 = tpu.dynamic_rotate %505 by %c239_i32_326 dim 0 : vector<256x32xf32>, i32 -> vector<256x32xf32>
    %c8_327 = arith.constant 8 : index
    %c0_328 = arith.constant 0 : index
    %c0_329 = arith.constant 0 : index
    %552 = vector.load %arg16[%c8_327, %c0_328, %c0_329] : memref<9x256x1xf32, #tpu.memory_space<vmem>>, vector<1x256x1xf32>
    %553 = vector.shape_cast %552 : vector<1x256x1xf32> to vector<256x1xf32>
    %554 = vector.broadcast %553 : vector<256x1xf32> to vector<256x32xf32>
    %555 = arith.mulf %551, %554 : vector<256x32xf32>
    %556 = arith.truncf %555 : vector<256x32xf32> to vector<256x32xbf16>
    %557 = tpu.concatenate %513, %519, %525, %531, %532, %538, %544, %550, %556 in 1 : vector<256x32xbf16>, vector<256x32xbf16>, vector<256x32xbf16>, vector<256x32xbf16>, vector<256x32xbf16>, vector<256x32xbf16>, vector<256x32xbf16>, vector<256x32xbf16>, vector<256x32xbf16> -> vector<256x288xbf16>
    %cst_330 = arith.constant dense<0.000000e+00> : vector<256x32xf32>
    %558 = tpu.matmul %557, %507, %cst_330 {dimension_numbers = #tpu.dot_dimension_numbers<[1], [0], [0], [1], [0, 0, 1, 1], [], []>} : vector<256x288xbf16>, vector<288x32xbf16>, vector<256x32xf32> -> vector<256x32xf32>
    %c4_331 = arith.constant 4 : index
    %c0_332 = arith.constant 0 : index
    %c0_333 = arith.constant 0 : index
    %559 = vector.load %arg9[%c4_331, %c0_332, %c0_333] : memref<5x1x32xf32, #tpu.memory_space<vmem>>, vector<1x1x32xf32>
    %560 = vector.shape_cast %559 : vector<1x1x32xf32> to vector<1x32xf32>
    %561 = vector.broadcast %560 : vector<1x32xf32> to vector<256x32xf32>
    %562 = arith.addf %558, %561 : vector<256x32xf32>
    %c0_334 = arith.constant 0 : index
    %c0_335 = arith.constant 0 : index
    %c0_336 = arith.constant 0 : index
    %563 = vector.load %arg22[%c0_334, %c0_335, %c0_336] : memref<1x256x32xf32, #tpu.memory_space<vmem>>, vector<1x256x32xf32>
    %564 = vector.shape_cast %563 : vector<1x256x32xf32> to vector<256x32xf32>
    %565 = vector.shape_cast %562 : vector<256x32xf32> to vector<1x256x32xf32>
    tpu.vector_store %arg22[%c0_334, %c0_335, %c0_336], %565 {strides = array<i32>} : memref<1x256x32xf32, #tpu.memory_space<vmem>>, vector<1x256x32xf32>,
    %c0_337 = arith.constant 0 : index
    %c1_338 = arith.constant 1 : index
    %c0_339 = arith.constant 0 : index
    %c0_340 = arith.constant 0 : index
    %566 = vector.load %arg5[%c0_337, %c1_338, %c0_339, %c0_340] : memref<1x2x256x1xf32, #tpu.memory_space<vmem>>, vector<1x1x256x1xf32>
    %567 = vector.shape_cast %566 : vector<1x1x256x1xf32> to vector<256x1xf32>
    %c5_341 = arith.constant 5 : index
    %c0_342 = arith.constant 0 : index
    %c0_343 = arith.constant 0 : index
    %568 = vector.load %arg7[%c5_341, %c0_342, %c0_343] : memref<6x1x32xf32, #tpu.memory_space<vmem>>, vector<1x1x32xf32>
    %569 = vector.shape_cast %568 : vector<1x1x32xf32> to vector<1x32xf32>
    %c0_344 = arith.constant 0 : index
    %c5_345 = arith.constant 5 : index
    %c0_346 = arith.constant 0 : index
    %c0_347 = arith.constant 0 : index
    %570 = vector.load %arg1[%c0_344, %c5_345, %c0_346, %c0_347] : memref<1x6x1x32xf32, #tpu.memory_space<vmem>>, vector<1x1x1x32xf32>
    %571 = vector.shape_cast %570 : vector<1x1x1x32xf32> to vector<1x32xf32>
    %c0_348 = arith.constant 0 : index
    %c5_349 = arith.constant 5 : index
    %c0_350 = arith.constant 0 : index
    %c0_351 = arith.constant 0 : index
    %572 = vector.load %arg2[%c0_348, %c5_349, %c0_350, %c0_351] : memref<1x6x1x32xf32, #tpu.memory_space<vmem>>, vector<1x1x1x32xf32>
    %573 = vector.shape_cast %572 : vector<1x1x1x32xf32> to vector<1x32xf32>
    %574 = vector.broadcast %569 : vector<1x32xf32> to vector<256x32xf32>
    %575 = vector.broadcast %567 : vector<256x1xf32> to vector<256x32xf32>
    %576 = arith.mulf %574, %575 : vector<256x32xf32>
    %577 = arith.addf %562, %576 : vector<256x32xf32>
    %cst_352 = arith.constant 0.000000e+00 : f32
    %578 = vector.broadcast %cst_352 : f32 to vector<256x32xf32>
    %579 = arith.cmpf oge, %577, %578 : vector<256x32xf32>
    %cst_353 = arith.constant 2.000000e-01 : f32
    %580 = vector.broadcast %cst_353 : f32 to vector<256x32xf32>
    %581 = arith.mulf %580, %577 : vector<256x32xf32>
    %582 = arith.select %579, %577, %581 : vector<256x32xi1>, vector<256x32xf32>
    %cst_354 = arith.constant dense<0.000000e+00> : vector<32xf32>
    %583 = vector.multi_reduction <add>, %582, %cst_354 [0] : vector<256x32xf32> to vector<32xf32>
    %584 = vector.shape_cast %583 : vector<32xf32> to vector<1x32xf32>
    %cst_355 = arith.constant 2.560000e+02 : f32
    %585 = vector.broadcast %cst_355 : f32 to vector<1x32xf32>
    %586 = arith.divf %584, %585 : vector<1x32xf32>
    %587 = vector.broadcast %586 : vector<1x32xf32> to vector<256x32xf32>
    %588 = arith.subf %582, %587 : vector<256x32xf32>
    %589 = arith.mulf %588, %588 : vector<256x32xf32>
    %cst_356 = arith.constant dense<0.000000e+00> : vector<32xf32>
    %590 = vector.multi_reduction <add>, %589, %cst_356 [0] : vector<256x32xf32> to vector<32xf32>
    %591 = vector.shape_cast %590 : vector<32xf32> to vector<1x32xf32>
    %cst_357 = arith.constant 2.560000e+02 : f32
    %592 = vector.broadcast %cst_357 : f32 to vector<1x32xf32>
    %593 = arith.divf %591, %592 : vector<1x32xf32>
    %594 = vector.broadcast %586 : vector<1x32xf32> to vector<256x32xf32>
    %595 = arith.subf %582, %594 : vector<256x32xf32>
    %cst_358 = arith.constant 9.99999974E-6 : f32
    %596 = vector.broadcast %cst_358 : f32 to vector<1x32xf32>
    %597 = arith.addf %593, %596 : vector<1x32xf32>
    %598 = math.rsqrt %597 : vector<1x32xf32>
    %599 = vector.broadcast %598 : vector<1x32xf32> to vector<256x32xf32>
    %600 = arith.mulf %595, %599 : vector<256x32xf32>
    %601 = vector.broadcast %571 : vector<1x32xf32> to vector<256x32xf32>
    %602 = arith.mulf %600, %601 : vector<256x32xf32>
    %603 = vector.broadcast %573 : vector<1x32xf32> to vector<256x32xf32>
    %604 = arith.addf %602, %603 : vector<256x32xf32>
    %c0_359 = arith.constant 0 : index
    %c0_360 = arith.constant 0 : index
    %c0_361 = arith.constant 0 : index
    %605 = vector.load %arg21[%c0_359, %c0_360, %c0_361] : memref<1x256x32xf32, #tpu.memory_space<vmem>>, vector<1x256x32xf32>
    %606 = vector.shape_cast %605 : vector<1x256x32xf32> to vector<256x32xf32>
    %607 = vector.shape_cast %604 : vector<256x32xf32> to vector<1x256x32xf32>
    tpu.vector_store %arg21[%c0_359, %c0_360, %c0_361], %607 {strides = array<i32>} : memref<1x256x32xf32, #tpu.memory_space<vmem>>, vector<1x256x32xf32>,
    %608 = arith.truncf %604 : vector<256x32xf32> to vector<256x32xbf16>
    %c0_362 = arith.constant 0 : index
    %c0_363 = arith.constant 0 : index
    %609 = vector.load %arg10[%c0_362, %c0_363] : memref<32x3xbf16, #tpu.memory_space<vmem>>, vector<32x3xbf16>
    %cst_364 = arith.constant dense<0.000000e+00> : vector<256x3xf32>
    %610 = tpu.matmul %608, %609, %cst_364 {dimension_numbers = #tpu.dot_dimension_numbers<[1], [0], [0], [1], [0, 0, 1, 1], [], []>} : vector<256x32xbf16>, vector<32x3xbf16>, vector<256x3xf32> -> vector<256x3xf32>
    %c0_365 = arith.constant 0 : index
    %c0_366 = arith.constant 0 : index
    %611 = vector.load %arg11[%c0_365, %c0_366] : memref<1x3xf32, #tpu.memory_space<vmem>>, vector<1x3xf32>
    %612 = vector.broadcast %611 : vector<1x3xf32> to vector<256x3xf32>
    %613 = arith.addf %610, %612 : vector<256x3xf32>
    %c0_367 = arith.constant 0 : index
    %c0_368 = arith.constant 0 : index
    %c0_369 = arith.constant 0 : index
    %614 = vector.load %arg23[%c0_367, %c0_368, %c0_369] : memref<1x256x3xf32, #tpu.memory_space<vmem>>, vector<1x256x3xf32>
    %615 = vector.shape_cast %614 : vector<1x256x3xf32> to vector<256x3xf32>
    %616 = vector.shape_cast %613 : vector<256x3xf32> to vector<1x256x3xf32>
    tpu.vector_store %arg23[%c0_367, %c0_368, %c0_369], %616 {strides = array<i32>} : memref<1x256x3xf32, #tpu.memory_space<vmem>>, vector<1x256x3xf32>,
    return
  }
  func.func @transform_0(%arg0: i32) -> (i32, i32, i32, i32) {
    %c0_i32 = arith.constant 0 : i32
    %c0_i32_0 = arith.constant 0 : i32
    %c0_i32_1 = arith.constant 0 : i32
    %c0_i32_2 = arith.constant 0 : i32
    return %arg0, %c0_i32, %c0_i32_0, %c0_i32_1 : i32, i32, i32, i32
  }
  func.func @transform_1(%arg0: i32) -> (i32, i32, i32, i32) {
    %c0_i32 = arith.constant 0 : i32
    %c0_i32_0 = arith.constant 0 : i32
    %c0_i32_1 = arith.constant 0 : i32
    %c0_i32_2 = arith.constant 0 : i32
    return %arg0, %c0_i32, %c0_i32_0, %c0_i32_1 : i32, i32, i32, i32
  }
  func.func @transform_2(%arg0: i32) -> (i32, i32, i32, i32) {
    %c0_i32 = arith.constant 0 : i32
    %c0_i32_0 = arith.constant 0 : i32
    %c0_i32_1 = arith.constant 0 : i32
    %c0_i32_2 = arith.constant 0 : i32
    return %arg0, %c0_i32, %c0_i32_0, %c0_i32_1 : i32, i32, i32, i32
  }
  func.func @transform_3(%arg0: i32) -> (i32, i32, i32, i32) {
    %c0_i32 = arith.constant 0 : i32
    %c0_i32_0 = arith.constant 0 : i32
    %c0_i32_1 = arith.constant 0 : i32
    %c0_i32_2 = arith.constant 0 : i32
    return %arg0, %c0_i32, %c0_i32_0, %c0_i32_1 : i32, i32, i32, i32
  }
  func.func @transform_4(%arg0: i32) -> (i32, i32, i32, i32) {
    %c0_i32 = arith.constant 0 : i32
    %c0_i32_0 = arith.constant 0 : i32
    %c0_i32_1 = arith.constant 0 : i32
    %c0_i32_2 = arith.constant 0 : i32
    return %arg0, %c0_i32, %c0_i32_0, %c0_i32_1 : i32, i32, i32, i32
  }
  func.func @transform_5(%arg0: i32) -> (i32, i32) {
    %c0_i32 = arith.constant 0 : i32
    %c0_i32_0 = arith.constant 0 : i32
    %c0_i32_1 = arith.constant 0 : i32
    return %c0_i32, %c0_i32_0 : i32, i32
  }
  func.func @transform_6(%arg0: i32) -> (i32, i32, i32) {
    %c0_i32 = arith.constant 0 : i32
    %c0_i32_0 = arith.constant 0 : i32
    %c0_i32_1 = arith.constant 0 : i32
    %c0_i32_2 = arith.constant 0 : i32
    return %c0_i32, %c0_i32_0, %c0_i32_1 : i32, i32, i32
  }
  func.func @transform_7(%arg0: i32) -> (i32, i32, i32) {
    %c0_i32 = arith.constant 0 : i32
    %c0_i32_0 = arith.constant 0 : i32
    %c0_i32_1 = arith.constant 0 : i32
    %c0_i32_2 = arith.constant 0 : i32
    return %c0_i32, %c0_i32_0, %c0_i32_1 : i32, i32, i32
  }
  func.func @transform_8(%arg0: i32) -> (i32, i32, i32) {
    %c0_i32 = arith.constant 0 : i32
    %c0_i32_0 = arith.constant 0 : i32
    %c0_i32_1 = arith.constant 0 : i32
    %c0_i32_2 = arith.constant 0 : i32
    return %c0_i32, %c0_i32_0, %c0_i32_1 : i32, i32, i32
  }
  func.func @transform_9(%arg0: i32) -> (i32, i32) {
    %c0_i32 = arith.constant 0 : i32
    %c0_i32_0 = arith.constant 0 : i32
    %c0_i32_1 = arith.constant 0 : i32
    return %c0_i32, %c0_i32_0 : i32, i32
  }
  func.func @transform_10(%arg0: i32) -> (i32, i32) {
    %c0_i32 = arith.constant 0 : i32
    %c0_i32_0 = arith.constant 0 : i32
    %c0_i32_1 = arith.constant 0 : i32
    return %c0_i32, %c0_i32_0 : i32, i32
  }
  func.func @transform_11(%arg0: i32) -> (i32, i32) {
    %c0_i32 = arith.constant 0 : i32
    %c0_i32_0 = arith.constant 0 : i32
    %c0_i32_1 = arith.constant 0 : i32
    return %c0_i32, %c0_i32_0 : i32, i32
  }
  func.func @transform_12(%arg0: i32) -> (i32, i32) {
    %c0_i32 = arith.constant 0 : i32
    %c0_i32_0 = arith.constant 0 : i32
    %c0_i32_1 = arith.constant 0 : i32
    return %c0_i32, %c0_i32_0 : i32, i32
  }
  func.func @transform_13(%arg0: i32) -> (i32, i32, i32) {
    %c0_i32 = arith.constant 0 : i32
    %c0_i32_0 = arith.constant 0 : i32
    %c0_i32_1 = arith.constant 0 : i32
    %c0_i32_2 = arith.constant 0 : i32
    return %c0_i32, %c0_i32_0, %c0_i32_1 : i32, i32, i32
  }
  func.func @transform_14(%arg0: i32) -> (i32, i32, i32) {
    %c0_i32 = arith.constant 0 : i32
    %c0_i32_0 = arith.constant 0 : i32
    %c0_i32_1 = arith.constant 0 : i32
    %c0_i32_2 = arith.constant 0 : i32
    return %c0_i32, %c0_i32_0, %c0_i32_1 : i32, i32, i32
  }
  func.func @transform_15(%arg0: i32) -> (i32, i32, i32) {
    %c0_i32 = arith.constant 0 : i32
    %c0_i32_0 = arith.constant 0 : i32
    %c0_i32_1 = arith.constant 0 : i32
    %c0_i32_2 = arith.constant 0 : i32
    return %c0_i32, %c0_i32_0, %c0_i32_1 : i32, i32, i32
  }
  func.func @transform_16(%arg0: i32) -> (i32, i32, i32) {
    %c0_i32 = arith.constant 0 : i32
    %c0_i32_0 = arith.constant 0 : i32
    %c0_i32_1 = arith.constant 0 : i32
    return %arg0, %c0_i32, %c0_i32_0 : i32, i32, i32
  }
  func.func @transform_17(%arg0: i32) -> (i32, i32, i32) {
    %c0_i32 = arith.constant 0 : i32
    %c0_i32_0 = arith.constant 0 : i32
    %c0_i32_1 = arith.constant 0 : i32
    return %arg0, %c0_i32, %c0_i32_0 : i32, i32, i32
  }
  func.func @transform_18(%arg0: i32) -> (i32, i32, i32) {
    %c0_i32 = arith.constant 0 : i32
    %c0_i32_0 = arith.constant 0 : i32
    %c0_i32_1 = arith.constant 0 : i32
    return %arg0, %c0_i32, %c0_i32_0 : i32, i32, i32
  }
  func.func @transform_19(%arg0: i32) -> (i32, i32, i32) {
    %c0_i32 = arith.constant 0 : i32
    %c0_i32_0 = arith.constant 0 : i32
    %c0_i32_1 = arith.constant 0 : i32
    return %arg0, %c0_i32, %c0_i32_0 : i32, i32, i32
  }
  func.func @transform_20(%arg0: i32) -> (i32, i32, i32) {
    %c0_i32 = arith.constant 0 : i32
    %c0_i32_0 = arith.constant 0 : i32
    %c0_i32_1 = arith.constant 0 : i32
    return %arg0, %c0_i32, %c0_i32_0 : i32, i32, i32
  }
  func.func @transform_21(%arg0: i32) -> (i32, i32, i32) {
    %c0_i32 = arith.constant 0 : i32
    %c0_i32_0 = arith.constant 0 : i32
    %c0_i32_1 = arith.constant 0 : i32
    return %arg0, %c0_i32, %c0_i32_0 : i32, i32, i32
  }
  func.func @transform_22(%arg0: i32) -> (i32, i32, i32) {
    %c0_i32 = arith.constant 0 : i32
    %c0_i32_0 = arith.constant 0 : i32
    %c0_i32_1 = arith.constant 0 : i32
    return %arg0, %c0_i32, %c0_i32_0 : i32, i32, i32
  }
}

</mosaic_0001>

<llo_original>
// kernel: g_synthesis_forward.1
$region0: #{g_synthesis_forward.1}
  #allocation0 [shape = 'u32[]', space=smem, size = 0x4, offset = 0x4, fixed_abs, tag = 'smem constant byte address 0x4 - core index']
  #allocation1 [shape = 'u32[144,128]{1,0:T(1,128)}', space=vmem, size = 0x12000, scoped, tag = 'internal scratch']
  %s0 = inlined_call_operand.vmem [shape: f32[2,6,1,32], index: 0, kind: input, shape index: {}]
  %s1 = inlined_call_operand.vmem [shape: f32[2,6,1,32], index: 1, kind: input, shape index: {}]
  %s2 = inlined_call_operand.vmem [shape: f32[2,2,16,1], index: 2, kind: input, shape index: {}]
  %s3 = inlined_call_operand.vmem [shape: f32[2,2,64,1], index: 3, kind: input, shape index: {}]
  %s4 = inlined_call_operand.vmem [shape: f32[2,2,256,1], index: 4, kind: input, shape index: {}]
  %s5 = inlined_call_operand.vmem [shape: f32[16,32], index: 5, kind: input, shape index: {}]
  %s6 = inlined_call_operand.vmem [shape: f32[6,1,32], index: 6, kind: input, shape index: {}]
  %s7 = inlined_call_operand.vmem [shape: bf16[5,288,32], index: 7, kind: input, shape index: {}]
  %s8 = inlined_call_operand.vmem [shape: f32[5,1,32], index: 8, kind: input, shape index: {}]
  %s9 = inlined_call_operand.vmem [shape: bf16[32,3], index: 9, kind: input, shape index: {}]
  %s10 = inlined_call_operand.vmem [shape: f32[1,3], index: 10, kind: input, shape index: {}]
  %s11 = inlined_call_operand.vmem [shape: bf16[64,16], index: 11, kind: input, shape index: {}]
  %s12 = inlined_call_operand.vmem [shape: bf16[256,64], index: 12, kind: input, shape index: {}]
  %s13 = inlined_call_operand.vmem [shape: f32[9,16,1], index: 13, kind: input, shape index: {}]
  %s14 = inlined_call_operand.vmem [shape: f32[9,64,1], index: 14, kind: input, shape index: {}]
  %s15 = inlined_call_operand.vmem [shape: f32[9,256,1], index: 15, kind: input, shape index: {}]
  %s16 = inlined_call_operand.hbm [shape: f32[2,16,32], index: 16, kind: output, shape index: {0}]
  %s17 = inlined_call_operand.hbm [shape: f32[2,16,32], index: 17, kind: output, shape index: {1}]
  %s18 = inlined_call_operand.hbm [shape: f32[2,64,32], index: 18, kind: output, shape index: {2}]
  %s19 = inlined_call_operand.hbm [shape: f32[2,64,32], index: 19, kind: output, shape index: {3}]
  %s20 = inlined_call_operand.hbm [shape: f32[2,256,32], index: 20, kind: output, shape index: {4}]
  %s21 = inlined_call_operand.hbm [shape: f32[2,256,32], index: 21, kind: output, shape index: {5}]
  %s22 = inlined_call_operand.vmem [shape: f32[2,256,3], index: 22, kind: output, shape index: {6}]
  %23 = xla_tuple %s16, %s17, %s18, %s19, %s20, %s21, %s22
  %s24 = sld [smem:[#allocation0]]
  $region145: #{g_synthesis_forward.1} parent=0
    _
  %s26 = ssub.s32 1, %s24
  %s27 = scalar_select 0, %s26, %s24
  $region1: #{g_synthesis_forward.1} parent=0
    #allocation2 [shape = 'u8[16384]{0}', space=vmem, size = 0x4000, scoped, tag = 'output window, operand 0']
    #allocation3 [shape = 's32[2]{0}', space=sflag, size = 0x8, scoped, tag = 'scoped memory for g_synthesis_forward.1']
    #allocation4 [shape = 'u8[16384]{0}', space=vmem, size = 0x4000, scoped, tag = 'output window, operand 1']
    #allocation5 [shape = 's32[2]{0}', space=sflag, size = 0x8, scoped, tag = 'scoped memory for g_synthesis_forward.1']
    #allocation6 [shape = 'u8[65536]{0}', space=vmem, size = 0x10000, scoped, tag = 'output window, operand 2']
    #allocation7 [shape = 'u8[65536]{0}', space=vmem, size = 0x10000, scoped, tag = 'output window, operand 3']
    #allocation8 [shape = 's32[2]{0}', space=sflag, size = 0x8, scoped, tag = 'scoped memory for g_synthesis_forward.1']
    #allocation9 [shape = 'u8[262144]{0}', space=vmem, size = 0x40000, scoped, tag = 'output window, operand 4']
    #allocation10 [shape = 'u8[262144]{0}', space=vmem, size = 0x40000, scoped, tag = 'output window, operand 5']
    #allocation11 [shape = 's32[2]{0}', space=sflag, size = 0x8, scoped, tag = 'scoped memory for g_synthesis_forward.1']
    %28 = vsyncpa [#allocation3], 0
    %s29 = scalar_lea.sflag [#allocation3], 1
    %30 = vsyncpa %s29, 0
    %31 = vsyncpa [#allocation5], 0
    %s32 = scalar_lea.sflag [#allocation5], 1
    %33 = vsyncpa %s32, 0
    %34 = vsyncpa [#allocation8], 0
    %s35 = scalar_lea.sflag [#allocation8], 1
    %36 = vsyncpa %s35, 0
    %37 = vsyncpa [#allocation11], 0
    %s38 = scalar_lea.sflag [#allocation11], 1
    %39 = vsyncpa %s38, 0
    loop: start=0, step=1, limit=4
    $region2: #{g_synthesis_forward.1} parent=1 // loop_pre_header
      _
    $region3: #{g_synthesis_forward.1} parent=1 // loop_header
      %s41 = sphi 0, %s45
      %p42 = scmp.ge.s32.totalorder %s41, 4
      %s51 = sphi 0, %s53
      %s54 = sphi 0, %s51
      %s55 = sphi 0, %s54
      %s71 = sphi 0, %s55
      %s77 = sphi 0, %s79
      %s80 = sphi 0, %s77
      %s81 = sphi 0, %s80
      %s97 = sphi 0, %s81
      %s103 = sphi 0, %s105
      %s106 = sphi 0, %s103
      %s107 = sphi 0, %s106
      %s123 = sphi 0, %s107
      %s129 = sphi 0, %s131
      %s132 = sphi 0, %s129
      %s133 = sphi 0, %s132
      %s149 = sphi 0, %s133
      %s155 = sphi 0, %s157
      %s158 = sphi 0, %s155
      %s159 = sphi 0, %s158
      %s175 = sphi 0, %s159
      %s179 = sphi 0, %s179
      %s181 = sphi 0, %s179
      %s182 = sphi 0, %s181
      %s196 = sphi 0, %s182
      %s200 = sphi 0, %s200
      %s202 = sphi 0, %s200
      %s203 = sphi 0, %s202
      %s217 = sphi 0, %s203
      %s221 = sphi 0, %s221
      %s223 = sphi 0, %s221
      %s224 = sphi 0, %s223
      %s238 = sphi 0, %s224
      %s242 = sphi 0, %s242
      %s244 = sphi 0, %s242
      %s245 = sphi 0, %s244
      %s259 = sphi 0, %s245
      %s263 = sphi 0, %s263
      %s265 = sphi 0, %s263
      %s266 = sphi 0, %s265
      %s280 = sphi 0, %s266
      %s284 = sphi 0, %s284
      %s286 = sphi 0, %s284
      %s287 = sphi 0, %s286
      %s301 = sphi 0, %s287
      %s305 = sphi 0, %s305
      %s307 = sphi 0, %s305
      %s308 = sphi 0, %s307
      %s322 = sphi 0, %s308
      %s326 = sphi 0, %s326
      %s328 = sphi 0, %s326
      %s329 = sphi 0, %s328
      %s343 = sphi 0, %s329
      %s347 = sphi 0, %s347
      %s349 = sphi 0, %s347
      %s350 = sphi 0, %s349
      %s364 = sphi 0, %s350
      %s368 = sphi 0, %s368
      %s370 = sphi 0, %s368
      %s371 = sphi 0, %s370
      %s385 = sphi 0, %s371
      %s389 = sphi 0, %s389
      %s391 = sphi 0, %s389
      %s392 = sphi 0, %s391
      %s406 = sphi 0, %s392
      %s412 = sphi 0, %s414
      %s415 = sphi 0, %s412
      %s416 = sphi 0, %s415
      %s432 = sphi 0, %s416
      %s438 = sphi 0, %s440
      %s441 = sphi 0, %s438
      %s442 = sphi 0, %s441
      %s458 = sphi 0, %s442
      %s464 = sphi 0, %s466
      %s467 = sphi 0, %s464
      %s468 = sphi 0, %s467
      %s484 = sphi 0, %s468
      %s490 = sphi 0, %s492
      %s493 = sphi 0, %s490
      %s494 = sphi 0, %s493
      %s510 = sphi 0, %s494
      %s516 = sphi 0, %s518
      %s519 = sphi 0, %s516
      %s520 = sphi 0, %s519
      %s536 = sphi 0, %s520
      %s542 = sphi 0, %s544
      %s545 = sphi 0, %s542
      %s546 = sphi 0, %s545
      %s562 = sphi 0, %s546
      %s568 = sphi 0, %s570
      %s571 = sphi 0, %s568
      %s572 = sphi 0, %s571
      %s588 = sphi 0, %s572
    $region4: #{g_synthesis_forward.1} parent=1 // loop_header_branch
      %44 = sbr.rel (%p42) target = $region8
    $region5: #{g_synthesis_forward.1} parent=1 // loop_body
      %s46 = ssub.s32 %s41, 1
      %s47 = ssub.s32 %s41, 2
      %s48 = sadd.s32 %s41, 1
      %s49 = ssub.s32 %s41, %s48
      %p50 = scmp.eq.s32.totalorder %s49, 0
      %s52 = sadd.s32 %s51, 1
      %s53 = scalar_select %p50, %s51, %s52
      %p56 = pneg %p50
      %p57 = scmp.eq.s32.totalorder %s41, 1
      %p58 = por %p56, %p57
      %p59 = scmp.ne.s32.totalorder %s51, %s54
      %p60 = scmp.eq.s32.totalorder %s41, 0
      %p61 = por %p59, %p60
      %p62 = scmp.ne.s32.totalorder %s51, %s54
      %p63 = scmp.eq.s32.totalorder %s46, 1
      %p64 = por %p62, %p63
      %p65 = scmp.ne.s32.totalorder %s54, %s55
      %p66 = scmp.eq.s32.totalorder %s46, 0
      %p67 = por %p65, %p66
      %p68 = scmp.ne.s32.totalorder %s54, %s55
      %p69 = scmp.eq.s32.totalorder %s47, 1
      %p70 = por %p68, %p69
      %p72 = scmp.ne.s32.totalorder %s55, %s71
      %p73 = scmp.eq.s32.totalorder %s47, 0
      %p74 = por %p72, %p73
      %s75 = ssub.s32 %s41, %s48
      %p76 = scmp.eq.s32.totalorder %s75, 0
      %s78 = sadd.s32 %s77, 1
      %s79 = scalar_select %p76, %s77, %s78
      %p82 = pneg %p76
      %p83 = scmp.eq.s32.totalorder %s41, 1
      %p84 = por %p82, %p83
      %p85 = scmp.ne.s32.totalorder %s77, %s80
      %p86 = scmp.eq.s32.totalorder %s41, 0
      %p87 = por %p85, %p86
      %p88 = scmp.ne.s32.totalorder %s77, %s80
      %p89 = scmp.eq.s32.totalorder %s46, 1
      %p90 = por %p88, %p89
      %p91 = scmp.ne.s32.totalorder %s80, %s81
      %p92 = scmp.eq.s32.totalorder %s46, 0
      %p93 = por %p91, %p92
      %p94 = scmp.ne.s32.totalorder %s80, %s81
      %p95 = scmp.eq.s32.totalorder %s47, 1
      %p96 = por %p94, %p95
      %p98 = scmp.ne.s32.totalorder %s81, %s97
      %p99 = scmp.eq.s32.totalorder %s47, 0
      %p100 = por %p98, %p99
      %s101 = ssub.s32 %s41, %s48
      %p102 = scmp.eq.s32.totalorder %s101, 0
      %s104 = sadd.s32 %s103, 1
      %s105 = scalar_select %p102, %s103, %s104
      %p108 = pneg %p102
      %p109 = scmp.eq.s32.totalorder %s41, 1
      %p110 = por %p108, %p109
      %p111 = scmp.ne.s32.totalorder %s103, %s106
      %p112 = scmp.eq.s32.totalorder %s41, 0
      %p113 = por %p111, %p112
      %p114 = scmp.ne.s32.totalorder %s103, %s106
      %p115 = scmp.eq.s32.totalorder %s46, 1
      %p116 = por %p114, %p115
      %p117 = scmp.ne.s32.totalorder %s106, %s107
      %p118 = scmp.eq.s32.totalorder %s46, 0
      %p119 = por %p117, %p118
      %p120 = scmp.ne.s32.totalorder %s106, %s107
      %p121 = scmp.eq.s32.totalorder %s47, 1
      %p122 = por %p120, %p121
      %p124 = scmp.ne.s32.totalorder %s107, %s123
      %p125 = scmp.eq.s32.totalorder %s47, 0
      %p126 = por %p124, %p125
      %s127 = ssub.s32 %s41, %s48
      %p128 = scmp.eq.s32.totalorder %s127, 0
      %s130 = sadd.s32 %s129, 1
      %s131 = scalar_select %p128, %s129, %s130
      %p134 = pneg %p128
      %p135 = scmp.eq.s32.totalorder %s41, 1
      %p136 = por %p134, %p135
      %p137 = scmp.ne.s32.totalorder %s129, %s132
      %p138 = scmp.eq.s32.totalorder %s41, 0
      %p139 = por %p137, %p138
      %p140 = scmp.ne.s32.totalorder %s129, %s132
      %p141 = scmp.eq.s32.totalorder %s46, 1
      %p142 = por %p140, %p141
      %p143 = scmp.ne.s32.totalorder %s132, %s133
      %p144 = scmp.eq.s32.totalorder %s46, 0
      %p145 = por %p143, %p144
      %p146 = scmp.ne.s32.totalorder %s132, %s133
      %p147 = scmp.eq.s32.totalorder %s47, 1
      %p148 = por %p146, %p147
      %p150 = scmp.ne.s32.totalorder %s133, %s149
      %p151 = scmp.eq.s32.totalorder %s47, 0
      %p152 = por %p150, %p151
      %s153 = ssub.s32 %s41, %s48
      %p154 = scmp.eq.s32.totalorder %s153, 0
      %s156 = sadd.s32 %s155, 1
      %s157 = scalar_select %p154, %s155, %s156
      %p160 = pneg %p154
      %p161 = scmp.eq.s32.totalorder %s41, 1
      %p162 = por %p160, %p161
      %p163 = scmp.ne.s32.totalorder %s155, %s158
      %p164 = scmp.eq.s32.totalorder %s41, 0
      %p165 = por %p163, %p164
      %p166 = scmp.ne.s32.totalorder %s155, %s158
      %p167 = scmp.eq.s32.totalorder %s46, 1
      %p168 = por %p166, %p167
      %p169 = scmp.ne.s32.totalorder %s158, %s159
      %p170 = scmp.eq.s32.totalorder %s46, 0
      %p171 = por %p169, %p170
      %p172 = scmp.ne.s32.totalorder %s158, %s159
      %p173 = scmp.eq.s32.totalorder %s47, 1
      %p174 = por %p172, %p173
      %p176 = scmp.ne.s32.totalorder %s159, %s175
      %p177 = scmp.eq.s32.totalorder %s47, 0
      %p178 = por %p176, %p177
      %s180 = sadd.s32 %s179, 1
      %p183 = scmp.eq.s32.totalorder %s41, 1
      %p184 = scmp.ne.s32.totalorder %s179, %s181
      %p185 = scmp.eq.s32.totalorder %s41, 0
      %p186 = por %p184, %p185
      %p187 = scmp.ne.s32.totalorder %s179, %s181
      %p188 = scmp.eq.s32.totalorder %s46, 1
      %p189 = por %p187, %p188
      %p190 = scmp.ne.s32.totalorder %s181, %s182
      %p191 = scmp.eq.s32.totalorder %s46, 0
      %p192 = por %p190, %p191
      %p193 = scmp.ne.s32.totalorder %s181, %s182
      %p194 = scmp.eq.s32.totalorder %s47, 1
      %p195 = por %p193, %p194
      %p197 = scmp.ne.s32.totalorder %s182, %s196
      %p198 = scmp.eq.s32.totalorder %s47, 0
      %p199 = por %p197, %p198
      %s201 = sadd.s32 %s200, 1
      %p204 = scmp.eq.s32.totalorder %s41, 1
      %p205 = scmp.ne.s32.totalorder %s200, %s202
      %p206 = scmp.eq.s32.totalorder %s41, 0
      %p207 = por %p205, %p206
      %p208 = scmp.ne.s32.totalorder %s200, %s202
      %p209 = scmp.eq.s32.totalorder %s46, 1
      %p210 = por %p208, %p209
      %p211 = scmp.ne.s32.totalorder %s202, %s203
      %p212 = scmp.eq.s32.totalorder %s46, 0
      %p213 = por %p211, %p212
      %p214 = scmp.ne.s32.totalorder %s202, %s203
      %p215 = scmp.eq.s32.totalorder %s47, 1
      %p216 = por %p214, %p215
      %p218 = scmp.ne.s32.totalorder %s203, %s217
      %p219 = scmp.eq.s32.totalorder %s47, 0
      %p220 = por %p218, %p219
      %s222 = sadd.s32 %s221, 1
      %p225 = scmp.eq.s32.totalorder %s41, 1
      %p226 = scmp.ne.s32.totalorder %s221, %s223
      %p227 = scmp.eq.s32.totalorder %s41, 0
      %p228 = por %p226, %p227
      %p229 = scmp.ne.s32.totalorder %s221, %s223
      %p230 = scmp.eq.s32.totalorder %s46, 1
      %p231 = por %p229, %p230
      %p232 = scmp.ne.s32.totalorder %s223, %s224
      %p233 = scmp.eq.s32.totalorder %s46, 0
      %p234 = por %p232, %p233
      %p235 = scmp.ne.s32.totalorder %s223, %s224
      %p236 = scmp.eq.s32.totalorder %s47, 1
      %p237 = por %p235, %p236
      %p239 = scmp.ne.s32.totalorder %s224, %s238
      %p240 = scmp.eq.s32.totalorder %s47, 0
      %p241 = por %p239, %p240
      %s243 = sadd.s32 %s242, 1
      %p246 = scmp.eq.s32.totalorder %s41, 1
      %p247 = scmp.ne.s32.totalorder %s242, %s244
      %p248 = scmp.eq.s32.totalorder %s41, 0
      %p249 = por %p247, %p248
      %p250 = scmp.ne.s32.totalorder %s242, %s244
      %p251 = scmp.eq.s32.totalorder %s46, 1
      %p252 = por %p250, %p251
      %p253 = scmp.ne.s32.totalorder %s244, %s245
      %p254 = scmp.eq.s32.totalorder %s46, 0
      %p255 = por %p253, %p254
      %p256 = scmp.ne.s32.totalorder %s244, %s245
      %p257 = scmp.eq.s32.totalorder %s47, 1
      %p258 = por %p256, %p257
      %p260 = scmp.ne.s32.totalorder %s245, %s259
      %p261 = scmp.eq.s32.totalorder %s47, 0
      %p262 = por %p260, %p261
      %s264 = sadd.s32 %s263, 1
      %p267 = scmp.eq.s32.totalorder %s41, 1
      %p268 = scmp.ne.s32.totalorder %s263, %s265
      %p269 = scmp.eq.s32.totalorder %s41, 0
      %p270 = por %p268, %p269
      %p271 = scmp.ne.s32.totalorder %s263, %s265
      %p272 = scmp.eq.s32.totalorder %s46, 1
      %p273 = por %p271, %p272
      %p274 = scmp.ne.s32.totalorder %s265, %s266
      %p275 = scmp.eq.s32.totalorder %s46, 0
      %p276 = por %p274, %p275
      %p277 = scmp.ne.s32.totalorder %s265, %s266
      %p278 = scmp.eq.s32.totalorder %s47, 1
      %p279 = por %p277, %p278
      %p281 = scmp.ne.s32.totalorder %s266, %s280
      %p282 = scmp.eq.s32.totalorder %s47, 0
      %p283 = por %p281, %p282
      %s285 = sadd.s32 %s284, 1
      %p288 = scmp.eq.s32.totalorder %s41, 1
      %p289 = scmp.ne.s32.totalorder %s284, %s286
      %p290 = scmp.eq.s32.totalorder %s41, 0
      %p291 = por %p289, %p290
      %p292 = scmp.ne.s32.totalorder %s284, %s286
      %p293 = scmp.eq.s32.totalorder %s46, 1
      %p294 = por %p292, %p293
      %p295 = scmp.ne.s32.totalorder %s286, %s287
      %p296 = scmp.eq.s32.totalorder %s46, 0
      %p297 = por %p295, %p296
      %p298 = scmp.ne.s32.totalorder %s286, %s287
      %p299 = scmp.eq.s32.totalorder %s47, 1
      %p300 = por %p298, %p299
      %p302 = scmp.ne.s32.totalorder %s287, %s301
      %p303 = scmp.eq.s32.totalorder %s47, 0
      %p304 = por %p302, %p303
      %s306 = sadd.s32 %s305, 1
      %p309 = scmp.eq.s32.totalorder %s41, 1
      %p310 = scmp.ne.s32.totalorder %s305, %s307
      %p311 = scmp.eq.s32.totalorder %s41, 0
      %p312 = por %p310, %p311
      %p313 = scmp.ne.s32.totalorder %s305, %s307
      %p314 = scmp.eq.s32.totalorder %s46, 1
      %p315 = por %p313, %p314
      %p316 = scmp.ne.s32.totalorder %s307, %s308
      %p317 = scmp.eq.s32.totalorder %s46, 0
      %p318 = por %p316, %p317
      %p319 = scmp.ne.s32.totalorder %s307, %s308
      %p320 = scmp.eq.s32.totalorder %s47, 1
      %p321 = por %p319, %p320
      %p323 = scmp.ne.s32.totalorder %s308, %s322
      %p324 = scmp.eq.s32.totalorder %s47, 0
      %p325 = por %p323, %p324
      %s327 = sadd.s32 %s326, 1
      %p330 = scmp.eq.s32.totalorder %s41, 1
      %p331 = scmp.ne.s32.totalorder %s326, %s328
      %p332 = scmp.eq.s32.totalorder %s41, 0
      %p333 = por %p331, %p332
      %p334 = scmp.ne.s32.totalorder %s326, %s328
      %p335 = scmp.eq.s32.totalorder %s46, 1
      %p336 = por %p334, %p335
      %p337 = scmp.ne.s32.totalorder %s328, %s329
      %p338 = scmp.eq.s32.totalorder %s46, 0
      %p339 = por %p337, %p338
      %p340 = scmp.ne.s32.totalorder %s328, %s329
      %p341 = scmp.eq.s32.totalorder %s47, 1
      %p342 = por %p340, %p341
      %p344 = scmp.ne.s32.totalorder %s329, %s343
      %p345 = scmp.eq.s32.totalorder %s47, 0
      %p346 = por %p344, %p345
      %s348 = sadd.s32 %s347, 1
      %p351 = scmp.eq.s32.totalorder %s41, 1
      %p352 = scmp.ne.s32.totalorder %s347, %s349
      %p353 = scmp.eq.s32.totalorder %s41, 0
      %p354 = por %p352, %p353
      %p355 = scmp.ne.s32.totalorder %s347, %s349
      %p356 = scmp.eq.s32.totalorder %s46, 1
      %p357 = por %p355, %p356
      %p358 = scmp.ne.s32.totalorder %s349, %s350
      %p359 = scmp.eq.s32.totalorder %s46, 0
      %p360 = por %p358, %p359
      %p361 = scmp.ne.s32.totalorder %s349, %s350
      %p362 = scmp.eq.s32.totalorder %s47, 1
      %p363 = por %p361, %p362
      %p365 = scmp.ne.s32.totalorder %s350, %s364
      %p366 = scmp.eq.s32.totalorder %s47, 0
      %p367 = por %p365, %p366
      %s369 = sadd.s32 %s368, 1
      %p372 = scmp.eq.s32.totalorder %s41, 1
      %p373 = scmp.ne.s32.totalorder %s368, %s370
      %p374 = scmp.eq.s32.totalorder %s41, 0
      %p375 = por %p373, %p374
      %p376 = scmp.ne.s32.totalorder %s368, %s370
      %p377 = scmp.eq.s32.totalorder %s46, 1
      %p378 = por %p376, %p377
      %p379 = scmp.ne.s32.totalorder %s370, %s371
      %p380 = scmp.eq.s32.totalorder %s46, 0
      %p381 = por %p379, %p380
      %p382 = scmp.ne.s32.totalorder %s370, %s371
      %p383 = scmp.eq.s32.totalorder %s47, 1
      %p384 = por %p382, %p383
      %p386 = scmp.ne.s32.totalorder %s371, %s385
      %p387 = scmp.eq.s32.totalorder %s47, 0
      %p388 = por %p386, %p387
      %s390 = sadd.s32 %s389, 1
      %p393 = scmp.eq.s32.totalorder %s41, 1
      %p394 = scmp.ne.s32.totalorder %s389, %s391
      %p395 = scmp.eq.s32.totalorder %s41, 0
      %p396 = por %p394, %p395
      %p397 = scmp.ne.s32.totalorder %s389, %s391
      %p398 = scmp.eq.s32.totalorder %s46, 1
      %p399 = por %p397, %p398
      %p400 = scmp.ne.s32.totalorder %s391, %s392
      %p401 = scmp.eq.s32.totalorder %s46, 0
      %p402 = por %p400, %p401
      %p403 = scmp.ne.s32.totalorder %s391, %s392
      %p404 = scmp.eq.s32.totalorder %s47, 1
      %p405 = por %p403, %p404
      %p407 = scmp.ne.s32.totalorder %s392, %s406
      %p408 = scmp.eq.s32.totalorder %s47, 0
      %p409 = por %p407, %p408
      %s410 = ssub.s32 %s41, %s48
      %p411 = scmp.eq.s32.totalorder %s410, 0
      %s413 = sadd.s32 %s412, 1
      %s414 = scalar_select %p411, %s412, %s413
      %p417 = pneg %p411
      %p418 = scmp.eq.s32.totalorder %s41, 1
      %p419 = por %p417, %p418
      %p420 = scmp.ne.s32.totalorder %s412, %s415
      %p421 = scmp.eq.s32.totalorder %s41, 0
      %p422 = por %p420, %p421
      %p423 = scmp.ne.s32.totalorder %s412, %s415
      %p424 = scmp.eq.s32.totalorder %s46, 1
      %p425 = por %p423, %p424
      %p426 = scmp.ne.s32.totalorder %s415, %s416
      %p427 = scmp.eq.s32.totalorder %s46, 0
      %p428 = por %p426, %p427
      %p429 = scmp.ne.s32.totalorder %s415, %s416
      %p430 = scmp.eq.s32.totalorder %s47, 1
      %p431 = por %p429, %p430
      %p433 = scmp.ne.s32.totalorder %s416, %s432
      %p434 = scmp.eq.s32.totalorder %s47, 0
      %p435 = por %p433, %p434
      %s436 = ssub.s32 %s41, %s48
      %p437 = scmp.eq.s32.totalorder %s436, 0
      %s439 = sadd.s32 %s438, 1
      %s440 = scalar_select %p437, %s438, %s439
      %p443 = pneg %p437
      %p444 = scmp.eq.s32.totalorder %s41, 1
      %p445 = por %p443, %p444
      %p446 = scmp.ne.s32.totalorder %s438, %s441
      %p447 = scmp.eq.s32.totalorder %s41, 0
      %p448 = por %p446, %p447
      %p449 = scmp.ne.s32.totalorder %s438, %s441
      %p450 = scmp.eq.s32.totalorder %s46, 1
      %p451 = por %p449, %p450
      %p452 = scmp.ne.s32.totalorder %s441, %s442
      %p453 = scmp.eq.s32.totalorder %s46, 0
      %p454 = por %p452, %p453
      %p455 = scmp.ne.s32.totalorder %s441, %s442
      %p456 = scmp.eq.s32.totalorder %s47, 1
      %p457 = por %p455, %p456
      %p459 = scmp.ne.s32.totalorder %s442, %s458
      %p460 = scmp.eq.s32.totalorder %s47, 0
      %p461 = por %p459, %p460
      %s462 = ssub.s32 %s41, %s48
      %p463 = scmp.eq.s32.totalorder %s462, 0
      %s465 = sadd.s32 %s464, 1
      %s466 = scalar_select %p463, %s464, %s465
      %p469 = pneg %p463
      %p470 = scmp.eq.s32.totalorder %s41, 1
      %p471 = por %p469, %p470
      %p472 = scmp.ne.s32.totalorder %s464, %s467
      %p473 = scmp.eq.s32.totalorder %s41, 0
      %p474 = por %p472, %p473
      %p475 = scmp.ne.s32.totalorder %s464, %s467
      %p476 = scmp.eq.s32.totalorder %s46, 1
      %p477 = por %p475, %p476
      %p478 = scmp.ne.s32.totalorder %s467, %s468
      %p479 = scmp.eq.s32.totalorder %s46, 0
      %p480 = por %p478, %p479
      %p481 = scmp.ne.s32.totalorder %s467, %s468
      %p482 = scmp.eq.s32.totalorder %s47, 1
      %p483 = por %p481, %p482
      %p485 = scmp.ne.s32.totalorder %s468, %s484
      %p486 = scmp.eq.s32.totalorder %s47, 0
      %p487 = por %p485, %p486
      %s488 = ssub.s32 %s41, %s48
      %p489 = scmp.eq.s32.totalorder %s488, 0
      %s491 = sadd.s32 %s490, 1
      %s492 = scalar_select %p489, %s490, %s491
      %p495 = pneg %p489
      %p496 = scmp.eq.s32.totalorder %s41, 1
      %p497 = por %p495, %p496
      %p498 = scmp.ne.s32.totalorder %s490, %s493
      %p499 = scmp.eq.s32.totalorder %s41, 0
      %p500 = por %p498, %p499
      %p501 = scmp.ne.s32.totalorder %s490, %s493
      %p502 = scmp.eq.s32.totalorder %s46, 1
      %p503 = por %p501, %p502
      %p504 = scmp.ne.s32.totalorder %s493, %s494
      %p505 = scmp.eq.s32.totalorder %s46, 0
      %p506 = por %p504, %p505
      %p507 = scmp.ne.s32.totalorder %s493, %s494
      %p508 = scmp.eq.s32.totalorder %s47, 1
      %p509 = por %p507, %p508
      %p511 = scmp.ne.s32.totalorder %s494, %s510
      %p512 = scmp.eq.s32.totalorder %s47, 0
      %p513 = por %p511, %p512
      %s514 = ssub.s32 %s41, %s48
      %p515 = scmp.eq.s32.totalorder %s514, 0
      %s517 = sadd.s32 %s516, 1
      %s518 = scalar_select %p515, %s516, %s517
      %p521 = pneg %p515
      %p522 = scmp.eq.s32.totalorder %s41, 1
      %p523 = por %p521, %p522
      %p524 = scmp.ne.s32.totalorder %s516, %s519
      %p525 = scmp.eq.s32.totalorder %s41, 0
      %p526 = por %p524, %p525
      %p527 = scmp.ne.s32.totalorder %s516, %s519
      %p528 = scmp.eq.s32.totalorder %s46, 1
      %p529 = por %p527, %p528
      %p530 = scmp.ne.s32.totalorder %s519, %s520
      %p531 = scmp.eq.s32.totalorder %s46, 0
      %p532 = por %p530, %p531
      %p533 = scmp.ne.s32.totalorder %s519, %s520
      %p534 = scmp.eq.s32.totalorder %s47, 1
      %p535 = por %p533, %p534
      %p537 = scmp.ne.s32.totalorder %s520, %s536
      %p538 = scmp.eq.s32.totalorder %s47, 0
      %p539 = por %p537, %p538
      %s540 = ssub.s32 %s41, %s48
      %p541 = scmp.eq.s32.totalorder %s540, 0
      %s543 = sadd.s32 %s542, 1
      %s544 = scalar_select %p541, %s542, %s543
      %p547 = pneg %p541
      %p548 = scmp.eq.s32.totalorder %s41, 1
      %p549 = por %p547, %p548
      %p550 = scmp.ne.s32.totalorder %s542, %s545
      %p551 = scmp.eq.s32.totalorder %s41, 0
      %p552 = por %p550, %p551
      %p553 = scmp.ne.s32.totalorder %s542, %s545
      %p554 = scmp.eq.s32.totalorder %s46, 1
      %p555 = por %p553, %p554
      %p556 = scmp.ne.s32.totalorder %s545, %s546
      %p557 = scmp.eq.s32.totalorder %s46, 0
      %p558 = por %p556, %p557
      %p559 = scmp.ne.s32.totalorder %s545, %s546
      %p560 = scmp.eq.s32.totalorder %s47, 1
      %p561 = por %p559, %p560
      %p563 = scmp.ne.s32.totalorder %s546, %s562
      %p564 = scmp.eq.s32.totalorder %s47, 0
      %p565 = por %p563, %p564
      %s566 = ssub.s32 %s41, %s48
      %p567 = scmp.eq.s32.totalorder %s566, 0
      %s569 = sadd.s32 %s568, 1
      %s570 = scalar_select %p567, %s568, %s569
      %p573 = pneg %p567
      %p574 = scmp.eq.s32.totalorder %s41, 1
      %p575 = por %p573, %p574
      %p576 = scmp.ne.s32.totalorder %s568, %s571
      %p577 = scmp.eq.s32.totalorder %s41, 0
      %p578 = por %p576, %p577
      %p579 = scmp.ne.s32.totalorder %s568, %s571
      %p580 = scmp.eq.s32.totalorder %s46, 1
      %p581 = por %p579, %p580
      %p582 = scmp.ne.s32.totalorder %s571, %s572
      %p583 = scmp.eq.s32.totalorder %s46, 0
      %p584 = por %p582, %p583
      %p585 = scmp.ne.s32.totalorder %s571, %s572
      %p586 = scmp.eq.s32.totalorder %s47, 1
      %p587 = por %p585, %p586
      %p589 = scmp.ne.s32.totalorder %s572, %s588
      %p590 = scmp.eq.s32.totalorder %s47, 0
      %p591 = por %p589, %p590
      %p592 = scmp.le.s32.totalorder 1, %s41
      %p593 = scmp.lt.s32.totalorder %s41, 3
      %p594 = pnand %p592, %p593
      %p595 = pneg %p594
      // Predicated region
      $region9: #{g_synthesis_forward.1} parent=5 // pred_check
        _
      $region10: #{g_synthesis_forward.1} parent=5 // pred_check_branch
        %597 = sbr.rel (%p594) target = $region12
      $region11: #{g_synthesis_forward.1} parent=5 // pred_region
        %s598 = ssub.s32 %s41, 1
        // Predicated region
        $region13: #{g_synthesis_forward.1} parent=11 // pred_check
          %p599 = pneg %p192
        $region14: #{g_synthesis_forward.1} parent=11 // pred_check_branch
          %601 = sbr.rel (%p599) target = $region16
        $region15: #{g_synthesis_forward.1} parent=11 // pred_region
          _
        $region16: #{g_synthesis_forward.1} parent=11 // pred_fallthru
          _
        // Predicated region
        $region17: #{g_synthesis_forward.1} parent=11 // pred_check
          %p602 = pneg %p213
        $region18: #{g_synthesis_forward.1} parent=11 // pred_check_branch
          %604 = sbr.rel (%p602) target = $region20
        $region19: #{g_synthesis_forward.1} parent=11 // pred_region
          _
        $region20: #{g_synthesis_forward.1} parent=11 // pred_fallthru
          _
        // Predicated region
        $region21: #{g_synthesis_forward.1} parent=11 // pred_check
          %p605 = pneg %p234
        $region22: #{g_synthesis_forward.1} parent=11 // pred_check_branch
          %607 = sbr.rel (%p605) target = $region24
        $region23: #{g_synthesis_forward.1} parent=11 // pred_region
          _
        $region24: #{g_synthesis_forward.1} parent=11 // pred_fallthru
          _
        // Predicated region
        $region25: #{g_synthesis_forward.1} parent=11 // pred_check
          %p608 = pneg %p255
        $region26: #{g_synthesis_forward.1} parent=11 // pred_check_branch
          %610 = sbr.rel (%p608) target = $region28
        $region27: #{g_synthesis_forward.1} parent=11 // pred_region
          _
        $region28: #{g_synthesis_forward.1} parent=11 // pred_fallthru
          _
        // Predicated region
        $region29: #{g_synthesis_forward.1} parent=11 // pred_check
          %p611 = pneg %p276
        $region30: #{g_synthesis_forward.1} parent=11 // pred_check_branch
          %613 = sbr.rel (%p611) target = $region32
        $region31: #{g_synthesis_forward.1} parent=11 // pred_region
          _
        $region32: #{g_synthesis_forward.1} parent=11 // pred_fallthru
          _
        // Predicated region
        $region33: #{g_synthesis_forward.1} parent=11 // pred_check
          %p614 = pneg %p297
        $region34: #{g_synthesis_forward.1} parent=11 // pred_check_branch
          %616 = sbr.rel (%p614) target = $region36
        $region35: #{g_synthesis_forward.1} parent=11 // pred_region
          _
        $region36: #{g_synthesis_forward.1} parent=11 // pred_fallthru
          _
        // Predicated region
        $region37: #{g_synthesis_forward.1} parent=11 // pred_check
          %p617 = pneg %p318
        $region38: #{g_synthesis_forward.1} parent=11 // pred_check_branch
          %619 = sbr.rel (%p617) target = $region40
        $region39: #{g_synthesis_forward.1} parent=11 // pred_region
          _
        $region40: #{g_synthesis_forward.1} parent=11 // pred_fallthru
          _
        // Predicated region
        $region41: #{g_synthesis_forward.1} parent=11 // pred_check
          %p620 = pneg %p339
        $region42: #{g_synthesis_forward.1} parent=11 // pred_check_branch
          %622 = sbr.rel (%p620) target = $region44
        $region43: #{g_synthesis_forward.1} parent=11 // pred_region
          _
        $region44: #{g_synthesis_forward.1} parent=11 // pred_fallthru
          _
        // Predicated region
        $region45: #{g_synthesis_forward.1} parent=11 // pred_check
          %p623 = pneg %p360
        $region46: #{g_synthesis_forward.1} parent=11 // pred_check_branch
          %625 = sbr.rel (%p623) target = $region48
        $region47: #{g_synthesis_forward.1} parent=11 // pred_region
          _
        $region48: #{g_synthesis_forward.1} parent=11 // pred_fallthru
          _
        // Predicated region
        $region49: #{g_synthesis_forward.1} parent=11 // pred_check
          %p626 = pneg %p381
        $region50: #{g_synthesis_forward.1} parent=11 // pred_check_branch
          %628 = sbr.rel (%p626) target = $region52
        $region51: #{g_synthesis_forward.1} parent=11 // pred_region
          _
        $region52: #{g_synthesis_forward.1} parent=11 // pred_fallthru
          _
        // Predicated region
        $region53: #{g_synthesis_forward.1} parent=11 // pred_check
          %p629 = pneg %p402
        $region54: #{g_synthesis_forward.1} parent=11 // pred_check_branch
          %631 = sbr.rel (%p629) target = $region56
        $region55: #{g_synthesis_forward.1} parent=11 // pred_region
          _
        $region56: #{g_synthesis_forward.1} parent=11 // pred_fallthru
          _
      $region12: #{g_synthesis_forward.1} parent=5 // pred_fallthru
        _
      %p632 = scmp.lt.s32.totalorder %s41, 2
      // Predicated region
      $region57: #{g_synthesis_forward.1} parent=5 // pred_check
        %p633 = pneg %p632
      $region58: #{g_synthesis_forward.1} parent=5 // pred_check_branch
        %635 = sbr.rel (%p633) target = $region60
      $region59: #{g_synthesis_forward.1} parent=5 // pred_region
        // Predicated region
        $region61: #{g_synthesis_forward.1} parent=59 // pred_check
          %p636 = pneg %p61
        $region62: #{g_synthesis_forward.1} parent=59 // pred_check_branch
          %638 = sbr.rel (%p636) target = $region64
        $region63: #{g_synthesis_forward.1} parent=59 // pred_region
          %p639 = scmp.lt.s32.totalorder %s41, 1
          %s640 = scalar_select %p639, %s41, 1
          %s641 = smul.addr %s640, 6
          %s642 = scalar_lea.vmem %s0, %s641
        $region64: #{g_synthesis_forward.1} parent=59 // pred_fallthru
          _
        // Predicated region
        $region65: #{g_synthesis_forward.1} parent=59 // pred_check
          %p643 = pneg %p87
        $region66: #{g_synthesis_forward.1} parent=59 // pred_check_branch
          %645 = sbr.rel (%p643) target = $region68
        $region67: #{g_synthesis_forward.1} parent=59 // pred_region
          %p646 = scmp.lt.s32.totalorder %s41, 1
          %s647 = scalar_select %p646, %s41, 1
          %s648 = smul.addr %s647, 6
          %s649 = scalar_lea.vmem %s1, %s648
        $region68: #{g_synthesis_forward.1} parent=59 // pred_fallthru
          _
        // Predicated region
        $region69: #{g_synthesis_forward.1} parent=59 // pred_check
          %p650 = pneg %p113
        $region70: #{g_synthesis_forward.1} parent=59 // pred_check_branch
          %652 = sbr.rel (%p650) target = $region72
        $region71: #{g_synthesis_forward.1} parent=59 // pred_region
          %p653 = scmp.lt.s32.totalorder %s41, 1
          %s654 = scalar_select %p653, %s41, 1
          %s655 = smul.addr %s654, 4
          %s656 = smul.addr %s655, 8
          %s657 = scalar_lea.vmem %s2, %s656
        $region72: #{g_synthesis_forward.1} parent=59 // pred_fallthru
          _
        // Predicated region
        $region73: #{g_synthesis_forward.1} parent=59 // pred_check
          %p658 = pneg %p139
        $region74: #{g_synthesis_forward.1} parent=59 // pred_check_branch
          %660 = sbr.rel (%p658) target = $region76
        $region75: #{g_synthesis_forward.1} parent=59 // pred_region
          %p661 = scmp.lt.s32.totalorder %s41, 1
          %s662 = scalar_select %p661, %s41, 1
          %s663 = smul.addr %s662, 16
          %s664 = smul.addr %s663, 8
          %s665 = scalar_lea.vmem %s3, %s664
        $region76: #{g_synthesis_forward.1} parent=59 // pred_fallthru
          _
        // Predicated region
        $region77: #{g_synthesis_forward.1} parent=59 // pred_check
          %p666 = pneg %p165
        $region78: #{g_synthesis_forward.1} parent=59 // pred_check_branch
          %668 = sbr.rel (%p666) target = $region80
        $region79: #{g_synthesis_forward.1} parent=59 // pred_region
          %p669 = scmp.lt.s32.totalorder %s41, 1
          %s670 = scalar_select %p669, %s41, 1
          %s671 = smul.addr %s670, 64
          %s672 = smul.addr %s671, 8
          %s673 = scalar_lea.vmem %s4, %s672
        $region80: #{g_synthesis_forward.1} parent=59 // pred_fallthru
          _
      $region60: #{g_synthesis_forward.1} parent=5 // pred_fallthru
        _
      %p674 = scmp.le.s32.totalorder 1, %s41
      %p675 = scmp.lt.s32.totalorder %s41, 3
      %p676 = pnand %p674, %p675
      %p677 = pneg %p676
      // Predicated region
      $region81: #{g_synthesis_forward.1} parent=5 // pred_check
        _
      $region82: #{g_synthesis_forward.1} parent=5 // pred_check_branch
        %679 = sbr.rel (%p676) target = $region84
      $region83: #{g_synthesis_forward.1} parent=5 // pred_region
        %s680 = ssub.s32 %s41, 1
        %p681 = scmp.lt.s32.totalorder %s46, 1
        %s682 = scalar_select %p681, %s46, 1
        %s683 = smul.addr %s682, 6
        %s684 = scalar_lea.vmem %s0, %s683
        %p685 = pneg %p67
        %p686 = pneg %p64
        %p687 = scmp.lt.s32.totalorder %s46, 1
        %s688 = scalar_select %p687, %s46, 1
        %s689 = smul.addr %s688, 6
        %s690 = scalar_lea.vmem %s1, %s689
        %p691 = pneg %p93
        %p692 = pneg %p90
        %p693 = scmp.lt.s32.totalorder %s46, 1
        %s694 = scalar_select %p693, %s46, 1
        %s695 = smul.addr %s694, 4
        %s696 = smul.addr %s695, 8
        %s697 = scalar_lea.vmem %s2, %s696
        %p698 = pneg %p119
        %p699 = pneg %p116
        %p700 = scmp.lt.s32.totalorder %s46, 1
        %s701 = scalar_select %p700, %s46, 1
        %s702 = smul.addr %s701, 16
        %s703 = smul.addr %s702, 8
        %s704 = scalar_lea.vmem %s3, %s703
        %p705 = pneg %p145
        %p706 = pneg %p142
        %p707 = scmp.lt.s32.totalorder %s46, 1
        %s708 = scalar_select %p707, %s46, 1
        %s709 = smul.addr %s708, 64
        %s710 = smul.addr %s709, 8
        %s711 = scalar_lea.vmem %s4, %s710
        %p712 = pneg %p171
        %p713 = pneg %p168
        %p714 = pneg %p192
        %p715 = pneg %p189
        %p716 = pneg %p213
        %p717 = pneg %p210
        %p718 = pneg %p234
        %p719 = pneg %p231
        %p720 = pneg %p255
        %p721 = pneg %p252
        %p722 = pneg %p276
        %p723 = pneg %p273
        %p724 = pneg %p297
        %p725 = pneg %p294
        %p726 = pneg %p318
        %p727 = pneg %p315
        %p728 = pneg %p339
        %p729 = pneg %p336
        %p730 = pneg %p360
        %p731 = pneg %p357
        %p732 = pneg %p381
        %p733 = pneg %p378
        %p734 = pneg %p402
        %p735 = pneg %p399
        %p736 = pneg %p428
        %p737 = pneg %p425
        %s738 = sand.u32 %s415, 1
        %s739 = scalar_lea.sflag [#allocation3], %s738
        %s740 = sand.u32 %s415, 1
        %s741 = smul.addr %s740, 16
        %s742 = scalar_lea.vmem [#allocation2], %s741
        %p743 = pneg %p454
        %p744 = pneg %p451
        %s745 = sand.u32 %s46, 1
        %s746 = scalar_lea.sflag [#allocation5], %s745
        %s747 = sand.u32 %s441, 1
        %s748 = smul.addr %s747, 16
        %s749 = scalar_lea.vmem [#allocation4], %s748
        %p750 = pneg %p480
        %p751 = pneg %p477
        %s752 = sand.u32 %s46, 1
        %s753 = scalar_lea.sflag [#allocation5], %s752
        %s754 = sand.u32 %s467, 1
        %s755 = smul.addr %s754, 64
        %s756 = scalar_lea.vmem [#allocation6], %s755
        %p757 = pneg %p506
        %p758 = pneg %p503
        %s759 = sand.u32 %s46, 1
        %s760 = scalar_lea.sflag [#allocation8], %s759
        %s761 = sand.u32 %s493, 1
        %s762 = smul.addr %s761, 64
        %s763 = scalar_lea.vmem [#allocation7], %s762
        %p764 = pneg %p532
        %p765 = pneg %p529
        %s766 = sand.u32 %s46, 1
        %s767 = scalar_lea.sflag [#allocation8], %s766
        %s768 = sand.u32 %s519, 1
        %s769 = smul.addr %s768, 256
        %s770 = scalar_lea.vmem [#allocation9], %s769
        %p771 = pneg %p558
        %p772 = pneg %p555
        %s773 = sand.u32 %s545, 1
        %s774 = scalar_lea.sflag [#allocation11], %s773
        %s775 = sand.u32 %s545, 1
        %s776 = smul.addr %s775, 256
        %s777 = scalar_lea.vmem [#allocation10], %s776
        %p778 = pneg %p584
        %p779 = pneg %p581
        %p780 = scmp.lt.s32.totalorder %s46, 1
        %s781 = scalar_select %p780, %s46, 1
        %s782 = smul.addr %s781, 32
        %s783 = smul.addr %s782, 8
        %s784 = scalar_lea.vmem %s22, %s783
        %p785 = scmp.lt.s32.totalorder %s46, 1
        %s786 = scalar_select %p785, %s46, 1
        %s787 = smul.addr %s786, 6
        %s788 = scalar_lea.vmem %s0, %s787
        %p789 = scmp.lt.s32.totalorder %s46, 1
        %s790 = scalar_select %p789, %s46, 1
        %s791 = smul.addr %s790, 6
        %s792 = scalar_lea.vmem %s1, %s791
        %p793 = scmp.lt.s32.totalorder %s46, 1
        %s794 = scalar_select %p793, %s46, 1
        %s795 = smul.addr %s794, 4
        %s796 = smul.addr %s795, 8
        %s797 = scalar_lea.vmem %s2, %s796
        %p798 = scmp.lt.s32.totalorder %s46, 1
        %s799 = scalar_select %p798, %s46, 1
        %s800 = smul.addr %s799, 16
        %s801 = smul.addr %s800, 8
        %s802 = scalar_lea.vmem %s3, %s801
        %p803 = scmp.lt.s32.totalorder %s46, 1
        %s804 = scalar_select %p803, %s46, 1
        %s805 = smul.addr %s804, 64
        %s806 = smul.addr %s805, 8
        %s807 = scalar_lea.vmem %s4, %s806
        %p808 = scmp.lt.s32.totalorder %s46, 1
        %s809 = scalar_select %p808, %s46, 1
        %s810 = smul.addr %s809, 32
        %s811 = smul.addr %s810, 8
        %s812 = scalar_lea.vmem %s22, %s811
        %v814 = vld [vmem:[%s5] sm:$0xff]
        %v815 = vld [vmem:[%s5 + $0x8] sm:$0xff]
        %v816 = vld [vmem:[%s797] sm:$0xff]
        %v817 = vld [vmem:[%s797 + $0x8] sm:$0xff]
        %v818 = vld [vmem:[%s6] sm:$0x1]
        %v819 = vld [vmem:[%s788] sm:$0x1]
        %v820 = vld [vmem:[%s792] sm:$0x1]
        %v822 = vlaneseq
        %v823 = vshrl.u32 %v822, 7
        %v824 = vsub.s32 0, %v823
        %v825 = vrot.slane %v818, %v824
        %828 = vset.pattern.permute.xlu0 0
        %829 = vperm.xlu0 %828, %v816
        %v830 = vpop.permute.xlu0 %829
        %833 = vset.pattern.permute.xlu0 0
        %834 = vperm.xlu0 %833, %v817
        %v835 = vpop.permute.xlu0 %834
        %v837 = vmul.f32 %v825, %v830
        %v838 = vmul.f32 %v825, %v835
        %v839 = vadd.f32 %v814, %v837
        %v840 = vadd.f32 %v815, %v838
        %vm841 = vcmp.ge.f32.partialorder %v839, 0.0
        %vm842 = vcmp.ge.f32.partialorder %v840, 0.0
        %v843 = vmul.f32 %v839, 0.2
        %v844 = vmul.f32 %v840, 0.2
        %v845 = vsel %vm841, %v839, %v843
        %v846 = vsel %vm842, %v840, %v844
        %vm847 = vcmask 261120
        %v848 = vsel %vm847, %v845, 0.0
        %v849 = vsel %vm847, %v846, 0.0
        %v850 = vadd.f32 %v848, %v849
        %v851 = vrot.slane %v850, 4
        %v852 = vadd.f32 %v850, %v851
        %v853 = vrot.slane %v852, 2
        %v854 = vadd.f32 %v852, %v853
        %v855 = vrot.slane %v854, 1
        %v856 = vadd.f32 %v854, %v855
        %v857 = vrcp.pop 16.0
        %v858 = vmul.f32 %v856, %v857
        %v859 = vsub.f32 %v845, %v858
        %v860 = vsub.f32 %v846, %v858
        %v861 = vmul.f32 %v859, %v859
        %v862 = vmul.f32 %v860, %v860
        %v863 = vsel %vm847, %v861, 0.0
        %v864 = vsel %vm847, %v862, 0.0
        %v865 = vadd.f32 %v863, %v864
        %v866 = vrot.slane %v865, 4
        %v867 = vadd.f32 %v865, %v866
        %v868 = vrot.slane %v867, 2
        %v869 = vadd.f32 %v867, %v868
        %v870 = vrot.slane %v869, 1
        %v871 = vadd.f32 %v869, %v870
        %v872 = vmul.f32 %v871, %v857
        %v873 = vadd.f32 %v872, 1e-05
        %v874 = vrsqrt.pop %v873
        %v875 = vmul.f32 %v859, %v874
        %v876 = vmul.f32 %v860, %v874
        %v878 = vlaneseq
        %v879 = vshrl.u32 %v878, 7
        %v880 = vsub.s32 0, %v879
        %v881 = vrot.slane %v819, %v880
        %v883 = vmul.f32 %v875, %v881
        %v884 = vmul.f32 %v876, %v881
        %v886 = vlaneseq
        %v887 = vshrl.u32 %v886, 7
        %v888 = vsub.s32 0, %v887
        %v889 = vrot.slane %v820, %v888
        %v891 = vadd.f32 %v883, %v889
        %v892 = vadd.f32 %v884, %v889
        %v893 = vld [vmem:[%s7] sm:$0xf]
        %v894 = vld [vmem:[%s7 + $0x4] sm:$0xf]
        %v895 = vld [vmem:[%s7 + $0x8] sm:$0xf]
        %v896 = vld [vmem:[%s7 + $0xc] sm:$0xf]
        %v897 = vld [vmem:[%s7 + $0x10] sm:$0xf]
        %v898 = vld [vmem:[%s7 + $0x14] sm:$0xf]
        %v899 = vld [vmem:[%s7 + $0x18] sm:$0xf]
        %v900 = vld [vmem:[%s7 + $0x1c] sm:$0xf]
        %v901 = vld [vmem:[%s7 + $0x20] sm:$0xf]
        %v902 = vld [vmem:[%s7 + $0x24] sm:$0xf]
        %v903 = vld [vmem:[%s7 + $0x28] sm:$0xf]
        %v904 = vld [vmem:[%s7 + $0x2c] sm:$0xf]
        %v905 = vld [vmem:[%s7 + $0x30] sm:$0xf]
        %v906 = vld [vmem:[%s7 + $0x34] sm:$0xf]
        %v907 = vld [vmem:[%s7 + $0x38] sm:$0xf]
        %v908 = vld [vmem:[%s7 + $0x3c] sm:$0xf]
        %v909 = vld [vmem:[%s7 + $0x40] sm:$0xf]
        %v910 = vld [vmem:[%s7 + $0x44] sm:$0xf]
        %v911 = vld [vmem:[%s7 + $0x48] sm:$0xf]
        %v912 = vld [vmem:[%s7 + $0x4c] sm:$0xf]
        %v913 = vld [vmem:[%s7 + $0x50] sm:$0xf]
        %v914 = vld [vmem:[%s7 + $0x54] sm:$0xf]
        %v915 = vld [vmem:[%s7 + $0x58] sm:$0xf]
        %v916 = vld [vmem:[%s7 + $0x5c] sm:$0xf]
        %v917 = vld [vmem:[%s7 + $0x60] sm:$0xf]
        %v918 = vld [vmem:[%s7 + $0x64] sm:$0xf]
        %v919 = vld [vmem:[%s7 + $0x68] sm:$0xf]
        %v920 = vld [vmem:[%s7 + $0x6c] sm:$0xf]
        %v921 = vld [vmem:[%s7 + $0x70] sm:$0xf]
        %v922 = vld [vmem:[%s7 + $0x74] sm:$0xf]
        %v923 = vld [vmem:[%s7 + $0x78] sm:$0xf]
        %v924 = vld [vmem:[%s7 + $0x7c] sm:$0xf]
        %v925 = vld [vmem:[%s7 + $0x80] sm:$0xf]
        %v926 = vld [vmem:[%s7 + $0x84] sm:$0xf]
        %v927 = vld [vmem:[%s7 + $0x88] sm:$0xf]
        %v928 = vld [vmem:[%s7 + $0x8c] sm:$0xf]
        %v929 = vrot.slane %v891, 3
        %v930 = vrot.slane %v892, 3
        %v931 = vlaneseq
        %v932 = vshrl.u32 %v931, 7
        %vm933 = vcmp.lt.s32.totalorder %v932, 5
        %v934 = vsel %vm933, %v929, %v930
        %v935 = vsel %vm933, %v930, %v929
        %v936 = vld [vmem:[%s13] sm:$0xff]
        %v937 = vld [vmem:[%s13 + $0x8] sm:$0xff]
        %939 = vset.pattern.permute.xlu0 0
        %940 = vperm.xlu0 %939, %v936
        %v941 = vpop.permute.xlu0 %940
        %944 = vset.pattern.permute.xlu0 0
        %945 = vperm.xlu0 %944, %v937
        %v946 = vpop.permute.xlu0 %945
        %v948 = vmul.f32 %v935, %v941
        %v949 = vmul.f32 %v934, %v946
        %v950 = vpack.c.bf16 %v949, %v948
        %v951 = vrot.slane %v891, 4
        %v952 = vrot.slane %v892, 4
        %vm953 = vcmp.lt.s32.totalorder %v932, 4
        %v954 = vsel %vm953, %v951, %v952
        %v955 = vsel %vm953, %v952, %v951
        %s956 = scalar_lea.vmem %s13, 16
        %v957 = vld [vmem:[%s956] sm:$0xff]
        %v958 = vld [vmem:[%s956 + $0x8] sm:$0xff]
        %960 = vset.pattern.permute.xlu0 0
        %961 = vperm.xlu0 %960, %v957
        %v962 = vpop.permute.xlu0 %961
        %965 = vset.pattern.permute.xlu0 0
        %966 = vperm.xlu0 %965, %v958
        %v967 = vpop.permute.xlu0 %966
        %v969 = vmul.f32 %v955, %v962
        %v970 = vmul.f32 %v954, %v967
        %v971 = vpack.c.bf16 %v970, %v969
        %v972 = vrot.slane %v891, 5
        %v973 = vrot.slane %v892, 5
        %vm974 = vcmp.lt.s32.totalorder %v932, 3
        %v975 = vsel %vm974, %v972, %v973
        %v976 = vsel %vm974, %v973, %v972
        %s977 = scalar_lea.vmem %s13, 32
        %v978 = vld [vmem:[%s977] sm:$0xff]
        %v979 = vld [vmem:[%s977 + $0x8] sm:$0xff]
        %981 = vset.pattern.permute.xlu0 0
        %982 = vperm.xlu0 %981, %v978
        %v983 = vpop.permute.xlu0 %982
        %986 = vset.pattern.permute.xlu0 0
        %987 = vperm.xlu0 %986, %v979
        %v988 = vpop.permute.xlu0 %987
        %v990 = vmul.f32 %v976, %v983
        %v991 = vmul.f32 %v975, %v988
        %v992 = vpack.c.bf16 %v991, %v990
        %v993 = vrot.slane %v891, 7
        %v994 = vrot.slane %v892, 7
        %vm995 = vcmp.lt.s32.totalorder %v932, 1
        %v996 = vsel %vm995, %v993, %v994
        %v997 = vsel %vm995, %v994, %v993
        %s998 = scalar_lea.vmem %s13, 48
        %v999 = vld [vmem:[%s998] sm:$0xff]
        %v1000 = vld [vmem:[%s998 + $0x8] sm:$0xff]
        %1002 = vset.pattern.permute.xlu0 0
        %1003 = vperm.xlu0 %1002, %v999
        %v1004 = vpop.permute.xlu0 %1003
        %1007 = vset.pattern.permute.xlu0 0
        %1008 = vperm.xlu0 %1007, %v1000
        %v1009 = vpop.permute.xlu0 %1008
        %v1011 = vmul.f32 %v997, %v1004
        %v1012 = vmul.f32 %v996, %v1009
        %v1013 = vpack.c.bf16 %v1012, %v1011
        %v1014 = vpack.c.bf16 %v892, %v891
        %v1015 = vrot.slane %v891, 1
        %v1016 = vrot.slane %v892, 1
        %vm1017 = vcmp.lt.s32.totalorder %v932, 7
        %v1018 = vsel %vm1017, %v1015, %v1016
        %v1019 = vsel %vm1017, %v1016, %v1015
        %s1020 = scalar_lea.vmem %s13, 80
        %v1021 = vld [vmem:[%s1020] sm:$0xff]
        %v1022 = vld [vmem:[%s1020 + $0x8] sm:$0xff]
        %1024 = vset.pattern.permute.xlu0 0
        %1025 = vperm.xlu0 %1024, %v1021
        %v1026 = vpop.permute.xlu0 %1025
        %1029 = vset.pattern.permute.xlu0 0
        %1030 = vperm.xlu0 %1029, %v1022
        %v1031 = vpop.permute.xlu0 %1030
        %v1033 = vmul.f32 %v1018, %v1026
        %v1034 = vmul.f32 %v1019, %v1031
        %v1035 = vpack.c.bf16 %v1034, %v1033
        %s1036 = scalar_lea.vmem %s13, 96
        %v1037 = vld [vmem:[%s1036] sm:$0xff]
        %v1038 = vld [vmem:[%s1036 + $0x8] sm:$0xff]
        %1040 = vset.pattern.permute.xlu0 0
        %1041 = vperm.xlu0 %1040, %v1037
        %v1042 = vpop.permute.xlu0 %1041
        %1045 = vset.pattern.permute.xlu0 0
        %1046 = vperm.xlu0 %1045, %v1038
        %v1047 = vpop.permute.xlu0 %1046
        %v1049 = vmul.f32 %v934, %v1042
        %v1050 = vmul.f32 %v935, %v1047
        %v1051 = vpack.c.bf16 %v1050, %v1049
        %s1052 = scalar_lea.vmem %s13, 112
        %v1053 = vld [vmem:[%s1052] sm:$0xff]
        %v1054 = vld [vmem:[%s1052 + $0x8] sm:$0xff]
        %1056 = vset.pattern.permute.xlu0 0
        %1057 = vperm.xlu0 %1056, %v1053
        %v1058 = vpop.permute.xlu0 %1057
        %1061 = vset.pattern.permute.xlu0 0
        %1062 = vperm.xlu0 %1061, %v1054
        %v1063 = vpop.permute.xlu0 %1062
        %v1065 = vmul.f32 %v954, %v1058
        %v1066 = vmul.f32 %v955, %v1063
        %v1067 = vpack.c.bf16 %v1066, %v1065
        %s1068 = scalar_lea.vmem %s13, 128
        %v1069 = vld [vmem:[%s1068] sm:$0xff]
        %v1070 = vld [vmem:[%s1068 + $0x8] sm:$0xff]
        %1072 = vset.pattern.permute.xlu0 0
        %1073 = vperm.xlu0 %1072, %v1069
        %v1074 = vpop.permute.xlu0 %1073
        %1077 = vset.pattern.permute.xlu0 0
        %1078 = vperm.xlu0 %1077, %v1070
        %v1079 = vpop.permute.xlu0 %1078
        %v1081 = vmul.f32 %v975, %v1074
        %v1082 = vmul.f32 %v976, %v1079
        %v1083 = vpack.c.bf16 %v1082, %v1081
        %1085 = vrot.lane.b32.xlu0 %v971, 32
        %v1086 = vpop.permute.xlu0 %1085
        %1088 = vrot.lane.b32.xlu0 %v992, 64
        %v1089 = vpop.permute.xlu0 %1088
        %1091 = vrot.lane.b32.xlu0 %v1013, 96
        %v1092 = vpop.permute.xlu0 %1091
        %1094 = vrot.lane.b32.xlu0 %v1035, 32
        %v1095 = vpop.permute.xlu0 %1094
        %1097 = vrot.lane.b32.xlu0 %v1051, 64
        %v1098 = vpop.permute.xlu0 %1097
        %1100 = vrot.lane.b32.xlu0 %v1067, 96
        %v1101 = vpop.permute.xlu0 %1100
        %v1104 = vsel %vm847, %v950, %v1086
        %vm1105 = vcmask 523264
        %v1107 = vsel %vm1105, %v1104, %v1089
        %vm1108 = vcmask 785408
        %v1110 = vsel %vm1108, %v1107, %v1092
        %v1114 = vsel %vm847, %v1014, %v1095
        %v1116 = vsel %vm1105, %v1114, %v1098
        %v1118 = vsel %vm1108, %v1116, %v1101
        %v1120 = vld [vmem:[%s8] sm:$0x1]
        %v1122 = vlaneseq
        %v1123 = vshrl.u32 %v1122, 7
        %v1124 = vsub.s32 0, %v1123
        %v1125 = vrot.slane %v1120, %v1124
        %v1163 = vunpack.c.l.b16 %v893
        %v1164 = vunpack.c.l.b16 %v894
        %v1165 = vunpack.c.l.b16 %v895
        %v1166 = vunpack.c.l.b16 %v896
        %v1167 = vunpack.c.l.b16 %v897
        %v1168 = vunpack.c.l.b16 %v898
        %v1169 = vunpack.c.l.b16 %v899
        %v1170 = vunpack.c.l.b16 %v900
        %v1171 = vunpack.c.l.b16 %v901
        %v1172 = vunpack.c.l.b16 %v902
        %v1173 = vunpack.c.l.b16 %v903
        %v1174 = vunpack.c.l.b16 %v904
        %v1175 = vunpack.c.l.b16 %v905
        %v1176 = vunpack.c.l.b16 %v906
        %v1177 = vunpack.c.l.b16 %v907
        %v1178 = vunpack.c.l.b16 %v908
        %v1179 = vunpack.c.l.b16 %v909
        %v1180 = vunpack.c.l.b16 %v910
        %v1181 = vunpack.c.l.b16 %v911
        %v1182 = vunpack.c.l.b16 %v912
        %v1183 = vunpack.c.l.b16 %v913
        %v1184 = vunpack.c.l.b16 %v914
        %v1185 = vunpack.c.l.b16 %v915
        %v1186 = vunpack.c.l.b16 %v916
        %v1187 = vunpack.c.l.b16 %v917
        %v1188 = vunpack.c.l.b16 %v918
        %v1189 = vunpack.c.l.b16 %v919
        %v1190 = vunpack.c.l.b16 %v920
        %v1191 = vunpack.c.l.b16 %v921
        %v1192 = vunpack.c.l.b16 %v922
        %v1193 = vunpack.c.l.b16 %v923
        %v1194 = vunpack.c.l.b16 %v924
        %v1195 = vunpack.c.l.b16 %v925
        %v1196 = vunpack.c.l.b16 %v926
        %v1197 = vunpack.c.l.b16 %v927
        %v1198 = vunpack.c.l.b16 %v928
        %v1199 = vpack.c.b16 %v1164, %v1163
        %v1200 = vpack.c.b16 %v1166, %v1165
        %v1201 = vpack.c.b16 %v1168, %v1167
        %v1202 = vpack.c.b16 %v1170, %v1169
        %v1203 = vpack.c.b16 %v1172, %v1171
        %v1204 = vpack.c.b16 %v1174, %v1173
        %v1205 = vpack.c.b16 %v1176, %v1175
        %v1206 = vpack.c.b16 %v1178, %v1177
        %v1207 = vpack.c.b16 %v1180, %v1179
        %v1208 = vpack.c.b16 %v1182, %v1181
        %v1209 = vpack.c.b16 %v1184, %v1183
        %v1210 = vpack.c.b16 %v1186, %v1185
        %v1211 = vpack.c.b16 %v1188, %v1187
        %v1212 = vpack.c.b16 %v1190, %v1189
        %v1213 = vpack.c.b16 %v1192, %v1191
        %v1214 = vpack.c.b16 %v1194, %v1193
        %v1215 = vpack.c.b16 %v1196, %v1195
        %v1216 = vpack.c.b16 %v1198, %v1197
        %v1236 = vsel %vm847, %v1083, 0
        %1238 = vmatprep.subr.bf16.mxu0 0
        %1239 = vmatpush1.bf16.msra.mxu0 %v1206
        %1240 = vmatprep.subr.bf16.mxu0 0
        %1241 = vmatpush1.bf16.msra.mxu0 %v1205
        %1242 = vmatprep.subr.bf16.mxu0 0
        %1243 = vmatpush1.bf16.msra.mxu0 %v1204
        %1244 = vmatprep.subr.bf16.mxu0 0
        %1245 = vmatpush1.bf16.msra.mxu0 %v1203
        %1246 = vmatprep.subr.bf16.mxu0 0
        %1247 = vmatpush1.bf16.msra.mxu0 %v1202
        %1248 = vmatprep.subr.bf16.mxu0 0
        %1249 = vmatpush1.bf16.msra.mxu0 %v1201
        %1250 = vmatprep.subr.bf16.mxu0 0
        %1251 = vmatpush1.bf16.msra.mxu0 %v1200
        %1252 = vmatprep.subr.bf16.mxu0 0
        %1253 = vmatpush1.bf16.msra.mxu0 %v1199
        %1254 = vmatprep.subr.bf16.mxu0 0
        %1255 = vmatpush2.bf16.msra.mxu0 %v1214
        %1256 = vmatprep.subr.bf16.mxu0 0
        %1257 = vmatpush2.bf16.msra.mxu0 %v1213
        %1258 = vmatprep.subr.bf16.mxu0 0
        %1259 = vmatpush2.bf16.msra.mxu0 %v1212
        %1260 = vmatprep.subr.bf16.mxu0 0
        %1261 = vmatpush2.bf16.msra.mxu0 %v1211
        %1262 = vmatprep.subr.bf16.mxu0 0
        %1263 = vmatpush2.bf16.msra.mxu0 %v1210
        %1264 = vmatprep.subr.bf16.mxu0 0
        %1265 = vmatpush2.bf16.msra.mxu0 %v1209
        %1266 = vmatprep.subr.bf16.mxu0 0
        %1267 = vmatpush2.bf16.msra.mxu0 %v1208
        %1268 = vmatprep.subr.bf16.mxu0 0
        %1269 = vmatpush2.bf16.msra.mxu0 %v1207
        %1270 = vmatprep.mubr.bf16.mxu0 %v1118
        %1271 = vmatmul.mubr.bf16.gmra.mxu0 %v1110
        %v1272 = vpop.f32.mrf.mxu0
        %v1273 = vadd.f32 %v1125, %v1272
        %v1274 = vpop.f32.mrf.mxu0
        %v1275 = vpop.f32.mrf.mxu0
        %v1276 = vadd.f32 %v1125, %v1275
        %v1277 = vpop.f32.mrf.mxu0
        %1278 = vdwg.mxu0
        %1279 = vmatprep.subr.bf16.mxu0 0
        %1280 = vmatpush1.bf16.msra.mxu0 0
        %1281 = vmatprep.subr.bf16.mxu0 0
        %1282 = vmatpush1.bf16.msra.mxu0 0
        %1283 = vmatprep.subr.bf16.mxu0 0
        %1284 = vmatpush1.bf16.msra.mxu0 0
        %1285 = vmatprep.subr.bf16.mxu0 0
        %1286 = vmatpush1.bf16.msra.mxu0 0
        %1287 = vmatprep.subr.bf16.mxu0 0
        %1288 = vmatpush1.bf16.msra.mxu0 0
        %1289 = vmatprep.subr.bf16.mxu0 0
        %1290 = vmatpush1.bf16.msra.mxu0 0
        %1291 = vmatprep.subr.bf16.mxu0 0
        %1292 = vmatpush1.bf16.msra.mxu0 %v1216
        %1293 = vmatprep.subr.bf16.mxu0 0
        %1294 = vmatpush1.bf16.msra.mxu0 %v1215
        %1295 = vmatprep.subr.bf16.mxu0 0
        %1296 = vmatpush2.bf16.msra.mxu0 0
        %1297 = vmatprep.subr.bf16.mxu0 0
        %1298 = vmatpush2.bf16.msra.mxu0 0
        %1299 = vmatprep.subr.bf16.mxu0 0
        %1300 = vmatpush2.bf16.msra.mxu0 0
        %1301 = vmatprep.subr.bf16.mxu0 0
        %1302 = vmatpush2.bf16.msra.mxu0 0
        %1303 = vmatprep.subr.bf16.mxu0 0
        %1304 = vmatpush2.bf16.msra.mxu0 0
        %1305 = vmatprep.subr.bf16.mxu0 0
        %1306 = vmatpush2.bf16.msra.mxu0 0
        %1307 = vmatprep.subr.bf16.mxu0 0
        %1308 = vmatpush2.bf16.msra.mxu0 0
        %1309 = vmatprep.subr.bf16.mxu0 0
        %1310 = vmatpush2.bf16.msra.mxu0 0
        %1311 = vmatprep.mubr.bf16.mxu0 0
        %1312 = vmatmul.mubr.bf16.gmra.mxu0 %v1236
        %v1313 = vpop.f32.mrf.mxu0
        %v1314 = vadd.f32 %v1273, %v1313
        %v1315 = vpop.f32.mrf.mxu0
        %v1316 = vpop.f32.mrf.mxu0
        %v1317 = vadd.f32 %v1276, %v1316
        %v1318 = vpop.f32.mrf.mxu0
        %1319 = vdwg.mxu0
        %1320 = vst.msk [vmem:[%s749] sm:$0xff] %vm847, %v1314
        %1321 = vst.msk [vmem:[%s749 + $0x8] sm:$0xff] %vm847, %v1317
        %s1322 = scalar_lea.vmem %s797, 16
        %v1323 = vld [vmem:[%s1322] sm:$0xff]
        %v1324 = vld [vmem:[%s1322 + $0x8] sm:$0xff]
        %s1325 = scalar_lea.vmem %s6, 1
        %v1326 = vld [vmem:[%s1325] sm:$0x1]
        %s1327 = scalar_lea.vmem %s788, 1
        %v1328 = vld [vmem:[%s1327] sm:$0x1]
        %s1329 = scalar_lea.vmem %s792, 1
        %v1330 = vld [vmem:[%s1329] sm:$0x1]
        %v1332 = vlaneseq
        %v1333 = vshrl.u32 %v1332, 7
        %v1334 = vsub.s32 0, %v1333
        %v1335 = vrot.slane %v1326, %v1334
        %1338 = vset.pattern.permute.xlu0 0
        %1339 = vperm.xlu0 %1338, %v1323
        %v1340 = vpop.permute.xlu0 %1339
        %1343 = vset.pattern.permute.xlu0 0
        %1344 = vperm.xlu0 %1343, %v1324
        %v1345 = vpop.permute.xlu0 %1344
        %v1347 = vmul.f32 %v1335, %v1340
        %v1348 = vmul.f32 %v1335, %v1345
        %v1349 = vadd.f32 %v1314, %v1347
        %v1350 = vadd.f32 %v1317, %v1348
        %vm1351 = vcmp.ge.f32.partialorder %v1349, 0.0
        %vm1352 = vcmp.ge.f32.partialorder %v1350, 0.0
        %v1353 = vmul.f32 %v1349, 0.2
        %v1354 = vmul.f32 %v1350, 0.2
        %v1355 = vsel %vm1351, %v1349, %v1353
        %v1356 = vsel %vm1352, %v1350, %v1354
        %v1357 = vsel %vm847, %v1355, 0.0
        %v1358 = vsel %vm847, %v1356, 0.0
        %v1359 = vadd.f32 %v1357, %v1358
        %v1360 = vrot.slane %v1359, 4
        %v1361 = vadd.f32 %v1359, %v1360
        %v1362 = vrot.slane %v1361, 2
        %v1363 = vadd.f32 %v1361, %v1362
        %v1364 = vrot.slane %v1363, 1
        %v1365 = vadd.f32 %v1363, %v1364
        %v1366 = vmul.f32 %v1365, %v857
        %v1367 = vsub.f32 %v1355, %v1366
        %v1368 = vsub.f32 %v1356, %v1366
        %v1369 = vmul.f32 %v1367, %v1367
        %v1370 = vmul.f32 %v1368, %v1368
        %v1371 = vsel %vm847, %v1369, 0.0
        %v1372 = vsel %vm847, %v1370, 0.0
        %v1373 = vadd.f32 %v1371, %v1372
        %v1374 = vrot.slane %v1373, 4
        %v1375 = vadd.f32 %v1373, %v1374
        %v1376 = vrot.slane %v1375, 2
        %v1377 = vadd.f32 %v1375, %v1376
        %v1378 = vrot.slane %v1377, 1
        %v1379 = vadd.f32 %v1377, %v1378
        %v1380 = vmul.f32 %v1379, %v857
        %v1381 = vadd.f32 %v1380, 1e-05
        %v1382 = vrsqrt.pop %v1381
        %v1383 = vmul.f32 %v1367, %v1382
        %v1384 = vmul.f32 %v1368, %v1382
        %v1386 = vlaneseq
        %v1387 = vshrl.u32 %v1386, 7
        %v1388 = vsub.s32 0, %v1387
        %v1389 = vrot.slane %v1328, %v1388
        %v1391 = vmul.f32 %v1383, %v1389
        %v1392 = vmul.f32 %v1384, %v1389
        %v1394 = vlaneseq
        %v1395 = vshrl.u32 %v1394, 7
        %v1396 = vsub.s32 0, %v1395
        %v1397 = vrot.slane %v1330, %v1396
        %v1399 = vadd.f32 %v1391, %v1397
        %v1400 = vadd.f32 %v1392, %v1397
        %1401 = vst.msk [vmem:[%s742] sm:$0xff] %vm847, %v1399
        %1402 = vst.msk [vmem:[%s742 + $0x8] sm:$0xff] %vm847, %v1400
        %v1403 = vld [vmem:[%s11] sm:$0xf]
        %v1404 = vld [vmem:[%s11 + $0x4] sm:$0xf]
        %v1405 = vld [vmem:[%s11 + $0x8] sm:$0xf]
        %v1406 = vld [vmem:[%s11 + $0xc] sm:$0xf]
        %v1407 = vld [vmem:[%s11 + $0x10] sm:$0xf]
        %v1408 = vld [vmem:[%s11 + $0x14] sm:$0xf]
        %v1409 = vld [vmem:[%s11 + $0x18] sm:$0xf]
        %v1410 = vld [vmem:[%s11 + $0x1c] sm:$0xf]
        %v1411 = vpack.c.bf16 %v1400, %v1399
        %v1420 = vunpack.c.l.b16 %v1403
        %v1421 = vunpack.c.l.b16 %v1404
        %v1422 = vunpack.c.l.b16 %v1405
        %v1423 = vunpack.c.l.b16 %v1406
        %v1424 = vunpack.c.l.b16 %v1407
        %v1425 = vunpack.c.l.b16 %v1408
        %v1426 = vunpack.c.l.b16 %v1409
        %v1427 = vunpack.c.l.b16 %v1410
        %v1428 = vpack.c.b16 %v1421, %v1420
        %v1429 = vpack.c.b16 %v1423, %v1422
        %v1430 = vpack.c.b16 %v1425, %v1424
        %v1431 = vpack.c.b16 %v1427, %v1426
        %vm1432 = vcmask 130048
        %v1434 = vsel %vm1432, %v1428, 0
        %v1437 = vsel %vm1432, %v1429, 0
        %v1440 = vsel %vm1432, %v1430, 0
        %v1443 = vsel %vm1432, %v1431, 0
        %1445 = vmatprep.subr.bf16.mxu0 0
        %1446 = vmatpush1.bf16.msra.mxu0 0
        %1447 = vmatprep.subr.bf16.mxu0 0
        %1448 = vmatpush1.bf16.msra.mxu0 0
        %1449 = vmatprep.subr.bf16.mxu0 0
        %1450 = vmatpush1.bf16.msra.mxu0 0
        %1451 = vmatprep.subr.bf16.mxu0 0
        %1452 = vmatpush1.bf16.msra.mxu0 0
        %1453 = vmatprep.subr.bf16.mxu0 0
        %1454 = vmatpush1.bf16.msra.mxu0 0
        %1455 = vmatprep.subr.bf16.mxu0 0
        %1456 = vmatpush1.bf16.msra.mxu0 0
        %1457 = vmatprep.subr.bf16.mxu0 0
        %1458 = vmatpush1.bf16.msra.mxu0 0
        %1459 = vmatprep.subr.bf16.mxu0 0
        %1460 = vmatpush1.bf16.msra.mxu0 %v1411
        %1461 = vmatprep.subr.bf16.mxu0 0
        %1462 = vmatpush2.bf16.msra.mxu0 0
        %1463 = vmatprep.subr.bf16.mxu0 0
        %1464 = vmatpush2.bf16.msra.mxu0 0
        %1465 = vmatprep.subr.bf16.mxu0 0
        %1466 = vmatpush2.bf16.msra.mxu0 0
        %1467 = vmatprep.subr.bf16.mxu0 0
        %1468 = vmatpush2.bf16.msra.mxu0 0
        %1469 = vmatprep.subr.bf16.mxu0 0
        %1470 = vmatpush2.bf16.msra.mxu0 0
        %1471 = vmatprep.subr.bf16.mxu0 0
        %1472 = vmatpush2.bf16.msra.mxu0 0
        %1473 = vmatprep.subr.bf16.mxu0 0
        %1474 = vmatpush2.bf16.msra.mxu0 0
        %1475 = vmatprep.subr.bf16.mxu0 0
        %1476 = vmatpush2.bf16.msra.mxu0 0
        %1477 = vmatprep.mubr.bf16.mxu0 0
        %1478 = vmatmul.mubr.bf16.gmra.mxu0 %v1434
        %v1479 = vpop.f32.mrf.mxu0
        %v1480 = vadd.f32 0.0, %v1479
        %v1481 = vpop.f32.mrf.mxu0
        %v1482 = vpop.f32.mrf.mxu0
        %v1483 = vadd.f32 0.0, %v1482
        %v1484 = vpop.f32.mrf.mxu0
        %1485 = vmatprep.mubr.bf16.mxu0 0
        %1486 = vmatmul.mubr.bf16.gmra.mxu0 %v1437
        %v1487 = vpop.f32.mrf.mxu0
        %v1488 = vadd.f32 0.0, %v1487
        %v1489 = vpop.f32.mrf.mxu0
        %v1490 = vpop.f32.mrf.mxu0
        %v1491 = vadd.f32 0.0, %v1490
        %v1492 = vpop.f32.mrf.mxu0
        %1493 = vmatprep.mubr.bf16.mxu0 0
        %1494 = vmatmul.mubr.bf16.gmra.mxu0 %v1440
        %v1495 = vpop.f32.mrf.mxu0
        %v1496 = vadd.f32 0.0, %v1495
        %v1497 = vpop.f32.mrf.mxu0
        %v1498 = vpop.f32.mrf.mxu0
        %v1499 = vadd.f32 0.0, %v1498
        %v1500 = vpop.f32.mrf.mxu0
        %1501 = vmatprep.mubr.bf16.mxu0 0
        %1502 = vmatmul.mubr.bf16.gmra.mxu0 %v1443
        %v1503 = vpop.f32.mrf.mxu0
        %v1504 = vadd.f32 0.0, %v1503
        %v1505 = vpop.f32.mrf.mxu0
        %v1506 = vpop.f32.mrf.mxu0
        %v1507 = vadd.f32 0.0, %v1506
        %v1508 = vpop.f32.mrf.mxu0
        %1509 = vdwg.mxu0
        %s1510 = scalar_lea.vmem %s7, 144
        %v1511 = vld [vmem:[%s1510] sm:$0xf]
        %v1512 = vld [vmem:[%s1510 + $0x4] sm:$0xf]
        %v1513 = vld [vmem:[%s1510 + $0x8] sm:$0xf]
        %v1514 = vld [vmem:[%s1510 + $0xc] sm:$0xf]
        %v1515 = vld [vmem:[%s1510 + $0x10] sm:$0xf]
        %v1516 = vld [vmem:[%s1510 + $0x14] sm:$0xf]
        %v1517 = vld [vmem:[%s1510 + $0x18] sm:$0xf]
        %v1518 = vld [vmem:[%s1510 + $0x1c] sm:$0xf]
        %v1519 = vld [vmem:[%s1510 + $0x20] sm:$0xf]
        %v1520 = vld [vmem:[%s1510 + $0x24] sm:$0xf]
        %v1521 = vld [vmem:[%s1510 + $0x28] sm:$0xf]
        %v1522 = vld [vmem:[%s1510 + $0x2c] sm:$0xf]
        %v1523 = vld [vmem:[%s1510 + $0x30] sm:$0xf]
        %v1524 = vld [vmem:[%s1510 + $0x34] sm:$0xf]
        %v1525 = vld [vmem:[%s1510 + $0x38] sm:$0xf]
        %v1526 = vld [vmem:[%s1510 + $0x3c] sm:$0xf]
        %v1527 = vld [vmem:[%s1510 + $0x40] sm:$0xf]
        %v1528 = vld [vmem:[%s1510 + $0x44] sm:$0xf]
        %v1529 = vld [vmem:[%s1510 + $0x48] sm:$0xf]
        %v1530 = vld [vmem:[%s1510 + $0x4c] sm:$0xf]
        %v1531 = vld [vmem:[%s1510 + $0x50] sm:$0xf]
        %v1532 = vld [vmem:[%s1510 + $0x54] sm:$0xf]
        %v1533 = vld [vmem:[%s1510 + $0x58] sm:$0xf]
        %v1534 = vld [vmem:[%s1510 + $0x5c] sm:$0xf]
        %v1535 = vld [vmem:[%s1510 + $0x60] sm:$0xf]
        %v1536 = vld [vmem:[%s1510 + $0x64] sm:$0xf]
        %v1537 = vld [vmem:[%s1510 + $0x68] sm:$0xf]
        %v1538 = vld [vmem:[%s1510 + $0x6c] sm:$0xf]
        %v1539 = vld [vmem:[%s1510 + $0x70] sm:$0xf]
        %v1540 = vld [vmem:[%s1510 + $0x74] sm:$0xf]
        %v1541 = vld [vmem:[%s1510 + $0x78] sm:$0xf]
        %v1542 = vld [vmem:[%s1510 + $0x7c] sm:$0xf]
        %v1543 = vld [vmem:[%s1510 + $0x80] sm:$0xf]
        %v1544 = vld [vmem:[%s1510 + $0x84] sm:$0xf]
        %v1545 = vld [vmem:[%s1510 + $0x88] sm:$0xf]
        %v1546 = vld [vmem:[%s1510 + $0x8c] sm:$0xf]
        %v1547 = vrot.slane %v1480, 7
        %v1548 = vrot.slane %v1483, 7
        %v1549 = vrot.slane %v1488, 7
        %v1550 = vrot.slane %v1491, 7
        %v1551 = vrot.slane %v1496, 7
        %v1552 = vrot.slane %v1499, 7
        %v1553 = vrot.slane %v1504, 7
        %v1554 = vrot.slane %v1507, 7
        %v1555 = vsel %vm995, %v1553, %v1554
        %v1556 = vsel %vm995, %v1552, %v1553
        %v1557 = vsel %vm995, %v1551, %v1552
        %v1558 = vsel %vm995, %v1550, %v1551
        %v1559 = vsel %vm995, %v1549, %v1550
        %v1560 = vsel %vm995, %v1548, %v1549
        %v1561 = vsel %vm995, %v1547, %v1548
        %v1562 = vsel %vm995, %v1554, %v1547
        %v1563 = vld [vmem:[%s14] sm:$0xff]
        %v1564 = vld [vmem:[%s14 + $0x8] sm:$0xff]
        %v1565 = vld [vmem:[%s14 + $0x10] sm:$0xff]
        %v1566 = vld [vmem:[%s14 + $0x18] sm:$0xff]
        %v1567 = vld [vmem:[%s14 + $0x20] sm:$0xff]
        %v1568 = vld [vmem:[%s14 + $0x28] sm:$0xff]
        %v1569 = vld [vmem:[%s14 + $0x30] sm:$0xff]
        %v1570 = vld [vmem:[%s14 + $0x38] sm:$0xff]
        %1572 = vset.pattern.permute.xlu0 0
        %1573 = vperm.xlu0 %1572, %v1563
        %v1574 = vpop.permute.xlu0 %1573
        %1577 = vset.pattern.permute.xlu0 0
        %1578 = vperm.xlu0 %1577, %v1564
        %v1579 = vpop.permute.xlu0 %1578
        %1582 = vset.pattern.permute.xlu0 0
        %1583 = vperm.xlu0 %1582, %v1565
        %v1584 = vpop.permute.xlu0 %1583
        %1587 = vset.pattern.permute.xlu0 0
        %1588 = vperm.xlu0 %1587, %v1566
        %v1589 = vpop.permute.xlu0 %1588
        %1592 = vset.pattern.permute.xlu0 0
        %1593 = vperm.xlu0 %1592, %v1567
        %v1594 = vpop.permute.xlu0 %1593
        %1597 = vset.pattern.permute.xlu0 0
        %1598 = vperm.xlu0 %1597, %v1568
        %v1599 = vpop.permute.xlu0 %1598
        %1602 = vset.pattern.permute.xlu0 0
        %1603 = vperm.xlu0 %1602, %v1569
        %v1604 = vpop.permute.xlu0 %1603
        %1607 = vset.pattern.permute.xlu0 0
        %1608 = vperm.xlu0 %1607, %v1570
        %v1609 = vpop.permute.xlu0 %1608
        %v1611 = vmul.f32 %v1555, %v1574
        %v1612 = vmul.f32 %v1562, %v1579
        %v1613 = vmul.f32 %v1561, %v1584
        %v1614 = vmul.f32 %v1560, %v1589
        %v1615 = vmul.f32 %v1559, %v1594
        %v1616 = vmul.f32 %v1558, %v1599
        %v1617 = vmul.f32 %v1557, %v1604
        %v1618 = vmul.f32 %v1556, %v1609
        %v1619 = vpack.c.bf16 %v1612, %v1611
        %v1620 = vpack.c.bf16 %v1614, %v1613
        %v1621 = vpack.c.bf16 %v1616, %v1615
        %v1622 = vpack.c.bf16 %v1618, %v1617
        %s1623 = scalar_lea.vmem %s14, 64
        %v1624 = vld [vmem:[%s1623] sm:$0xff]
        %v1625 = vld [vmem:[%s1623 + $0x8] sm:$0xff]
        %v1626 = vld [vmem:[%s1623 + $0x10] sm:$0xff]
        %v1627 = vld [vmem:[%s1623 + $0x18] sm:$0xff]
        %v1628 = vld [vmem:[%s1623 + $0x20] sm:$0xff]
        %v1629 = vld [vmem:[%s1623 + $0x28] sm:$0xff]
        %v1630 = vld [vmem:[%s1623 + $0x30] sm:$0xff]
        %v1631 = vld [vmem:[%s1623 + $0x38] sm:$0xff]
        %1633 = vset.pattern.permute.xlu0 0
        %1634 = vperm.xlu0 %1633, %v1624
        %v1635 = vpop.permute.xlu0 %1634
        %1638 = vset.pattern.permute.xlu0 0
        %1639 = vperm.xlu0 %1638, %v1625
        %v1640 = vpop.permute.xlu0 %1639
        %1643 = vset.pattern.permute.xlu0 0
        %1644 = vperm.xlu0 %1643, %v1626
        %v1645 = vpop.permute.xlu0 %1644
        %1648 = vset.pattern.permute.xlu0 0
        %1649 = vperm.xlu0 %1648, %v1627
        %v1650 = vpop.permute.xlu0 %1649
        %1653 = vset.pattern.permute.xlu0 0
        %1654 = vperm.xlu0 %1653, %v1628
        %v1655 = vpop.permute.xlu0 %1654
        %1658 = vset.pattern.permute.xlu0 0
        %1659 = vperm.xlu0 %1658, %v1629
        %v1660 = vpop.permute.xlu0 %1659
        %1663 = vset.pattern.permute.xlu0 0
        %1664 = vperm.xlu0 %1663, %v1630
        %v1665 = vpop.permute.xlu0 %1664
        %1668 = vset.pattern.permute.xlu0 0
        %1669 = vperm.xlu0 %1668, %v1631
        %v1670 = vpop.permute.xlu0 %1669
        %v1672 = vmul.f32 %v1507, %v1635
        %v1673 = vmul.f32 %v1480, %v1640
        %v1674 = vmul.f32 %v1483, %v1645
        %v1675 = vmul.f32 %v1488, %v1650
        %v1676 = vmul.f32 %v1491, %v1655
        %v1677 = vmul.f32 %v1496, %v1660
        %v1678 = vmul.f32 %v1499, %v1665
        %v1679 = vmul.f32 %v1504, %v1670
        %v1680 = vpack.c.bf16 %v1673, %v1672
        %v1681 = vpack.c.bf16 %v1675, %v1674
        %v1682 = vpack.c.bf16 %v1677, %v1676
        %v1683 = vpack.c.bf16 %v1679, %v1678
        %v1684 = vrot.slane %v1480, 1
        %v1685 = vrot.slane %v1483, 1
        %v1686 = vrot.slane %v1488, 1
        %v1687 = vrot.slane %v1491, 1
        %v1688 = vrot.slane %v1496, 1
        %v1689 = vrot.slane %v1499, 1
        %v1690 = vrot.slane %v1504, 1
        %v1691 = vrot.slane %v1507, 1
        %v1692 = vsel %vm1017, %v1690, %v1691
        %v1693 = vsel %vm1017, %v1689, %v1690
        %v1694 = vsel %vm1017, %v1688, %v1689
        %v1695 = vsel %vm1017, %v1687, %v1688
        %v1696 = vsel %vm1017, %v1686, %v1687
        %v1697 = vsel %vm1017, %v1685, %v1686
        %v1698 = vsel %vm1017, %v1684, %v1685
        %v1699 = vsel %vm1017, %v1691, %v1684
        %s1700 = scalar_lea.vmem %s14, 128
        %v1701 = vld [vmem:[%s1700] sm:$0xff]
        %v1702 = vld [vmem:[%s1700 + $0x8] sm:$0xff]
        %v1703 = vld [vmem:[%s1700 + $0x10] sm:$0xff]
        %v1704 = vld [vmem:[%s1700 + $0x18] sm:$0xff]
        %v1705 = vld [vmem:[%s1700 + $0x20] sm:$0xff]
        %v1706 = vld [vmem:[%s1700 + $0x28] sm:$0xff]
        %v1707 = vld [vmem:[%s1700 + $0x30] sm:$0xff]
        %v1708 = vld [vmem:[%s1700 + $0x38] sm:$0xff]
        %1710 = vset.pattern.permute.xlu0 0
        %1711 = vperm.xlu0 %1710, %v1701
        %v1712 = vpop.permute.xlu0 %1711
        %1715 = vset.pattern.permute.xlu0 0
        %1716 = vperm.xlu0 %1715, %v1702
        %v1717 = vpop.permute.xlu0 %1716
        %1720 = vset.pattern.permute.xlu0 0
        %1721 = vperm.xlu0 %1720, %v1703
        %v1722 = vpop.permute.xlu0 %1721
        %1725 = vset.pattern.permute.xlu0 0
        %1726 = vperm.xlu0 %1725, %v1704
        %v1727 = vpop.permute.xlu0 %1726
        %1730 = vset.pattern.permute.xlu0 0
        %1731 = vperm.xlu0 %1730, %v1705
        %v1732 = vpop.permute.xlu0 %1731
        %1735 = vset.pattern.permute.xlu0 0
        %1736 = vperm.xlu0 %1735, %v1706
        %v1737 = vpop.permute.xlu0 %1736
        %1740 = vset.pattern.permute.xlu0 0
        %1741 = vperm.xlu0 %1740, %v1707
        %v1742 = vpop.permute.xlu0 %1741
        %1745 = vset.pattern.permute.xlu0 0
        %1746 = vperm.xlu0 %1745, %v1708
        %v1747 = vpop.permute.xlu0 %1746
        %v1749 = vmul.f32 %v1699, %v1712
        %v1750 = vmul.f32 %v1698, %v1717
        %v1751 = vmul.f32 %v1697, %v1722
        %v1752 = vmul.f32 %v1696, %v1727
        %v1753 = vmul.f32 %v1695, %v1732
        %v1754 = vmul.f32 %v1694, %v1737
        %v1755 = vmul.f32 %v1693, %v1742
        %v1756 = vmul.f32 %v1692, %v1747
        %v1757 = vpack.c.bf16 %v1750, %v1749
        %v1758 = vpack.c.bf16 %v1752, %v1751
        %v1759 = vpack.c.bf16 %v1754, %v1753
        %v1760 = vpack.c.bf16 %v1756, %v1755
        %s1761 = scalar_lea.vmem %s14, 192
        %v1762 = vld [vmem:[%s1761] sm:$0xff]
        %v1763 = vld [vmem:[%s1761 + $0x8] sm:$0xff]
        %v1764 = vld [vmem:[%s1761 + $0x10] sm:$0xff]
        %v1765 = vld [vmem:[%s1761 + $0x18] sm:$0xff]
        %v1766 = vld [vmem:[%s1761 + $0x20] sm:$0xff]
        %v1767 = vld [vmem:[%s1761 + $0x28] sm:$0xff]
        %v1768 = vld [vmem:[%s1761 + $0x30] sm:$0xff]
        %v1769 = vld [vmem:[%s1761 + $0x38] sm:$0xff]
        %1771 = vset.pattern.permute.xlu0 0
        %1772 = vperm.xlu0 %1771, %v1762
        %v1773 = vpop.permute.xlu0 %1772
        %1776 = vset.pattern.permute.xlu0 0
        %1777 = vperm.xlu0 %1776, %v1763
        %v1778 = vpop.permute.xlu0 %1777
        %1781 = vset.pattern.permute.xlu0 0
        %1782 = vperm.xlu0 %1781, %v1764
        %v1783 = vpop.permute.xlu0 %1782
        %1786 = vset.pattern.permute.xlu0 0
        %1787 = vperm.xlu0 %1786, %v1765
        %v1788 = vpop.permute.xlu0 %1787
        %1791 = vset.pattern.permute.xlu0 0
        %1792 = vperm.xlu0 %1791, %v1766
        %v1793 = vpop.permute.xlu0 %1792
        %1796 = vset.pattern.permute.xlu0 0
        %1797 = vperm.xlu0 %1796, %v1767
        %v1798 = vpop.permute.xlu0 %1797
        %1801 = vset.pattern.permute.xlu0 0
        %1802 = vperm.xlu0 %1801, %v1768
        %v1803 = vpop.permute.xlu0 %1802
        %1806 = vset.pattern.permute.xlu0 0
        %1807 = vperm.xlu0 %1806, %v1769
        %v1808 = vpop.permute.xlu0 %1807
        %v1810 = vmul.f32 %v1562, %v1773
        %v1811 = vmul.f32 %v1561, %v1778
        %v1812 = vmul.f32 %v1560, %v1783
        %v1813 = vmul.f32 %v1559, %v1788
        %v1814 = vmul.f32 %v1558, %v1793
        %v1815 = vmul.f32 %v1557, %v1798
        %v1816 = vmul.f32 %v1556, %v1803
        %v1817 = vmul.f32 %v1555, %v1808
        %v1818 = vpack.c.bf16 %v1811, %v1810
        %v1819 = vpack.c.bf16 %v1813, %v1812
        %v1820 = vpack.c.bf16 %v1815, %v1814
        %v1821 = vpack.c.bf16 %v1817, %v1816
        %v1822 = vpack.c.bf16 %v1483, %v1480
        %v1823 = vpack.c.bf16 %v1491, %v1488
        %v1824 = vpack.c.bf16 %v1499, %v1496
        %v1825 = vpack.c.bf16 %v1507, %v1504
        %s1826 = scalar_lea.vmem %s14, 320
        %v1827 = vld [vmem:[%s1826] sm:$0xff]
        %v1828 = vld [vmem:[%s1826 + $0x8] sm:$0xff]
        %v1829 = vld [vmem:[%s1826 + $0x10] sm:$0xff]
        %v1830 = vld [vmem:[%s1826 + $0x18] sm:$0xff]
        %v1831 = vld [vmem:[%s1826 + $0x20] sm:$0xff]
        %v1832 = vld [vmem:[%s1826 + $0x28] sm:$0xff]
        %v1833 = vld [vmem:[%s1826 + $0x30] sm:$0xff]
        %v1834 = vld [vmem:[%s1826 + $0x38] sm:$0xff]
        %1836 = vset.pattern.permute.xlu0 0
        %1837 = vperm.xlu0 %1836, %v1827
        %v1838 = vpop.permute.xlu0 %1837
        %1841 = vset.pattern.permute.xlu0 0
        %1842 = vperm.xlu0 %1841, %v1828
        %v1843 = vpop.permute.xlu0 %1842
        %1846 = vset.pattern.permute.xlu0 0
        %1847 = vperm.xlu0 %1846, %v1829
        %v1848 = vpop.permute.xlu0 %1847
        %1851 = vset.pattern.permute.xlu0 0
        %1852 = vperm.xlu0 %1851, %v1830
        %v1853 = vpop.permute.xlu0 %1852
        %1856 = vset.pattern.permute.xlu0 0
        %1857 = vperm.xlu0 %1856, %v1831
        %v1858 = vpop.permute.xlu0 %1857
        %1861 = vset.pattern.permute.xlu0 0
        %1862 = vperm.xlu0 %1861, %v1832
        %v1863 = vpop.permute.xlu0 %1862
        %1866 = vset.pattern.permute.xlu0 0
        %1867 = vperm.xlu0 %1866, %v1833
        %v1868 = vpop.permute.xlu0 %1867
        %1871 = vset.pattern.permute.xlu0 0
        %1872 = vperm.xlu0 %1871, %v1834
        %v1873 = vpop.permute.xlu0 %1872
        %v1875 = vmul.f32 %v1698, %v1838
        %v1876 = vmul.f32 %v1697, %v1843
        %v1877 = vmul.f32 %v1696, %v1848
        %v1878 = vmul.f32 %v1695, %v1853
        %v1879 = vmul.f32 %v1694, %v1858
        %v1880 = vmul.f32 %v1693, %v1863
        %v1881 = vmul.f32 %v1692, %v1868
        %v1882 = vmul.f32 %v1699, %v1873
        %v1883 = vpack.c.bf16 %v1876, %v1875
        %v1884 = vpack.c.bf16 %v1878, %v1877
        %v1885 = vpack.c.bf16 %v1880, %v1879
        %v1886 = vpack.c.bf16 %v1882, %v1881
        %s1887 = scalar_lea.vmem %s14, 384
        %v1888 = vld [vmem:[%s1887] sm:$0xff]
        %v1889 = vld [vmem:[%s1887 + $0x8] sm:$0xff]
        %v1890 = vld [vmem:[%s1887 + $0x10] sm:$0xff]
        %v1891 = vld [vmem:[%s1887 + $0x18] sm:$0xff]
        %v1892 = vld [vmem:[%s1887 + $0x20] sm:$0xff]
        %v1893 = vld [vmem:[%s1887 + $0x28] sm:$0xff]
        %v1894 = vld [vmem:[%s1887 + $0x30] sm:$0xff]
        %v1895 = vld [vmem:[%s1887 + $0x38] sm:$0xff]
        %1897 = vset.pattern.permute.xlu0 0
        %1898 = vperm.xlu0 %1897, %v1888
        %v1899 = vpop.permute.xlu0 %1898
        %1902 = vset.pattern.permute.xlu0 0
        %1903 = vperm.xlu0 %1902, %v1889
        %v1904 = vpop.permute.xlu0 %1903
        %1907 = vset.pattern.permute.xlu0 0
        %1908 = vperm.xlu0 %1907, %v1890
        %v1909 = vpop.permute.xlu0 %1908
        %1912 = vset.pattern.permute.xlu0 0
        %1913 = vperm.xlu0 %1912, %v1891
        %v1914 = vpop.permute.xlu0 %1913
        %1917 = vset.pattern.permute.xlu0 0
        %1918 = vperm.xlu0 %1917, %v1892
        %v1919 = vpop.permute.xlu0 %1918
        %1922 = vset.pattern.permute.xlu0 0
        %1923 = vperm.xlu0 %1922, %v1893
        %v1924 = vpop.permute.xlu0 %1923
        %1927 = vset.pattern.permute.xlu0 0
        %1928 = vperm.xlu0 %1927, %v1894
        %v1929 = vpop.permute.xlu0 %1928
        %1932 = vset.pattern.permute.xlu0 0
        %1933 = vperm.xlu0 %1932, %v1895
        %v1934 = vpop.permute.xlu0 %1933
        %v1936 = vmul.f32 %v1561, %v1899
        %v1937 = vmul.f32 %v1560, %v1904
        %v1938 = vmul.f32 %v1559, %v1909
        %v1939 = vmul.f32 %v1558, %v1914
        %v1940 = vmul.f32 %v1557, %v1919
        %v1941 = vmul.f32 %v1556, %v1924
        %v1942 = vmul.f32 %v1555, %v1929
        %v1943 = vmul.f32 %v1562, %v1934
        %v1944 = vpack.c.bf16 %v1937, %v1936
        %v1945 = vpack.c.bf16 %v1939, %v1938
        %v1946 = vpack.c.bf16 %v1941, %v1940
        %v1947 = vpack.c.bf16 %v1943, %v1942
        %s1948 = scalar_lea.vmem %s14, 448
        %v1949 = vld [vmem:[%s1948] sm:$0xff]
        %v1950 = vld [vmem:[%s1948 + $0x8] sm:$0xff]
        %v1951 = vld [vmem:[%s1948 + $0x10] sm:$0xff]
        %v1952 = vld [vmem:[%s1948 + $0x18] sm:$0xff]
        %v1953 = vld [vmem:[%s1948 + $0x20] sm:$0xff]
        %v1954 = vld [vmem:[%s1948 + $0x28] sm:$0xff]
        %v1955 = vld [vmem:[%s1948 + $0x30] sm:$0xff]
        %v1956 = vld [vmem:[%s1948 + $0x38] sm:$0xff]
        %1958 = vset.pattern.permute.xlu0 0
        %1959 = vperm.xlu0 %1958, %v1949
        %v1960 = vpop.permute.xlu0 %1959
        %1963 = vset.pattern.permute.xlu0 0
        %1964 = vperm.xlu0 %1963, %v1950
        %v1965 = vpop.permute.xlu0 %1964
        %1968 = vset.pattern.permute.xlu0 0
        %1969 = vperm.xlu0 %1968, %v1951
        %v1970 = vpop.permute.xlu0 %1969
        %1973 = vset.pattern.permute.xlu0 0
        %1974 = vperm.xlu0 %1973, %v1952
        %v1975 = vpop.permute.xlu0 %1974
        %1978 = vset.pattern.permute.xlu0 0
        %1979 = vperm.xlu0 %1978, %v1953
        %v1980 = vpop.permute.xlu0 %1979
        %1983 = vset.pattern.permute.xlu0 0
        %1984 = vperm.xlu0 %1983, %v1954
        %v1985 = vpop.permute.xlu0 %1984
        %1988 = vset.pattern.permute.xlu0 0
        %1989 = vperm.xlu0 %1988, %v1955
        %v1990 = vpop.permute.xlu0 %1989
        %1993 = vset.pattern.permute.xlu0 0
        %1994 = vperm.xlu0 %1993, %v1956
        %v1995 = vpop.permute.xlu0 %1994
        %v1997 = vmul.f32 %v1483, %v1960
        %v1998 = vmul.f32 %v1488, %v1965
        %v1999 = vmul.f32 %v1491, %v1970
        %v2000 = vmul.f32 %v1496, %v1975
        %v2001 = vmul.f32 %v1499, %v1980
        %v2002 = vmul.f32 %v1504, %v1985
        %v2003 = vmul.f32 %v1507, %v1990
        %v2004 = vmul.f32 %v1480, %v1995
        %v2005 = vpack.c.bf16 %v1998, %v1997
        %v2006 = vpack.c.bf16 %v2000, %v1999
        %v2007 = vpack.c.bf16 %v2002, %v2001
        %v2008 = vpack.c.bf16 %v2004, %v2003
        %s2009 = scalar_lea.vmem %s14, 512
        %v2010 = vld [vmem:[%s2009] sm:$0xff]
        %v2011 = vld [vmem:[%s2009 + $0x8] sm:$0xff]
        %v2012 = vld [vmem:[%s2009 + $0x10] sm:$0xff]
        %v2013 = vld [vmem:[%s2009 + $0x18] sm:$0xff]
        %v2014 = vld [vmem:[%s2009 + $0x20] sm:$0xff]
        %v2015 = vld [vmem:[%s2009 + $0x28] sm:$0xff]
        %v2016 = vld [vmem:[%s2009 + $0x30] sm:$0xff]
        %v2017 = vld [vmem:[%s2009 + $0x38] sm:$0xff]
        %2019 = vset.pattern.permute.xlu0 0
        %2020 = vperm.xlu0 %2019, %v2010
        %v2021 = vpop.permute.xlu0 %2020
        %2024 = vset.pattern.permute.xlu0 0
        %2025 = vperm.xlu0 %2024, %v2011
        %v2026 = vpop.permute.xlu0 %2025
        %2029 = vset.pattern.permute.xlu0 0
        %2030 = vperm.xlu0 %2029, %v2012
        %v2031 = vpop.permute.xlu0 %2030
        %2034 = vset.pattern.permute.xlu0 0
        %2035 = vperm.xlu0 %2034, %v2013
        %v2036 = vpop.permute.xlu0 %2035
        %2039 = vset.pattern.permute.xlu0 0
        %2040 = vperm.xlu0 %2039, %v2014
        %v2041 = vpop.permute.xlu0 %2040
        %2044 = vset.pattern.permute.xlu0 0
        %2045 = vperm.xlu0 %2044, %v2015
        %v2046 = vpop.permute.xlu0 %2045
        %2049 = vset.pattern.permute.xlu0 0
        %2050 = vperm.xlu0 %2049, %v2016
        %v2051 = vpop.permute.xlu0 %2050
        %2054 = vset.pattern.permute.xlu0 0
        %2055 = vperm.xlu0 %2054, %v2017
        %v2056 = vpop.permute.xlu0 %2055
        %v2058 = vmul.f32 %v1697, %v2021
        %v2059 = vmul.f32 %v1696, %v2026
        %v2060 = vmul.f32 %v1695, %v2031
        %v2061 = vmul.f32 %v1694, %v2036
        %v2062 = vmul.f32 %v1693, %v2041
        %v2063 = vmul.f32 %v1692, %v2046
        %v2064 = vmul.f32 %v1699, %v2051
        %v2065 = vmul.f32 %v1698, %v2056
        %v2066 = vpack.c.bf16 %v2059, %v2058
        %v2067 = vpack.c.bf16 %v2061, %v2060
        %v2068 = vpack.c.bf16 %v2063, %v2062
        %v2069 = vpack.c.bf16 %v2065, %v2064
        %2074 = vrot.lane.b32.xlu0 %v1680, 32
        %v2075 = vpop.permute.xlu0 %2074
        %2076 = vrot.lane.b32.xlu0 %v1681, 32
        %v2077 = vpop.permute.xlu0 %2076
        %2078 = vrot.lane.b32.xlu0 %v1682, 32
        %v2079 = vpop.permute.xlu0 %2078
        %2080 = vrot.lane.b32.xlu0 %v1683, 32
        %v2081 = vpop.permute.xlu0 %2080
        %2086 = vrot.lane.b32.xlu0 %v1757, 64
        %v2087 = vpop.permute.xlu0 %2086
        %2088 = vrot.lane.b32.xlu0 %v1758, 64
        %v2089 = vpop.permute.xlu0 %2088
        %2090 = vrot.lane.b32.xlu0 %v1759, 64
        %v2091 = vpop.permute.xlu0 %2090
        %2092 = vrot.lane.b32.xlu0 %v1760, 64
        %v2093 = vpop.permute.xlu0 %2092
        %2098 = vrot.lane.b32.xlu0 %v1818, 96
        %v2099 = vpop.permute.xlu0 %2098
        %2100 = vrot.lane.b32.xlu0 %v1819, 96
        %v2101 = vpop.permute.xlu0 %2100
        %2102 = vrot.lane.b32.xlu0 %v1820, 96
        %v2103 = vpop.permute.xlu0 %2102
        %2104 = vrot.lane.b32.xlu0 %v1821, 96
        %v2105 = vpop.permute.xlu0 %2104
        %2110 = vrot.lane.b32.xlu0 %v1883, 32
        %v2111 = vpop.permute.xlu0 %2110
        %2112 = vrot.lane.b32.xlu0 %v1884, 32
        %v2113 = vpop.permute.xlu0 %2112
        %2114 = vrot.lane.b32.xlu0 %v1885, 32
        %v2115 = vpop.permute.xlu0 %2114
        %2116 = vrot.lane.b32.xlu0 %v1886, 32
        %v2117 = vpop.permute.xlu0 %2116
        %2122 = vrot.lane.b32.xlu0 %v1944, 64
        %v2123 = vpop.permute.xlu0 %2122
        %2124 = vrot.lane.b32.xlu0 %v1945, 64
        %v2125 = vpop.permute.xlu0 %2124
        %2126 = vrot.lane.b32.xlu0 %v1946, 64
        %v2127 = vpop.permute.xlu0 %2126
        %2128 = vrot.lane.b32.xlu0 %v1947, 64
        %v2129 = vpop.permute.xlu0 %2128
        %2134 = vrot.lane.b32.xlu0 %v2005, 96
        %v2135 = vpop.permute.xlu0 %2134
        %2136 = vrot.lane.b32.xlu0 %v2006, 96
        %v2137 = vpop.permute.xlu0 %2136
        %2138 = vrot.lane.b32.xlu0 %v2007, 96
        %v2139 = vpop.permute.xlu0 %2138
        %2140 = vrot.lane.b32.xlu0 %v2008, 96
        %v2141 = vpop.permute.xlu0 %2140
        %v2144 = vsel %vm847, %v1619, %v2075
        %v2147 = vsel %vm847, %v1620, %v2077
        %v2150 = vsel %vm847, %v1621, %v2079
        %v2153 = vsel %vm847, %v1622, %v2081
        %v2155 = vsel %vm1105, %v2144, %v2087
        %v2157 = vsel %vm1105, %v2147, %v2089
        %v2159 = vsel %vm1105, %v2150, %v2091
        %v2161 = vsel %vm1105, %v2153, %v2093
        %v2163 = vsel %vm1108, %v2155, %v2099
        %v2166 = vsel %vm1108, %v2157, %v2101
        %v2169 = vsel %vm1108, %v2159, %v2103
        %v2172 = vsel %vm1108, %v2161, %v2105
        %v2176 = vsel %vm847, %v1822, %v2111
        %v2179 = vsel %vm847, %v1823, %v2113
        %v2182 = vsel %vm847, %v1824, %v2115
        %v2185 = vsel %vm847, %v1825, %v2117
        %v2187 = vsel %vm1105, %v2176, %v2123
        %v2189 = vsel %vm1105, %v2179, %v2125
        %v2191 = vsel %vm1105, %v2182, %v2127
        %v2193 = vsel %vm1105, %v2185, %v2129
        %v2195 = vsel %vm1108, %v2187, %v2135
        %v2198 = vsel %vm1108, %v2189, %v2137
        %v2201 = vsel %vm1108, %v2191, %v2139
        %v2204 = vsel %vm1108, %v2193, %v2141
        %v2242 = vunpack.c.l.b16 %v1511
        %v2243 = vunpack.c.l.b16 %v1512
        %v2244 = vunpack.c.l.b16 %v1513
        %v2245 = vunpack.c.l.b16 %v1514
        %v2246 = vunpack.c.l.b16 %v1515
        %v2247 = vunpack.c.l.b16 %v1516
        %v2248 = vunpack.c.l.b16 %v1517
        %v2249 = vunpack.c.l.b16 %v1518
        %v2250 = vunpack.c.l.b16 %v1519
        %v2251 = vunpack.c.l.b16 %v1520
        %v2252 = vunpack.c.l.b16 %v1521
        %v2253 = vunpack.c.l.b16 %v1522
        %v2254 = vunpack.c.l.b16 %v1523
        %v2255 = vunpack.c.l.b16 %v1524
        %v2256 = vunpack.c.l.b16 %v1525
        %v2257 = vunpack.c.l.b16 %v1526
        %v2258 = vunpack.c.l.b16 %v1527
        %v2259 = vunpack.c.l.b16 %v1528
        %v2260 = vunpack.c.l.b16 %v1529
        %v2261 = vunpack.c.l.b16 %v1530
        %v2262 = vunpack.c.l.b16 %v1531
        %v2263 = vunpack.c.l.b16 %v1532
        %v2264 = vunpack.c.l.b16 %v1533
        %v2265 = vunpack.c.l.b16 %v1534
        %v2266 = vunpack.c.l.b16 %v1535
        %v2267 = vunpack.c.l.b16 %v1536
        %v2268 = vunpack.c.l.b16 %v1537
        %v2269 = vunpack.c.l.b16 %v1538
        %v2270 = vunpack.c.l.b16 %v1539
        %v2271 = vunpack.c.l.b16 %v1540
        %v2272 = vunpack.c.l.b16 %v1541
        %v2273 = vunpack.c.l.b16 %v1542
        %v2274 = vunpack.c.l.b16 %v1543
        %v2275 = vunpack.c.l.b16 %v1544
        %v2276 = vunpack.c.l.b16 %v1545
        %v2277 = vunpack.c.l.b16 %v1546
        %v2278 = vpack.c.b16 %v2243, %v2242
        %v2279 = vpack.c.b16 %v2245, %v2244
        %v2280 = vpack.c.b16 %v2247, %v2246
        %v2281 = vpack.c.b16 %v2249, %v2248
        %v2282 = vpack.c.b16 %v2251, %v2250
        %v2283 = vpack.c.b16 %v2253, %v2252
        %v2284 = vpack.c.b16 %v2255, %v2254
        %v2285 = vpack.c.b16 %v2257, %v2256
        %v2286 = vpack.c.b16 %v2259, %v2258
        %v2287 = vpack.c.b16 %v2261, %v2260
        %v2288 = vpack.c.b16 %v2263, %v2262
        %v2289 = vpack.c.b16 %v2265, %v2264
        %v2290 = vpack.c.b16 %v2267, %v2266
        %v2291 = vpack.c.b16 %v2269, %v2268
        %v2292 = vpack.c.b16 %v2271, %v2270
        %v2293 = vpack.c.b16 %v2273, %v2272
        %v2294 = vpack.c.b16 %v2275, %v2274
        %v2295 = vpack.c.b16 %v2277, %v2276
        %v2315 = vsel %vm847, %v2066, 0
        %v2318 = vsel %vm847, %v2067, 0
        %v2321 = vsel %vm847, %v2068, 0
        %v2324 = vsel %vm847, %v2069, 0
        %2326 = vmatprep.subr.bf16.mxu0 0
        %2327 = vmatpush1.bf16.msra.mxu0 %v2285
        %2328 = vmatprep.subr.bf16.mxu0 0
        %2329 = vmatpush1.bf16.msra.mxu0 %v2284
        %2330 = vmatprep.subr.bf16.mxu0 0
        %2331 = vmatpush1.bf16.msra.mxu0 %v2283
        %2332 = vmatprep.subr.bf16.mxu0 0
        %2333 = vmatpush1.bf16.msra.mxu0 %v2282
        %2334 = vmatprep.subr.bf16.mxu0 0
        %2335 = vmatpush1.bf16.msra.mxu0 %v2281
        %2336 = vmatprep.subr.bf16.mxu0 0
        %2337 = vmatpush1.bf16.msra.mxu0 %v2280
        %2338 = vmatprep.subr.bf16.mxu0 0
        %2339 = vmatpush1.bf16.msra.mxu0 %v2279
        %2340 = vmatprep.subr.bf16.mxu0 0
        %2341 = vmatpush1.bf16.msra.mxu0 %v2278
        %2342 = vmatprep.subr.bf16.mxu0 0
        %2343 = vmatpush2.bf16.msra.mxu0 %v2293
        %2344 = vmatprep.subr.bf16.mxu0 0
        %2345 = vmatpush2.bf16.msra.mxu0 %v2292
        %2346 = vmatprep.subr.bf16.mxu0 0
        %2347 = vmatpush2.bf16.msra.mxu0 %v2291
        %2348 = vmatprep.subr.bf16.mxu0 0
        %2349 = vmatpush2.bf16.msra.mxu0 %v2290
        %2350 = vmatprep.subr.bf16.mxu0 0
        %2351 = vmatpush2.bf16.msra.mxu0 %v2289
        %2352 = vmatprep.subr.bf16.mxu0 0
        %2353 = vmatpush2.bf16.msra.mxu0 %v2288
        %2354 = vmatprep.subr.bf16.mxu0 0
        %2355 = vmatpush2.bf16.msra.mxu0 %v2287
        %2356 = vmatprep.subr.bf16.mxu0 0
        %2357 = vmatpush2.bf16.msra.mxu0 %v2286
        %2358 = vmatprep.mubr.bf16.mxu0 %v2195
        %2359 = vmatmul.mubr.bf16.gmra.mxu0 %v2163
        %v2360 = vpop.f32.mrf.mxu0
        %v2361 = vadd.f32 0.0, %v2360
        %v2362 = vpop.f32.mrf.mxu0
        %v2363 = vpop.f32.mrf.mxu0
        %v2364 = vadd.f32 0.0, %v2363
        %v2365 = vpop.f32.mrf.mxu0
        %2366 = vmatprep.mubr.bf16.mxu0 %v2198
        %2367 = vmatmul.mubr.bf16.gmra.mxu0 %v2166
        %v2368 = vpop.f32.mrf.mxu0
        %v2369 = vadd.f32 0.0, %v2368
        %v2370 = vpop.f32.mrf.mxu0
        %v2371 = vpop.f32.mrf.mxu0
        %v2372 = vadd.f32 0.0, %v2371
        %v2373 = vpop.f32.mrf.mxu0
        %2374 = vmatprep.mubr.bf16.mxu0 %v2201
        %2375 = vmatmul.mubr.bf16.gmra.mxu0 %v2169
        %v2376 = vpop.f32.mrf.mxu0
        %v2377 = vadd.f32 0.0, %v2376
        %v2378 = vpop.f32.mrf.mxu0
        %v2379 = vpop.f32.mrf.mxu0
        %v2380 = vadd.f32 0.0, %v2379
        %v2381 = vpop.f32.mrf.mxu0
        %2382 = vmatprep.mubr.bf16.mxu0 %v2204
        %2383 = vmatmul.mubr.bf16.gmra.mxu0 %v2172
        %v2384 = vpop.f32.mrf.mxu0
        %v2385 = vadd.f32 0.0, %v2384
        %v2386 = vpop.f32.mrf.mxu0
        %v2387 = vpop.f32.mrf.mxu0
        %v2388 = vadd.f32 0.0, %v2387
        %v2389 = vpop.f32.mrf.mxu0
        %2390 = vdwg.mxu0
        %2391 = vmatprep.subr.bf16.mxu0 0
        %2392 = vmatpush1.bf16.msra.mxu0 0
        %2393 = vmatprep.subr.bf16.mxu0 0
        %2394 = vmatpush1.bf16.msra.mxu0 0
        %2395 = vmatprep.subr.bf16.mxu0 0
        %2396 = vmatpush1.bf16.msra.mxu0 0
        %2397 = vmatprep.subr.bf16.mxu0 0
        %2398 = vmatpush1.bf16.msra.mxu0 0
        %2399 = vmatprep.subr.bf16.mxu0 0
        %2400 = vmatpush1.bf16.msra.mxu0 0
        %2401 = vmatprep.subr.bf16.mxu0 0
        %2402 = vmatpush1.bf16.msra.mxu0 0
        %2403 = vmatprep.subr.bf16.mxu0 0
        %2404 = vmatpush1.bf16.msra.mxu0 %v2295
        %2405 = vmatprep.subr.bf16.mxu0 0
        %2406 = vmatpush1.bf16.msra.mxu0 %v2294
        %2407 = vmatprep.subr.bf16.mxu0 0
        %2408 = vmatpush2.bf16.msra.mxu0 0
        %2409 = vmatprep.subr.bf16.mxu0 0
        %2410 = vmatpush2.bf16.msra.mxu0 0
        %2411 = vmatprep.subr.bf16.mxu0 0
        %2412 = vmatpush2.bf16.msra.mxu0 0
        %2413 = vmatprep.subr.bf16.mxu0 0
        %2414 = vmatpush2.bf16.msra.mxu0 0
        %2415 = vmatprep.subr.bf16.mxu0 0
        %2416 = vmatpush2.bf16.msra.mxu0 0
        %2417 = vmatprep.subr.bf16.mxu0 0
        %2418 = vmatpush2.bf16.msra.mxu0 0
        %2419 = vmatprep.subr.bf16.mxu0 0
        %2420 = vmatpush2.bf16.msra.mxu0 0
        %2421 = vmatprep.subr.bf16.mxu0 0
        %2422 = vmatpush2.bf16.msra.mxu0 0
        %2423 = vmatprep.mubr.bf16.mxu0 0
        %2424 = vmatmul.mubr.bf16.gmra.mxu0 %v2315
        %v2425 = vpop.f32.mrf.mxu0
        %v2426 = vadd.f32 %v2361, %v2425
        %v2427 = vpop.f32.mrf.mxu0
        %v2428 = vpop.f32.mrf.mxu0
        %v2429 = vadd.f32 %v2364, %v2428
        %v2430 = vpop.f32.mrf.mxu0
        %2431 = vmatprep.mubr.bf16.mxu0 0
        %2432 = vmatmul.mubr.bf16.gmra.mxu0 %v2318
        %v2433 = vpop.f32.mrf.mxu0
        %v2434 = vadd.f32 %v2369, %v2433
        %v2435 = vpop.f32.mrf.mxu0
        %v2436 = vpop.f32.mrf.mxu0
        %v2437 = vadd.f32 %v2372, %v2436
        %v2438 = vpop.f32.mrf.mxu0
        %2439 = vmatprep.mubr.bf16.mxu0 0
        %2440 = vmatmul.mubr.bf16.gmra.mxu0 %v2321
        %v2441 = vpop.f32.mrf.mxu0
        %v2442 = vadd.f32 %v2377, %v2441
        %v2443 = vpop.f32.mrf.mxu0
        %v2444 = vpop.f32.mrf.mxu0
        %v2445 = vadd.f32 %v2380, %v2444
        %v2446 = vpop.f32.mrf.mxu0
        %2447 = vmatprep.mubr.bf16.mxu0 0
        %2448 = vmatmul.mubr.bf16.gmra.mxu0 %v2324
        %v2449 = vpop.f32.mrf.mxu0
        %v2450 = vadd.f32 %v2385, %v2449
        %v2451 = vpop.f32.mrf.mxu0
        %v2452 = vpop.f32.mrf.mxu0
        %v2453 = vadd.f32 %v2388, %v2452
        %v2454 = vpop.f32.mrf.mxu0
        %2455 = vdwg.mxu0
        %v2456 = vmul.f32 %v2453, %v1635
        %v2457 = vmul.f32 %v2426, %v1640
        %v2458 = vmul.f32 %v2429, %v1645
        %v2459 = vmul.f32 %v2434, %v1650
        %v2460 = vmul.f32 %v2437, %v1655
        %v2461 = vmul.f32 %v2442, %v1660
        %v2462 = vmul.f32 %v2445, %v1665
        %v2463 = vmul.f32 %v2450, %v1670
        %v2464 = vmul.f32 %v2429, %v1960
        %v2465 = vmul.f32 %v2434, %v1965
        %v2466 = vmul.f32 %v2437, %v1970
        %v2467 = vmul.f32 %v2442, %v1975
        %v2468 = vmul.f32 %v2445, %v1980
        %v2469 = vmul.f32 %v2450, %v1985
        %v2470 = vmul.f32 %v2453, %v1990
        %v2471 = vmul.f32 %v2426, %v1995
        %v2472 = vmul.f32 %v2426, 2.0
        %v2473 = vmul.f32 %v2429, 2.0
        %v2474 = vmul.f32 %v2434, 2.0
        %v2475 = vmul.f32 %v2437, 2.0
        %v2476 = vmul.f32 %v2442, 2.0
        %v2477 = vmul.f32 %v2445, 2.0
        %v2478 = vmul.f32 %v2450, 2.0
        %v2479 = vmul.f32 %v2453, 2.0
        %v2480 = vadd.f32 %v2456, %v2472
        %v2481 = vadd.f32 %v2457, %v2473
        %v2482 = vadd.f32 %v2458, %v2474
        %v2483 = vadd.f32 %v2459, %v2475
        %v2484 = vadd.f32 %v2460, %v2476
        %v2485 = vadd.f32 %v2461, %v2477
        %v2486 = vadd.f32 %v2462, %v2478
        %v2487 = vadd.f32 %v2463, %v2479
        %v2488 = vadd.f32 %v2480, %v2464
        %v2489 = vadd.f32 %v2481, %v2465
        %v2490 = vadd.f32 %v2482, %v2466
        %v2491 = vadd.f32 %v2483, %v2467
        %v2492 = vadd.f32 %v2484, %v2468
        %v2493 = vadd.f32 %v2485, %v2469
        %v2494 = vadd.f32 %v2486, %v2470
        %v2495 = vadd.f32 %v2487, %v2471
        %v2496 = vmul.f32 %v2488, 0.25
        %v2497 = vmul.f32 %v2489, 0.25
        %v2498 = vmul.f32 %v2490, 0.25
        %v2499 = vmul.f32 %v2491, 0.25
        %v2500 = vmul.f32 %v2492, 0.25
        %v2501 = vmul.f32 %v2493, 0.25
        %v2502 = vmul.f32 %v2494, 0.25
        %v2503 = vmul.f32 %v2495, 0.25
        %v2504 = vrot.slane %v2496, 7
        %v2505 = vrot.slane %v2497, 7
        %v2506 = vrot.slane %v2498, 7
        %v2507 = vrot.slane %v2499, 7
        %v2508 = vrot.slane %v2500, 7
        %v2509 = vrot.slane %v2501, 7
        %v2510 = vrot.slane %v2502, 7
        %v2511 = vrot.slane %v2503, 7
        %v2512 = vsel %vm995, %v2510, %v2511
        %v2513 = vsel %vm995, %v2509, %v2510
        %v2514 = vsel %vm995, %v2508, %v2509
        %v2515 = vsel %vm995, %v2507, %v2508
        %v2516 = vsel %vm995, %v2506, %v2507
        %v2517 = vsel %vm995, %v2505, %v2506
        %v2518 = vsel %vm995, %v2504, %v2505
        %v2519 = vsel %vm995, %v2511, %v2504
        %v2520 = vmul.f32 %v2519, %v1773
        %v2521 = vmul.f32 %v2518, %v1778
        %v2522 = vmul.f32 %v2517, %v1783
        %v2523 = vmul.f32 %v2516, %v1788
        %v2524 = vmul.f32 %v2515, %v1793
        %v2525 = vmul.f32 %v2514, %v1798
        %v2526 = vmul.f32 %v2513, %v1803
        %v2527 = vmul.f32 %v2512, %v1808
        %v2528 = vrot.slane %v2496, 1
        %v2529 = vrot.slane %v2497, 1
        %v2530 = vrot.slane %v2498, 1
        %v2531 = vrot.slane %v2499, 1
        %v2532 = vrot.slane %v2500, 1
        %v2533 = vrot.slane %v2501, 1
        %v2534 = vrot.slane %v2502, 1
        %v2535 = vrot.slane %v2503, 1
        %v2536 = vsel %vm1017, %v2534, %v2535
        %v2537 = vsel %vm1017, %v2533, %v2534
        %v2538 = vsel %vm1017, %v2532, %v2533
        %v2539 = vsel %vm1017, %v2531, %v2532
        %v2540 = vsel %vm1017, %v2530, %v2531
        %v2541 = vsel %vm1017, %v2529, %v2530
        %v2542 = vsel %vm1017, %v2528, %v2529
        %v2543 = vsel %vm1017, %v2535, %v2528
        %v2544 = vmul.f32 %v2542, %v1838
        %v2545 = vmul.f32 %v2541, %v1843
        %v2546 = vmul.f32 %v2540, %v1848
        %v2547 = vmul.f32 %v2539, %v1853
        %v2548 = vmul.f32 %v2538, %v1858
        %v2549 = vmul.f32 %v2537, %v1863
        %v2550 = vmul.f32 %v2536, %v1868
        %v2551 = vmul.f32 %v2543, %v1873
        %v2552 = vmul.f32 %v2496, 2.0
        %v2553 = vmul.f32 %v2497, 2.0
        %v2554 = vmul.f32 %v2498, 2.0
        %v2555 = vmul.f32 %v2499, 2.0
        %v2556 = vmul.f32 %v2500, 2.0
        %v2557 = vmul.f32 %v2501, 2.0
        %v2558 = vmul.f32 %v2502, 2.0
        %v2559 = vmul.f32 %v2503, 2.0
        %v2560 = vadd.f32 %v2520, %v2552
        %v2561 = vadd.f32 %v2521, %v2553
        %v2562 = vadd.f32 %v2522, %v2554
        %v2563 = vadd.f32 %v2523, %v2555
        %v2564 = vadd.f32 %v2524, %v2556
        %v2565 = vadd.f32 %v2525, %v2557
        %v2566 = vadd.f32 %v2526, %v2558
        %v2567 = vadd.f32 %v2527, %v2559
        %v2568 = vadd.f32 %v2560, %v2544
        %v2569 = vadd.f32 %v2561, %v2545
        %v2570 = vadd.f32 %v2562, %v2546
        %v2571 = vadd.f32 %v2563, %v2547
        %v2572 = vadd.f32 %v2564, %v2548
        %v2573 = vadd.f32 %v2565, %v2549
        %v2574 = vadd.f32 %v2566, %v2550
        %v2575 = vadd.f32 %v2567, %v2551
        %v2576 = vmul.f32 %v2568, 0.25
        %v2577 = vmul.f32 %v2569, 0.25
        %v2578 = vmul.f32 %v2570, 0.25
        %v2579 = vmul.f32 %v2571, 0.25
        %v2580 = vmul.f32 %v2572, 0.25
        %v2581 = vmul.f32 %v2573, 0.25
        %v2582 = vmul.f32 %v2574, 0.25
        %v2583 = vmul.f32 %v2575, 0.25
        %s2584 = scalar_lea.vmem %s8, 1
        %v2585 = vld [vmem:[%s2584] sm:$0x1]
        %v2587 = vlaneseq
        %v2588 = vshrl.u32 %v2587, 7
        %v2589 = vsub.s32 0, %v2588
        %v2590 = vrot.slane %v2585, %v2589
        %v2592 = vadd.f32 %v2576, %v2590
        %v2593 = vadd.f32 %v2577, %v2590
        %v2594 = vadd.f32 %v2578, %v2590
        %v2595 = vadd.f32 %v2579, %v2590
        %v2596 = vadd.f32 %v2580, %v2590
        %v2597 = vadd.f32 %v2581, %v2590
        %v2598 = vadd.f32 %v2582, %v2590
        %v2599 = vadd.f32 %v2583, %v2590
        %v2600 = vld [vmem:[%s802] sm:$0xff]
        %v2601 = vld [vmem:[%s802 + $0x8] sm:$0xff]
        %v2602 = vld [vmem:[%s802 + $0x10] sm:$0xff]
        %v2603 = vld [vmem:[%s802 + $0x18] sm:$0xff]
        %v2604 = vld [vmem:[%s802 + $0x20] sm:$0xff]
        %v2605 = vld [vmem:[%s802 + $0x28] sm:$0xff]
        %v2606 = vld [vmem:[%s802 + $0x30] sm:$0xff]
        %v2607 = vld [vmem:[%s802 + $0x38] sm:$0xff]
        %s2608 = scalar_lea.vmem %s6, 2
        %v2609 = vld [vmem:[%s2608] sm:$0x1]
        %s2610 = scalar_lea.vmem %s788, 2
        %v2611 = vld [vmem:[%s2610] sm:$0x1]
        %s2612 = scalar_lea.vmem %s792, 2
        %v2613 = vld [vmem:[%s2612] sm:$0x1]
        %v2615 = vlaneseq
        %v2616 = vshrl.u32 %v2615, 7
        %v2617 = vsub.s32 0, %v2616
        %v2618 = vrot.slane %v2609, %v2617
        %2621 = vset.pattern.permute.xlu0 0
        %2622 = vperm.xlu0 %2621, %v2600
        %v2623 = vpop.permute.xlu0 %2622
        %2626 = vset.pattern.permute.xlu0 0
        %2627 = vperm.xlu0 %2626, %v2601
        %v2628 = vpop.permute.xlu0 %2627
        %2631 = vset.pattern.permute.xlu0 0
        %2632 = vperm.xlu0 %2631, %v2602
        %v2633 = vpop.permute.xlu0 %2632
        %2636 = vset.pattern.permute.xlu0 0
        %2637 = vperm.xlu0 %2636, %v2603
        %v2638 = vpop.permute.xlu0 %2637
        %2641 = vset.pattern.permute.xlu0 0
        %2642 = vperm.xlu0 %2641, %v2604
        %v2643 = vpop.permute.xlu0 %2642
        %2646 = vset.pattern.permute.xlu0 0
        %2647 = vperm.xlu0 %2646, %v2605
        %v2648 = vpop.permute.xlu0 %2647
        %2651 = vset.pattern.permute.xlu0 0
        %2652 = vperm.xlu0 %2651, %v2606
        %v2653 = vpop.permute.xlu0 %2652
        %2656 = vset.pattern.permute.xlu0 0
        %2657 = vperm.xlu0 %2656, %v2607
        %v2658 = vpop.permute.xlu0 %2657
        %v2660 = vmul.f32 %v2618, %v2623
        %v2661 = vmul.f32 %v2618, %v2628
        %v2662 = vmul.f32 %v2618, %v2633
        %v2663 = vmul.f32 %v2618, %v2638
        %v2664 = vmul.f32 %v2618, %v2643
        %v2665 = vmul.f32 %v2618, %v2648
        %v2666 = vmul.f32 %v2618, %v2653
        %v2667 = vmul.f32 %v2618, %v2658
        %v2668 = vadd.f32 %v2592, %v2660
        %v2669 = vadd.f32 %v2593, %v2661
        %v2670 = vadd.f32 %v2594, %v2662
        %v2671 = vadd.f32 %v2595, %v2663
        %v2672 = vadd.f32 %v2596, %v2664
        %v2673 = vadd.f32 %v2597, %v2665
        %v2674 = vadd.f32 %v2598, %v2666
        %v2675 = vadd.f32 %v2599, %v2667
        %vm2676 = vcmp.ge.f32.partialorder %v2668, 0.0
        %vm2677 = vcmp.ge.f32.partialorder %v2669, 0.0
        %vm2678 = vcmp.ge.f32.partialorder %v2670, 0.0
        %vm2679 = vcmp.ge.f32.partialorder %v2671, 0.0
        %vm2680 = vcmp.ge.f32.partialorder %v2672, 0.0
        %vm2681 = vcmp.ge.f32.partialorder %v2673, 0.0
        %vm2682 = vcmp.ge.f32.partialorder %v2674, 0.0
        %vm2683 = vcmp.ge.f32.partialorder %v2675, 0.0
        %v2684 = vmul.f32 %v2668, 0.2
        %v2685 = vmul.f32 %v2669, 0.2
        %v2686 = vmul.f32 %v2670, 0.2
        %v2687 = vmul.f32 %v2671, 0.2
        %v2688 = vmul.f32 %v2672, 0.2
        %v2689 = vmul.f32 %v2673, 0.2
        %v2690 = vmul.f32 %v2674, 0.2
        %v2691 = vmul.f32 %v2675, 0.2
        %v2692 = vsel %vm2676, %v2668, %v2684
        %v2693 = vsel %vm2677, %v2669, %v2685
        %v2694 = vsel %vm2678, %v2670, %v2686
        %v2695 = vsel %vm2679, %v2671, %v2687
        %v2696 = vsel %vm2680, %v2672, %v2688
        %v2697 = vsel %vm2681, %v2673, %v2689
        %v2698 = vsel %vm2682, %v2674, %v2690
        %v2699 = vsel %vm2683, %v2675, %v2691
        %v2700 = vsel %vm847, %v2692, 0.0
        %v2701 = vsel %vm847, %v2693, 0.0
        %v2702 = vadd.f32 %v2700, %v2701
        %v2703 = vsel %vm847, %v2694, 0.0
        %v2704 = vadd.f32 %v2702, %v2703
        %v2705 = vsel %vm847, %v2695, 0.0
        %v2706 = vadd.f32 %v2704, %v2705
        %v2707 = vsel %vm847, %v2696, 0.0
        %v2708 = vadd.f32 %v2706, %v2707
        %v2709 = vsel %vm847, %v2697, 0.0
        %v2710 = vadd.f32 %v2708, %v2709
        %v2711 = vsel %vm847, %v2698, 0.0
        %v2712 = vadd.f32 %v2710, %v2711
        %v2713 = vsel %vm847, %v2699, 0.0
        %v2714 = vadd.f32 %v2712, %v2713
        %v2715 = vrot.slane %v2714, 4
        %v2716 = vadd.f32 %v2714, %v2715
        %v2717 = vrot.slane %v2716, 2
        %v2718 = vadd.f32 %v2716, %v2717
        %v2719 = vrot.slane %v2718, 1
        %v2720 = vadd.f32 %v2718, %v2719
        %v2721 = vrcp.pop 64.0
        %v2722 = vmul.f32 %v2720, %v2721
        %v2723 = vsub.f32 %v2692, %v2722
        %v2724 = vsub.f32 %v2693, %v2722
        %v2725 = vsub.f32 %v2694, %v2722
        %v2726 = vsub.f32 %v2695, %v2722
        %v2727 = vsub.f32 %v2696, %v2722
        %v2728 = vsub.f32 %v2697, %v2722
        %v2729 = vsub.f32 %v2698, %v2722
        %v2730 = vsub.f32 %v2699, %v2722
        %v2731 = vmul.f32 %v2723, %v2723
        %v2732 = vmul.f32 %v2724, %v2724
        %v2733 = vmul.f32 %v2725, %v2725
        %v2734 = vmul.f32 %v2726, %v2726
        %v2735 = vmul.f32 %v2727, %v2727
        %v2736 = vmul.f32 %v2728, %v2728
        %v2737 = vmul.f32 %v2729, %v2729
        %v2738 = vmul.f32 %v2730, %v2730
        %v2739 = vsel %vm847, %v2731, 0.0
        %v2740 = vsel %vm847, %v2732, 0.0
        %v2741 = vadd.f32 %v2739, %v2740
        %v2742 = vsel %vm847, %v2733, 0.0
        %v2743 = vadd.f32 %v2741, %v2742
        %v2744 = vsel %vm847, %v2734, 0.0
        %v2745 = vadd.f32 %v2743, %v2744
        %v2746 = vsel %vm847, %v2735, 0.0
        %v2747 = vadd.f32 %v2745, %v2746
        %v2748 = vsel %vm847, %v2736, 0.0
        %v2749 = vadd.f32 %v2747, %v2748
        %v2750 = vsel %vm847, %v2737, 0.0
        %v2751 = vadd.f32 %v2749, %v2750
        %v2752 = vsel %vm847, %v2738, 0.0
        %v2753 = vadd.f32 %v2751, %v2752
        %v2754 = vrot.slane %v2753, 4
        %v2755 = vadd.f32 %v2753, %v2754
        %v2756 = vrot.slane %v2755, 2
        %v2757 = vadd.f32 %v2755, %v2756
        %v2758 = vrot.slane %v2757, 1
        %v2759 = vadd.f32 %v2757, %v2758
        %v2760 = vmul.f32 %v2759, %v2721
        %v2761 = vadd.f32 %v2760, 1e-05
        %v2762 = vrsqrt.pop %v2761
        %v2763 = vmul.f32 %v2723, %v2762
        %v2764 = vmul.f32 %v2724, %v2762
        %v2765 = vmul.f32 %v2725, %v2762
        %v2766 = vmul.f32 %v2726, %v2762
        %v2767 = vmul.f32 %v2727, %v2762
        %v2768 = vmul.f32 %v2728, %v2762
        %v2769 = vmul.f32 %v2729, %v2762
        %v2770 = vmul.f32 %v2730, %v2762
        %v2772 = vlaneseq
        %v2773 = vshrl.u32 %v2772, 7
        %v2774 = vsub.s32 0, %v2773
        %v2775 = vrot.slane %v2611, %v2774
        %v2777 = vmul.f32 %v2763, %v2775
        %v2778 = vmul.f32 %v2764, %v2775
        %v2779 = vmul.f32 %v2765, %v2775
        %v2780 = vmul.f32 %v2766, %v2775
        %v2781 = vmul.f32 %v2767, %v2775
        %v2782 = vmul.f32 %v2768, %v2775
        %v2783 = vmul.f32 %v2769, %v2775
        %v2784 = vmul.f32 %v2770, %v2775
        %v2786 = vlaneseq
        %v2787 = vshrl.u32 %v2786, 7
        %v2788 = vsub.s32 0, %v2787
        %v2789 = vrot.slane %v2613, %v2788
        %v2791 = vadd.f32 %v2777, %v2789
        %v2792 = vadd.f32 %v2778, %v2789
        %v2793 = vadd.f32 %v2779, %v2789
        %v2794 = vadd.f32 %v2780, %v2789
        %v2795 = vadd.f32 %v2781, %v2789
        %v2796 = vadd.f32 %v2782, %v2789
        %v2797 = vadd.f32 %v2783, %v2789
        %v2798 = vadd.f32 %v2784, %v2789
        %s2799 = scalar_lea.vmem %s7, 288
        %v2800 = vld [vmem:[%s2799] sm:$0xf]
        %v2801 = vld [vmem:[%s2799 + $0x4] sm:$0xf]
        %v2802 = vld [vmem:[%s2799 + $0x8] sm:$0xf]
        %v2803 = vld [vmem:[%s2799 + $0xc] sm:$0xf]
        %v2804 = vld [vmem:[%s2799 + $0x10] sm:$0xf]
        %v2805 = vld [vmem:[%s2799 + $0x14] sm:$0xf]
        %v2806 = vld [vmem:[%s2799 + $0x18] sm:$0xf]
        %v2807 = vld [vmem:[%s2799 + $0x1c] sm:$0xf]
        %v2808 = vld [vmem:[%s2799 + $0x20] sm:$0xf]
        %v2809 = vld [vmem:[%s2799 + $0x24] sm:$0xf]
        %v2810 = vld [vmem:[%s2799 + $0x28] sm:$0xf]
        %v2811 = vld [vmem:[%s2799 + $0x2c] sm:$0xf]
        %v2812 = vld [vmem:[%s2799 + $0x30] sm:$0xf]
        %v2813 = vld [vmem:[%s2799 + $0x34] sm:$0xf]
        %v2814 = vld [vmem:[%s2799 + $0x38] sm:$0xf]
        %v2815 = vld [vmem:[%s2799 + $0x3c] sm:$0xf]
        %v2816 = vld [vmem:[%s2799 + $0x40] sm:$0xf]
        %v2817 = vld [vmem:[%s2799 + $0x44] sm:$0xf]
        %v2818 = vld [vmem:[%s2799 + $0x48] sm:$0xf]
        %v2819 = vld [vmem:[%s2799 + $0x4c] sm:$0xf]
        %v2820 = vld [vmem:[%s2799 + $0x50] sm:$0xf]
        %v2821 = vld [vmem:[%s2799 + $0x54] sm:$0xf]
        %v2822 = vld [vmem:[%s2799 + $0x58] sm:$0xf]
        %v2823 = vld [vmem:[%s2799 + $0x5c] sm:$0xf]
        %v2824 = vld [vmem:[%s2799 + $0x60] sm:$0xf]
        %v2825 = vld [vmem:[%s2799 + $0x64] sm:$0xf]
        %v2826 = vld [vmem:[%s2799 + $0x68] sm:$0xf]
        %v2827 = vld [vmem:[%s2799 + $0x6c] sm:$0xf]
        %v2828 = vld [vmem:[%s2799 + $0x70] sm:$0xf]
        %v2829 = vld [vmem:[%s2799 + $0x74] sm:$0xf]
        %v2830 = vld [vmem:[%s2799 + $0x78] sm:$0xf]
        %v2831 = vld [vmem:[%s2799 + $0x7c] sm:$0xf]
        %v2832 = vld [vmem:[%s2799 + $0x80] sm:$0xf]
        %v2833 = vld [vmem:[%s2799 + $0x84] sm:$0xf]
        %v2834 = vld [vmem:[%s2799 + $0x88] sm:$0xf]
        %v2835 = vld [vmem:[%s2799 + $0x8c] sm:$0xf]
        %v2836 = vrot.slane %v2791, 7
        %v2837 = vrot.slane %v2792, 7
        %v2838 = vrot.slane %v2793, 7
        %v2839 = vrot.slane %v2794, 7
        %v2840 = vrot.slane %v2795, 7
        %v2841 = vrot.slane %v2796, 7
        %v2842 = vrot.slane %v2797, 7
        %v2843 = vrot.slane %v2798, 7
        %v2844 = vsel %vm995, %v2842, %v2843
        %v2845 = vsel %vm995, %v2841, %v2842
        %v2846 = vsel %vm995, %v2840, %v2841
        %v2847 = vsel %vm995, %v2839, %v2840
        %v2848 = vsel %vm995, %v2838, %v2839
        %v2849 = vsel %vm995, %v2837, %v2838
        %v2850 = vsel %vm995, %v2836, %v2837
        %v2851 = vsel %vm995, %v2843, %v2836
        %v2852 = vmul.f32 %v2844, %v1574
        %v2853 = vmul.f32 %v2851, %v1579
        %v2854 = vmul.f32 %v2850, %v1584
        %v2855 = vmul.f32 %v2849, %v1589
        %v2856 = vmul.f32 %v2848, %v1594
        %v2857 = vmul.f32 %v2847, %v1599
        %v2858 = vmul.f32 %v2846, %v1604
        %v2859 = vmul.f32 %v2845, %v1609
        %v2860 = vpack.c.bf16 %v2853, %v2852
        %v2861 = vpack.c.bf16 %v2855, %v2854
        %v2862 = vpack.c.bf16 %v2857, %v2856
        %v2863 = vpack.c.bf16 %v2859, %v2858
        %v2864 = vmul.f32 %v2798, %v1635
        %v2865 = vmul.f32 %v2791, %v1640
        %v2866 = vmul.f32 %v2792, %v1645
        %v2867 = vmul.f32 %v2793, %v1650
        %v2868 = vmul.f32 %v2794, %v1655
        %v2869 = vmul.f32 %v2795, %v1660
        %v2870 = vmul.f32 %v2796, %v1665
        %v2871 = vmul.f32 %v2797, %v1670
        %v2872 = vpack.c.bf16 %v2865, %v2864
        %v2873 = vpack.c.bf16 %v2867, %v2866
        %v2874 = vpack.c.bf16 %v2869, %v2868
        %v2875 = vpack.c.bf16 %v2871, %v2870
        %v2876 = vrot.slane %v2791, 1
        %v2877 = vrot.slane %v2792, 1
        %v2878 = vrot.slane %v2793, 1
        %v2879 = vrot.slane %v2794, 1
        %v2880 = vrot.slane %v2795, 1
        %v2881 = vrot.slane %v2796, 1
        %v2882 = vrot.slane %v2797, 1
        %v2883 = vrot.slane %v2798, 1
        %v2884 = vsel %vm1017, %v2882, %v2883
        %v2885 = vsel %vm1017, %v2881, %v2882
        %v2886 = vsel %vm1017, %v2880, %v2881
        %v2887 = vsel %vm1017, %v2879, %v2880
        %v2888 = vsel %vm1017, %v2878, %v2879
        %v2889 = vsel %vm1017, %v2877, %v2878
        %v2890 = vsel %vm1017, %v2876, %v2877
        %v2891 = vsel %vm1017, %v2883, %v2876
        %v2892 = vmul.f32 %v2891, %v1712
        %v2893 = vmul.f32 %v2890, %v1717
        %v2894 = vmul.f32 %v2889, %v1722
        %v2895 = vmul.f32 %v2888, %v1727
        %v2896 = vmul.f32 %v2887, %v1732
        %v2897 = vmul.f32 %v2886, %v1737
        %v2898 = vmul.f32 %v2885, %v1742
        %v2899 = vmul.f32 %v2884, %v1747
        %v2900 = vpack.c.bf16 %v2893, %v2892
        %v2901 = vpack.c.bf16 %v2895, %v2894
        %v2902 = vpack.c.bf16 %v2897, %v2896
        %v2903 = vpack.c.bf16 %v2899, %v2898
        %v2904 = vmul.f32 %v2851, %v1773
        %v2905 = vmul.f32 %v2850, %v1778
        %v2906 = vmul.f32 %v2849, %v1783
        %v2907 = vmul.f32 %v2848, %v1788
        %v2908 = vmul.f32 %v2847, %v1793
        %v2909 = vmul.f32 %v2846, %v1798
        %v2910 = vmul.f32 %v2845, %v1803
        %v2911 = vmul.f32 %v2844, %v1808
        %v2912 = vpack.c.bf16 %v2905, %v2904
        %v2913 = vpack.c.bf16 %v2907, %v2906
        %v2914 = vpack.c.bf16 %v2909, %v2908
        %v2915 = vpack.c.bf16 %v2911, %v2910
        %v2916 = vpack.c.bf16 %v2792, %v2791
        %v2917 = vpack.c.bf16 %v2794, %v2793
        %v2918 = vpack.c.bf16 %v2796, %v2795
        %v2919 = vpack.c.bf16 %v2798, %v2797
        %v2920 = vmul.f32 %v2890, %v1838
        %v2921 = vmul.f32 %v2889, %v1843
        %v2922 = vmul.f32 %v2888, %v1848
        %v2923 = vmul.f32 %v2887, %v1853
        %v2924 = vmul.f32 %v2886, %v1858
        %v2925 = vmul.f32 %v2885, %v1863
        %v2926 = vmul.f32 %v2884, %v1868
        %v2927 = vmul.f32 %v2891, %v1873
        %v2928 = vpack.c.bf16 %v2921, %v2920
        %v2929 = vpack.c.bf16 %v2923, %v2922
        %v2930 = vpack.c.bf16 %v2925, %v2924
        %v2931 = vpack.c.bf16 %v2927, %v2926
        %v2932 = vmul.f32 %v2850, %v1899
        %v2933 = vmul.f32 %v2849, %v1904
        %v2934 = vmul.f32 %v2848, %v1909
        %v2935 = vmul.f32 %v2847, %v1914
        %v2936 = vmul.f32 %v2846, %v1919
        %v2937 = vmul.f32 %v2845, %v1924
        %v2938 = vmul.f32 %v2844, %v1929
        %v2939 = vmul.f32 %v2851, %v1934
        %v2940 = vpack.c.bf16 %v2933, %v2932
        %v2941 = vpack.c.bf16 %v2935, %v2934
        %v2942 = vpack.c.bf16 %v2937, %v2936
        %v2943 = vpack.c.bf16 %v2939, %v2938
        %v2944 = vmul.f32 %v2792, %v1960
        %v2945 = vmul.f32 %v2793, %v1965
        %v2946 = vmul.f32 %v2794, %v1970
        %v2947 = vmul.f32 %v2795, %v1975
        %v2948 = vmul.f32 %v2796, %v1980
        %v2949 = vmul.f32 %v2797, %v1985
        %v2950 = vmul.f32 %v2798, %v1990
        %v2951 = vmul.f32 %v2791, %v1995
        %v2952 = vpack.c.bf16 %v2945, %v2944
        %v2953 = vpack.c.bf16 %v2947, %v2946
        %v2954 = vpack.c.bf16 %v2949, %v2948
        %v2955 = vpack.c.bf16 %v2951, %v2950
        %v2956 = vmul.f32 %v2889, %v2021
        %v2957 = vmul.f32 %v2888, %v2026
        %v2958 = vmul.f32 %v2887, %v2031
        %v2959 = vmul.f32 %v2886, %v2036
        %v2960 = vmul.f32 %v2885, %v2041
        %v2961 = vmul.f32 %v2884, %v2046
        %v2962 = vmul.f32 %v2891, %v2051
        %v2963 = vmul.f32 %v2890, %v2056
        %v2964 = vpack.c.bf16 %v2957, %v2956
        %v2965 = vpack.c.bf16 %v2959, %v2958
        %v2966 = vpack.c.bf16 %v2961, %v2960
        %v2967 = vpack.c.bf16 %v2963, %v2962
        %2972 = vrot.lane.b32.xlu0 %v2872, 32
        %v2973 = vpop.permute.xlu0 %2972
        %2974 = vrot.lane.b32.xlu0 %v2873, 32
        %v2975 = vpop.permute.xlu0 %2974
        %2976 = vrot.lane.b32.xlu0 %v2874, 32
        %v2977 = vpop.permute.xlu0 %2976
        %2978 = vrot.lane.b32.xlu0 %v2875, 32
        %v2979 = vpop.permute.xlu0 %2978
        %2984 = vrot.lane.b32.xlu0 %v2900, 64
        %v2985 = vpop.permute.xlu0 %2984
        %2986 = vrot.lane.b32.xlu0 %v2901, 64
        %v2987 = vpop.permute.xlu0 %2986
        %2988 = vrot.lane.b32.xlu0 %v2902, 64
        %v2989 = vpop.permute.xlu0 %2988
        %2990 = vrot.lane.b32.xlu0 %v2903, 64
        %v2991 = vpop.permute.xlu0 %2990
        %2996 = vrot.lane.b32.xlu0 %v2912, 96
        %v2997 = vpop.permute.xlu0 %2996
        %2998 = vrot.lane.b32.xlu0 %v2913, 96
        %v2999 = vpop.permute.xlu0 %2998
        %3000 = vrot.lane.b32.xlu0 %v2914, 96
        %v3001 = vpop.permute.xlu0 %3000
        %3002 = vrot.lane.b32.xlu0 %v2915, 96
        %v3003 = vpop.permute.xlu0 %3002
        %3008 = vrot.lane.b32.xlu0 %v2928, 32
        %v3009 = vpop.permute.xlu0 %3008
        %3010 = vrot.lane.b32.xlu0 %v2929, 32
        %v3011 = vpop.permute.xlu0 %3010
        %3012 = vrot.lane.b32.xlu0 %v2930, 32
        %v3013 = vpop.permute.xlu0 %3012
        %3014 = vrot.lane.b32.xlu0 %v2931, 32
        %v3015 = vpop.permute.xlu0 %3014
        %3020 = vrot.lane.b32.xlu0 %v2940, 64
        %v3021 = vpop.permute.xlu0 %3020
        %3022 = vrot.lane.b32.xlu0 %v2941, 64
        %v3023 = vpop.permute.xlu0 %3022
        %3024 = vrot.lane.b32.xlu0 %v2942, 64
        %v3025 = vpop.permute.xlu0 %3024
        %3026 = vrot.lane.b32.xlu0 %v2943, 64
        %v3027 = vpop.permute.xlu0 %3026
        %3032 = vrot.lane.b32.xlu0 %v2952, 96
        %v3033 = vpop.permute.xlu0 %3032
        %3034 = vrot.lane.b32.xlu0 %v2953, 96
        %v3035 = vpop.permute.xlu0 %3034
        %3036 = vrot.lane.b32.xlu0 %v2954, 96
        %v3037 = vpop.permute.xlu0 %3036
        %3038 = vrot.lane.b32.xlu0 %v2955, 96
        %v3039 = vpop.permute.xlu0 %3038
        %v3042 = vsel %vm847, %v2860, %v2973
        %v3045 = vsel %vm847, %v2861, %v2975
        %v3048 = vsel %vm847, %v2862, %v2977
        %v3051 = vsel %vm847, %v2863, %v2979
        %v3053 = vsel %vm1105, %v3042, %v2985
        %v3055 = vsel %vm1105, %v3045, %v2987
        %v3057 = vsel %vm1105, %v3048, %v2989
        %v3059 = vsel %vm1105, %v3051, %v2991
        %v3061 = vsel %vm1108, %v3053, %v2997
        %v3064 = vsel %vm1108, %v3055, %v2999
        %v3067 = vsel %vm1108, %v3057, %v3001
        %v3070 = vsel %vm1108, %v3059, %v3003
        %v3074 = vsel %vm847, %v2916, %v3009
        %v3077 = vsel %vm847, %v2917, %v3011
        %v3080 = vsel %vm847, %v2918, %v3013
        %v3083 = vsel %vm847, %v2919, %v3015
        %v3085 = vsel %vm1105, %v3074, %v3021
        %v3087 = vsel %vm1105, %v3077, %v3023
        %v3089 = vsel %vm1105, %v3080, %v3025
        %v3091 = vsel %vm1105, %v3083, %v3027
        %v3093 = vsel %vm1108, %v3085, %v3033
        %v3096 = vsel %vm1108, %v3087, %v3035
        %v3099 = vsel %vm1108, %v3089, %v3037
        %v3102 = vsel %vm1108, %v3091, %v3039
        %s3104 = scalar_lea.vmem %s8, 2
        %v3105 = vld [vmem:[%s3104] sm:$0x1]
        %v3107 = vlaneseq
        %v3108 = vshrl.u32 %v3107, 7
        %v3109 = vsub.s32 0, %v3108
        %v3110 = vrot.slane %v3105, %v3109
        %v3148 = vunpack.c.l.b16 %v2800
        %v3149 = vunpack.c.l.b16 %v2801
        %v3150 = vunpack.c.l.b16 %v2802
        %v3151 = vunpack.c.l.b16 %v2803
        %v3152 = vunpack.c.l.b16 %v2804
        %v3153 = vunpack.c.l.b16 %v2805
        %v3154 = vunpack.c.l.b16 %v2806
        %v3155 = vunpack.c.l.b16 %v2807
        %v3156 = vunpack.c.l.b16 %v2808
        %v3157 = vunpack.c.l.b16 %v2809
        %v3158 = vunpack.c.l.b16 %v2810
        %v3159 = vunpack.c.l.b16 %v2811
        %v3160 = vunpack.c.l.b16 %v2812
        %v3161 = vunpack.c.l.b16 %v2813
        %v3162 = vunpack.c.l.b16 %v2814
        %v3163 = vunpack.c.l.b16 %v2815
        %v3164 = vunpack.c.l.b16 %v2816
        %v3165 = vunpack.c.l.b16 %v2817
        %v3166 = vunpack.c.l.b16 %v2818
        %v3167 = vunpack.c.l.b16 %v2819
        %v3168 = vunpack.c.l.b16 %v2820
        %v3169 = vunpack.c.l.b16 %v2821
        %v3170 = vunpack.c.l.b16 %v2822
        %v3171 = vunpack.c.l.b16 %v2823
        %v3172 = vunpack.c.l.b16 %v2824
        %v3173 = vunpack.c.l.b16 %v2825
        %v3174 = vunpack.c.l.b16 %v2826
        %v3175 = vunpack.c.l.b16 %v2827
        %v3176 = vunpack.c.l.b16 %v2828
        %v3177 = vunpack.c.l.b16 %v2829
        %v3178 = vunpack.c.l.b16 %v2830
        %v3179 = vunpack.c.l.b16 %v2831
        %v3180 = vunpack.c.l.b16 %v2832
        %v3181 = vunpack.c.l.b16 %v2833
        %v3182 = vunpack.c.l.b16 %v2834
        %v3183 = vunpack.c.l.b16 %v2835
        %v3184 = vpack.c.b16 %v3149, %v3148
        %v3185 = vpack.c.b16 %v3151, %v3150
        %v3186 = vpack.c.b16 %v3153, %v3152
        %v3187 = vpack.c.b16 %v3155, %v3154
        %v3188 = vpack.c.b16 %v3157, %v3156
        %v3189 = vpack.c.b16 %v3159, %v3158
        %v3190 = vpack.c.b16 %v3161, %v3160
        %v3191 = vpack.c.b16 %v3163, %v3162
        %v3192 = vpack.c.b16 %v3165, %v3164
        %v3193 = vpack.c.b16 %v3167, %v3166
        %v3194 = vpack.c.b16 %v3169, %v3168
        %v3195 = vpack.c.b16 %v3171, %v3170
        %v3196 = vpack.c.b16 %v3173, %v3172
        %v3197 = vpack.c.b16 %v3175, %v3174
        %v3198 = vpack.c.b16 %v3177, %v3176
        %v3199 = vpack.c.b16 %v3179, %v3178
        %v3200 = vpack.c.b16 %v3181, %v3180
        %v3201 = vpack.c.b16 %v3183, %v3182
        %v3221 = vsel %vm847, %v2964, 0
        %v3224 = vsel %vm847, %v2965, 0
        %v3227 = vsel %vm847, %v2966, 0
        %v3230 = vsel %vm847, %v2967, 0
        %3232 = vmatprep.subr.bf16.mxu0 0
        %3233 = vmatpush1.bf16.msra.mxu0 %v3191
        %3234 = vmatprep.subr.bf16.mxu0 0
        %3235 = vmatpush1.bf16.msra.mxu0 %v3190
        %3236 = vmatprep.subr.bf16.mxu0 0
        %3237 = vmatpush1.bf16.msra.mxu0 %v3189
        %3238 = vmatprep.subr.bf16.mxu0 0
        %3239 = vmatpush1.bf16.msra.mxu0 %v3188
        %3240 = vmatprep.subr.bf16.mxu0 0
        %3241 = vmatpush1.bf16.msra.mxu0 %v3187
        %3242 = vmatprep.subr.bf16.mxu0 0
        %3243 = vmatpush1.bf16.msra.mxu0 %v3186
        %3244 = vmatprep.subr.bf16.mxu0 0
        %3245 = vmatpush1.bf16.msra.mxu0 %v3185
        %3246 = vmatprep.subr.bf16.mxu0 0
        %3247 = vmatpush1.bf16.msra.mxu0 %v3184
        %3248 = vmatprep.subr.bf16.mxu0 0
        %3249 = vmatpush2.bf16.msra.mxu0 %v3199
        %3250 = vmatprep.subr.bf16.mxu0 0
        %3251 = vmatpush2.bf16.msra.mxu0 %v3198
        %3252 = vmatprep.subr.bf16.mxu0 0
        %3253 = vmatpush2.bf16.msra.mxu0 %v3197
        %3254 = vmatprep.subr.bf16.mxu0 0
        %3255 = vmatpush2.bf16.msra.mxu0 %v3196
        %3256 = vmatprep.subr.bf16.mxu0 0
        %3257 = vmatpush2.bf16.msra.mxu0 %v3195
        %3258 = vmatprep.subr.bf16.mxu0 0
        %3259 = vmatpush2.bf16.msra.mxu0 %v3194
        %3260 = vmatprep.subr.bf16.mxu0 0
        %3261 = vmatpush2.bf16.msra.mxu0 %v3193
        %3262 = vmatprep.subr.bf16.mxu0 0
        %3263 = vmatpush2.bf16.msra.mxu0 %v3192
        %3264 = vmatprep.mubr.bf16.mxu0 %v3093
        %3265 = vmatmul.mubr.bf16.gmra.mxu0 %v3061
        %v3266 = vpop.f32.mrf.mxu0
        %v3267 = vadd.f32 %v3110, %v3266
        %v3268 = vpop.f32.mrf.mxu0
        %v3269 = vpop.f32.mrf.mxu0
        %v3270 = vadd.f32 %v3110, %v3269
        %v3271 = vpop.f32.mrf.mxu0
        %3272 = vmatprep.mubr.bf16.mxu0 %v3096
        %3273 = vmatmul.mubr.bf16.gmra.mxu0 %v3064
        %v3274 = vpop.f32.mrf.mxu0
        %v3275 = vadd.f32 %v3110, %v3274
        %v3276 = vpop.f32.mrf.mxu0
        %v3277 = vpop.f32.mrf.mxu0
        %v3278 = vadd.f32 %v3110, %v3277
        %v3279 = vpop.f32.mrf.mxu0
        %3280 = vmatprep.mubr.bf16.mxu0 %v3099
        %3281 = vmatmul.mubr.bf16.gmra.mxu0 %v3067
        %v3282 = vpop.f32.mrf.mxu0
        %v3283 = vadd.f32 %v3110, %v3282
        %v3284 = vpop.f32.mrf.mxu0
        %v3285 = vpop.f32.mrf.mxu0
        %v3286 = vadd.f32 %v3110, %v3285
        %v3287 = vpop.f32.mrf.mxu0
        %3288 = vmatprep.mubr.bf16.mxu0 %v3102
        %3289 = vmatmul.mubr.bf16.gmra.mxu0 %v3070
        %v3290 = vpop.f32.mrf.mxu0
        %v3291 = vadd.f32 %v3110, %v3290
        %v3292 = vpop.f32.mrf.mxu0
        %v3293 = vpop.f32.mrf.mxu0
        %v3294 = vadd.f32 %v3110, %v3293
        %v3295 = vpop.f32.mrf.mxu0
        %3296 = vdwg.mxu0
        %3297 = vmatprep.subr.bf16.mxu0 0
        %3298 = vmatpush1.bf16.msra.mxu0 0
        %3299 = vmatprep.subr.bf16.mxu0 0
        %3300 = vmatpush1.bf16.msra.mxu0 0
        %3301 = vmatprep.subr.bf16.mxu0 0
        %3302 = vmatpush1.bf16.msra.mxu0 0
        %3303 = vmatprep.subr.bf16.mxu0 0
        %3304 = vmatpush1.bf16.msra.mxu0 0
        %3305 = vmatprep.subr.bf16.mxu0 0
        %3306 = vmatpush1.bf16.msra.mxu0 0
        %3307 = vmatprep.subr.bf16.mxu0 0
        %3308 = vmatpush1.bf16.msra.mxu0 0
        %3309 = vmatprep.subr.bf16.mxu0 0
        %3310 = vmatpush1.bf16.msra.mxu0 %v3201
        %3311 = vmatprep.subr.bf16.mxu0 0
        %3312 = vmatpush1.bf16.msra.mxu0 %v3200
        %3313 = vmatprep.subr.bf16.mxu0 0
        %3314 = vmatpush2.bf16.msra.mxu0 0
        %3315 = vmatprep.subr.bf16.mxu0 0
        %3316 = vmatpush2.bf16.msra.mxu0 0
        %3317 = vmatprep.subr.bf16.mxu0 0
        %3318 = vmatpush2.bf16.msra.mxu0 0
        %3319 = vmatprep.subr.bf16.mxu0 0
        %3320 = vmatpush2.bf16.msra.mxu0 0
        %3321 = vmatprep.subr.bf16.mxu0 0
        %3322 = vmatpush2.bf16.msra.mxu0 0
        %3323 = vmatprep.subr.bf16.mxu0 0
        %3324 = vmatpush2.bf16.msra.mxu0 0
        %3325 = vmatprep.subr.bf16.mxu0 0
        %3326 = vmatpush2.bf16.msra.mxu0 0
        %3327 = vmatprep.subr.bf16.mxu0 0
        %3328 = vmatpush2.bf16.msra.mxu0 0
        %3329 = vmatprep.mubr.bf16.mxu0 0
        %3330 = vmatmul.mubr.bf16.gmra.mxu0 %v3221
        %v3331 = vpop.f32.mrf.mxu0
        %v3332 = vadd.f32 %v3267, %v3331
        %v3333 = vpop.f32.mrf.mxu0
        %v3334 = vpop.f32.mrf.mxu0
        %v3335 = vadd.f32 %v3270, %v3334
        %v3336 = vpop.f32.mrf.mxu0
        %3337 = vmatprep.mubr.bf16.mxu0 0
        %3338 = vmatmul.mubr.bf16.gmra.mxu0 %v3224
        %v3339 = vpop.f32.mrf.mxu0
        %v3340 = vadd.f32 %v3275, %v3339
        %v3341 = vpop.f32.mrf.mxu0
        %v3342 = vpop.f32.mrf.mxu0
        %v3343 = vadd.f32 %v3278, %v3342
        %v3344 = vpop.f32.mrf.mxu0
        %3345 = vmatprep.mubr.bf16.mxu0 0
        %3346 = vmatmul.mubr.bf16.gmra.mxu0 %v3227
        %v3347 = vpop.f32.mrf.mxu0
        %v3348 = vadd.f32 %v3283, %v3347
        %v3349 = vpop.f32.mrf.mxu0
        %v3350 = vpop.f32.mrf.mxu0
        %v3351 = vadd.f32 %v3286, %v3350
        %v3352 = vpop.f32.mrf.mxu0
        %3353 = vmatprep.mubr.bf16.mxu0 0
        %3354 = vmatmul.mubr.bf16.gmra.mxu0 %v3230
        %v3355 = vpop.f32.mrf.mxu0
        %v3356 = vadd.f32 %v3291, %v3355
        %v3357 = vpop.f32.mrf.mxu0
        %v3358 = vpop.f32.mrf.mxu0
        %v3359 = vadd.f32 %v3294, %v3358
        %v3360 = vpop.f32.mrf.mxu0
        %3361 = vdwg.mxu0
        %3362 = vst.msk [vmem:[%s763] sm:$0xff] %vm847, %v3332
        %3363 = vst.msk [vmem:[%s763 + $0x8] sm:$0xff] %vm847, %v3335
        %3364 = vst.msk [vmem:[%s763 + $0x10] sm:$0xff] %vm847, %v3340
        %3365 = vst.msk [vmem:[%s763 + $0x18] sm:$0xff] %vm847, %v3343
        %3366 = vst.msk [vmem:[%s763 + $0x20] sm:$0xff] %vm847, %v3348
        %3367 = vst.msk [vmem:[%s763 + $0x28] sm:$0xff] %vm847, %v3351
        %3368 = vst.msk [vmem:[%s763 + $0x30] sm:$0xff] %vm847, %v3356
        %3369 = vst.msk [vmem:[%s763 + $0x38] sm:$0xff] %vm847, %v3359
        %s3370 = scalar_lea.vmem %s802, 64
        %v3371 = vld [vmem:[%s3370] sm:$0xff]
        %v3372 = vld [vmem:[%s3370 + $0x8] sm:$0xff]
        %v3373 = vld [vmem:[%s3370 + $0x10] sm:$0xff]
        %v3374 = vld [vmem:[%s3370 + $0x18] sm:$0xff]
        %v3375 = vld [vmem:[%s3370 + $0x20] sm:$0xff]
        %v3376 = vld [vmem:[%s3370 + $0x28] sm:$0xff]
        %v3377 = vld [vmem:[%s3370 + $0x30] sm:$0xff]
        %v3378 = vld [vmem:[%s3370 + $0x38] sm:$0xff]
        %s3379 = scalar_lea.vmem %s6, 3
        %v3380 = vld [vmem:[%s3379] sm:$0x1]
        %s3381 = scalar_lea.vmem %s788, 3
        %v3382 = vld [vmem:[%s3381] sm:$0x1]
        %s3383 = scalar_lea.vmem %s792, 3
        %v3384 = vld [vmem:[%s3383] sm:$0x1]
        %v3386 = vlaneseq
        %v3387 = vshrl.u32 %v3386, 7
        %v3388 = vsub.s32 0, %v3387
        %v3389 = vrot.slane %v3380, %v3388
        %3392 = vset.pattern.permute.xlu0 0
        %3393 = vperm.xlu0 %3392, %v3371
        %v3394 = vpop.permute.xlu0 %3393
        %3397 = vset.pattern.permute.xlu0 0
        %3398 = vperm.xlu0 %3397, %v3372
        %v3399 = vpop.permute.xlu0 %3398
        %3402 = vset.pattern.permute.xlu0 0
        %3403 = vperm.xlu0 %3402, %v3373
        %v3404 = vpop.permute.xlu0 %3403
        %3407 = vset.pattern.permute.xlu0 0
        %3408 = vperm.xlu0 %3407, %v3374
        %v3409 = vpop.permute.xlu0 %3408
        %3412 = vset.pattern.permute.xlu0 0
        %3413 = vperm.xlu0 %3412, %v3375
        %v3414 = vpop.permute.xlu0 %3413
        %3417 = vset.pattern.permute.xlu0 0
        %3418 = vperm.xlu0 %3417, %v3376
        %v3419 = vpop.permute.xlu0 %3418
        %3422 = vset.pattern.permute.xlu0 0
        %3423 = vperm.xlu0 %3422, %v3377
        %v3424 = vpop.permute.xlu0 %3423
        %3427 = vset.pattern.permute.xlu0 0
        %3428 = vperm.xlu0 %3427, %v3378
        %v3429 = vpop.permute.xlu0 %3428
        %v3431 = vmul.f32 %v3389, %v3394
        %v3432 = vmul.f32 %v3389, %v3399
        %v3433 = vmul.f32 %v3389, %v3404
        %v3434 = vmul.f32 %v3389, %v3409
        %v3435 = vmul.f32 %v3389, %v3414
        %v3436 = vmul.f32 %v3389, %v3419
        %v3437 = vmul.f32 %v3389, %v3424
        %v3438 = vmul.f32 %v3389, %v3429
        %v3439 = vadd.f32 %v3332, %v3431
        %v3440 = vadd.f32 %v3335, %v3432
        %v3441 = vadd.f32 %v3340, %v3433
        %v3442 = vadd.f32 %v3343, %v3434
        %v3443 = vadd.f32 %v3348, %v3435
        %v3444 = vadd.f32 %v3351, %v3436
        %v3445 = vadd.f32 %v3356, %v3437
        %v3446 = vadd.f32 %v3359, %v3438
        %vm3447 = vcmp.ge.f32.partialorder %v3439, 0.0
        %vm3448 = vcmp.ge.f32.partialorder %v3440, 0.0
        %vm3449 = vcmp.ge.f32.partialorder %v3441, 0.0
        %vm3450 = vcmp.ge.f32.partialorder %v3442, 0.0
        %vm3451 = vcmp.ge.f32.partialorder %v3443, 0.0
        %vm3452 = vcmp.ge.f32.partialorder %v3444, 0.0
        %vm3453 = vcmp.ge.f32.partialorder %v3445, 0.0
        %vm3454 = vcmp.ge.f32.partialorder %v3446, 0.0
        %v3455 = vmul.f32 %v3439, 0.2
        %v3456 = vmul.f32 %v3440, 0.2
        %v3457 = vmul.f32 %v3441, 0.2
        %v3458 = vmul.f32 %v3442, 0.2
        %v3459 = vmul.f32 %v3443, 0.2
        %v3460 = vmul.f32 %v3444, 0.2
        %v3461 = vmul.f32 %v3445, 0.2
        %v3462 = vmul.f32 %v3446, 0.2
        %v3463 = vsel %vm3447, %v3439, %v3455
        %v3464 = vsel %vm3448, %v3440, %v3456
        %v3465 = vsel %vm3449, %v3441, %v3457
        %v3466 = vsel %vm3450, %v3442, %v3458
        %v3467 = vsel %vm3451, %v3443, %v3459
        %v3468 = vsel %vm3452, %v3444, %v3460
        %v3469 = vsel %vm3453, %v3445, %v3461
        %v3470 = vsel %vm3454, %v3446, %v3462
        %v3471 = vsel %vm847, %v3463, 0.0
        %v3472 = vsel %vm847, %v3464, 0.0
        %v3473 = vadd.f32 %v3471, %v3472
        %v3474 = vsel %vm847, %v3465, 0.0
        %v3475 = vadd.f32 %v3473, %v3474
        %v3476 = vsel %vm847, %v3466, 0.0
        %v3477 = vadd.f32 %v3475, %v3476
        %v3478 = vsel %vm847, %v3467, 0.0
        %v3479 = vadd.f32 %v3477, %v3478
        %v3480 = vsel %vm847, %v3468, 0.0
        %v3481 = vadd.f32 %v3479, %v3480
        %v3482 = vsel %vm847, %v3469, 0.0
        %v3483 = vadd.f32 %v3481, %v3482
        %v3484 = vsel %vm847, %v3470, 0.0
        %v3485 = vadd.f32 %v3483, %v3484
        %v3486 = vrot.slane %v3485, 4
        %v3487 = vadd.f32 %v3485, %v3486
        %v3488 = vrot.slane %v3487, 2
        %v3489 = vadd.f32 %v3487, %v3488
        %v3490 = vrot.slane %v3489, 1
        %v3491 = vadd.f32 %v3489, %v3490
        %v3492 = vmul.f32 %v3491, %v2721
        %v3493 = vsub.f32 %v3463, %v3492
        %v3494 = vsub.f32 %v3464, %v3492
        %v3495 = vsub.f32 %v3465, %v3492
        %v3496 = vsub.f32 %v3466, %v3492
        %v3497 = vsub.f32 %v3467, %v3492
        %v3498 = vsub.f32 %v3468, %v3492
        %v3499 = vsub.f32 %v3469, %v3492
        %v3500 = vsub.f32 %v3470, %v3492
        %v3501 = vmul.f32 %v3493, %v3493
        %v3502 = vmul.f32 %v3494, %v3494
        %v3503 = vmul.f32 %v3495, %v3495
        %v3504 = vmul.f32 %v3496, %v3496
        %v3505 = vmul.f32 %v3497, %v3497
        %v3506 = vmul.f32 %v3498, %v3498
        %v3507 = vmul.f32 %v3499, %v3499
        %v3508 = vmul.f32 %v3500, %v3500
        %v3509 = vsel %vm847, %v3501, 0.0
        %v3510 = vsel %vm847, %v3502, 0.0
        %v3511 = vadd.f32 %v3509, %v3510
        %v3512 = vsel %vm847, %v3503, 0.0
        %v3513 = vadd.f32 %v3511, %v3512
        %v3514 = vsel %vm847, %v3504, 0.0
        %v3515 = vadd.f32 %v3513, %v3514
        %v3516 = vsel %vm847, %v3505, 0.0
        %v3517 = vadd.f32 %v3515, %v3516
        %v3518 = vsel %vm847, %v3506, 0.0
        %v3519 = vadd.f32 %v3517, %v3518
        %v3520 = vsel %vm847, %v3507, 0.0
        %v3521 = vadd.f32 %v3519, %v3520
        %v3522 = vsel %vm847, %v3508, 0.0
        %v3523 = vadd.f32 %v3521, %v3522
        %v3524 = vrot.slane %v3523, 4
        %v3525 = vadd.f32 %v3523, %v3524
        %v3526 = vrot.slane %v3525, 2
        %v3527 = vadd.f32 %v3525, %v3526
        %v3528 = vrot.slane %v3527, 1
        %v3529 = vadd.f32 %v3527, %v3528
        %v3530 = vmul.f32 %v3529, %v2721
        %v3531 = vadd.f32 %v3530, 1e-05
        %v3532 = vrsqrt.pop %v3531
        %v3533 = vmul.f32 %v3493, %v3532
        %v3534 = vmul.f32 %v3494, %v3532
        %v3535 = vmul.f32 %v3495, %v3532
        %v3536 = vmul.f32 %v3496, %v3532
        %v3537 = vmul.f32 %v3497, %v3532
        %v3538 = vmul.f32 %v3498, %v3532
        %v3539 = vmul.f32 %v3499, %v3532
        %v3540 = vmul.f32 %v3500, %v3532
        %v3542 = vlaneseq
        %v3543 = vshrl.u32 %v3542, 7
        %v3544 = vsub.s32 0, %v3543
        %v3545 = vrot.slane %v3382, %v3544
        %v3547 = vmul.f32 %v3533, %v3545
        %v3548 = vmul.f32 %v3534, %v3545
        %v3549 = vmul.f32 %v3535, %v3545
        %v3550 = vmul.f32 %v3536, %v3545
        %v3551 = vmul.f32 %v3537, %v3545
        %v3552 = vmul.f32 %v3538, %v3545
        %v3553 = vmul.f32 %v3539, %v3545
        %v3554 = vmul.f32 %v3540, %v3545
        %v3556 = vlaneseq
        %v3557 = vshrl.u32 %v3556, 7
        %v3558 = vsub.s32 0, %v3557
        %v3559 = vrot.slane %v3384, %v3558
        %v3561 = vadd.f32 %v3547, %v3559
        %v3562 = vadd.f32 %v3548, %v3559
        %v3563 = vadd.f32 %v3549, %v3559
        %v3564 = vadd.f32 %v3550, %v3559
        %v3565 = vadd.f32 %v3551, %v3559
        %v3566 = vadd.f32 %v3552, %v3559
        %v3567 = vadd.f32 %v3553, %v3559
        %v3568 = vadd.f32 %v3554, %v3559
        %3569 = vst.msk [vmem:[%s756] sm:$0xff] %vm847, %v3561
        %3570 = vst.msk [vmem:[%s756 + $0x8] sm:$0xff] %vm847, %v3562
        %3571 = vst.msk [vmem:[%s756 + $0x10] sm:$0xff] %vm847, %v3563
        %3572 = vst.msk [vmem:[%s756 + $0x18] sm:$0xff] %vm847, %v3564
        %3573 = vst.msk [vmem:[%s756 + $0x20] sm:$0xff] %vm847, %v3565
        %3574 = vst.msk [vmem:[%s756 + $0x28] sm:$0xff] %vm847, %v3566
        %3575 = vst.msk [vmem:[%s756 + $0x30] sm:$0xff] %vm847, %v3567
        %3576 = vst.msk [vmem:[%s756 + $0x38] sm:$0xff] %vm847, %v3568
        %v3577 = vld [vmem:[%s12] sm:$0xf]
        %v3578 = vld [vmem:[%s12 + $0x4] sm:$0xf]
        %v3579 = vld [vmem:[%s12 + $0x8] sm:$0xf]
        %v3580 = vld [vmem:[%s12 + $0xc] sm:$0xf]
        %v3581 = vld [vmem:[%s12 + $0x10] sm:$0xf]
        %v3582 = vld [vmem:[%s12 + $0x14] sm:$0xf]
        %v3583 = vld [vmem:[%s12 + $0x18] sm:$0xf]
        %v3584 = vld [vmem:[%s12 + $0x1c] sm:$0xf]
        %v3585 = vld [vmem:[%s12 + $0x20] sm:$0xf]
        %v3586 = vld [vmem:[%s12 + $0x24] sm:$0xf]
        %v3587 = vld [vmem:[%s12 + $0x28] sm:$0xf]
        %v3588 = vld [vmem:[%s12 + $0x2c] sm:$0xf]
        %v3589 = vld [vmem:[%s12 + $0x30] sm:$0xf]
        %v3590 = vld [vmem:[%s12 + $0x34] sm:$0xf]
        %v3591 = vld [vmem:[%s12 + $0x38] sm:$0xf]
        %v3592 = vld [vmem:[%s12 + $0x3c] sm:$0xf]
        %v3593 = vld [vmem:[%s12 + $0x40] sm:$0xf]
        %v3594 = vld [vmem:[%s12 + $0x44] sm:$0xf]
        %v3595 = vld [vmem:[%s12 + $0x48] sm:$0xf]
        %v3596 = vld [vmem:[%s12 + $0x4c] sm:$0xf]
        %v3597 = vld [vmem:[%s12 + $0x50] sm:$0xf]
        %v3598 = vld [vmem:[%s12 + $0x54] sm:$0xf]
        %v3599 = vld [vmem:[%s12 + $0x58] sm:$0xf]
        %v3600 = vld [vmem:[%s12 + $0x5c] sm:$0xf]
        %v3601 = vld [vmem:[%s12 + $0x60] sm:$0xf]
        %v3602 = vld [vmem:[%s12 + $0x64] sm:$0xf]
        %v3603 = vld [vmem:[%s12 + $0x68] sm:$0xf]
        %v3604 = vld [vmem:[%s12 + $0x6c] sm:$0xf]
        %v3605 = vld [vmem:[%s12 + $0x70] sm:$0xf]
        %v3606 = vld [vmem:[%s12 + $0x74] sm:$0xf]
        %v3607 = vld [vmem:[%s12 + $0x78] sm:$0xf]
        %v3608 = vld [vmem:[%s12 + $0x7c] sm:$0xf]
        %v3609 = vpack.c.bf16 %v3562, %v3561
        %v3610 = vpack.c.bf16 %v3564, %v3563
        %v3611 = vpack.c.bf16 %v3566, %v3565
        %v3612 = vpack.c.bf16 %v3568, %v3567
        %v3645 = vunpack.c.l.b16 %v3577
        %v3646 = vunpack.c.l.b16 %v3578
        %v3647 = vunpack.c.l.b16 %v3579
        %v3648 = vunpack.c.l.b16 %v3580
        %v3649 = vunpack.c.l.b16 %v3581
        %v3650 = vunpack.c.l.b16 %v3582
        %v3651 = vunpack.c.l.b16 %v3583
        %v3652 = vunpack.c.l.b16 %v3584
        %v3653 = vunpack.c.l.b16 %v3585
        %v3654 = vunpack.c.l.b16 %v3586
        %v3655 = vunpack.c.l.b16 %v3587
        %v3656 = vunpack.c.l.b16 %v3588
        %v3657 = vunpack.c.l.b16 %v3589
        %v3658 = vunpack.c.l.b16 %v3590
        %v3659 = vunpack.c.l.b16 %v3591
        %v3660 = vunpack.c.l.b16 %v3592
        %v3661 = vunpack.c.l.b16 %v3593
        %v3662 = vunpack.c.l.b16 %v3594
        %v3663 = vunpack.c.l.b16 %v3595
        %v3664 = vunpack.c.l.b16 %v3596
        %v3665 = vunpack.c.l.b16 %v3597
        %v3666 = vunpack.c.l.b16 %v3598
        %v3667 = vunpack.c.l.b16 %v3599
        %v3668 = vunpack.c.l.b16 %v3600
        %v3669 = vunpack.c.l.b16 %v3601
        %v3670 = vunpack.c.l.b16 %v3602
        %v3671 = vunpack.c.l.b16 %v3603
        %v3672 = vunpack.c.l.b16 %v3604
        %v3673 = vunpack.c.l.b16 %v3605
        %v3674 = vunpack.c.l.b16 %v3606
        %v3675 = vunpack.c.l.b16 %v3607
        %v3676 = vunpack.c.l.b16 %v3608
        %v3677 = vpack.c.b16 %v3646, %v3645
        %v3678 = vpack.c.b16 %v3648, %v3647
        %v3679 = vpack.c.b16 %v3650, %v3649
        %v3680 = vpack.c.b16 %v3652, %v3651
        %v3681 = vpack.c.b16 %v3654, %v3653
        %v3682 = vpack.c.b16 %v3656, %v3655
        %v3683 = vpack.c.b16 %v3658, %v3657
        %v3684 = vpack.c.b16 %v3660, %v3659
        %v3685 = vpack.c.b16 %v3662, %v3661
        %v3686 = vpack.c.b16 %v3664, %v3663
        %v3687 = vpack.c.b16 %v3666, %v3665
        %v3688 = vpack.c.b16 %v3668, %v3667
        %v3689 = vpack.c.b16 %v3670, %v3669
        %v3690 = vpack.c.b16 %v3672, %v3671
        %v3691 = vpack.c.b16 %v3674, %v3673
        %v3692 = vpack.c.b16 %v3676, %v3675
        %v3694 = vsel %vm1105, %v3677, 0
        %v3697 = vsel %vm1105, %v3678, 0
        %v3700 = vsel %vm1105, %v3679, 0
        %v3703 = vsel %vm1105, %v3680, 0
        %v3706 = vsel %vm1105, %v3681, 0
        %v3709 = vsel %vm1105, %v3682, 0
        %v3712 = vsel %vm1105, %v3683, 0
        %v3715 = vsel %vm1105, %v3684, 0
        %v3718 = vsel %vm1105, %v3685, 0
        %v3721 = vsel %vm1105, %v3686, 0
        %v3724 = vsel %vm1105, %v3687, 0
        %v3727 = vsel %vm1105, %v3688, 0
        %v3730 = vsel %vm1105, %v3689, 0
        %v3733 = vsel %vm1105, %v3690, 0
        %v3736 = vsel %vm1105, %v3691, 0
        %v3739 = vsel %vm1105, %v3692, 0
        %3741 = vmatprep.subr.bf16.mxu0 0
        %3742 = vmatpush1.bf16.msra.mxu0 0
        %3743 = vmatprep.subr.bf16.mxu0 0
        %3744 = vmatpush1.bf16.msra.mxu0 0
        %3745 = vmatprep.subr.bf16.mxu0 0
        %3746 = vmatpush1.bf16.msra.mxu0 0
        %3747 = vmatprep.subr.bf16.mxu0 0
        %3748 = vmatpush1.bf16.msra.mxu0 0
        %3749 = vmatprep.subr.bf16.mxu0 0
        %3750 = vmatpush1.bf16.msra.mxu0 %v3612
        %3751 = vmatprep.subr.bf16.mxu0 0
        %3752 = vmatpush1.bf16.msra.mxu0 %v3611
        %3753 = vmatprep.subr.bf16.mxu0 0
        %3754 = vmatpush1.bf16.msra.mxu0 %v3610
        %3755 = vmatprep.subr.bf16.mxu0 0
        %3756 = vmatpush1.bf16.msra.mxu0 %v3609
        %3757 = vmatprep.subr.bf16.mxu0 0
        %3758 = vmatpush2.bf16.msra.mxu0 0
        %3759 = vmatprep.subr.bf16.mxu0 0
        %3760 = vmatpush2.bf16.msra.mxu0 0
        %3761 = vmatprep.subr.bf16.mxu0 0
        %3762 = vmatpush2.bf16.msra.mxu0 0
        %3763 = vmatprep.subr.bf16.mxu0 0
        %3764 = vmatpush2.bf16.msra.mxu0 0
        %3765 = vmatprep.subr.bf16.mxu0 0
        %3766 = vmatpush2.bf16.msra.mxu0 0
        %3767 = vmatprep.subr.bf16.mxu0 0
        %3768 = vmatpush2.bf16.msra.mxu0 0
        %3769 = vmatprep.subr.bf16.mxu0 0
        %3770 = vmatpush2.bf16.msra.mxu0 0
        %3771 = vmatprep.subr.bf16.mxu0 0
        %3772 = vmatpush2.bf16.msra.mxu0 0
        %3773 = vmatprep.mubr.bf16.mxu0 0
        %3774 = vmatmul.mubr.bf16.gmra.mxu0 %v3694
        %v3775 = vpop.f32.mrf.mxu0
        %v3776 = vadd.f32 0.0, %v3775
        %v3777 = vpop.f32.mrf.mxu0
        %v3778 = vpop.f32.mrf.mxu0
        %v3779 = vadd.f32 0.0, %v3778
        %v3780 = vpop.f32.mrf.mxu0
        %3781 = vmatprep.mubr.bf16.mxu0 0
        %3782 = vmatmul.mubr.bf16.gmra.mxu0 %v3697
        %v3783 = vpop.f32.mrf.mxu0
        %v3784 = vadd.f32 0.0, %v3783
        %v3785 = vpop.f32.mrf.mxu0
        %v3786 = vpop.f32.mrf.mxu0
        %v3787 = vadd.f32 0.0, %v3786
        %v3788 = vpop.f32.mrf.mxu0
        %3789 = vmatprep.mubr.bf16.mxu0 0
        %3790 = vmatmul.mubr.bf16.gmra.mxu0 %v3700
        %v3791 = vpop.f32.mrf.mxu0
        %v3792 = vadd.f32 0.0, %v3791
        %v3793 = vpop.f32.mrf.mxu0
        %v3794 = vpop.f32.mrf.mxu0
        %v3795 = vadd.f32 0.0, %v3794
        %v3796 = vpop.f32.mrf.mxu0
        %3797 = vmatprep.mubr.bf16.mxu0 0
        %3798 = vmatmul.mubr.bf16.gmra.mxu0 %v3703
        %v3799 = vpop.f32.mrf.mxu0
        %v3800 = vadd.f32 0.0, %v3799
        %v3801 = vpop.f32.mrf.mxu0
        %v3802 = vpop.f32.mrf.mxu0
        %v3803 = vadd.f32 0.0, %v3802
        %v3804 = vpop.f32.mrf.mxu0
        %3805 = vmatprep.mubr.bf16.mxu0 0
        %3806 = vmatmul.mubr.bf16.gmra.mxu0 %v3706
        %v3807 = vpop.f32.mrf.mxu0
        %v3808 = vadd.f32 0.0, %v3807
        %v3809 = vpop.f32.mrf.mxu0
        %v3810 = vpop.f32.mrf.mxu0
        %v3811 = vadd.f32 0.0, %v3810
        %v3812 = vpop.f32.mrf.mxu0
        %3813 = vmatprep.mubr.bf16.mxu0 0
        %3814 = vmatmul.mubr.bf16.gmra.mxu0 %v3709
        %v3815 = vpop.f32.mrf.mxu0
        %v3816 = vadd.f32 0.0, %v3815
        %v3817 = vpop.f32.mrf.mxu0
        %v3818 = vpop.f32.mrf.mxu0
        %v3819 = vadd.f32 0.0, %v3818
        %v3820 = vpop.f32.mrf.mxu0
        %3821 = vmatprep.mubr.bf16.mxu0 0
        %3822 = vmatmul.mubr.bf16.gmra.mxu0 %v3712
        %v3823 = vpop.f32.mrf.mxu0
        %v3824 = vadd.f32 0.0, %v3823
        %v3825 = vpop.f32.mrf.mxu0
        %v3826 = vpop.f32.mrf.mxu0
        %v3827 = vadd.f32 0.0, %v3826
        %v3828 = vpop.f32.mrf.mxu0
        %3829 = vmatprep.mubr.bf16.mxu0 0
        %3830 = vmatmul.mubr.bf16.gmra.mxu0 %v3715
        %v3831 = vpop.f32.mrf.mxu0
        %v3832 = vadd.f32 0.0, %v3831
        %v3833 = vpop.f32.mrf.mxu0
        %v3834 = vpop.f32.mrf.mxu0
        %v3835 = vadd.f32 0.0, %v3834
        %v3836 = vpop.f32.mrf.mxu0
        %3837 = vmatprep.mubr.bf16.mxu0 0
        %3838 = vmatmul.mubr.bf16.gmra.mxu0 %v3718
        %v3839 = vpop.f32.mrf.mxu0
        %v3840 = vadd.f32 0.0, %v3839
        %v3841 = vpop.f32.mrf.mxu0
        %v3842 = vpop.f32.mrf.mxu0
        %v3843 = vadd.f32 0.0, %v3842
        %v3844 = vpop.f32.mrf.mxu0
        %3845 = vmatprep.mubr.bf16.mxu0 0
        %3846 = vmatmul.mubr.bf16.gmra.mxu0 %v3721
        %v3847 = vpop.f32.mrf.mxu0
        %v3848 = vadd.f32 0.0, %v3847
        %v3849 = vpop.f32.mrf.mxu0
        %v3850 = vpop.f32.mrf.mxu0
        %v3851 = vadd.f32 0.0, %v3850
        %v3852 = vpop.f32.mrf.mxu0
        %3853 = vmatprep.mubr.bf16.mxu0 0
        %3854 = vmatmul.mubr.bf16.gmra.mxu0 %v3724
        %v3855 = vpop.f32.mrf.mxu0
        %v3856 = vadd.f32 0.0, %v3855
        %v3857 = vpop.f32.mrf.mxu0
        %v3858 = vpop.f32.mrf.mxu0
        %v3859 = vadd.f32 0.0, %v3858
        %v3860 = vpop.f32.mrf.mxu0
        %3861 = vmatprep.mubr.bf16.mxu0 0
        %3862 = vmatmul.mubr.bf16.gmra.mxu0 %v3727
        %v3863 = vpop.f32.mrf.mxu0
        %v3864 = vadd.f32 0.0, %v3863
        %v3865 = vpop.f32.mrf.mxu0
        %v3866 = vpop.f32.mrf.mxu0
        %v3867 = vadd.f32 0.0, %v3866
        %v3868 = vpop.f32.mrf.mxu0
        %3869 = vmatprep.mubr.bf16.mxu0 0
        %3870 = vmatmul.mubr.bf16.gmra.mxu0 %v3730
        %v3871 = vpop.f32.mrf.mxu0
        %v3872 = vadd.f32 0.0, %v3871
        %v3873 = vpop.f32.mrf.mxu0
        %v3874 = vpop.f32.mrf.mxu0
        %v3875 = vadd.f32 0.0, %v3874
        %v3876 = vpop.f32.mrf.mxu0
        %3877 = vmatprep.mubr.bf16.mxu0 0
        %3878 = vmatmul.mubr.bf16.gmra.mxu0 %v3733
        %v3879 = vpop.f32.mrf.mxu0
        %v3880 = vadd.f32 0.0, %v3879
        %v3881 = vpop.f32.mrf.mxu0
        %v3882 = vpop.f32.mrf.mxu0
        %v3883 = vadd.f32 0.0, %v3882
        %v3884 = vpop.f32.mrf.mxu0
        %3885 = vmatprep.mubr.bf16.mxu0 0
        %3886 = vmatmul.mubr.bf16.gmra.mxu0 %v3736
        %v3887 = vpop.f32.mrf.mxu0
        %v3888 = vadd.f32 0.0, %v3887
        %v3889 = vpop.f32.mrf.mxu0
        %v3890 = vpop.f32.mrf.mxu0
        %v3891 = vadd.f32 0.0, %v3890
        %v3892 = vpop.f32.mrf.mxu0
        %3893 = vmatprep.mubr.bf16.mxu0 0
        %3894 = vmatmul.mubr.bf16.gmra.mxu0 %v3739
        %v3895 = vpop.f32.mrf.mxu0
        %v3896 = vadd.f32 0.0, %v3895
        %v3897 = vpop.f32.mrf.mxu0
        %v3898 = vpop.f32.mrf.mxu0
        %v3899 = vadd.f32 0.0, %v3898
        %v3900 = vpop.f32.mrf.mxu0
        %3901 = vdwg.mxu0
        %s3902 = scalar_lea.vmem %s7, 432
        %v3903 = vld [vmem:[%s3902] sm:$0xf]
        %v3904 = vld [vmem:[%s3902 + $0x4] sm:$0xf]
        %v3905 = vld [vmem:[%s3902 + $0x8] sm:$0xf]
        %v3906 = vld [vmem:[%s3902 + $0xc] sm:$0xf]
        %v3907 = vld [vmem:[%s3902 + $0x10] sm:$0xf]
        %v3908 = vld [vmem:[%s3902 + $0x14] sm:$0xf]
        %v3909 = vld [vmem:[%s3902 + $0x18] sm:$0xf]
        %v3910 = vld [vmem:[%s3902 + $0x1c] sm:$0xf]
        %v3911 = vld [vmem:[%s3902 + $0x20] sm:$0xf]
        %v3912 = vld [vmem:[%s3902 + $0x24] sm:$0xf]
        %v3913 = vld [vmem:[%s3902 + $0x28] sm:$0xf]
        %v3914 = vld [vmem:[%s3902 + $0x2c] sm:$0xf]
        %v3915 = vld [vmem:[%s3902 + $0x30] sm:$0xf]
        %v3916 = vld [vmem:[%s3902 + $0x34] sm:$0xf]
        %v3917 = vld [vmem:[%s3902 + $0x38] sm:$0xf]
        %v3918 = vld [vmem:[%s3902 + $0x3c] sm:$0xf]
        %v3919 = vld [vmem:[%s3902 + $0x40] sm:$0xf]
        %v3920 = vld [vmem:[%s3902 + $0x44] sm:$0xf]
        %v3921 = vld [vmem:[%s3902 + $0x48] sm:$0xf]
        %v3922 = vld [vmem:[%s3902 + $0x4c] sm:$0xf]
        %v3923 = vld [vmem:[%s3902 + $0x50] sm:$0xf]
        %v3924 = vld [vmem:[%s3902 + $0x54] sm:$0xf]
        %v3925 = vld [vmem:[%s3902 + $0x58] sm:$0xf]
        %v3926 = vld [vmem:[%s3902 + $0x5c] sm:$0xf]
        %v3927 = vld [vmem:[%s3902 + $0x60] sm:$0xf]
        %v3928 = vld [vmem:[%s3902 + $0x64] sm:$0xf]
        %v3929 = vld [vmem:[%s3902 + $0x68] sm:$0xf]
        %v3930 = vld [vmem:[%s3902 + $0x6c] sm:$0xf]
        %v3931 = vld [vmem:[%s3902 + $0x70] sm:$0xf]
        %v3932 = vld [vmem:[%s3902 + $0x74] sm:$0xf]
        %v3933 = vld [vmem:[%s3902 + $0x78] sm:$0xf]
        %v3934 = vld [vmem:[%s3902 + $0x7c] sm:$0xf]
        %v3935 = vld [vmem:[%s3902 + $0x80] sm:$0xf]
        %v3936 = vld [vmem:[%s3902 + $0x84] sm:$0xf]
        %v3937 = vld [vmem:[%s3902 + $0x88] sm:$0xf]
        %v3938 = vld [vmem:[%s3902 + $0x8c] sm:$0xf]
        %v3939 = vrot.slane %v3776, 7
        %v3940 = vrot.slane %v3779, 7
        %v3941 = vrot.slane %v3784, 7
        %v3942 = vrot.slane %v3787, 7
        %v3943 = vrot.slane %v3792, 7
        %v3944 = vrot.slane %v3795, 7
        %v3945 = vrot.slane %v3800, 7
        %v3946 = vrot.slane %v3803, 7
        %v3947 = vrot.slane %v3808, 7
        %v3948 = vrot.slane %v3811, 7
        %v3949 = vrot.slane %v3816, 7
        %v3950 = vrot.slane %v3819, 7
        %v3951 = vrot.slane %v3824, 7
        %v3952 = vrot.slane %v3827, 7
        %v3953 = vrot.slane %v3832, 7
        %v3954 = vrot.slane %v3835, 7
        %v3955 = vrot.slane %v3840, 7
        %v3956 = vrot.slane %v3843, 7
        %v3957 = vrot.slane %v3848, 7
        %v3958 = vrot.slane %v3851, 7
        %v3959 = vrot.slane %v3856, 7
        %v3960 = vrot.slane %v3859, 7
        %v3961 = vrot.slane %v3864, 7
        %v3962 = vrot.slane %v3867, 7
        %v3963 = vrot.slane %v3872, 7
        %v3964 = vrot.slane %v3875, 7
        %v3965 = vrot.slane %v3880, 7
        %v3966 = vrot.slane %v3883, 7
        %v3967 = vrot.slane %v3888, 7
        %v3968 = vrot.slane %v3891, 7
        %v3969 = vrot.slane %v3896, 7
        %v3970 = vrot.slane %v3899, 7
        %v3971 = vsel %vm995, %v3969, %v3970
        %v3972 = vsel %vm995, %v3968, %v3969
        %v3973 = vsel %vm995, %v3967, %v3968
        %v3974 = vsel %vm995, %v3966, %v3967
        %v3975 = vsel %vm995, %v3965, %v3966
        %v3976 = vsel %vm995, %v3964, %v3965
        %v3977 = vsel %vm995, %v3963, %v3964
        %v3978 = vsel %vm995, %v3962, %v3963
        %v3979 = vsel %vm995, %v3961, %v3962
        %v3980 = vsel %vm995, %v3960, %v3961
        %v3981 = vsel %vm995, %v3959, %v3960
        %v3982 = vsel %vm995, %v3958, %v3959
        %v3983 = vsel %vm995, %v3957, %v3958
        %v3984 = vsel %vm995, %v3956, %v3957
        %v3985 = vsel %vm995, %v3955, %v3956
        %v3986 = vsel %vm995, %v3954, %v3955
        %v3987 = vsel %vm995, %v3953, %v3954
        %v3988 = vsel %vm995, %v3952, %v3953
        %v3989 = vsel %vm995, %v3951, %v3952
        %v3990 = vsel %vm995, %v3950, %v3951
        %v3991 = vsel %vm995, %v3949, %v3950
        %v3992 = vsel %vm995, %v3948, %v3949
        %v3993 = vsel %vm995, %v3947, %v3948
        %v3994 = vsel %vm995, %v3946, %v3947
        %v3995 = vsel %vm995, %v3945, %v3946
        %v3996 = vsel %vm995, %v3944, %v3945
        %v3997 = vsel %vm995, %v3943, %v3944
        %v3998 = vsel %vm995, %v3942, %v3943
        %v3999 = vsel %vm995, %v3941, %v3942
        %v4000 = vsel %vm995, %v3940, %v3941
        %v4001 = vsel %vm995, %v3939, %v3940
        %v4002 = vsel %vm995, %v3970, %v3939
        %v4003 = vld [vmem:[%s15] sm:$0xff]
        %v4004 = vld [vmem:[%s15 + $0x8] sm:$0xff]
        %v4005 = vld [vmem:[%s15 + $0x10] sm:$0xff]
        %v4006 = vld [vmem:[%s15 + $0x18] sm:$0xff]
        %v4007 = vld [vmem:[%s15 + $0x20] sm:$0xff]
        %v4008 = vld [vmem:[%s15 + $0x28] sm:$0xff]
        %v4009 = vld [vmem:[%s15 + $0x30] sm:$0xff]
        %v4010 = vld [vmem:[%s15 + $0x38] sm:$0xff]
        %v4011 = vld [vmem:[%s15 + $0x40] sm:$0xff]
        %v4012 = vld [vmem:[%s15 + $0x48] sm:$0xff]
        %v4013 = vld [vmem:[%s15 + $0x50] sm:$0xff]
        %v4014 = vld [vmem:[%s15 + $0x58] sm:$0xff]
        %v4015 = vld [vmem:[%s15 + $0x60] sm:$0xff]
        %v4016 = vld [vmem:[%s15 + $0x68] sm:$0xff]
        %v4017 = vld [vmem:[%s15 + $0x70] sm:$0xff]
        %v4018 = vld [vmem:[%s15 + $0x78] sm:$0xff]
        %v4019 = vld [vmem:[%s15 + $0x80] sm:$0xff]
        %v4020 = vld [vmem:[%s15 + $0x88] sm:$0xff]
        %v4021 = vld [vmem:[%s15 + $0x90] sm:$0xff]
        %v4022 = vld [vmem:[%s15 + $0x98] sm:$0xff]
        %v4023 = vld [vmem:[%s15 + $0xa0] sm:$0xff]
        %v4024 = vld [vmem:[%s15 + $0xa8] sm:$0xff]
        %v4025 = vld [vmem:[%s15 + $0xb0] sm:$0xff]
        %v4026 = vld [vmem:[%s15 + $0xb8] sm:$0xff]
        %v4027 = vld [vmem:[%s15 + $0xc0] sm:$0xff]
        %v4028 = vld [vmem:[%s15 + $0xc8] sm:$0xff]
        %v4029 = vld [vmem:[%s15 + $0xd0] sm:$0xff]
        %v4030 = vld [vmem:[%s15 + $0xd8] sm:$0xff]
        %v4031 = vld [vmem:[%s15 + $0xe0] sm:$0xff]
        %v4032 = vld [vmem:[%s15 + $0xe8] sm:$0xff]
        %v4033 = vld [vmem:[%s15 + $0xf0] sm:$0xff]
        %v4034 = vld [vmem:[%s15 + $0xf8] sm:$0xff]
        %4036 = vset.pattern.permute.xlu0 0
        %4037 = vperm.xlu0 %4036, %v4003
        %v4038 = vpop.permute.xlu0 %4037
        %4041 = vset.pattern.permute.xlu0 0
        %4042 = vperm.xlu0 %4041, %v4004
        %v4043 = vpop.permute.xlu0 %4042
        %4046 = vset.pattern.permute.xlu0 0
        %4047 = vperm.xlu0 %4046, %v4005
        %v4048 = vpop.permute.xlu0 %4047
        %4051 = vset.pattern.permute.xlu0 0
        %4052 = vperm.xlu0 %4051, %v4006
        %v4053 = vpop.permute.xlu0 %4052
        %4056 = vset.pattern.permute.xlu0 0
        %4057 = vperm.xlu0 %4056, %v4007
        %v4058 = vpop.permute.xlu0 %4057
        %4061 = vset.pattern.permute.xlu0 0
        %4062 = vperm.xlu0 %4061, %v4008
        %v4063 = vpop.permute.xlu0 %4062
        %4066 = vset.pattern.permute.xlu0 0
        %4067 = vperm.xlu0 %4066, %v4009
        %v4068 = vpop.permute.xlu0 %4067
        %4071 = vset.pattern.permute.xlu0 0
        %4072 = vperm.xlu0 %4071, %v4010
        %v4073 = vpop.permute.xlu0 %4072
        %4076 = vset.pattern.permute.xlu0 0
        %4077 = vperm.xlu0 %4076, %v4011
        %v4078 = vpop.permute.xlu0 %4077
        %4081 = vset.pattern.permute.xlu0 0
        %4082 = vperm.xlu0 %4081, %v4012
        %v4083 = vpop.permute.xlu0 %4082
        %4086 = vset.pattern.permute.xlu0 0
        %4087 = vperm.xlu0 %4086, %v4013
        %v4088 = vpop.permute.xlu0 %4087
        %4091 = vset.pattern.permute.xlu0 0
        %4092 = vperm.xlu0 %4091, %v4014
        %v4093 = vpop.permute.xlu0 %4092
        %4096 = vset.pattern.permute.xlu0 0
        %4097 = vperm.xlu0 %4096, %v4015
        %v4098 = vpop.permute.xlu0 %4097
        %4101 = vset.pattern.permute.xlu0 0
        %4102 = vperm.xlu0 %4101, %v4016
        %v4103 = vpop.permute.xlu0 %4102
        %4106 = vset.pattern.permute.xlu0 0
        %4107 = vperm.xlu0 %4106, %v4017
        %v4108 = vpop.permute.xlu0 %4107
        %4111 = vset.pattern.permute.xlu0 0
        %4112 = vperm.xlu0 %4111, %v4018
        %v4113 = vpop.permute.xlu0 %4112
        %4116 = vset.pattern.permute.xlu0 0
        %4117 = vperm.xlu0 %4116, %v4019
        %v4118 = vpop.permute.xlu0 %4117
        %4121 = vset.pattern.permute.xlu0 0
        %4122 = vperm.xlu0 %4121, %v4020
        %v4123 = vpop.permute.xlu0 %4122
        %4126 = vset.pattern.permute.xlu0 0
        %4127 = vperm.xlu0 %4126, %v4021
        %v4128 = vpop.permute.xlu0 %4127
        %4131 = vset.pattern.permute.xlu0 0
        %4132 = vperm.xlu0 %4131, %v4022
        %v4133 = vpop.permute.xlu0 %4132
        %4136 = vset.pattern.permute.xlu0 0
        %4137 = vperm.xlu0 %4136, %v4023
        %v4138 = vpop.permute.xlu0 %4137
        %4141 = vset.pattern.permute.xlu0 0
        %4142 = vperm.xlu0 %4141, %v4024
        %v4143 = vpop.permute.xlu0 %4142
        %4146 = vset.pattern.permute.xlu0 0
        %4147 = vperm.xlu0 %4146, %v4025
        %v4148 = vpop.permute.xlu0 %4147
        %4151 = vset.pattern.permute.xlu0 0
        %4152 = vperm.xlu0 %4151, %v4026
        %v4153 = vpop.permute.xlu0 %4152
        %4156 = vset.pattern.permute.xlu0 0
        %4157 = vperm.xlu0 %4156, %v4027
        %v4158 = vpop.permute.xlu0 %4157
        %4161 = vset.pattern.permute.xlu0 0
        %4162 = vperm.xlu0 %4161, %v4028
        %v4163 = vpop.permute.xlu0 %4162
        %4166 = vset.pattern.permute.xlu0 0
        %4167 = vperm.xlu0 %4166, %v4029
        %v4168 = vpop.permute.xlu0 %4167
        %4171 = vset.pattern.permute.xlu0 0
        %4172 = vperm.xlu0 %4171, %v4030
        %v4173 = vpop.permute.xlu0 %4172
        %4176 = vset.pattern.permute.xlu0 0
        %4177 = vperm.xlu0 %4176, %v4031
        %v4178 = vpop.permute.xlu0 %4177
        %4181 = vset.pattern.permute.xlu0 0
        %4182 = vperm.xlu0 %4181, %v4032
        %v4183 = vpop.permute.xlu0 %4182
        %4186 = vset.pattern.permute.xlu0 0
        %4187 = vperm.xlu0 %4186, %v4033
        %v4188 = vpop.permute.xlu0 %4187
        %4191 = vset.pattern.permute.xlu0 0
        %4192 = vperm.xlu0 %4191, %v4034
        %v4193 = vpop.permute.xlu0 %4192
        %v4195 = vmul.f32 %v3972, %v4038
        %v4196 = vmul.f32 %v3971, %v4043
        %v4197 = vmul.f32 %v4002, %v4048
        %v4198 = vmul.f32 %v4001, %v4053
        %v4199 = vmul.f32 %v4000, %v4058
        %v4200 = vmul.f32 %v3999, %v4063
        %v4201 = vmul.f32 %v3998, %v4068
        %v4202 = vmul.f32 %v3997, %v4073
        %v4203 = vmul.f32 %v3996, %v4078
        %v4204 = vmul.f32 %v3995, %v4083
        %v4205 = vmul.f32 %v3994, %v4088
        %v4206 = vmul.f32 %v3993, %v4093
        %v4207 = vmul.f32 %v3992, %v4098
        %v4208 = vmul.f32 %v3991, %v4103
        %v4209 = vmul.f32 %v3990, %v4108
        %v4210 = vmul.f32 %v3989, %v4113
        %v4211 = vmul.f32 %v3988, %v4118
        %v4212 = vmul.f32 %v3987, %v4123
        %v4213 = vmul.f32 %v3986, %v4128
        %v4214 = vmul.f32 %v3985, %v4133
        %v4215 = vmul.f32 %v3984, %v4138
        %v4216 = vmul.f32 %v3983, %v4143
        %v4217 = vmul.f32 %v3982, %v4148
        %v4218 = vmul.f32 %v3981, %v4153
        %v4219 = vmul.f32 %v3980, %v4158
        %v4220 = vmul.f32 %v3979, %v4163
        %v4221 = vmul.f32 %v3978, %v4168
        %v4222 = vmul.f32 %v3977, %v4173
        %v4223 = vmul.f32 %v3976, %v4178
        %v4224 = vmul.f32 %v3975, %v4183
        %v4225 = vmul.f32 %v3974, %v4188
        %v4226 = vmul.f32 %v3973, %v4193
        %v4227 = vpack.c.bf16 %v4196, %v4195
        %v4228 = vpack.c.bf16 %v4198, %v4197
        %v4229 = vpack.c.bf16 %v4200, %v4199
        %v4230 = vpack.c.bf16 %v4202, %v4201
        %v4231 = vpack.c.bf16 %v4204, %v4203
        %v4232 = vpack.c.bf16 %v4206, %v4205
        %v4233 = vpack.c.bf16 %v4208, %v4207
        %v4234 = vpack.c.bf16 %v4210, %v4209
        %v4235 = vpack.c.bf16 %v4212, %v4211
        %v4236 = vpack.c.bf16 %v4214, %v4213
        %v4237 = vpack.c.bf16 %v4216, %v4215
        %v4238 = vpack.c.bf16 %v4218, %v4217
        %v4239 = vpack.c.bf16 %v4220, %v4219
        %v4240 = vpack.c.bf16 %v4222, %v4221
        %v4241 = vpack.c.bf16 %v4224, %v4223
        %v4242 = vpack.c.bf16 %v4226, %v4225
        %s4243 = scalar_lea.vmem %s15, 256
        %v4244 = vld [vmem:[%s4243] sm:$0xff]
        %v4245 = vld [vmem:[%s4243 + $0x8] sm:$0xff]
        %v4246 = vld [vmem:[%s4243 + $0x10] sm:$0xff]
        %v4247 = vld [vmem:[%s4243 + $0x18] sm:$0xff]
        %v4248 = vld [vmem:[%s4243 + $0x20] sm:$0xff]
        %v4249 = vld [vmem:[%s4243 + $0x28] sm:$0xff]
        %v4250 = vld [vmem:[%s4243 + $0x30] sm:$0xff]
        %v4251 = vld [vmem:[%s4243 + $0x38] sm:$0xff]
        %v4252 = vld [vmem:[%s4243 + $0x40] sm:$0xff]
        %v4253 = vld [vmem:[%s4243 + $0x48] sm:$0xff]
        %v4254 = vld [vmem:[%s4243 + $0x50] sm:$0xff]
        %v4255 = vld [vmem:[%s4243 + $0x58] sm:$0xff]
        %v4256 = vld [vmem:[%s4243 + $0x60] sm:$0xff]
        %v4257 = vld [vmem:[%s4243 + $0x68] sm:$0xff]
        %v4258 = vld [vmem:[%s4243 + $0x70] sm:$0xff]
        %v4259 = vld [vmem:[%s4243 + $0x78] sm:$0xff]
        %v4260 = vld [vmem:[%s4243 + $0x80] sm:$0xff]
        %v4261 = vld [vmem:[%s4243 + $0x88] sm:$0xff]
        %v4262 = vld [vmem:[%s4243 + $0x90] sm:$0xff]
        %v4263 = vld [vmem:[%s4243 + $0x98] sm:$0xff]
        %v4264 = vld [vmem:[%s4243 + $0xa0] sm:$0xff]
        %v4265 = vld [vmem:[%s4243 + $0xa8] sm:$0xff]
        %v4266 = vld [vmem:[%s4243 + $0xb0] sm:$0xff]
        %v4267 = vld [vmem:[%s4243 + $0xb8] sm:$0xff]
        %v4268 = vld [vmem:[%s4243 + $0xc0] sm:$0xff]
        %v4269 = vld [vmem:[%s4243 + $0xc8] sm:$0xff]
        %v4270 = vld [vmem:[%s4243 + $0xd0] sm:$0xff]
        %v4271 = vld [vmem:[%s4243 + $0xd8] sm:$0xff]
        %v4272 = vld [vmem:[%s4243 + $0xe0] sm:$0xff]
        %v4273 = vld [vmem:[%s4243 + $0xe8] sm:$0xff]
        %v4274 = vld [vmem:[%s4243 + $0xf0] sm:$0xff]
        %v4275 = vld [vmem:[%s4243 + $0xf8] sm:$0xff]
        %4277 = vset.pattern.permute.xlu0 0
        %4278 = vperm.xlu0 %4277, %v4244
        %v4279 = vpop.permute.xlu0 %4278
        %4282 = vset.pattern.permute.xlu0 0
        %4283 = vperm.xlu0 %4282, %v4245
        %v4284 = vpop.permute.xlu0 %4283
        %4287 = vset.pattern.permute.xlu0 0
        %4288 = vperm.xlu0 %4287, %v4246
        %v4289 = vpop.permute.xlu0 %4288
        %4292 = vset.pattern.permute.xlu0 0
        %4293 = vperm.xlu0 %4292, %v4247
        %v4294 = vpop.permute.xlu0 %4293
        %4297 = vset.pattern.permute.xlu0 0
        %4298 = vperm.xlu0 %4297, %v4248
        %v4299 = vpop.permute.xlu0 %4298
        %4302 = vset.pattern.permute.xlu0 0
        %4303 = vperm.xlu0 %4302, %v4249
        %v4304 = vpop.permute.xlu0 %4303
        %4307 = vset.pattern.permute.xlu0 0
        %4308 = vperm.xlu0 %4307, %v4250
        %v4309 = vpop.permute.xlu0 %4308
        %4312 = vset.pattern.permute.xlu0 0
        %4313 = vperm.xlu0 %4312, %v4251
        %v4314 = vpop.permute.xlu0 %4313
        %4317 = vset.pattern.permute.xlu0 0
        %4318 = vperm.xlu0 %4317, %v4252
        %v4319 = vpop.permute.xlu0 %4318
        %4322 = vset.pattern.permute.xlu0 0
        %4323 = vperm.xlu0 %4322, %v4253
        %v4324 = vpop.permute.xlu0 %4323
        %4327 = vset.pattern.permute.xlu0 0
        %4328 = vperm.xlu0 %4327, %v4254
        %v4329 = vpop.permute.xlu0 %4328
        %4332 = vset.pattern.permute.xlu0 0
        %4333 = vperm.xlu0 %4332, %v4255
        %v4334 = vpop.permute.xlu0 %4333
        %4337 = vset.pattern.permute.xlu0 0
        %4338 = vperm.xlu0 %4337, %v4256
        %v4339 = vpop.permute.xlu0 %4338
        %4342 = vset.pattern.permute.xlu0 0
        %4343 = vperm.xlu0 %4342, %v4257
        %v4344 = vpop.permute.xlu0 %4343
        %4347 = vset.pattern.permute.xlu0 0
        %4348 = vperm.xlu0 %4347, %v4258
        %v4349 = vpop.permute.xlu0 %4348
        %4352 = vset.pattern.permute.xlu0 0
        %4353 = vperm.xlu0 %4352, %v4259
        %v4354 = vpop.permute.xlu0 %4353
        %4357 = vset.pattern.permute.xlu0 0
        %4358 = vperm.xlu0 %4357, %v4260
        %v4359 = vpop.permute.xlu0 %4358
        %4362 = vset.pattern.permute.xlu0 0
        %4363 = vperm.xlu0 %4362, %v4261
        %v4364 = vpop.permute.xlu0 %4363
        %4367 = vset.pattern.permute.xlu0 0
        %4368 = vperm.xlu0 %4367, %v4262
        %v4369 = vpop.permute.xlu0 %4368
        %4372 = vset.pattern.permute.xlu0 0
        %4373 = vperm.xlu0 %4372, %v4263
        %v4374 = vpop.permute.xlu0 %4373
        %4377 = vset.pattern.permute.xlu0 0
        %4378 = vperm.xlu0 %4377, %v4264
        %v4379 = vpop.permute.xlu0 %4378
        %4382 = vset.pattern.permute.xlu0 0
        %4383 = vperm.xlu0 %4382, %v4265
        %v4384 = vpop.permute.xlu0 %4383
        %4387 = vset.pattern.permute.xlu0 0
        %4388 = vperm.xlu0 %4387, %v4266
        %v4389 = vpop.permute.xlu0 %4388
        %4392 = vset.pattern.permute.xlu0 0
        %4393 = vperm.xlu0 %4392, %v4267
        %v4394 = vpop.permute.xlu0 %4393
        %4397 = vset.pattern.permute.xlu0 0
        %4398 = vperm.xlu0 %4397, %v4268
        %v4399 = vpop.permute.xlu0 %4398
        %4402 = vset.pattern.permute.xlu0 0
        %4403 = vperm.xlu0 %4402, %v4269
        %v4404 = vpop.permute.xlu0 %4403
        %4407 = vset.pattern.permute.xlu0 0
        %4408 = vperm.xlu0 %4407, %v4270
        %v4409 = vpop.permute.xlu0 %4408
        %4412 = vset.pattern.permute.xlu0 0
        %4413 = vperm.xlu0 %4412, %v4271
        %v4414 = vpop.permute.xlu0 %4413
        %4417 = vset.pattern.permute.xlu0 0
        %4418 = vperm.xlu0 %4417, %v4272
        %v4419 = vpop.permute.xlu0 %4418
        %4422 = vset.pattern.permute.xlu0 0
        %4423 = vperm.xlu0 %4422, %v4273
        %v4424 = vpop.permute.xlu0 %4423
        %4427 = vset.pattern.permute.xlu0 0
        %4428 = vperm.xlu0 %4427, %v4274
        %v4429 = vpop.permute.xlu0 %4428
        %4432 = vset.pattern.permute.xlu0 0
        %4433 = vperm.xlu0 %4432, %v4275
        %v4434 = vpop.permute.xlu0 %4433
        %v4436 = vmul.f32 %v3896, %v4279
        %v4437 = vmul.f32 %v3899, %v4284
        %v4438 = vmul.f32 %v3776, %v4289
        %v4439 = vmul.f32 %v3779, %v4294
        %v4440 = vmul.f32 %v3784, %v4299
        %v4441 = vmul.f32 %v3787, %v4304
        %v4442 = vmul.f32 %v3792, %v4309
        %v4443 = vmul.f32 %v3795, %v4314
        %v4444 = vmul.f32 %v3800, %v4319
        %v4445 = vmul.f32 %v3803, %v4324
        %v4446 = vmul.f32 %v3808, %v4329
        %v4447 = vmul.f32 %v3811, %v4334
        %v4448 = vmul.f32 %v3816, %v4339
        %v4449 = vmul.f32 %v3819, %v4344
        %v4450 = vmul.f32 %v3824, %v4349
        %v4451 = vmul.f32 %v3827, %v4354
        %v4452 = vmul.f32 %v3832, %v4359
        %v4453 = vmul.f32 %v3835, %v4364
        %v4454 = vmul.f32 %v3840, %v4369
        %v4455 = vmul.f32 %v3843, %v4374
        %v4456 = vmul.f32 %v3848, %v4379
        %v4457 = vmul.f32 %v3851, %v4384
        %v4458 = vmul.f32 %v3856, %v4389
        %v4459 = vmul.f32 %v3859, %v4394
        %v4460 = vmul.f32 %v3864, %v4399
        %v4461 = vmul.f32 %v3867, %v4404
        %v4462 = vmul.f32 %v3872, %v4409
        %v4463 = vmul.f32 %v3875, %v4414
        %v4464 = vmul.f32 %v3880, %v4419
        %v4465 = vmul.f32 %v3883, %v4424
        %v4466 = vmul.f32 %v3888, %v4429
        %v4467 = vmul.f32 %v3891, %v4434
        %v4468 = vpack.c.bf16 %v4437, %v4436
        %v4469 = vpack.c.bf16 %v4439, %v4438
        %v4470 = vpack.c.bf16 %v4441, %v4440
        %v4471 = vpack.c.bf16 %v4443, %v4442
        %v4472 = vpack.c.bf16 %v4445, %v4444
        %v4473 = vpack.c.bf16 %v4447, %v4446
        %v4474 = vpack.c.bf16 %v4449, %v4448
        %v4475 = vpack.c.bf16 %v4451, %v4450
        %v4476 = vpack.c.bf16 %v4453, %v4452
        %v4477 = vpack.c.bf16 %v4455, %v4454
        %v4478 = vpack.c.bf16 %v4457, %v4456
        %v4479 = vpack.c.bf16 %v4459, %v4458
        %v4480 = vpack.c.bf16 %v4461, %v4460
        %v4481 = vpack.c.bf16 %v4463, %v4462
        %v4482 = vpack.c.bf16 %v4465, %v4464
        %v4483 = vpack.c.bf16 %v4467, %v4466
        %v4484 = vrot.slane %v3776, 1
        %v4485 = vrot.slane %v3779, 1
        %v4486 = vrot.slane %v3784, 1
        %v4487 = vrot.slane %v3787, 1
        %v4488 = vrot.slane %v3792, 1
        %v4489 = vrot.slane %v3795, 1
        %v4490 = vrot.slane %v3800, 1
        %v4491 = vrot.slane %v3803, 1
        %v4492 = vrot.slane %v3808, 1
        %v4493 = vrot.slane %v3811, 1
        %v4494 = vrot.slane %v3816, 1
        %v4495 = vrot.slane %v3819, 1
        %v4496 = vrot.slane %v3824, 1
        %v4497 = vrot.slane %v3827, 1
        %v4498 = vrot.slane %v3832, 1
        %v4499 = vrot.slane %v3835, 1
        %v4500 = vrot.slane %v3840, 1
        %v4501 = vrot.slane %v3843, 1
        %v4502 = vrot.slane %v3848, 1
        %v4503 = vrot.slane %v3851, 1
        %v4504 = vrot.slane %v3856, 1
        %v4505 = vrot.slane %v3859, 1
        %v4506 = vrot.slane %v3864, 1
        %v4507 = vrot.slane %v3867, 1
        %v4508 = vrot.slane %v3872, 1
        %v4509 = vrot.slane %v3875, 1
        %v4510 = vrot.slane %v3880, 1
        %v4511 = vrot.slane %v3883, 1
        %v4512 = vrot.slane %v3888, 1
        %v4513 = vrot.slane %v3891, 1
        %v4514 = vrot.slane %v3896, 1
        %v4515 = vrot.slane %v3899, 1
        %v4516 = vsel %vm1017, %v4514, %v4515
        %v4517 = vsel %vm1017, %v4513, %v4514
        %v4518 = vsel %vm1017, %v4512, %v4513
        %v4519 = vsel %vm1017, %v4511, %v4512
        %v4520 = vsel %vm1017, %v4510, %v4511
        %v4521 = vsel %vm1017, %v4509, %v4510
        %v4522 = vsel %vm1017, %v4508, %v4509
        %v4523 = vsel %vm1017, %v4507, %v4508
        %v4524 = vsel %vm1017, %v4506, %v4507
        %v4525 = vsel %vm1017, %v4505, %v4506
        %v4526 = vsel %vm1017, %v4504, %v4505
        %v4527 = vsel %vm1017, %v4503, %v4504
        %v4528 = vsel %vm1017, %v4502, %v4503
        %v4529 = vsel %vm1017, %v4501, %v4502
        %v4530 = vsel %vm1017, %v4500, %v4501
        %v4531 = vsel %vm1017, %v4499, %v4500
        %v4532 = vsel %vm1017, %v4498, %v4499
        %v4533 = vsel %vm1017, %v4497, %v4498
        %v4534 = vsel %vm1017, %v4496, %v4497
        %v4535 = vsel %vm1017, %v4495, %v4496
        %v4536 = vsel %vm1017, %v4494, %v4495
        %v4537 = vsel %vm1017, %v4493, %v4494
        %v4538 = vsel %vm1017, %v4492, %v4493
        %v4539 = vsel %vm1017, %v4491, %v4492
        %v4540 = vsel %vm1017, %v4490, %v4491
        %v4541 = vsel %vm1017, %v4489, %v4490
        %v4542 = vsel %vm1017, %v4488, %v4489
        %v4543 = vsel %vm1017, %v4487, %v4488
        %v4544 = vsel %vm1017, %v4486, %v4487
        %v4545 = vsel %vm1017, %v4485, %v4486
        %v4546 = vsel %vm1017, %v4484, %v4485
        %v4547 = vsel %vm1017, %v4515, %v4484
        %s4548 = scalar_lea.vmem %s15, 512
        %v4549 = vld [vmem:[%s4548] sm:$0xff]
        %v4550 = vld [vmem:[%s4548 + $0x8] sm:$0xff]
        %v4551 = vld [vmem:[%s4548 + $0x10] sm:$0xff]
        %v4552 = vld [vmem:[%s4548 + $0x18] sm:$0xff]
        %v4553 = vld [vmem:[%s4548 + $0x20] sm:$0xff]
        %v4554 = vld [vmem:[%s4548 + $0x28] sm:$0xff]
        %v4555 = vld [vmem:[%s4548 + $0x30] sm:$0xff]
        %v4556 = vld [vmem:[%s4548 + $0x38] sm:$0xff]
        %v4557 = vld [vmem:[%s4548 + $0x40] sm:$0xff]
        %v4558 = vld [vmem:[%s4548 + $0x48] sm:$0xff]
        %v4559 = vld [vmem:[%s4548 + $0x50] sm:$0xff]
        %v4560 = vld [vmem:[%s4548 + $0x58] sm:$0xff]
        %v4561 = vld [vmem:[%s4548 + $0x60] sm:$0xff]
        %v4562 = vld [vmem:[%s4548 + $0x68] sm:$0xff]
        %v4563 = vld [vmem:[%s4548 + $0x70] sm:$0xff]
        %v4564 = vld [vmem:[%s4548 + $0x78] sm:$0xff]
        %v4565 = vld [vmem:[%s4548 + $0x80] sm:$0xff]
        %v4566 = vld [vmem:[%s4548 + $0x88] sm:$0xff]
        %v4567 = vld [vmem:[%s4548 + $0x90] sm:$0xff]
        %v4568 = vld [vmem:[%s4548 + $0x98] sm:$0xff]
        %v4569 = vld [vmem:[%s4548 + $0xa0] sm:$0xff]
        %v4570 = vld [vmem:[%s4548 + $0xa8] sm:$0xff]
        %v4571 = vld [vmem:[%s4548 + $0xb0] sm:$0xff]
        %v4572 = vld [vmem:[%s4548 + $0xb8] sm:$0xff]
        %v4573 = vld [vmem:[%s4548 + $0xc0] sm:$0xff]
        %v4574 = vld [vmem:[%s4548 + $0xc8] sm:$0xff]
        %v4575 = vld [vmem:[%s4548 + $0xd0] sm:$0xff]
        %v4576 = vld [vmem:[%s4548 + $0xd8] sm:$0xff]
        %v4577 = vld [vmem:[%s4548 + $0xe0] sm:$0xff]
        %v4578 = vld [vmem:[%s4548 + $0xe8] sm:$0xff]
        %v4579 = vld [vmem:[%s4548 + $0xf0] sm:$0xff]
        %v4580 = vld [vmem:[%s4548 + $0xf8] sm:$0xff]
        %4582 = vset.pattern.permute.xlu0 0
        %4583 = vperm.xlu0 %4582, %v4549
        %v4584 = vpop.permute.xlu0 %4583
        %4587 = vset.pattern.permute.xlu0 0
        %4588 = vperm.xlu0 %4587, %v4550
        %v4589 = vpop.permute.xlu0 %4588
        %4592 = vset.pattern.permute.xlu0 0
        %4593 = vperm.xlu0 %4592, %v4551
        %v4594 = vpop.permute.xlu0 %4593
        %4597 = vset.pattern.permute.xlu0 0
        %4598 = vperm.xlu0 %4597, %v4552
        %v4599 = vpop.permute.xlu0 %4598
        %4602 = vset.pattern.permute.xlu0 0
        %4603 = vperm.xlu0 %4602, %v4553
        %v4604 = vpop.permute.xlu0 %4603
        %4607 = vset.pattern.permute.xlu0 0
        %4608 = vperm.xlu0 %4607, %v4554
        %v4609 = vpop.permute.xlu0 %4608
        %4612 = vset.pattern.permute.xlu0 0
        %4613 = vperm.xlu0 %4612, %v4555
        %v4614 = vpop.permute.xlu0 %4613
        %4617 = vset.pattern.permute.xlu0 0
        %4618 = vperm.xlu0 %4617, %v4556
        %v4619 = vpop.permute.xlu0 %4618
        %4622 = vset.pattern.permute.xlu0 0
        %4623 = vperm.xlu0 %4622, %v4557
        %v4624 = vpop.permute.xlu0 %4623
        %4627 = vset.pattern.permute.xlu0 0
        %4628 = vperm.xlu0 %4627, %v4558
        %v4629 = vpop.permute.xlu0 %4628
        %4632 = vset.pattern.permute.xlu0 0
        %4633 = vperm.xlu0 %4632, %v4559
        %v4634 = vpop.permute.xlu0 %4633
        %4637 = vset.pattern.permute.xlu0 0
        %4638 = vperm.xlu0 %4637, %v4560
        %v4639 = vpop.permute.xlu0 %4638
        %4642 = vset.pattern.permute.xlu0 0
        %4643 = vperm.xlu0 %4642, %v4561
        %v4644 = vpop.permute.xlu0 %4643
        %4647 = vset.pattern.permute.xlu0 0
        %4648 = vperm.xlu0 %4647, %v4562
        %v4649 = vpop.permute.xlu0 %4648
        %4652 = vset.pattern.permute.xlu0 0
        %4653 = vperm.xlu0 %4652, %v4563
        %v4654 = vpop.permute.xlu0 %4653
        %4657 = vset.pattern.permute.xlu0 0
        %4658 = vperm.xlu0 %4657, %v4564
        %v4659 = vpop.permute.xlu0 %4658
        %4662 = vset.pattern.permute.xlu0 0
        %4663 = vperm.xlu0 %4662, %v4565
        %v4664 = vpop.permute.xlu0 %4663
        %4667 = vset.pattern.permute.xlu0 0
        %4668 = vperm.xlu0 %4667, %v4566
        %v4669 = vpop.permute.xlu0 %4668
        %4672 = vset.pattern.permute.xlu0 0
        %4673 = vperm.xlu0 %4672, %v4567
        %v4674 = vpop.permute.xlu0 %4673
        %4677 = vset.pattern.permute.xlu0 0
        %4678 = vperm.xlu0 %4677, %v4568
        %v4679 = vpop.permute.xlu0 %4678
        %4682 = vset.pattern.permute.xlu0 0
        %4683 = vperm.xlu0 %4682, %v4569
        %v4684 = vpop.permute.xlu0 %4683
        %4687 = vset.pattern.permute.xlu0 0
        %4688 = vperm.xlu0 %4687, %v4570
        %v4689 = vpop.permute.xlu0 %4688
        %4692 = vset.pattern.permute.xlu0 0
        %4693 = vperm.xlu0 %4692, %v4571
        %v4694 = vpop.permute.xlu0 %4693
        %4697 = vset.pattern.permute.xlu0 0
        %4698 = vperm.xlu0 %4697, %v4572
        %v4699 = vpop.permute.xlu0 %4698
        %4702 = vset.pattern.permute.xlu0 0
        %4703 = vperm.xlu0 %4702, %v4573
        %v4704 = vpop.permute.xlu0 %4703
        %4707 = vset.pattern.permute.xlu0 0
        %4708 = vperm.xlu0 %4707, %v4574
        %v4709 = vpop.permute.xlu0 %4708
        %4712 = vset.pattern.permute.xlu0 0
        %4713 = vperm.xlu0 %4712, %v4575
        %v4714 = vpop.permute.xlu0 %4713
        %4717 = vset.pattern.permute.xlu0 0
        %4718 = vperm.xlu0 %4717, %v4576
        %v4719 = vpop.permute.xlu0 %4718
        %4722 = vset.pattern.permute.xlu0 0
        %4723 = vperm.xlu0 %4722, %v4577
        %v4724 = vpop.permute.xlu0 %4723
        %4727 = vset.pattern.permute.xlu0 0
        %4728 = vperm.xlu0 %4727, %v4578
        %v4729 = vpop.permute.xlu0 %4728
        %4732 = vset.pattern.permute.xlu0 0
        %4733 = vperm.xlu0 %4732, %v4579
        %v4734 = vpop.permute.xlu0 %4733
        %4737 = vset.pattern.permute.xlu0 0
        %4738 = vperm.xlu0 %4737, %v4580
        %v4739 = vpop.permute.xlu0 %4738
        %v4741 = vmul.f32 %v4516, %v4584
        %v4742 = vmul.f32 %v4547, %v4589
        %v4743 = vmul.f32 %v4546, %v4594
        %v4744 = vmul.f32 %v4545, %v4599
        %v4745 = vmul.f32 %v4544, %v4604
        %v4746 = vmul.f32 %v4543, %v4609
        %v4747 = vmul.f32 %v4542, %v4614
        %v4748 = vmul.f32 %v4541, %v4619
        %v4749 = vmul.f32 %v4540, %v4624
        %v4750 = vmul.f32 %v4539, %v4629
        %v4751 = vmul.f32 %v4538, %v4634
        %v4752 = vmul.f32 %v4537, %v4639
        %v4753 = vmul.f32 %v4536, %v4644
        %v4754 = vmul.f32 %v4535, %v4649
        %v4755 = vmul.f32 %v4534, %v4654
        %v4756 = vmul.f32 %v4533, %v4659
        %v4757 = vmul.f32 %v4532, %v4664
        %v4758 = vmul.f32 %v4531, %v4669
        %v4759 = vmul.f32 %v4530, %v4674
        %v4760 = vmul.f32 %v4529, %v4679
        %v4761 = vmul.f32 %v4528, %v4684
        %v4762 = vmul.f32 %v4527, %v4689
        %v4763 = vmul.f32 %v4526, %v4694
        %v4764 = vmul.f32 %v4525, %v4699
        %v4765 = vmul.f32 %v4524, %v4704
        %v4766 = vmul.f32 %v4523, %v4709
        %v4767 = vmul.f32 %v4522, %v4714
        %v4768 = vmul.f32 %v4521, %v4719
        %v4769 = vmul.f32 %v4520, %v4724
        %v4770 = vmul.f32 %v4519, %v4729
        %v4771 = vmul.f32 %v4518, %v4734
        %v4772 = vmul.f32 %v4517, %v4739
        %v4773 = vpack.c.bf16 %v4742, %v4741
        %v4774 = vpack.c.bf16 %v4744, %v4743
        %v4775 = vpack.c.bf16 %v4746, %v4745
        %v4776 = vpack.c.bf16 %v4748, %v4747
        %v4777 = vpack.c.bf16 %v4750, %v4749
        %v4778 = vpack.c.bf16 %v4752, %v4751
        %v4779 = vpack.c.bf16 %v4754, %v4753
        %v4780 = vpack.c.bf16 %v4756, %v4755
        %v4781 = vpack.c.bf16 %v4758, %v4757
        %v4782 = vpack.c.bf16 %v4760, %v4759
        %v4783 = vpack.c.bf16 %v4762, %v4761
        %v4784 = vpack.c.bf16 %v4764, %v4763
        %v4785 = vpack.c.bf16 %v4766, %v4765
        %v4786 = vpack.c.bf16 %v4768, %v4767
        %v4787 = vpack.c.bf16 %v4770, %v4769
        %v4788 = vpack.c.bf16 %v4772, %v4771
        %s4789 = scalar_lea.vmem %s15, 768
        %v4790 = vld [vmem:[%s4789] sm:$0xff]
        %v4791 = vld [vmem:[%s4789 + $0x8] sm:$0xff]
        %v4792 = vld [vmem:[%s4789 + $0x10] sm:$0xff]
        %v4793 = vld [vmem:[%s4789 + $0x18] sm:$0xff]
        %v4794 = vld [vmem:[%s4789 + $0x20] sm:$0xff]
        %v4795 = vld [vmem:[%s4789 + $0x28] sm:$0xff]
        %v4796 = vld [vmem:[%s4789 + $0x30] sm:$0xff]
        %v4797 = vld [vmem:[%s4789 + $0x38] sm:$0xff]
        %v4798 = vld [vmem:[%s4789 + $0x40] sm:$0xff]
        %v4799 = vld [vmem:[%s4789 + $0x48] sm:$0xff]
        %v4800 = vld [vmem:[%s4789 + $0x50] sm:$0xff]
        %v4801 = vld [vmem:[%s4789 + $0x58] sm:$0xff]
        %v4802 = vld [vmem:[%s4789 + $0x60] sm:$0xff]
        %v4803 = vld [vmem:[%s4789 + $0x68] sm:$0xff]
        %v4804 = vld [vmem:[%s4789 + $0x70] sm:$0xff]
        %v4805 = vld [vmem:[%s4789 + $0x78] sm:$0xff]
        %v4806 = vld [vmem:[%s4789 + $0x80] sm:$0xff]
        %v4807 = vld [vmem:[%s4789 + $0x88] sm:$0xff]
        %v4808 = vld [vmem:[%s4789 + $0x90] sm:$0xff]
        %v4809 = vld [vmem:[%s4789 + $0x98] sm:$0xff]
        %v4810 = vld [vmem:[%s4789 + $0xa0] sm:$0xff]
        %v4811 = vld [vmem:[%s4789 + $0xa8] sm:$0xff]
        %v4812 = vld [vmem:[%s4789 + $0xb0] sm:$0xff]
        %v4813 = vld [vmem:[%s4789 + $0xb8] sm:$0xff]
        %v4814 = vld [vmem:[%s4789 + $0xc0] sm:$0xff]
        %v4815 = vld [vmem:[%s4789 + $0xc8] sm:$0xff]
        %v4816 = vld [vmem:[%s4789 + $0xd0] sm:$0xff]
        %v4817 = vld [vmem:[%s4789 + $0xd8] sm:$0xff]
        %v4818 = vld [vmem:[%s4789 + $0xe0] sm:$0xff]
        %v4819 = vld [vmem:[%s4789 + $0xe8] sm:$0xff]
        %v4820 = vld [vmem:[%s4789 + $0xf0] sm:$0xff]
        %v4821 = vld [vmem:[%s4789 + $0xf8] sm:$0xff]
        %4823 = vset.pattern.permute.xlu0 0
        %4824 = vperm.xlu0 %4823, %v4790
        %v4825 = vpop.permute.xlu0 %4824
        %4828 = vset.pattern.permute.xlu0 0
        %4829 = vperm.xlu0 %4828, %v4791
        %v4830 = vpop.permute.xlu0 %4829
        %4833 = vset.pattern.permute.xlu0 0
        %4834 = vperm.xlu0 %4833, %v4792
        %v4835 = vpop.permute.xlu0 %4834
        %4838 = vset.pattern.permute.xlu0 0
        %4839 = vperm.xlu0 %4838, %v4793
        %v4840 = vpop.permute.xlu0 %4839
        %4843 = vset.pattern.permute.xlu0 0
        %4844 = vperm.xlu0 %4843, %v4794
        %v4845 = vpop.permute.xlu0 %4844
        %4848 = vset.pattern.permute.xlu0 0
        %4849 = vperm.xlu0 %4848, %v4795
        %v4850 = vpop.permute.xlu0 %4849
        %4853 = vset.pattern.permute.xlu0 0
        %4854 = vperm.xlu0 %4853, %v4796
        %v4855 = vpop.permute.xlu0 %4854
        %4858 = vset.pattern.permute.xlu0 0
        %4859 = vperm.xlu0 %4858, %v4797
        %v4860 = vpop.permute.xlu0 %4859
        %4863 = vset.pattern.permute.xlu0 0
        %4864 = vperm.xlu0 %4863, %v4798
        %v4865 = vpop.permute.xlu0 %4864
        %4868 = vset.pattern.permute.xlu0 0
        %4869 = vperm.xlu0 %4868, %v4799
        %v4870 = vpop.permute.xlu0 %4869
        %4873 = vset.pattern.permute.xlu0 0
        %4874 = vperm.xlu0 %4873, %v4800
        %v4875 = vpop.permute.xlu0 %4874
        %4878 = vset.pattern.permute.xlu0 0
        %4879 = vperm.xlu0 %4878, %v4801
        %v4880 = vpop.permute.xlu0 %4879
        %4883 = vset.pattern.permute.xlu0 0
        %4884 = vperm.xlu0 %4883, %v4802
        %v4885 = vpop.permute.xlu0 %4884
        %4888 = vset.pattern.permute.xlu0 0
        %4889 = vperm.xlu0 %4888, %v4803
        %v4890 = vpop.permute.xlu0 %4889
        %4893 = vset.pattern.permute.xlu0 0
        %4894 = vperm.xlu0 %4893, %v4804
        %v4895 = vpop.permute.xlu0 %4894
        %4898 = vset.pattern.permute.xlu0 0
        %4899 = vperm.xlu0 %4898, %v4805
        %v4900 = vpop.permute.xlu0 %4899
        %4903 = vset.pattern.permute.xlu0 0
        %4904 = vperm.xlu0 %4903, %v4806
        %v4905 = vpop.permute.xlu0 %4904
        %4908 = vset.pattern.permute.xlu0 0
        %4909 = vperm.xlu0 %4908, %v4807
        %v4910 = vpop.permute.xlu0 %4909
        %4913 = vset.pattern.permute.xlu0 0
        %4914 = vperm.xlu0 %4913, %v4808
        %v4915 = vpop.permute.xlu0 %4914
        %4918 = vset.pattern.permute.xlu0 0
        %4919 = vperm.xlu0 %4918, %v4809
        %v4920 = vpop.permute.xlu0 %4919
        %4923 = vset.pattern.permute.xlu0 0
        %4924 = vperm.xlu0 %4923, %v4810
        %v4925 = vpop.permute.xlu0 %4924
        %4928 = vset.pattern.permute.xlu0 0
        %4929 = vperm.xlu0 %4928, %v4811
        %v4930 = vpop.permute.xlu0 %4929
        %4933 = vset.pattern.permute.xlu0 0
        %4934 = vperm.xlu0 %4933, %v4812
        %v4935 = vpop.permute.xlu0 %4934
        %4938 = vset.pattern.permute.xlu0 0
        %4939 = vperm.xlu0 %4938, %v4813
        %v4940 = vpop.permute.xlu0 %4939
        %4943 = vset.pattern.permute.xlu0 0
        %4944 = vperm.xlu0 %4943, %v4814
        %v4945 = vpop.permute.xlu0 %4944
        %4948 = vset.pattern.permute.xlu0 0
        %4949 = vperm.xlu0 %4948, %v4815
        %v4950 = vpop.permute.xlu0 %4949
        %4953 = vset.pattern.permute.xlu0 0
        %4954 = vperm.xlu0 %4953, %v4816
        %v4955 = vpop.permute.xlu0 %4954
        %4958 = vset.pattern.permute.xlu0 0
        %4959 = vperm.xlu0 %4958, %v4817
        %v4960 = vpop.permute.xlu0 %4959
        %4963 = vset.pattern.permute.xlu0 0
        %4964 = vperm.xlu0 %4963, %v4818
        %v4965 = vpop.permute.xlu0 %4964
        %4968 = vset.pattern.permute.xlu0 0
        %4969 = vperm.xlu0 %4968, %v4819
        %v4970 = vpop.permute.xlu0 %4969
        %4973 = vset.pattern.permute.xlu0 0
        %4974 = vperm.xlu0 %4973, %v4820
        %v4975 = vpop.permute.xlu0 %4974
        %4978 = vset.pattern.permute.xlu0 0
        %4979 = vperm.xlu0 %4978, %v4821
        %v4980 = vpop.permute.xlu0 %4979
        %v4982 = vmul.f32 %v4002, %v4825
        %v4983 = vmul.f32 %v4001, %v4830
        %v4984 = vmul.f32 %v4000, %v4835
        %v4985 = vmul.f32 %v3999, %v4840
        %v4986 = vmul.f32 %v3998, %v4845
        %v4987 = vmul.f32 %v3997, %v4850
        %v4988 = vmul.f32 %v3996, %v4855
        %v4989 = vmul.f32 %v3995, %v4860
        %v4990 = vmul.f32 %v3994, %v4865
        %v4991 = vmul.f32 %v3993, %v4870
        %v4992 = vmul.f32 %v3992, %v4875
        %v4993 = vmul.f32 %v3991, %v4880
        %v4994 = vmul.f32 %v3990, %v4885
        %v4995 = vmul.f32 %v3989, %v4890
        %v4996 = vmul.f32 %v3988, %v4895
        %v4997 = vmul.f32 %v3987, %v4900
        %v4998 = vmul.f32 %v3986, %v4905
        %v4999 = vmul.f32 %v3985, %v4910
        %v5000 = vmul.f32 %v3984, %v4915
        %v5001 = vmul.f32 %v3983, %v4920
        %v5002 = vmul.f32 %v3982, %v4925
        %v5003 = vmul.f32 %v3981, %v4930
        %v5004 = vmul.f32 %v3980, %v4935
        %v5005 = vmul.f32 %v3979, %v4940
        %v5006 = vmul.f32 %v3978, %v4945
        %v5007 = vmul.f32 %v3977, %v4950
        %v5008 = vmul.f32 %v3976, %v4955
        %v5009 = vmul.f32 %v3975, %v4960
        %v5010 = vmul.f32 %v3974, %v4965
        %v5011 = vmul.f32 %v3973, %v4970
        %v5012 = vmul.f32 %v3972, %v4975
        %v5013 = vmul.f32 %v3971, %v4980
        %v5014 = vpack.c.bf16 %v4983, %v4982
        %v5015 = vpack.c.bf16 %v4985, %v4984
        %v5016 = vpack.c.bf16 %v4987, %v4986
        %v5017 = vpack.c.bf16 %v4989, %v4988
        %v5018 = vpack.c.bf16 %v4991, %v4990
        %v5019 = vpack.c.bf16 %v4993, %v4992
        %v5020 = vpack.c.bf16 %v4995, %v4994
        %v5021 = vpack.c.bf16 %v4997, %v4996
        %v5022 = vpack.c.bf16 %v4999, %v4998
        %v5023 = vpack.c.bf16 %v5001, %v5000
        %v5024 = vpack.c.bf16 %v5003, %v5002
        %v5025 = vpack.c.bf16 %v5005, %v5004
        %v5026 = vpack.c.bf16 %v5007, %v5006
        %v5027 = vpack.c.bf16 %v5009, %v5008
        %v5028 = vpack.c.bf16 %v5011, %v5010
        %v5029 = vpack.c.bf16 %v5013, %v5012
        %v5030 = vpack.c.bf16 %v3779, %v3776
        %v5031 = vpack.c.bf16 %v3787, %v3784
        %v5032 = vpack.c.bf16 %v3795, %v3792
        %v5033 = vpack.c.bf16 %v3803, %v3800
        %v5034 = vpack.c.bf16 %v3811, %v3808
        %v5035 = vpack.c.bf16 %v3819, %v3816
        %v5036 = vpack.c.bf16 %v3827, %v3824
        %v5037 = vpack.c.bf16 %v3835, %v3832
        %v5038 = vpack.c.bf16 %v3843, %v3840
        %v5039 = vpack.c.bf16 %v3851, %v3848
        %v5040 = vpack.c.bf16 %v3859, %v3856
        %v5041 = vpack.c.bf16 %v3867, %v3864
        %v5042 = vpack.c.bf16 %v3875, %v3872
        %v5043 = vpack.c.bf16 %v3883, %v3880
        %v5044 = vpack.c.bf16 %v3891, %v3888
        %v5045 = vpack.c.bf16 %v3899, %v3896
        %s5046 = scalar_lea.vmem %s15, 1280
        %v5047 = vld [vmem:[%s5046] sm:$0xff]
        %v5048 = vld [vmem:[%s5046 + $0x8] sm:$0xff]
        %v5049 = vld [vmem:[%s5046 + $0x10] sm:$0xff]
        %v5050 = vld [vmem:[%s5046 + $0x18] sm:$0xff]
        %v5051 = vld [vmem:[%s5046 + $0x20] sm:$0xff]
        %v5052 = vld [vmem:[%s5046 + $0x28] sm:$0xff]
        %v5053 = vld [vmem:[%s5046 + $0x30] sm:$0xff]
        %v5054 = vld [vmem:[%s5046 + $0x38] sm:$0xff]
        %v5055 = vld [vmem:[%s5046 + $0x40] sm:$0xff]
        %v5056 = vld [vmem:[%s5046 + $0x48] sm:$0xff]
        %v5057 = vld [vmem:[%s5046 + $0x50] sm:$0xff]
        %v5058 = vld [vmem:[%s5046 + $0x58] sm:$0xff]
        %v5059 = vld [vmem:[%s5046 + $0x60] sm:$0xff]
        %v5060 = vld [vmem:[%s5046 + $0x68] sm:$0xff]
        %v5061 = vld [vmem:[%s5046 + $0x70] sm:$0xff]
        %v5062 = vld [vmem:[%s5046 + $0x78] sm:$0xff]
        %v5063 = vld [vmem:[%s5046 + $0x80] sm:$0xff]
        %v5064 = vld [vmem:[%s5046 + $0x88] sm:$0xff]
        %v5065 = vld [vmem:[%s5046 + $0x90] sm:$0xff]
        %v5066 = vld [vmem:[%s5046 + $0x98] sm:$0xff]
        %v5067 = vld [vmem:[%s5046 + $0xa0] sm:$0xff]
        %v5068 = vld [vmem:[%s5046 + $0xa8] sm:$0xff]
        %v5069 = vld [vmem:[%s5046 + $0xb0] sm:$0xff]
        %v5070 = vld [vmem:[%s5046 + $0xb8] sm:$0xff]
        %v5071 = vld [vmem:[%s5046 + $0xc0] sm:$0xff]
        %v5072 = vld [vmem:[%s5046 + $0xc8] sm:$0xff]
        %v5073 = vld [vmem:[%s5046 + $0xd0] sm:$0xff]
        %v5074 = vld [vmem:[%s5046 + $0xd8] sm:$0xff]
        %v5075 = vld [vmem:[%s5046 + $0xe0] sm:$0xff]
        %v5076 = vld [vmem:[%s5046 + $0xe8] sm:$0xff]
        %v5077 = vld [vmem:[%s5046 + $0xf0] sm:$0xff]
        %v5078 = vld [vmem:[%s5046 + $0xf8] sm:$0xff]
        %5080 = vset.pattern.permute.xlu0 0
        %5081 = vperm.xlu0 %5080, %v5047
        %v5082 = vpop.permute.xlu0 %5081
        %5085 = vset.pattern.permute.xlu0 0
        %5086 = vperm.xlu0 %5085, %v5048
        %v5087 = vpop.permute.xlu0 %5086
        %5090 = vset.pattern.permute.xlu0 0
        %5091 = vperm.xlu0 %5090, %v5049
        %v5092 = vpop.permute.xlu0 %5091
        %5095 = vset.pattern.permute.xlu0 0
        %5096 = vperm.xlu0 %5095, %v5050
        %v5097 = vpop.permute.xlu0 %5096
        %5100 = vset.pattern.permute.xlu0 0
        %5101 = vperm.xlu0 %5100, %v5051
        %v5102 = vpop.permute.xlu0 %5101
        %5105 = vset.pattern.permute.xlu0 0
        %5106 = vperm.xlu0 %5105, %v5052
        %v5107 = vpop.permute.xlu0 %5106
        %5110 = vset.pattern.permute.xlu0 0
        %5111 = vperm.xlu0 %5110, %v5053
        %v5112 = vpop.permute.xlu0 %5111
        %5115 = vset.pattern.permute.xlu0 0
        %5116 = vperm.xlu0 %5115, %v5054
        %v5117 = vpop.permute.xlu0 %5116
        %5120 = vset.pattern.permute.xlu0 0
        %5121 = vperm.xlu0 %5120, %v5055
        %v5122 = vpop.permute.xlu0 %5121
        %5125 = vset.pattern.permute.xlu0 0
        %5126 = vperm.xlu0 %5125, %v5056
        %v5127 = vpop.permute.xlu0 %5126
        %5130 = vset.pattern.permute.xlu0 0
        %5131 = vperm.xlu0 %5130, %v5057
        %v5132 = vpop.permute.xlu0 %5131
        %5135 = vset.pattern.permute.xlu0 0
        %5136 = vperm.xlu0 %5135, %v5058
        %v5137 = vpop.permute.xlu0 %5136
        %5140 = vset.pattern.permute.xlu0 0
        %5141 = vperm.xlu0 %5140, %v5059
        %v5142 = vpop.permute.xlu0 %5141
        %5145 = vset.pattern.permute.xlu0 0
        %5146 = vperm.xlu0 %5145, %v5060
        %v5147 = vpop.permute.xlu0 %5146
        %5150 = vset.pattern.permute.xlu0 0
        %5151 = vperm.xlu0 %5150, %v5061
        %v5152 = vpop.permute.xlu0 %5151
        %5155 = vset.pattern.permute.xlu0 0
        %5156 = vperm.xlu0 %5155, %v5062
        %v5157 = vpop.permute.xlu0 %5156
        %5160 = vset.pattern.permute.xlu0 0
        %5161 = vperm.xlu0 %5160, %v5063
        %v5162 = vpop.permute.xlu0 %5161
        %5165 = vset.pattern.permute.xlu0 0
        %5166 = vperm.xlu0 %5165, %v5064
        %v5167 = vpop.permute.xlu0 %5166
        %5170 = vset.pattern.permute.xlu0 0
        %5171 = vperm.xlu0 %5170, %v5065
        %v5172 = vpop.permute.xlu0 %5171
        %5175 = vset.pattern.permute.xlu0 0
        %5176 = vperm.xlu0 %5175, %v5066
        %v5177 = vpop.permute.xlu0 %5176
        %5180 = vset.pattern.permute.xlu0 0
        %5181 = vperm.xlu0 %5180, %v5067
        %v5182 = vpop.permute.xlu0 %5181
        %5185 = vset.pattern.permute.xlu0 0
        %5186 = vperm.xlu0 %5185, %v5068
        %v5187 = vpop.permute.xlu0 %5186
        %5190 = vset.pattern.permute.xlu0 0
        %5191 = vperm.xlu0 %5190, %v5069
        %v5192 = vpop.permute.xlu0 %5191
        %5195 = vset.pattern.permute.xlu0 0
        %5196 = vperm.xlu0 %5195, %v5070
        %v5197 = vpop.permute.xlu0 %5196
        %5200 = vset.pattern.permute.xlu0 0
        %5201 = vperm.xlu0 %5200, %v5071
        %v5202 = vpop.permute.xlu0 %5201
        %5205 = vset.pattern.permute.xlu0 0
        %5206 = vperm.xlu0 %5205, %v5072
        %v5207 = vpop.permute.xlu0 %5206
        %5210 = vset.pattern.permute.xlu0 0
        %5211 = vperm.xlu0 %5210, %v5073
        %v5212 = vpop.permute.xlu0 %5211
        %5215 = vset.pattern.permute.xlu0 0
        %5216 = vperm.xlu0 %5215, %v5074
        %v5217 = vpop.permute.xlu0 %5216
        %5220 = vset.pattern.permute.xlu0 0
        %5221 = vperm.xlu0 %5220, %v5075
        %v5222 = vpop.permute.xlu0 %5221
        %5225 = vset.pattern.permute.xlu0 0
        %5226 = vperm.xlu0 %5225, %v5076
        %v5227 = vpop.permute.xlu0 %5226
        %5230 = vset.pattern.permute.xlu0 0
        %5231 = vperm.xlu0 %5230, %v5077
        %v5232 = vpop.permute.xlu0 %5231
        %5235 = vset.pattern.permute.xlu0 0
        %5236 = vperm.xlu0 %5235, %v5078
        %v5237 = vpop.permute.xlu0 %5236
        %v5239 = vmul.f32 %v4546, %v5082
        %v5240 = vmul.f32 %v4545, %v5087
        %v5241 = vmul.f32 %v4544, %v5092
        %v5242 = vmul.f32 %v4543, %v5097
        %v5243 = vmul.f32 %v4542, %v5102
        %v5244 = vmul.f32 %v4541, %v5107
        %v5245 = vmul.f32 %v4540, %v5112
        %v5246 = vmul.f32 %v4539, %v5117
        %v5247 = vmul.f32 %v4538, %v5122
        %v5248 = vmul.f32 %v4537, %v5127
        %v5249 = vmul.f32 %v4536, %v5132
        %v5250 = vmul.f32 %v4535, %v5137
        %v5251 = vmul.f32 %v4534, %v5142
        %v5252 = vmul.f32 %v4533, %v5147
        %v5253 = vmul.f32 %v4532, %v5152
        %v5254 = vmul.f32 %v4531, %v5157
        %v5255 = vmul.f32 %v4530, %v5162
        %v5256 = vmul.f32 %v4529, %v5167
        %v5257 = vmul.f32 %v4528, %v5172
        %v5258 = vmul.f32 %v4527, %v5177
        %v5259 = vmul.f32 %v4526, %v5182
        %v5260 = vmul.f32 %v4525, %v5187
        %v5261 = vmul.f32 %v4524, %v5192
        %v5262 = vmul.f32 %v4523, %v5197
        %v5263 = vmul.f32 %v4522, %v5202
        %v5264 = vmul.f32 %v4521, %v5207
        %v5265 = vmul.f32 %v4520, %v5212
        %v5266 = vmul.f32 %v4519, %v5217
        %v5267 = vmul.f32 %v4518, %v5222
        %v5268 = vmul.f32 %v4517, %v5227
        %v5269 = vmul.f32 %v4516, %v5232
        %v5270 = vmul.f32 %v4547, %v5237
        %v5271 = vpack.c.bf16 %v5240, %v5239
        %v5272 = vpack.c.bf16 %v5242, %v5241
        %v5273 = vpack.c.bf16 %v5244, %v5243
        %v5274 = vpack.c.bf16 %v5246, %v5245
        %v5275 = vpack.c.bf16 %v5248, %v5247
        %v5276 = vpack.c.bf16 %v5250, %v5249
        %v5277 = vpack.c.bf16 %v5252, %v5251
        %v5278 = vpack.c.bf16 %v5254, %v5253
        %v5279 = vpack.c.bf16 %v5256, %v5255
        %v5280 = vpack.c.bf16 %v5258, %v5257
        %v5281 = vpack.c.bf16 %v5260, %v5259
        %v5282 = vpack.c.bf16 %v5262, %v5261
        %v5283 = vpack.c.bf16 %v5264, %v5263
        %v5284 = vpack.c.bf16 %v5266, %v5265
        %v5285 = vpack.c.bf16 %v5268, %v5267
        %v5286 = vpack.c.bf16 %v5270, %v5269
        %s5287 = scalar_lea.vmem %s15, 1536
        %v5288 = vld [vmem:[%s5287] sm:$0xff]
        %v5289 = vld [vmem:[%s5287 + $0x8] sm:$0xff]
        %v5290 = vld [vmem:[%s5287 + $0x10] sm:$0xff]
        %v5291 = vld [vmem:[%s5287 + $0x18] sm:$0xff]
        %v5292 = vld [vmem:[%s5287 + $0x20] sm:$0xff]
        %v5293 = vld [vmem:[%s5287 + $0x28] sm:$0xff]
        %v5294 = vld [vmem:[%s5287 + $0x30] sm:$0xff]
        %v5295 = vld [vmem:[%s5287 + $0x38] sm:$0xff]
        %v5296 = vld [vmem:[%s5287 + $0x40] sm:$0xff]
        %v5297 = vld [vmem:[%s5287 + $0x48] sm:$0xff]
        %v5298 = vld [vmem:[%s5287 + $0x50] sm:$0xff]
        %v5299 = vld [vmem:[%s5287 + $0x58] sm:$0xff]
        %v5300 = vld [vmem:[%s5287 + $0x60] sm:$0xff]
        %v5301 = vld [vmem:[%s5287 + $0x68] sm:$0xff]
        %v5302 = vld [vmem:[%s5287 + $0x70] sm:$0xff]
        %v5303 = vld [vmem:[%s5287 + $0x78] sm:$0xff]
        %v5304 = vld [vmem:[%s5287 + $0x80] sm:$0xff]
        %v5305 = vld [vmem:[%s5287 + $0x88] sm:$0xff]
        %v5306 = vld [vmem:[%s5287 + $0x90] sm:$0xff]
        %v5307 = vld [vmem:[%s5287 + $0x98] sm:$0xff]
        %v5308 = vld [vmem:[%s5287 + $0xa0] sm:$0xff]
        %v5309 = vld [vmem:[%s5287 + $0xa8] sm:$0xff]
        %v5310 = vld [vmem:[%s5287 + $0xb0] sm:$0xff]
        %v5311 = vld [vmem:[%s5287 + $0xb8] sm:$0xff]
        %v5312 = vld [vmem:[%s5287 + $0xc0] sm:$0xff]
        %v5313 = vld [vmem:[%s5287 + $0xc8] sm:$0xff]
        %v5314 = vld [vmem:[%s5287 + $0xd0] sm:$0xff]
        %v5315 = vld [vmem:[%s5287 + $0xd8] sm:$0xff]
        %v5316 = vld [vmem:[%s5287 + $0xe0] sm:$0xff]
        %v5317 = vld [vmem:[%s5287 + $0xe8] sm:$0xff]
        %v5318 = vld [vmem:[%s5287 + $0xf0] sm:$0xff]
        %v5319 = vld [vmem:[%s5287 + $0xf8] sm:$0xff]
        %5321 = vset.pattern.permute.xlu0 0
        %5322 = vperm.xlu0 %5321, %v5288
        %v5323 = vpop.permute.xlu0 %5322
        %5326 = vset.pattern.permute.xlu0 0
        %5327 = vperm.xlu0 %5326, %v5289
        %v5328 = vpop.permute.xlu0 %5327
        %5331 = vset.pattern.permute.xlu0 0
        %5332 = vperm.xlu0 %5331, %v5290
        %v5333 = vpop.permute.xlu0 %5332
        %5336 = vset.pattern.permute.xlu0 0
        %5337 = vperm.xlu0 %5336, %v5291
        %v5338 = vpop.permute.xlu0 %5337
        %5341 = vset.pattern.permute.xlu0 0
        %5342 = vperm.xlu0 %5341, %v5292
        %v5343 = vpop.permute.xlu0 %5342
        %5346 = vset.pattern.permute.xlu0 0
        %5347 = vperm.xlu0 %5346, %v5293
        %v5348 = vpop.permute.xlu0 %5347
        %5351 = vset.pattern.permute.xlu0 0
        %5352 = vperm.xlu0 %5351, %v5294
        %v5353 = vpop.permute.xlu0 %5352
        %5356 = vset.pattern.permute.xlu0 0
        %5357 = vperm.xlu0 %5356, %v5295
        %v5358 = vpop.permute.xlu0 %5357
        %5361 = vset.pattern.permute.xlu0 0
        %5362 = vperm.xlu0 %5361, %v5296
        %v5363 = vpop.permute.xlu0 %5362
        %5366 = vset.pattern.permute.xlu0 0
        %5367 = vperm.xlu0 %5366, %v5297
        %v5368 = vpop.permute.xlu0 %5367
        %5371 = vset.pattern.permute.xlu0 0
        %5372 = vperm.xlu0 %5371, %v5298
        %v5373 = vpop.permute.xlu0 %5372
        %5376 = vset.pattern.permute.xlu0 0
        %5377 = vperm.xlu0 %5376, %v5299
        %v5378 = vpop.permute.xlu0 %5377
        %5381 = vset.pattern.permute.xlu0 0
        %5382 = vperm.xlu0 %5381, %v5300
        %v5383 = vpop.permute.xlu0 %5382
        %5386 = vset.pattern.permute.xlu0 0
        %5387 = vperm.xlu0 %5386, %v5301
        %v5388 = vpop.permute.xlu0 %5387
        %5391 = vset.pattern.permute.xlu0 0
        %5392 = vperm.xlu0 %5391, %v5302
        %v5393 = vpop.permute.xlu0 %5392
        %5396 = vset.pattern.permute.xlu0 0
        %5397 = vperm.xlu0 %5396, %v5303
        %v5398 = vpop.permute.xlu0 %5397
        %5401 = vset.pattern.permute.xlu0 0
        %5402 = vperm.xlu0 %5401, %v5304
        %v5403 = vpop.permute.xlu0 %5402
        %5406 = vset.pattern.permute.xlu0 0
        %5407 = vperm.xlu0 %5406, %v5305
        %v5408 = vpop.permute.xlu0 %5407
        %5411 = vset.pattern.permute.xlu0 0
        %5412 = vperm.xlu0 %5411, %v5306
        %v5413 = vpop.permute.xlu0 %5412
        %5416 = vset.pattern.permute.xlu0 0
        %5417 = vperm.xlu0 %5416, %v5307
        %v5418 = vpop.permute.xlu0 %5417
        %5421 = vset.pattern.permute.xlu0 0
        %5422 = vperm.xlu0 %5421, %v5308
        %v5423 = vpop.permute.xlu0 %5422
        %5426 = vset.pattern.permute.xlu0 0
        %5427 = vperm.xlu0 %5426, %v5309
        %v5428 = vpop.permute.xlu0 %5427
        %5431 = vset.pattern.permute.xlu0 0
        %5432 = vperm.xlu0 %5431, %v5310
        %v5433 = vpop.permute.xlu0 %5432
        %5436 = vset.pattern.permute.xlu0 0
        %5437 = vperm.xlu0 %5436, %v5311
        %v5438 = vpop.permute.xlu0 %5437
        %5441 = vset.pattern.permute.xlu0 0
        %5442 = vperm.xlu0 %5441, %v5312
        %v5443 = vpop.permute.xlu0 %5442
        %5446 = vset.pattern.permute.xlu0 0
        %5447 = vperm.xlu0 %5446, %v5313
        %v5448 = vpop.permute.xlu0 %5447
        %5451 = vset.pattern.permute.xlu0 0
        %5452 = vperm.xlu0 %5451, %v5314
        %v5453 = vpop.permute.xlu0 %5452
        %5456 = vset.pattern.permute.xlu0 0
        %5457 = vperm.xlu0 %5456, %v5315
        %v5458 = vpop.permute.xlu0 %5457
        %5461 = vset.pattern.permute.xlu0 0
        %5462 = vperm.xlu0 %5461, %v5316
        %v5463 = vpop.permute.xlu0 %5462
        %5466 = vset.pattern.permute.xlu0 0
        %5467 = vperm.xlu0 %5466, %v5317
        %v5468 = vpop.permute.xlu0 %5467
        %5471 = vset.pattern.permute.xlu0 0
        %5472 = vperm.xlu0 %5471, %v5318
        %v5473 = vpop.permute.xlu0 %5472
        %5476 = vset.pattern.permute.xlu0 0
        %5477 = vperm.xlu0 %5476, %v5319
        %v5478 = vpop.permute.xlu0 %5477
        %v5480 = vmul.f32 %v4000, %v5323
        %v5481 = vmul.f32 %v3999, %v5328
        %v5482 = vmul.f32 %v3998, %v5333
        %v5483 = vmul.f32 %v3997, %v5338
        %v5484 = vmul.f32 %v3996, %v5343
        %v5485 = vmul.f32 %v3995, %v5348
        %v5486 = vmul.f32 %v3994, %v5353
        %v5487 = vmul.f32 %v3993, %v5358
        %v5488 = vmul.f32 %v3992, %v5363
        %v5489 = vmul.f32 %v3991, %v5368
        %v5490 = vmul.f32 %v3990, %v5373
        %v5491 = vmul.f32 %v3989, %v5378
        %v5492 = vmul.f32 %v3988, %v5383
        %v5493 = vmul.f32 %v3987, %v5388
        %v5494 = vmul.f32 %v3986, %v5393
        %v5495 = vmul.f32 %v3985, %v5398
        %v5496 = vmul.f32 %v3984, %v5403
        %v5497 = vmul.f32 %v3983, %v5408
        %v5498 = vmul.f32 %v3982, %v5413
        %v5499 = vmul.f32 %v3981, %v5418
        %v5500 = vmul.f32 %v3980, %v5423
        %v5501 = vmul.f32 %v3979, %v5428
        %v5502 = vmul.f32 %v3978, %v5433
        %v5503 = vmul.f32 %v3977, %v5438
        %v5504 = vmul.f32 %v3976, %v5443
        %v5505 = vmul.f32 %v3975, %v5448
        %v5506 = vmul.f32 %v3974, %v5453
        %v5507 = vmul.f32 %v3973, %v5458
        %v5508 = vmul.f32 %v3972, %v5463
        %v5509 = vmul.f32 %v3971, %v5468
        %v5510 = vmul.f32 %v4002, %v5473
        %v5511 = vmul.f32 %v4001, %v5478
        %v5512 = vpack.c.bf16 %v5481, %v5480
        %v5513 = vpack.c.bf16 %v5483, %v5482
        %v5514 = vpack.c.bf16 %v5485, %v5484
        %v5515 = vpack.c.bf16 %v5487, %v5486
        %v5516 = vpack.c.bf16 %v5489, %v5488
        %v5517 = vpack.c.bf16 %v5491, %v5490
        %v5518 = vpack.c.bf16 %v5493, %v5492
        %v5519 = vpack.c.bf16 %v5495, %v5494
        %v5520 = vpack.c.bf16 %v5497, %v5496
        %v5521 = vpack.c.bf16 %v5499, %v5498
        %v5522 = vpack.c.bf16 %v5501, %v5500
        %v5523 = vpack.c.bf16 %v5503, %v5502
        %v5524 = vpack.c.bf16 %v5505, %v5504
        %v5525 = vpack.c.bf16 %v5507, %v5506
        %v5526 = vpack.c.bf16 %v5509, %v5508
        %v5527 = vpack.c.bf16 %v5511, %v5510
        %s5528 = scalar_lea.vmem %s15, 1792
        %v5529 = vld [vmem:[%s5528] sm:$0xff]
        %v5530 = vld [vmem:[%s5528 + $0x8] sm:$0xff]
        %v5531 = vld [vmem:[%s5528 + $0x10] sm:$0xff]
        %v5532 = vld [vmem:[%s5528 + $0x18] sm:$0xff]
        %v5533 = vld [vmem:[%s5528 + $0x20] sm:$0xff]
        %v5534 = vld [vmem:[%s5528 + $0x28] sm:$0xff]
        %v5535 = vld [vmem:[%s5528 + $0x30] sm:$0xff]
        %v5536 = vld [vmem:[%s5528 + $0x38] sm:$0xff]
        %v5537 = vld [vmem:[%s5528 + $0x40] sm:$0xff]
        %v5538 = vld [vmem:[%s5528 + $0x48] sm:$0xff]
        %v5539 = vld [vmem:[%s5528 + $0x50] sm:$0xff]
        %v5540 = vld [vmem:[%s5528 + $0x58] sm:$0xff]
        %v5541 = vld [vmem:[%s5528 + $0x60] sm:$0xff]
        %v5542 = vld [vmem:[%s5528 + $0x68] sm:$0xff]
        %v5543 = vld [vmem:[%s5528 + $0x70] sm:$0xff]
        %v5544 = vld [vmem:[%s5528 + $0x78] sm:$0xff]
        %v5545 = vld [vmem:[%s5528 + $0x80] sm:$0xff]
        %v5546 = vld [vmem:[%s5528 + $0x88] sm:$0xff]
        %v5547 = vld [vmem:[%s5528 + $0x90] sm:$0xff]
        %v5548 = vld [vmem:[%s5528 + $0x98] sm:$0xff]
        %v5549 = vld [vmem:[%s5528 + $0xa0] sm:$0xff]
        %v5550 = vld [vmem:[%s5528 + $0xa8] sm:$0xff]
        %v5551 = vld [vmem:[%s5528 + $0xb0] sm:$0xff]
        %v5552 = vld [vmem:[%s5528 + $0xb8] sm:$0xff]
        %v5553 = vld [vmem:[%s5528 + $0xc0] sm:$0xff]
        %v5554 = vld [vmem:[%s5528 + $0xc8] sm:$0xff]
        %v5555 = vld [vmem:[%s5528 + $0xd0] sm:$0xff]
        %v5556 = vld [vmem:[%s5528 + $0xd8] sm:$0xff]
        %v5557 = vld [vmem:[%s5528 + $0xe0] sm:$0xff]
        %v5558 = vld [vmem:[%s5528 + $0xe8] sm:$0xff]
        %v5559 = vld [vmem:[%s5528 + $0xf0] sm:$0xff]
        %v5560 = vld [vmem:[%s5528 + $0xf8] sm:$0xff]
        %5562 = vset.pattern.permute.xlu0 0
        %5563 = vperm.xlu0 %5562, %v5529
        %v5564 = vpop.permute.xlu0 %5563
        %5567 = vset.pattern.permute.xlu0 0
        %5568 = vperm.xlu0 %5567, %v5530
        %v5569 = vpop.permute.xlu0 %5568
        %5572 = vset.pattern.permute.xlu0 0
        %5573 = vperm.xlu0 %5572, %v5531
        %v5574 = vpop.permute.xlu0 %5573
        %5577 = vset.pattern.permute.xlu0 0
        %5578 = vperm.xlu0 %5577, %v5532
        %v5579 = vpop.permute.xlu0 %5578
        %5582 = vset.pattern.permute.xlu0 0
        %5583 = vperm.xlu0 %5582, %v5533
        %v5584 = vpop.permute.xlu0 %5583
        %5587 = vset.pattern.permute.xlu0 0
        %5588 = vperm.xlu0 %5587, %v5534
        %v5589 = vpop.permute.xlu0 %5588
        %5592 = vset.pattern.permute.xlu0 0
        %5593 = vperm.xlu0 %5592, %v5535
        %v5594 = vpop.permute.xlu0 %5593
        %5597 = vset.pattern.permute.xlu0 0
        %5598 = vperm.xlu0 %5597, %v5536
        %v5599 = vpop.permute.xlu0 %5598
        %5602 = vset.pattern.permute.xlu0 0
        %5603 = vperm.xlu0 %5602, %v5537
        %v5604 = vpop.permute.xlu0 %5603
        %5607 = vset.pattern.permute.xlu0 0
        %5608 = vperm.xlu0 %5607, %v5538
        %v5609 = vpop.permute.xlu0 %5608
        %5612 = vset.pattern.permute.xlu0 0
        %5613 = vperm.xlu0 %5612, %v5539
        %v5614 = vpop.permute.xlu0 %5613
        %5617 = vset.pattern.permute.xlu0 0
        %5618 = vperm.xlu0 %5617, %v5540
        %v5619 = vpop.permute.xlu0 %5618
        %5622 = vset.pattern.permute.xlu0 0
        %5623 = vperm.xlu0 %5622, %v5541
        %v5624 = vpop.permute.xlu0 %5623
        %5627 = vset.pattern.permute.xlu0 0
        %5628 = vperm.xlu0 %5627, %v5542
        %v5629 = vpop.permute.xlu0 %5628
        %5632 = vset.pattern.permute.xlu0 0
        %5633 = vperm.xlu0 %5632, %v5543
        %v5634 = vpop.permute.xlu0 %5633
        %5637 = vset.pattern.permute.xlu0 0
        %5638 = vperm.xlu0 %5637, %v5544
        %v5639 = vpop.permute.xlu0 %5638
        %5642 = vset.pattern.permute.xlu0 0
        %5643 = vperm.xlu0 %5642, %v5545
        %v5644 = vpop.permute.xlu0 %5643
        %5647 = vset.pattern.permute.xlu0 0
        %5648 = vperm.xlu0 %5647, %v5546
        %v5649 = vpop.permute.xlu0 %5648
        %5652 = vset.pattern.permute.xlu0 0
        %5653 = vperm.xlu0 %5652, %v5547
        %v5654 = vpop.permute.xlu0 %5653
        %5657 = vset.pattern.permute.xlu0 0
        %5658 = vperm.xlu0 %5657, %v5548
        %v5659 = vpop.permute.xlu0 %5658
        %5662 = vset.pattern.permute.xlu0 0
        %5663 = vperm.xlu0 %5662, %v5549
        %v5664 = vpop.permute.xlu0 %5663
        %5667 = vset.pattern.permute.xlu0 0
        %5668 = vperm.xlu0 %5667, %v5550
        %v5669 = vpop.permute.xlu0 %5668
        %5672 = vset.pattern.permute.xlu0 0
        %5673 = vperm.xlu0 %5672, %v5551
        %v5674 = vpop.permute.xlu0 %5673
        %5677 = vset.pattern.permute.xlu0 0
        %5678 = vperm.xlu0 %5677, %v5552
        %v5679 = vpop.permute.xlu0 %5678
        %5682 = vset.pattern.permute.xlu0 0
        %5683 = vperm.xlu0 %5682, %v5553
        %v5684 = vpop.permute.xlu0 %5683
        %5687 = vset.pattern.permute.xlu0 0
        %5688 = vperm.xlu0 %5687, %v5554
        %v5689 = vpop.permute.xlu0 %5688
        %5692 = vset.pattern.permute.xlu0 0
        %5693 = vperm.xlu0 %5692, %v5555
        %v5694 = vpop.permute.xlu0 %5693
        %5697 = vset.pattern.permute.xlu0 0
        %5698 = vperm.xlu0 %5697, %v5556
        %v5699 = vpop.permute.xlu0 %5698
        %5702 = vset.pattern.permute.xlu0 0
        %5703 = vperm.xlu0 %5702, %v5557
        %v5704 = vpop.permute.xlu0 %5703
        %5707 = vset.pattern.permute.xlu0 0
        %5708 = vperm.xlu0 %5707, %v5558
        %v5709 = vpop.permute.xlu0 %5708
        %5712 = vset.pattern.permute.xlu0 0
        %5713 = vperm.xlu0 %5712, %v5559
        %v5714 = vpop.permute.xlu0 %5713
        %5717 = vset.pattern.permute.xlu0 0
        %5718 = vperm.xlu0 %5717, %v5560
        %v5719 = vpop.permute.xlu0 %5718
        %v5721 = vmul.f32 %v3784, %v5564
        %v5722 = vmul.f32 %v3787, %v5569
        %v5723 = vmul.f32 %v3792, %v5574
        %v5724 = vmul.f32 %v3795, %v5579
        %v5725 = vmul.f32 %v3800, %v5584
        %v5726 = vmul.f32 %v3803, %v5589
        %v5727 = vmul.f32 %v3808, %v5594
        %v5728 = vmul.f32 %v3811, %v5599
        %v5729 = vmul.f32 %v3816, %v5604
        %v5730 = vmul.f32 %v3819, %v5609
        %v5731 = vmul.f32 %v3824, %v5614
        %v5732 = vmul.f32 %v3827, %v5619
        %v5733 = vmul.f32 %v3832, %v5624
        %v5734 = vmul.f32 %v3835, %v5629
        %v5735 = vmul.f32 %v3840, %v5634
        %v5736 = vmul.f32 %v3843, %v5639
        %v5737 = vmul.f32 %v3848, %v5644
        %v5738 = vmul.f32 %v3851, %v5649
        %v5739 = vmul.f32 %v3856, %v5654
        %v5740 = vmul.f32 %v3859, %v5659
        %v5741 = vmul.f32 %v3864, %v5664
        %v5742 = vmul.f32 %v3867, %v5669
        %v5743 = vmul.f32 %v3872, %v5674
        %v5744 = vmul.f32 %v3875, %v5679
        %v5745 = vmul.f32 %v3880, %v5684
        %v5746 = vmul.f32 %v3883, %v5689
        %v5747 = vmul.f32 %v3888, %v5694
        %v5748 = vmul.f32 %v3891, %v5699
        %v5749 = vmul.f32 %v3896, %v5704
        %v5750 = vmul.f32 %v3899, %v5709
        %v5751 = vmul.f32 %v3776, %v5714
        %v5752 = vmul.f32 %v3779, %v5719
        %v5753 = vpack.c.bf16 %v5722, %v5721
        %v5754 = vpack.c.bf16 %v5724, %v5723
        %v5755 = vpack.c.bf16 %v5726, %v5725
        %v5756 = vpack.c.bf16 %v5728, %v5727
        %v5757 = vpack.c.bf16 %v5730, %v5729
        %v5758 = vpack.c.bf16 %v5732, %v5731
        %v5759 = vpack.c.bf16 %v5734, %v5733
        %v5760 = vpack.c.bf16 %v5736, %v5735
        %v5761 = vpack.c.bf16 %v5738, %v5737
        %v5762 = vpack.c.bf16 %v5740, %v5739
        %v5763 = vpack.c.bf16 %v5742, %v5741
        %v5764 = vpack.c.bf16 %v5744, %v5743
        %v5765 = vpack.c.bf16 %v5746, %v5745
        %v5766 = vpack.c.bf16 %v5748, %v5747
        %v5767 = vpack.c.bf16 %v5750, %v5749
        %v5768 = vpack.c.bf16 %v5752, %v5751
        %s5769 = scalar_lea.vmem %s15, 2048
        %v5770 = vld [vmem:[%s5769] sm:$0xff]
        %v5771 = vld [vmem:[%s5769 + $0x8] sm:$0xff]
        %v5772 = vld [vmem:[%s5769 + $0x10] sm:$0xff]
        %v5773 = vld [vmem:[%s5769 + $0x18] sm:$0xff]
        %v5774 = vld [vmem:[%s5769 + $0x20] sm:$0xff]
        %v5775 = vld [vmem:[%s5769 + $0x28] sm:$0xff]
        %v5776 = vld [vmem:[%s5769 + $0x30] sm:$0xff]
        %v5777 = vld [vmem:[%s5769 + $0x38] sm:$0xff]
        %v5778 = vld [vmem:[%s5769 + $0x40] sm:$0xff]
        %v5779 = vld [vmem:[%s5769 + $0x48] sm:$0xff]
        %v5780 = vld [vmem:[%s5769 + $0x50] sm:$0xff]
        %v5781 = vld [vmem:[%s5769 + $0x58] sm:$0xff]
        %v5782 = vld [vmem:[%s5769 + $0x60] sm:$0xff]
        %v5783 = vld [vmem:[%s5769 + $0x68] sm:$0xff]
        %v5784 = vld [vmem:[%s5769 + $0x70] sm:$0xff]
        %v5785 = vld [vmem:[%s5769 + $0x78] sm:$0xff]
        %v5786 = vld [vmem:[%s5769 + $0x80] sm:$0xff]
        %v5787 = vld [vmem:[%s5769 + $0x88] sm:$0xff]
        %v5788 = vld [vmem:[%s5769 + $0x90] sm:$0xff]
        %v5789 = vld [vmem:[%s5769 + $0x98] sm:$0xff]
        %v5790 = vld [vmem:[%s5769 + $0xa0] sm:$0xff]
        %v5791 = vld [vmem:[%s5769 + $0xa8] sm:$0xff]
        %v5792 = vld [vmem:[%s5769 + $0xb0] sm:$0xff]
        %v5793 = vld [vmem:[%s5769 + $0xb8] sm:$0xff]
        %v5794 = vld [vmem:[%s5769 + $0xc0] sm:$0xff]
        %v5795 = vld [vmem:[%s5769 + $0xc8] sm:$0xff]
        %v5796 = vld [vmem:[%s5769 + $0xd0] sm:$0xff]
        %v5797 = vld [vmem:[%s5769 + $0xd8] sm:$0xff]
        %v5798 = vld [vmem:[%s5769 + $0xe0] sm:$0xff]
        %v5799 = vld [vmem:[%s5769 + $0xe8] sm:$0xff]
        %v5800 = vld [vmem:[%s5769 + $0xf0] sm:$0xff]
        %v5801 = vld [vmem:[%s5769 + $0xf8] sm:$0xff]
        %5803 = vset.pattern.permute.xlu0 0
        %5804 = vperm.xlu0 %5803, %v5770
        %v5805 = vpop.permute.xlu0 %5804
        %5808 = vset.pattern.permute.xlu0 0
        %5809 = vperm.xlu0 %5808, %v5771
        %v5810 = vpop.permute.xlu0 %5809
        %5813 = vset.pattern.permute.xlu0 0
        %5814 = vperm.xlu0 %5813, %v5772
        %v5815 = vpop.permute.xlu0 %5814
        %5818 = vset.pattern.permute.xlu0 0
        %5819 = vperm.xlu0 %5818, %v5773
        %v5820 = vpop.permute.xlu0 %5819
        %5823 = vset.pattern.permute.xlu0 0
        %5824 = vperm.xlu0 %5823, %v5774
        %v5825 = vpop.permute.xlu0 %5824
        %5828 = vset.pattern.permute.xlu0 0
        %5829 = vperm.xlu0 %5828, %v5775
        %v5830 = vpop.permute.xlu0 %5829
        %5833 = vset.pattern.permute.xlu0 0
        %5834 = vperm.xlu0 %5833, %v5776
        %v5835 = vpop.permute.xlu0 %5834
        %5838 = vset.pattern.permute.xlu0 0
        %5839 = vperm.xlu0 %5838, %v5777
        %v5840 = vpop.permute.xlu0 %5839
        %5843 = vset.pattern.permute.xlu0 0
        %5844 = vperm.xlu0 %5843, %v5778
        %v5845 = vpop.permute.xlu0 %5844
        %5848 = vset.pattern.permute.xlu0 0
        %5849 = vperm.xlu0 %5848, %v5779
        %v5850 = vpop.permute.xlu0 %5849
        %5853 = vset.pattern.permute.xlu0 0
        %5854 = vperm.xlu0 %5853, %v5780
        %v5855 = vpop.permute.xlu0 %5854
        %5858 = vset.pattern.permute.xlu0 0
        %5859 = vperm.xlu0 %5858, %v5781
        %v5860 = vpop.permute.xlu0 %5859
        %5863 = vset.pattern.permute.xlu0 0
        %5864 = vperm.xlu0 %5863, %v5782
        %v5865 = vpop.permute.xlu0 %5864
        %5868 = vset.pattern.permute.xlu0 0
        %5869 = vperm.xlu0 %5868, %v5783
        %v5870 = vpop.permute.xlu0 %5869
        %5873 = vset.pattern.permute.xlu0 0
        %5874 = vperm.xlu0 %5873, %v5784
        %v5875 = vpop.permute.xlu0 %5874
        %5878 = vset.pattern.permute.xlu0 0
        %5879 = vperm.xlu0 %5878, %v5785
        %v5880 = vpop.permute.xlu0 %5879
        %5883 = vset.pattern.permute.xlu0 0
        %5884 = vperm.xlu0 %5883, %v5786
        %v5885 = vpop.permute.xlu0 %5884
        %5888 = vset.pattern.permute.xlu0 0
        %5889 = vperm.xlu0 %5888, %v5787
        %v5890 = vpop.permute.xlu0 %5889
        %5893 = vset.pattern.permute.xlu0 0
        %5894 = vperm.xlu0 %5893, %v5788
        %v5895 = vpop.permute.xlu0 %5894
        %5898 = vset.pattern.permute.xlu0 0
        %5899 = vperm.xlu0 %5898, %v5789
        %v5900 = vpop.permute.xlu0 %5899
        %5903 = vset.pattern.permute.xlu0 0
        %5904 = vperm.xlu0 %5903, %v5790
        %v5905 = vpop.permute.xlu0 %5904
        %5908 = vset.pattern.permute.xlu0 0
        %5909 = vperm.xlu0 %5908, %v5791
        %v5910 = vpop.permute.xlu0 %5909
        %5913 = vset.pattern.permute.xlu0 0
        %5914 = vperm.xlu0 %5913, %v5792
        %v5915 = vpop.permute.xlu0 %5914
        %5918 = vset.pattern.permute.xlu0 0
        %5919 = vperm.xlu0 %5918, %v5793
        %v5920 = vpop.permute.xlu0 %5919
        %5923 = vset.pattern.permute.xlu0 0
        %5924 = vperm.xlu0 %5923, %v5794
        %v5925 = vpop.permute.xlu0 %5924
        %5928 = vset.pattern.permute.xlu0 0
        %5929 = vperm.xlu0 %5928, %v5795
        %v5930 = vpop.permute.xlu0 %5929
        %5933 = vset.pattern.permute.xlu0 0
        %5934 = vperm.xlu0 %5933, %v5796
        %v5935 = vpop.permute.xlu0 %5934
        %5938 = vset.pattern.permute.xlu0 0
        %5939 = vperm.xlu0 %5938, %v5797
        %v5940 = vpop.permute.xlu0 %5939
        %5943 = vset.pattern.permute.xlu0 0
        %5944 = vperm.xlu0 %5943, %v5798
        %v5945 = vpop.permute.xlu0 %5944
        %5948 = vset.pattern.permute.xlu0 0
        %5949 = vperm.xlu0 %5948, %v5799
        %v5950 = vpop.permute.xlu0 %5949
        %5953 = vset.pattern.permute.xlu0 0
        %5954 = vperm.xlu0 %5953, %v5800
        %v5955 = vpop.permute.xlu0 %5954
        %5958 = vset.pattern.permute.xlu0 0
        %5959 = vperm.xlu0 %5958, %v5801
        %v5960 = vpop.permute.xlu0 %5959
        %v5962 = vmul.f32 %v4544, %v5805
        %v5963 = vmul.f32 %v4543, %v5810
        %v5964 = vmul.f32 %v4542, %v5815
        %v5965 = vmul.f32 %v4541, %v5820
        %v5966 = vmul.f32 %v4540, %v5825
        %v5967 = vmul.f32 %v4539, %v5830
        %v5968 = vmul.f32 %v4538, %v5835
        %v5969 = vmul.f32 %v4537, %v5840
        %v5970 = vmul.f32 %v4536, %v5845
        %v5971 = vmul.f32 %v4535, %v5850
        %v5972 = vmul.f32 %v4534, %v5855
        %v5973 = vmul.f32 %v4533, %v5860
        %v5974 = vmul.f32 %v4532, %v5865
        %v5975 = vmul.f32 %v4531, %v5870
        %v5976 = vmul.f32 %v4530, %v5875
        %v5977 = vmul.f32 %v4529, %v5880
        %v5978 = vmul.f32 %v4528, %v5885
        %v5979 = vmul.f32 %v4527, %v5890
        %v5980 = vmul.f32 %v4526, %v5895
        %v5981 = vmul.f32 %v4525, %v5900
        %v5982 = vmul.f32 %v4524, %v5905
        %v5983 = vmul.f32 %v4523, %v5910
        %v5984 = vmul.f32 %v4522, %v5915
        %v5985 = vmul.f32 %v4521, %v5920
        %v5986 = vmul.f32 %v4520, %v5925
        %v5987 = vmul.f32 %v4519, %v5930
        %v5988 = vmul.f32 %v4518, %v5935
        %v5989 = vmul.f32 %v4517, %v5940
        %v5990 = vmul.f32 %v4516, %v5945
        %v5991 = vmul.f32 %v4547, %v5950
        %v5992 = vmul.f32 %v4546, %v5955
        %v5993 = vmul.f32 %v4545, %v5960
        %v5994 = vpack.c.bf16 %v5963, %v5962
        %v5995 = vpack.c.bf16 %v5965, %v5964
        %v5996 = vpack.c.bf16 %v5967, %v5966
        %v5997 = vpack.c.bf16 %v5969, %v5968
        %v5998 = vpack.c.bf16 %v5971, %v5970
        %v5999 = vpack.c.bf16 %v5973, %v5972
        %v6000 = vpack.c.bf16 %v5975, %v5974
        %v6001 = vpack.c.bf16 %v5977, %v5976
        %v6002 = vpack.c.bf16 %v5979, %v5978
        %v6003 = vpack.c.bf16 %v5981, %v5980
        %v6004 = vpack.c.bf16 %v5983, %v5982
        %v6005 = vpack.c.bf16 %v5985, %v5984
        %v6006 = vpack.c.bf16 %v5987, %v5986
        %v6007 = vpack.c.bf16 %v5989, %v5988
        %v6008 = vpack.c.bf16 %v5991, %v5990
        %v6009 = vpack.c.bf16 %v5993, %v5992
        %6026 = vrot.lane.b32.xlu0 %v4468, 32
        %v6027 = vpop.permute.xlu0 %6026
        %6028 = vrot.lane.b32.xlu0 %v4469, 32
        %v6029 = vpop.permute.xlu0 %6028
        %6030 = vrot.lane.b32.xlu0 %v4470, 32
        %v6031 = vpop.permute.xlu0 %6030
        %6032 = vrot.lane.b32.xlu0 %v4471, 32
        %v6033 = vpop.permute.xlu0 %6032
        %6034 = vrot.lane.b32.xlu0 %v4472, 32
        %v6035 = vpop.permute.xlu0 %6034
        %6036 = vrot.lane.b32.xlu0 %v4473, 32
        %v6037 = vpop.permute.xlu0 %6036
        %6038 = vrot.lane.b32.xlu0 %v4474, 32
        %v6039 = vpop.permute.xlu0 %6038
        %6040 = vrot.lane.b32.xlu0 %v4475, 32
        %v6041 = vpop.permute.xlu0 %6040
        %6042 = vrot.lane.b32.xlu0 %v4476, 32
        %v6043 = vpop.permute.xlu0 %6042
        %6044 = vrot.lane.b32.xlu0 %v4477, 32
        %v6045 = vpop.permute.xlu0 %6044
        %6046 = vrot.lane.b32.xlu0 %v4478, 32
        %v6047 = vpop.permute.xlu0 %6046
        %6048 = vrot.lane.b32.xlu0 %v4479, 32
        %v6049 = vpop.permute.xlu0 %6048
        %6050 = vrot.lane.b32.xlu0 %v4480, 32
        %v6051 = vpop.permute.xlu0 %6050
        %6052 = vrot.lane.b32.xlu0 %v4481, 32
        %v6053 = vpop.permute.xlu0 %6052
        %6054 = vrot.lane.b32.xlu0 %v4482, 32
        %v6055 = vpop.permute.xlu0 %6054
        %6056 = vrot.lane.b32.xlu0 %v4483, 32
        %v6057 = vpop.permute.xlu0 %6056
        %6074 = vrot.lane.b32.xlu0 %v4773, 64
        %v6075 = vpop.permute.xlu0 %6074
        %6076 = vrot.lane.b32.xlu0 %v4774, 64
        %v6077 = vpop.permute.xlu0 %6076
        %6078 = vrot.lane.b32.xlu0 %v4775, 64
        %v6079 = vpop.permute.xlu0 %6078
        %6080 = vrot.lane.b32.xlu0 %v4776, 64
        %v6081 = vpop.permute.xlu0 %6080
        %6082 = vrot.lane.b32.xlu0 %v4777, 64
        %v6083 = vpop.permute.xlu0 %6082
        %6084 = vrot.lane.b32.xlu0 %v4778, 64
        %v6085 = vpop.permute.xlu0 %6084
        %6086 = vrot.lane.b32.xlu0 %v4779, 64
        %v6087 = vpop.permute.xlu0 %6086
        %6088 = vrot.lane.b32.xlu0 %v4780, 64
        %v6089 = vpop.permute.xlu0 %6088
        %6090 = vrot.lane.b32.xlu0 %v4781, 64
        %v6091 = vpop.permute.xlu0 %6090
        %6092 = vrot.lane.b32.xlu0 %v4782, 64
        %v6093 = vpop.permute.xlu0 %6092
        %6094 = vrot.lane.b32.xlu0 %v4783, 64
        %v6095 = vpop.permute.xlu0 %6094
        %6096 = vrot.lane.b32.xlu0 %v4784, 64
        %v6097 = vpop.permute.xlu0 %6096
        %6098 = vrot.lane.b32.xlu0 %v4785, 64
        %v6099 = vpop.permute.xlu0 %6098
        %6100 = vrot.lane.b32.xlu0 %v4786, 64
        %v6101 = vpop.permute.xlu0 %6100
        %6102 = vrot.lane.b32.xlu0 %v4787, 64
        %v6103 = vpop.permute.xlu0 %6102
        %6104 = vrot.lane.b32.xlu0 %v4788, 64
        %v6105 = vpop.permute.xlu0 %6104
        %6122 = vrot.lane.b32.xlu0 %v5014, 96
        %v6123 = vpop.permute.xlu0 %6122
        %6124 = vrot.lane.b32.xlu0 %v5015, 96
        %v6125 = vpop.permute.xlu0 %6124
        %6126 = vrot.lane.b32.xlu0 %v5016, 96
        %v6127 = vpop.permute.xlu0 %6126
        %6128 = vrot.lane.b32.xlu0 %v5017, 96
        %v6129 = vpop.permute.xlu0 %6128
        %6130 = vrot.lane.b32.xlu0 %v5018, 96
        %v6131 = vpop.permute.xlu0 %6130
        %6132 = vrot.lane.b32.xlu0 %v5019, 96
        %v6133 = vpop.permute.xlu0 %6132
        %6134 = vrot.lane.b32.xlu0 %v5020, 96
        %v6135 = vpop.permute.xlu0 %6134
        %6136 = vrot.lane.b32.xlu0 %v5021, 96
        %v6137 = vpop.permute.xlu0 %6136
        %6138 = vrot.lane.b32.xlu0 %v5022, 96
        %v6139 = vpop.permute.xlu0 %6138
        %6140 = vrot.lane.b32.xlu0 %v5023, 96
        %v6141 = vpop.permute.xlu0 %6140
        %6142 = vrot.lane.b32.xlu0 %v5024, 96
        %v6143 = vpop.permute.xlu0 %6142
        %6144 = vrot.lane.b32.xlu0 %v5025, 96
        %v6145 = vpop.permute.xlu0 %6144
        %6146 = vrot.lane.b32.xlu0 %v5026, 96
        %v6147 = vpop.permute.xlu0 %6146
        %6148 = vrot.lane.b32.xlu0 %v5027, 96
        %v6149 = vpop.permute.xlu0 %6148
        %6150 = vrot.lane.b32.xlu0 %v5028, 96
        %v6151 = vpop.permute.xlu0 %6150
        %6152 = vrot.lane.b32.xlu0 %v5029, 96
        %v6153 = vpop.permute.xlu0 %6152
        %6170 = vrot.lane.b32.xlu0 %v5271, 32
        %v6171 = vpop.permute.xlu0 %6170
        %6172 = vrot.lane.b32.xlu0 %v5272, 32
        %v6173 = vpop.permute.xlu0 %6172
        %6174 = vrot.lane.b32.xlu0 %v5273, 32
        %v6175 = vpop.permute.xlu0 %6174
        %6176 = vrot.lane.b32.xlu0 %v5274, 32
        %v6177 = vpop.permute.xlu0 %6176
        %6178 = vrot.lane.b32.xlu0 %v5275, 32
        %v6179 = vpop.permute.xlu0 %6178
        %6180 = vrot.lane.b32.xlu0 %v5276, 32
        %v6181 = vpop.permute.xlu0 %6180
        %6182 = vrot.lane.b32.xlu0 %v5277, 32
        %v6183 = vpop.permute.xlu0 %6182
        %6184 = vrot.lane.b32.xlu0 %v5278, 32
        %v6185 = vpop.permute.xlu0 %6184
        %6186 = vrot.lane.b32.xlu0 %v5279, 32
        %v6187 = vpop.permute.xlu0 %6186
        %6188 = vrot.lane.b32.xlu0 %v5280, 32
        %v6189 = vpop.permute.xlu0 %6188
        %6190 = vrot.lane.b32.xlu0 %v5281, 32
        %v6191 = vpop.permute.xlu0 %6190
        %6192 = vrot.lane.b32.xlu0 %v5282, 32
        %v6193 = vpop.permute.xlu0 %6192
        %6194 = vrot.lane.b32.xlu0 %v5283, 32
        %v6195 = vpop.permute.xlu0 %6194
        %6196 = vrot.lane.b32.xlu0 %v5284, 32
        %v6197 = vpop.permute.xlu0 %6196
        %6198 = vrot.lane.b32.xlu0 %v5285, 32
        %v6199 = vpop.permute.xlu0 %6198
        %6200 = vrot.lane.b32.xlu0 %v5286, 32
        %v6201 = vpop.permute.xlu0 %6200
        %6218 = vrot.lane.b32.xlu0 %v5512, 64
        %v6219 = vpop.permute.xlu0 %6218
        %6220 = vrot.lane.b32.xlu0 %v5513, 64
        %v6221 = vpop.permute.xlu0 %6220
        %6222 = vrot.lane.b32.xlu0 %v5514, 64
        %v6223 = vpop.permute.xlu0 %6222
        %6224 = vrot.lane.b32.xlu0 %v5515, 64
        %v6225 = vpop.permute.xlu0 %6224
        %6226 = vrot.lane.b32.xlu0 %v5516, 64
        %v6227 = vpop.permute.xlu0 %6226
        %6228 = vrot.lane.b32.xlu0 %v5517, 64
        %v6229 = vpop.permute.xlu0 %6228
        %6230 = vrot.lane.b32.xlu0 %v5518, 64
        %v6231 = vpop.permute.xlu0 %6230
        %6232 = vrot.lane.b32.xlu0 %v5519, 64
        %v6233 = vpop.permute.xlu0 %6232
        %6234 = vrot.lane.b32.xlu0 %v5520, 64
        %v6235 = vpop.permute.xlu0 %6234
        %6236 = vrot.lane.b32.xlu0 %v5521, 64
        %v6237 = vpop.permute.xlu0 %6236
        %6238 = vrot.lane.b32.xlu0 %v5522, 64
        %v6239 = vpop.permute.xlu0 %6238
        %6240 = vrot.lane.b32.xlu0 %v5523, 64
        %v6241 = vpop.permute.xlu0 %6240
        %6242 = vrot.lane.b32.xlu0 %v5524, 64
        %v6243 = vpop.permute.xlu0 %6242
        %6244 = vrot.lane.b32.xlu0 %v5525, 64
        %v6245 = vpop.permute.xlu0 %6244
        %6246 = vrot.lane.b32.xlu0 %v5526, 64
        %v6247 = vpop.permute.xlu0 %6246
        %6248 = vrot.lane.b32.xlu0 %v5527, 64
        %v6249 = vpop.permute.xlu0 %6248
        %6266 = vrot.lane.b32.xlu0 %v5753, 96
        %v6267 = vpop.permute.xlu0 %6266
        %6268 = vrot.lane.b32.xlu0 %v5754, 96
        %v6269 = vpop.permute.xlu0 %6268
        %6270 = vrot.lane.b32.xlu0 %v5755, 96
        %v6271 = vpop.permute.xlu0 %6270
        %6272 = vrot.lane.b32.xlu0 %v5756, 96
        %v6273 = vpop.permute.xlu0 %6272
        %6274 = vrot.lane.b32.xlu0 %v5757, 96
        %v6275 = vpop.permute.xlu0 %6274
        %6276 = vrot.lane.b32.xlu0 %v5758, 96
        %v6277 = vpop.permute.xlu0 %6276
        %6278 = vrot.lane.b32.xlu0 %v5759, 96
        %v6279 = vpop.permute.xlu0 %6278
        %6280 = vrot.lane.b32.xlu0 %v5760, 96
        %v6281 = vpop.permute.xlu0 %6280
        %6282 = vrot.lane.b32.xlu0 %v5761, 96
        %v6283 = vpop.permute.xlu0 %6282
        %6284 = vrot.lane.b32.xlu0 %v5762, 96
        %v6285 = vpop.permute.xlu0 %6284
        %6286 = vrot.lane.b32.xlu0 %v5763, 96
        %v6287 = vpop.permute.xlu0 %6286
        %6288 = vrot.lane.b32.xlu0 %v5764, 96
        %v6289 = vpop.permute.xlu0 %6288
        %6290 = vrot.lane.b32.xlu0 %v5765, 96
        %v6291 = vpop.permute.xlu0 %6290
        %6292 = vrot.lane.b32.xlu0 %v5766, 96
        %v6293 = vpop.permute.xlu0 %6292
        %6294 = vrot.lane.b32.xlu0 %v5767, 96
        %v6295 = vpop.permute.xlu0 %6294
        %6296 = vrot.lane.b32.xlu0 %v5768, 96
        %v6297 = vpop.permute.xlu0 %6296
        %v6300 = vsel %vm847, %v4227, %v6027
        %v6303 = vsel %vm847, %v4228, %v6029
        %v6306 = vsel %vm847, %v4229, %v6031
        %v6309 = vsel %vm847, %v4230, %v6033
        %v6312 = vsel %vm847, %v4231, %v6035
        %v6315 = vsel %vm847, %v4232, %v6037
        %v6318 = vsel %vm847, %v4233, %v6039
        %v6321 = vsel %vm847, %v4234, %v6041
        %v6324 = vsel %vm847, %v4235, %v6043
        %v6327 = vsel %vm847, %v4236, %v6045
        %v6330 = vsel %vm847, %v4237, %v6047
        %v6333 = vsel %vm847, %v4238, %v6049
        %v6336 = vsel %vm847, %v4239, %v6051
        %v6339 = vsel %vm847, %v4240, %v6053
        %v6342 = vsel %vm847, %v4241, %v6055
        %v6345 = vsel %vm847, %v4242, %v6057
        %v6347 = vsel %vm1105, %v6300, %v6075
        %v6349 = vsel %vm1105, %v6303, %v6077
        %v6351 = vsel %vm1105, %v6306, %v6079
        %v6353 = vsel %vm1105, %v6309, %v6081
        %v6355 = vsel %vm1105, %v6312, %v6083
        %v6357 = vsel %vm1105, %v6315, %v6085
        %v6359 = vsel %vm1105, %v6318, %v6087
        %v6361 = vsel %vm1105, %v6321, %v6089
        %v6363 = vsel %vm1105, %v6324, %v6091
        %v6365 = vsel %vm1105, %v6327, %v6093
        %v6367 = vsel %vm1105, %v6330, %v6095
        %v6369 = vsel %vm1105, %v6333, %v6097
        %v6371 = vsel %vm1105, %v6336, %v6099
        %v6373 = vsel %vm1105, %v6339, %v6101
        %v6375 = vsel %vm1105, %v6342, %v6103
        %v6377 = vsel %vm1105, %v6345, %v6105
        %v6379 = vsel %vm1108, %v6347, %v6123
        %v6382 = vsel %vm1108, %v6349, %v6125
        %v6385 = vsel %vm1108, %v6351, %v6127
        %v6388 = vsel %vm1108, %v6353, %v6129
        %v6391 = vsel %vm1108, %v6355, %v6131
        %v6394 = vsel %vm1108, %v6357, %v6133
        %v6397 = vsel %vm1108, %v6359, %v6135
        %v6400 = vsel %vm1108, %v6361, %v6137
        %v6403 = vsel %vm1108, %v6363, %v6139
        %v6406 = vsel %vm1108, %v6365, %v6141
        %v6409 = vsel %vm1108, %v6367, %v6143
        %v6412 = vsel %vm1108, %v6369, %v6145
        %v6415 = vsel %vm1108, %v6371, %v6147
        %v6418 = vsel %vm1108, %v6373, %v6149
        %v6421 = vsel %vm1108, %v6375, %v6151
        %v6424 = vsel %vm1108, %v6377, %v6153
        %v6428 = vsel %vm847, %v5030, %v6171
        %v6431 = vsel %vm847, %v5031, %v6173
        %v6434 = vsel %vm847, %v5032, %v6175
        %v6437 = vsel %vm847, %v5033, %v6177
        %v6440 = vsel %vm847, %v5034, %v6179
        %v6443 = vsel %vm847, %v5035, %v6181
        %v6446 = vsel %vm847, %v5036, %v6183
        %v6449 = vsel %vm847, %v5037, %v6185
        %v6452 = vsel %vm847, %v5038, %v6187
        %v6455 = vsel %vm847, %v5039, %v6189
        %v6458 = vsel %vm847, %v5040, %v6191
        %v6461 = vsel %vm847, %v5041, %v6193
        %v6464 = vsel %vm847, %v5042, %v6195
        %v6467 = vsel %vm847, %v5043, %v6197
        %v6470 = vsel %vm847, %v5044, %v6199
        %v6473 = vsel %vm847, %v5045, %v6201
        %v6475 = vsel %vm1105, %v6428, %v6219
        %v6477 = vsel %vm1105, %v6431, %v6221
        %v6479 = vsel %vm1105, %v6434, %v6223
        %v6481 = vsel %vm1105, %v6437, %v6225
        %v6483 = vsel %vm1105, %v6440, %v6227
        %v6485 = vsel %vm1105, %v6443, %v6229
        %v6487 = vsel %vm1105, %v6446, %v6231
        %v6489 = vsel %vm1105, %v6449, %v6233
        %v6491 = vsel %vm1105, %v6452, %v6235
        %v6493 = vsel %vm1105, %v6455, %v6237
        %v6495 = vsel %vm1105, %v6458, %v6239
        %v6497 = vsel %vm1105, %v6461, %v6241
        %v6499 = vsel %vm1105, %v6464, %v6243
        %v6501 = vsel %vm1105, %v6467, %v6245
        %v6503 = vsel %vm1105, %v6470, %v6247
        %v6505 = vsel %vm1105, %v6473, %v6249
        %v6507 = vsel %vm1108, %v6475, %v6267
        %v6510 = vsel %vm1108, %v6477, %v6269
        %v6513 = vsel %vm1108, %v6479, %v6271
        %v6516 = vsel %vm1108, %v6481, %v6273
        %v6519 = vsel %vm1108, %v6483, %v6275
        %v6522 = vsel %vm1108, %v6485, %v6277
        %v6525 = vsel %vm1108, %v6487, %v6279
        %v6528 = vsel %vm1108, %v6489, %v6281
        %v6531 = vsel %vm1108, %v6491, %v6283
        %v6534 = vsel %vm1108, %v6493, %v6285
        %v6537 = vsel %vm1108, %v6495, %v6287
        %v6540 = vsel %vm1108, %v6497, %v6289
        %v6543 = vsel %vm1108, %v6499, %v6291
        %v6546 = vsel %vm1108, %v6501, %v6293
        %v6549 = vsel %vm1108, %v6503, %v6295
        %v6552 = vsel %vm1108, %v6505, %v6297
        %v6590 = vunpack.c.l.b16 %v3903
        %v6591 = vunpack.c.l.b16 %v3904
        %v6592 = vunpack.c.l.b16 %v3905
        %v6593 = vunpack.c.l.b16 %v3906
        %v6594 = vunpack.c.l.b16 %v3907
        %v6595 = vunpack.c.l.b16 %v3908
        %v6596 = vunpack.c.l.b16 %v3909
        %v6597 = vunpack.c.l.b16 %v3910
        %v6598 = vunpack.c.l.b16 %v3911
        %v6599 = vunpack.c.l.b16 %v3912
        %v6600 = vunpack.c.l.b16 %v3913
        %v6601 = vunpack.c.l.b16 %v3914
        %v6602 = vunpack.c.l.b16 %v3915
        %v6603 = vunpack.c.l.b16 %v3916
        %v6604 = vunpack.c.l.b16 %v3917
        %v6605 = vunpack.c.l.b16 %v3918
        %v6606 = vunpack.c.l.b16 %v3919
        %v6607 = vunpack.c.l.b16 %v3920
        %v6608 = vunpack.c.l.b16 %v3921
        %v6609 = vunpack.c.l.b16 %v3922
        %v6610 = vunpack.c.l.b16 %v3923
        %v6611 = vunpack.c.l.b16 %v3924
        %v6612 = vunpack.c.l.b16 %v3925
        %v6613 = vunpack.c.l.b16 %v3926
        %v6614 = vunpack.c.l.b16 %v3927
        %v6615 = vunpack.c.l.b16 %v3928
        %v6616 = vunpack.c.l.b16 %v3929
        %v6617 = vunpack.c.l.b16 %v3930
        %v6618 = vunpack.c.l.b16 %v3931
        %v6619 = vunpack.c.l.b16 %v3932
        %v6620 = vunpack.c.l.b16 %v3933
        %v6621 = vunpack.c.l.b16 %v3934
        %v6622 = vunpack.c.l.b16 %v3935
        %v6623 = vunpack.c.l.b16 %v3936
        %v6624 = vunpack.c.l.b16 %v3937
        %v6625 = vunpack.c.l.b16 %v3938
        %v6626 = vpack.c.b16 %v6591, %v6590
        %v6627 = vpack.c.b16 %v6593, %v6592
        %v6628 = vpack.c.b16 %v6595, %v6594
        %v6629 = vpack.c.b16 %v6597, %v6596
        %v6630 = vpack.c.b16 %v6599, %v6598
        %v6631 = vpack.c.b16 %v6601, %v6600
        %v6632 = vpack.c.b16 %v6603, %v6602
        %v6633 = vpack.c.b16 %v6605, %v6604
        %v6634 = vpack.c.b16 %v6607, %v6606
        %v6635 = vpack.c.b16 %v6609, %v6608
        %v6636 = vpack.c.b16 %v6611, %v6610
        %v6637 = vpack.c.b16 %v6613, %v6612
        %v6638 = vpack.c.b16 %v6615, %v6614
        %v6639 = vpack.c.b16 %v6617, %v6616
        %v6640 = vpack.c.b16 %v6619, %v6618
        %v6641 = vpack.c.b16 %v6621, %v6620
        %v6642 = vpack.c.b16 %v6623, %v6622
        %v6643 = vpack.c.b16 %v6625, %v6624
        %v6663 = vsel %vm847, %v5994, 0
        %v6666 = vsel %vm847, %v5995, 0
        %v6669 = vsel %vm847, %v5996, 0
        %v6672 = vsel %vm847, %v5997, 0
        %v6675 = vsel %vm847, %v5998, 0
        %v6678 = vsel %vm847, %v5999, 0
        %v6681 = vsel %vm847, %v6000, 0
        %v6684 = vsel %vm847, %v6001, 0
        %v6687 = vsel %vm847, %v6002, 0
        %v6690 = vsel %vm847, %v6003, 0
        %v6693 = vsel %vm847, %v6004, 0
        %v6696 = vsel %vm847, %v6005, 0
        %v6699 = vsel %vm847, %v6006, 0
        %v6702 = vsel %vm847, %v6007, 0
        %v6705 = vsel %vm847, %v6008, 0
        %v6708 = vsel %vm847, %v6009, 0
        %6710 = vmatprep.subr.bf16.mxu0 0
        %6711 = vmatpush1.bf16.msra.mxu0 %v6633
        %6712 = vmatprep.subr.bf16.mxu0 0
        %6713 = vmatpush1.bf16.msra.mxu0 %v6632
        %6714 = vmatprep.subr.bf16.mxu0 0
        %6715 = vmatpush1.bf16.msra.mxu0 %v6631
        %6716 = vmatprep.subr.bf16.mxu0 0
        %6717 = vmatpush1.bf16.msra.mxu0 %v6630
        %6718 = vmatprep.subr.bf16.mxu0 0
        %6719 = vmatpush1.bf16.msra.mxu0 %v6629
        %6720 = vmatprep.subr.bf16.mxu0 0
        %6721 = vmatpush1.bf16.msra.mxu0 %v6628
        %6722 = vmatprep.subr.bf16.mxu0 0
        %6723 = vmatpush1.bf16.msra.mxu0 %v6627
        %6724 = vmatprep.subr.bf16.mxu0 0
        %6725 = vmatpush1.bf16.msra.mxu0 %v6626
        %6726 = vmatprep.subr.bf16.mxu0 0
        %6727 = vmatpush2.bf16.msra.mxu0 %v6641
        %6728 = vmatprep.subr.bf16.mxu0 0
        %6729 = vmatpush2.bf16.msra.mxu0 %v6640
        %6730 = vmatprep.subr.bf16.mxu0 0
        %6731 = vmatpush2.bf16.msra.mxu0 %v6639
        %6732 = vmatprep.subr.bf16.mxu0 0
        %6733 = vmatpush2.bf16.msra.mxu0 %v6638
        %6734 = vmatprep.subr.bf16.mxu0 0
        %6735 = vmatpush2.bf16.msra.mxu0 %v6637
        %6736 = vmatprep.subr.bf16.mxu0 0
        %6737 = vmatpush2.bf16.msra.mxu0 %v6636
        %6738 = vmatprep.subr.bf16.mxu0 0
        %6739 = vmatpush2.bf16.msra.mxu0 %v6635
        %6740 = vmatprep.subr.bf16.mxu0 0
        %6741 = vmatpush2.bf16.msra.mxu0 %v6634
        %6742 = vmatprep.mubr.bf16.mxu0 %v6507
        %6743 = vmatmul.mubr.bf16.gmra.mxu0 %v6379
        %v6744 = vpop.f32.mrf.mxu0
        %v6745 = vadd.f32 0.0, %v6744
        %v6746 = vpop.f32.mrf.mxu0
        %v6747 = vpop.f32.mrf.mxu0
        %v6748 = vadd.f32 0.0, %v6747
        %v6749 = vpop.f32.mrf.mxu0
        %6750 = vmatprep.mubr.bf16.mxu0 %v6510
        %6751 = vmatmul.mubr.bf16.gmra.mxu0 %v6382
        %v6752 = vpop.f32.mrf.mxu0
        %v6753 = vadd.f32 0.0, %v6752
        %v6754 = vpop.f32.mrf.mxu0
        %v6755 = vpop.f32.mrf.mxu0
        %v6756 = vadd.f32 0.0, %v6755
        %v6757 = vpop.f32.mrf.mxu0
        %6758 = vmatprep.mubr.bf16.mxu0 %v6513
        %6759 = vmatmul.mubr.bf16.gmra.mxu0 %v6385
        %v6760 = vpop.f32.mrf.mxu0
        %v6761 = vadd.f32 0.0, %v6760
        %v6762 = vpop.f32.mrf.mxu0
        %v6763 = vpop.f32.mrf.mxu0
        %v6764 = vadd.f32 0.0, %v6763
        %v6765 = vpop.f32.mrf.mxu0
        %6766 = vmatprep.mubr.bf16.mxu0 %v6516
        %6767 = vmatmul.mubr.bf16.gmra.mxu0 %v6388
        %v6768 = vpop.f32.mrf.mxu0
        %v6769 = vadd.f32 0.0, %v6768
        %v6770 = vpop.f32.mrf.mxu0
        %v6771 = vpop.f32.mrf.mxu0
        %v6772 = vadd.f32 0.0, %v6771
        %v6773 = vpop.f32.mrf.mxu0
        %6774 = vmatprep.mubr.bf16.mxu0 %v6519
        %6775 = vmatmul.mubr.bf16.gmra.mxu0 %v6391
        %v6776 = vpop.f32.mrf.mxu0
        %v6777 = vadd.f32 0.0, %v6776
        %v6778 = vpop.f32.mrf.mxu0
        %v6779 = vpop.f32.mrf.mxu0
        %v6780 = vadd.f32 0.0, %v6779
        %v6781 = vpop.f32.mrf.mxu0
        %6782 = vmatprep.mubr.bf16.mxu0 %v6522
        %6783 = vmatmul.mubr.bf16.gmra.mxu0 %v6394
        %v6784 = vpop.f32.mrf.mxu0
        %v6785 = vadd.f32 0.0, %v6784
        %v6786 = vpop.f32.mrf.mxu0
        %v6787 = vpop.f32.mrf.mxu0
        %v6788 = vadd.f32 0.0, %v6787
        %v6789 = vpop.f32.mrf.mxu0
        %6790 = vmatprep.mubr.bf16.mxu0 %v6525
        %6791 = vmatmul.mubr.bf16.gmra.mxu0 %v6397
        %v6792 = vpop.f32.mrf.mxu0
        %v6793 = vadd.f32 0.0, %v6792
        %v6794 = vpop.f32.mrf.mxu0
        %v6795 = vpop.f32.mrf.mxu0
        %v6796 = vadd.f32 0.0, %v6795
        %v6797 = vpop.f32.mrf.mxu0
        %6798 = vmatprep.mubr.bf16.mxu0 %v6528
        %6799 = vmatmul.mubr.bf16.gmra.mxu0 %v6400
        %v6800 = vpop.f32.mrf.mxu0
        %v6801 = vadd.f32 0.0, %v6800
        %v6802 = vpop.f32.mrf.mxu0
        %v6803 = vpop.f32.mrf.mxu0
        %v6804 = vadd.f32 0.0, %v6803
        %v6805 = vpop.f32.mrf.mxu0
        %6806 = vmatprep.mubr.bf16.mxu0 %v6531
        %6807 = vmatmul.mubr.bf16.gmra.mxu0 %v6403
        %v6808 = vpop.f32.mrf.mxu0
        %v6809 = vadd.f32 0.0, %v6808
        %v6810 = vpop.f32.mrf.mxu0
        %v6811 = vpop.f32.mrf.mxu0
        %v6812 = vadd.f32 0.0, %v6811
        %v6813 = vpop.f32.mrf.mxu0
        %6814 = vmatprep.mubr.bf16.mxu0 %v6534
        %6815 = vmatmul.mubr.bf16.gmra.mxu0 %v6406
        %v6816 = vpop.f32.mrf.mxu0
        %v6817 = vadd.f32 0.0, %v6816
        %v6818 = vpop.f32.mrf.mxu0
        %v6819 = vpop.f32.mrf.mxu0
        %v6820 = vadd.f32 0.0, %v6819
        %v6821 = vpop.f32.mrf.mxu0
        %6822 = vmatprep.mubr.bf16.mxu0 %v6537
        %6823 = vmatmul.mubr.bf16.gmra.mxu0 %v6409
        %v6824 = vpop.f32.mrf.mxu0
        %v6825 = vadd.f32 0.0, %v6824
        %v6826 = vpop.f32.mrf.mxu0
        %v6827 = vpop.f32.mrf.mxu0
        %v6828 = vadd.f32 0.0, %v6827
        %v6829 = vpop.f32.mrf.mxu0
        %6830 = vmatprep.mubr.bf16.mxu0 %v6540
        %6831 = vmatmul.mubr.bf16.gmra.mxu0 %v6412
        %v6832 = vpop.f32.mrf.mxu0
        %v6833 = vadd.f32 0.0, %v6832
        %v6834 = vpop.f32.mrf.mxu0
        %v6835 = vpop.f32.mrf.mxu0
        %v6836 = vadd.f32 0.0, %v6835
        %v6837 = vpop.f32.mrf.mxu0
        %6838 = vmatprep.mubr.bf16.mxu0 %v6543
        %6839 = vmatmul.mubr.bf16.gmra.mxu0 %v6415
        %v6840 = vpop.f32.mrf.mxu0
        %v6841 = vadd.f32 0.0, %v6840
        %v6842 = vpop.f32.mrf.mxu0
        %v6843 = vpop.f32.mrf.mxu0
        %v6844 = vadd.f32 0.0, %v6843
        %v6845 = vpop.f32.mrf.mxu0
        %6846 = vmatprep.mubr.bf16.mxu0 %v6546
        %6847 = vmatmul.mubr.bf16.gmra.mxu0 %v6418
        %v6848 = vpop.f32.mrf.mxu0
        %v6849 = vadd.f32 0.0, %v6848
        %v6850 = vpop.f32.mrf.mxu0
        %v6851 = vpop.f32.mrf.mxu0
        %v6852 = vadd.f32 0.0, %v6851
        %v6853 = vpop.f32.mrf.mxu0
        %6854 = vmatprep.mubr.bf16.mxu0 %v6549
        %6855 = vmatmul.mubr.bf16.gmra.mxu0 %v6421
        %v6856 = vpop.f32.mrf.mxu0
        %v6857 = vadd.f32 0.0, %v6856
        %v6858 = vpop.f32.mrf.mxu0
        %v6859 = vpop.f32.mrf.mxu0
        %v6860 = vadd.f32 0.0, %v6859
        %v6861 = vpop.f32.mrf.mxu0
        %6862 = vmatprep.mubr.bf16.mxu0 %v6552
        %6863 = vmatmul.mubr.bf16.gmra.mxu0 %v6424
        %v6864 = vpop.f32.mrf.mxu0
        %v6865 = vadd.f32 0.0, %v6864
        %v6866 = vpop.f32.mrf.mxu0
        %v6867 = vpop.f32.mrf.mxu0
        %v6868 = vadd.f32 0.0, %v6867
        %v6869 = vpop.f32.mrf.mxu0
        %6870 = vdwg.mxu0
        %6871 = vmatprep.subr.bf16.mxu0 0
        %6872 = vmatpush1.bf16.msra.mxu0 0
        %6873 = vmatprep.subr.bf16.mxu0 0
        %6874 = vmatpush1.bf16.msra.mxu0 0
        %6875 = vmatprep.subr.bf16.mxu0 0
        %6876 = vmatpush1.bf16.msra.mxu0 0
        %6877 = vmatprep.subr.bf16.mxu0 0
        %6878 = vmatpush1.bf16.msra.mxu0 0
        %6879 = vmatprep.subr.bf16.mxu0 0
        %6880 = vmatpush1.bf16.msra.mxu0 0
        %6881 = vmatprep.subr.bf16.mxu0 0
        %6882 = vmatpush1.bf16.msra.mxu0 0
        %6883 = vmatprep.subr.bf16.mxu0 0
        %6884 = vmatpush1.bf16.msra.mxu0 %v6643
        %6885 = vmatprep.subr.bf16.mxu0 0
        %6886 = vmatpush1.bf16.msra.mxu0 %v6642
        %6887 = vmatprep.subr.bf16.mxu0 0
        %6888 = vmatpush2.bf16.msra.mxu0 0
        %6889 = vmatprep.subr.bf16.mxu0 0
        %6890 = vmatpush2.bf16.msra.mxu0 0
        %6891 = vmatprep.subr.bf16.mxu0 0
        %6892 = vmatpush2.bf16.msra.mxu0 0
        %6893 = vmatprep.subr.bf16.mxu0 0
        %6894 = vmatpush2.bf16.msra.mxu0 0
        %6895 = vmatprep.subr.bf16.mxu0 0
        %6896 = vmatpush2.bf16.msra.mxu0 0
        %6897 = vmatprep.subr.bf16.mxu0 0
        %6898 = vmatpush2.bf16.msra.mxu0 0
        %6899 = vmatprep.subr.bf16.mxu0 0
        %6900 = vmatpush2.bf16.msra.mxu0 0
        %6901 = vmatprep.subr.bf16.mxu0 0
        %6902 = vmatpush2.bf16.msra.mxu0 0
        %6903 = vmatprep.mubr.bf16.mxu0 0
        %6904 = vmatmul.mubr.bf16.gmra.mxu0 %v6663
        %v6905 = vpop.f32.mrf.mxu0
        %v6906 = vadd.f32 %v6745, %v6905
        %v6907 = vpop.f32.mrf.mxu0
        %v6908 = vpop.f32.mrf.mxu0
        %v6909 = vadd.f32 %v6748, %v6908
        %v6910 = vpop.f32.mrf.mxu0
        %6911 = vmatprep.mubr.bf16.mxu0 0
        %6912 = vmatmul.mubr.bf16.gmra.mxu0 %v6666
        %v6913 = vpop.f32.mrf.mxu0
        %v6914 = vadd.f32 %v6753, %v6913
        %v6915 = vpop.f32.mrf.mxu0
        %v6916 = vpop.f32.mrf.mxu0
        %v6917 = vadd.f32 %v6756, %v6916
        %v6918 = vpop.f32.mrf.mxu0
        %6919 = vmatprep.mubr.bf16.mxu0 0
        %6920 = vmatmul.mubr.bf16.gmra.mxu0 %v6669
        %v6921 = vpop.f32.mrf.mxu0
        %v6922 = vadd.f32 %v6761, %v6921
        %v6923 = vpop.f32.mrf.mxu0
        %v6924 = vpop.f32.mrf.mxu0
        %v6925 = vadd.f32 %v6764, %v6924
        %v6926 = vpop.f32.mrf.mxu0
        %6927 = vmatprep.mubr.bf16.mxu0 0
        %6928 = vmatmul.mubr.bf16.gmra.mxu0 %v6672
        %v6929 = vpop.f32.mrf.mxu0
        %v6930 = vadd.f32 %v6769, %v6929
        %v6931 = vpop.f32.mrf.mxu0
        %v6932 = vpop.f32.mrf.mxu0
        %v6933 = vadd.f32 %v6772, %v6932
        %v6934 = vpop.f32.mrf.mxu0
        %6935 = vmatprep.mubr.bf16.mxu0 0
        %6936 = vmatmul.mubr.bf16.gmra.mxu0 %v6675
        %v6937 = vpop.f32.mrf.mxu0
        %v6938 = vadd.f32 %v6777, %v6937
        %v6939 = vpop.f32.mrf.mxu0
        %v6940 = vpop.f32.mrf.mxu0
        %v6941 = vadd.f32 %v6780, %v6940
        %v6942 = vpop.f32.mrf.mxu0
        %6943 = vmatprep.mubr.bf16.mxu0 0
        %6944 = vmatmul.mubr.bf16.gmra.mxu0 %v6678
        %v6945 = vpop.f32.mrf.mxu0
        %v6946 = vadd.f32 %v6785, %v6945
        %v6947 = vpop.f32.mrf.mxu0
        %v6948 = vpop.f32.mrf.mxu0
        %v6949 = vadd.f32 %v6788, %v6948
        %v6950 = vpop.f32.mrf.mxu0
        %6951 = vmatprep.mubr.bf16.mxu0 0
        %6952 = vmatmul.mubr.bf16.gmra.mxu0 %v6681
        %v6953 = vpop.f32.mrf.mxu0
        %v6954 = vadd.f32 %v6793, %v6953
        %v6955 = vpop.f32.mrf.mxu0
        %v6956 = vpop.f32.mrf.mxu0
        %v6957 = vadd.f32 %v6796, %v6956
        %v6958 = vpop.f32.mrf.mxu0
        %6959 = vmatprep.mubr.bf16.mxu0 0
        %6960 = vmatmul.mubr.bf16.gmra.mxu0 %v6684
        %v6961 = vpop.f32.mrf.mxu0
        %v6962 = vadd.f32 %v6801, %v6961
        %v6963 = vpop.f32.mrf.mxu0
        %v6964 = vpop.f32.mrf.mxu0
        %v6965 = vadd.f32 %v6804, %v6964
        %v6966 = vpop.f32.mrf.mxu0
        %6967 = vmatprep.mubr.bf16.mxu0 0
        %6968 = vmatmul.mubr.bf16.gmra.mxu0 %v6687
        %v6969 = vpop.f32.mrf.mxu0
        %v6970 = vadd.f32 %v6809, %v6969
        %v6971 = vpop.f32.mrf.mxu0
        %v6972 = vpop.f32.mrf.mxu0
        %v6973 = vadd.f32 %v6812, %v6972
        %v6974 = vpop.f32.mrf.mxu0
        %6975 = vmatprep.mubr.bf16.mxu0 0
        %6976 = vmatmul.mubr.bf16.gmra.mxu0 %v6690
        %v6977 = vpop.f32.mrf.mxu0
        %v6978 = vadd.f32 %v6817, %v6977
        %v6979 = vpop.f32.mrf.mxu0
        %v6980 = vpop.f32.mrf.mxu0
        %v6981 = vadd.f32 %v6820, %v6980
        %v6982 = vpop.f32.mrf.mxu0
        %6983 = vmatprep.mubr.bf16.mxu0 0
        %6984 = vmatmul.mubr.bf16.gmra.mxu0 %v6693
        %v6985 = vpop.f32.mrf.mxu0
        %v6986 = vadd.f32 %v6825, %v6985
        %v6987 = vpop.f32.mrf.mxu0
        %v6988 = vpop.f32.mrf.mxu0
        %v6989 = vadd.f32 %v6828, %v6988
        %v6990 = vpop.f32.mrf.mxu0
        %6991 = vmatprep.mubr.bf16.mxu0 0
        %6992 = vmatmul.mubr.bf16.gmra.mxu0 %v6696
        %v6993 = vpop.f32.mrf.mxu0
        %v6994 = vadd.f32 %v6833, %v6993
        %v6995 = vpop.f32.mrf.mxu0
        %v6996 = vpop.f32.mrf.mxu0
        %v6997 = vadd.f32 %v6836, %v6996
        %v6998 = vpop.f32.mrf.mxu0
        %6999 = vmatprep.mubr.bf16.mxu0 0
        %7000 = vmatmul.mubr.bf16.gmra.mxu0 %v6699
        %v7001 = vpop.f32.mrf.mxu0
        %v7002 = vadd.f32 %v6841, %v7001
        %v7003 = vpop.f32.mrf.mxu0
        %v7004 = vpop.f32.mrf.mxu0
        %v7005 = vadd.f32 %v6844, %v7004
        %v7006 = vpop.f32.mrf.mxu0
        %7007 = vmatprep.mubr.bf16.mxu0 0
        %7008 = vmatmul.mubr.bf16.gmra.mxu0 %v6702
        %v7009 = vpop.f32.mrf.mxu0
        %v7010 = vadd.f32 %v6849, %v7009
        %v7011 = vpop.f32.mrf.mxu0
        %v7012 = vpop.f32.mrf.mxu0
        %v7013 = vadd.f32 %v6852, %v7012
        %v7014 = vpop.f32.mrf.mxu0
        %7015 = vmatprep.mubr.bf16.mxu0 0
        %7016 = vmatmul.mubr.bf16.gmra.mxu0 %v6705
        %v7017 = vpop.f32.mrf.mxu0
        %v7018 = vadd.f32 %v6857, %v7017
        %v7019 = vpop.f32.mrf.mxu0
        %v7020 = vpop.f32.mrf.mxu0
        %v7021 = vadd.f32 %v6860, %v7020
        %v7022 = vpop.f32.mrf.mxu0
        %7023 = vmatprep.mubr.bf16.mxu0 0
        %7024 = vmatmul.mubr.bf16.gmra.mxu0 %v6708
        %v7025 = vpop.f32.mrf.mxu0
        %v7026 = vadd.f32 %v6865, %v7025
        %v7027 = vpop.f32.mrf.mxu0
        %v7028 = vpop.f32.mrf.mxu0
        %v7029 = vadd.f32 %v6868, %v7028
        %v7030 = vpop.f32.mrf.mxu0
        %7031 = vdwg.mxu0
        %v7032 = vmul.f32 %v7026, %v4279
        %v7033 = vmul.f32 %v7029, %v4284
        %v7034 = vmul.f32 %v6906, %v4289
        %v7035 = vmul.f32 %v6909, %v4294
        %v7036 = vmul.f32 %v6914, %v4299
        %v7037 = vmul.f32 %v6917, %v4304
        %v7038 = vmul.f32 %v6922, %v4309
        %v7039 = vmul.f32 %v6925, %v4314
        %v7040 = vmul.f32 %v6930, %v4319
        %v7041 = vmul.f32 %v6933, %v4324
        %v7042 = vmul.f32 %v6938, %v4329
        %v7043 = vmul.f32 %v6941, %v4334
        %v7044 = vmul.f32 %v6946, %v4339
        %v7045 = vmul.f32 %v6949, %v4344
        %v7046 = vmul.f32 %v6954, %v4349
        %v7047 = vmul.f32 %v6957, %v4354
        %v7048 = vmul.f32 %v6962, %v4359
        %v7049 = vmul.f32 %v6965, %v4364
        %v7050 = vmul.f32 %v6970, %v4369
        %v7051 = vmul.f32 %v6973, %v4374
        %v7052 = vmul.f32 %v6978, %v4379
        %v7053 = vmul.f32 %v6981, %v4384
        %v7054 = vmul.f32 %v6986, %v4389
        %v7055 = vmul.f32 %v6989, %v4394
        %v7056 = vmul.f32 %v6994, %v4399
        %v7057 = vmul.f32 %v6997, %v4404
        %v7058 = vmul.f32 %v7002, %v4409
        %v7059 = vmul.f32 %v7005, %v4414
        %v7060 = vmul.f32 %v7010, %v4419
        %v7061 = vmul.f32 %v7013, %v4424
        %v7062 = vmul.f32 %v7018, %v4429
        %v7063 = vmul.f32 %v7021, %v4434
        %v7064 = vmul.f32 %v6914, %v5564
        %v7065 = vmul.f32 %v6917, %v5569
        %v7066 = vmul.f32 %v6922, %v5574
        %v7067 = vmul.f32 %v6925, %v5579
        %v7068 = vmul.f32 %v6930, %v5584
        %v7069 = vmul.f32 %v6933, %v5589
        %v7070 = vmul.f32 %v6938, %v5594
        %v7071 = vmul.f32 %v6941, %v5599
        %v7072 = vmul.f32 %v6946, %v5604
        %v7073 = vmul.f32 %v6949, %v5609
        %v7074 = vmul.f32 %v6954, %v5614
        %v7075 = vmul.f32 %v6957, %v5619
        %v7076 = vmul.f32 %v6962, %v5624
        %v7077 = vmul.f32 %v6965, %v5629
        %v7078 = vmul.f32 %v6970, %v5634
        %v7079 = vmul.f32 %v6973, %v5639
        %v7080 = vmul.f32 %v6978, %v5644
        %v7081 = vmul.f32 %v6981, %v5649
        %v7082 = vmul.f32 %v6986, %v5654
        %v7083 = vmul.f32 %v6989, %v5659
        %v7084 = vmul.f32 %v6994, %v5664
        %v7085 = vmul.f32 %v6997, %v5669
        %v7086 = vmul.f32 %v7002, %v5674
        %v7087 = vmul.f32 %v7005, %v5679
        %v7088 = vmul.f32 %v7010, %v5684
        %v7089 = vmul.f32 %v7013, %v5689
        %v7090 = vmul.f32 %v7018, %v5694
        %v7091 = vmul.f32 %v7021, %v5699
        %v7092 = vmul.f32 %v7026, %v5704
        %v7093 = vmul.f32 %v7029, %v5709
        %v7094 = vmul.f32 %v6906, %v5714
        %v7095 = vmul.f32 %v6909, %v5719
        %v7096 = vmul.f32 %v6906, 2.0
        %v7097 = vmul.f32 %v6909, 2.0
        %v7098 = vmul.f32 %v6914, 2.0
        %v7099 = vmul.f32 %v6917, 2.0
        %v7100 = vmul.f32 %v6922, 2.0
        %v7101 = vmul.f32 %v6925, 2.0
        %v7102 = vmul.f32 %v6930, 2.0
        %v7103 = vmul.f32 %v6933, 2.0
        %v7104 = vmul.f32 %v6938, 2.0
        %v7105 = vmul.f32 %v6941, 2.0
        %v7106 = vmul.f32 %v6946, 2.0
        %v7107 = vmul.f32 %v6949, 2.0
        %v7108 = vmul.f32 %v6954, 2.0
        %v7109 = vmul.f32 %v6957, 2.0
        %v7110 = vmul.f32 %v6962, 2.0
        %v7111 = vmul.f32 %v6965, 2.0
        %v7112 = vmul.f32 %v6970, 2.0
        %v7113 = vmul.f32 %v6973, 2.0
        %v7114 = vmul.f32 %v6978, 2.0
        %v7115 = vmul.f32 %v6981, 2.0
        %v7116 = vmul.f32 %v6986, 2.0
        %v7117 = vmul.f32 %v6989, 2.0
        %v7118 = vmul.f32 %v6994, 2.0
        %v7119 = vmul.f32 %v6997, 2.0
        %v7120 = vmul.f32 %v7002, 2.0
        %v7121 = vmul.f32 %v7005, 2.0
        %v7122 = vmul.f32 %v7010, 2.0
        %v7123 = vmul.f32 %v7013, 2.0
        %v7124 = vmul.f32 %v7018, 2.0
        %v7125 = vmul.f32 %v7021, 2.0
        %v7126 = vmul.f32 %v7026, 2.0
        %v7127 = vmul.f32 %v7029, 2.0
        %v7128 = vadd.f32 %v7032, %v7096
        %v7129 = vadd.f32 %v7033, %v7097
        %v7130 = vadd.f32 %v7034, %v7098
        %v7131 = vadd.f32 %v7035, %v7099
        %v7132 = vadd.f32 %v7036, %v7100
        %v7133 = vadd.f32 %v7037, %v7101
        %v7134 = vadd.f32 %v7038, %v7102
        %v7135 = vadd.f32 %v7039, %v7103
        %v7136 = vadd.f32 %v7040, %v7104
        %v7137 = vadd.f32 %v7041, %v7105
        %v7138 = vadd.f32 %v7042, %v7106
        %v7139 = vadd.f32 %v7043, %v7107
        %v7140 = vadd.f32 %v7044, %v7108
        %v7141 = vadd.f32 %v7045, %v7109
        %v7142 = vadd.f32 %v7046, %v7110
        %v7143 = vadd.f32 %v7047, %v7111
        %v7144 = vadd.f32 %v7048, %v7112
        %v7145 = vadd.f32 %v7049, %v7113
        %v7146 = vadd.f32 %v7050, %v7114
        %v7147 = vadd.f32 %v7051, %v7115
        %v7148 = vadd.f32 %v7052, %v7116
        %v7149 = vadd.f32 %v7053, %v7117
        %v7150 = vadd.f32 %v7054, %v7118
        %v7151 = vadd.f32 %v7055, %v7119
        %v7152 = vadd.f32 %v7056, %v7120
        %v7153 = vadd.f32 %v7057, %v7121
        %v7154 = vadd.f32 %v7058, %v7122
        %v7155 = vadd.f32 %v7059, %v7123
        %v7156 = vadd.f32 %v7060, %v7124
        %v7157 = vadd.f32 %v7061, %v7125
        %v7158 = vadd.f32 %v7062, %v7126
        %v7159 = vadd.f32 %v7063, %v7127
        %v7160 = vadd.f32 %v7128, %v7064
        %v7161 = vadd.f32 %v7129, %v7065
        %v7162 = vadd.f32 %v7130, %v7066
        %v7163 = vadd.f32 %v7131, %v7067
        %v7164 = vadd.f32 %v7132, %v7068
        %v7165 = vadd.f32 %v7133, %v7069
        %v7166 = vadd.f32 %v7134, %v7070
        %v7167 = vadd.f32 %v7135, %v7071
        %v7168 = vadd.f32 %v7136, %v7072
        %v7169 = vadd.f32 %v7137, %v7073
        %v7170 = vadd.f32 %v7138, %v7074
        %v7171 = vadd.f32 %v7139, %v7075
        %v7172 = vadd.f32 %v7140, %v7076
        %v7173 = vadd.f32 %v7141, %v7077
        %v7174 = vadd.f32 %v7142, %v7078
        %v7175 = vadd.f32 %v7143, %v7079
        %v7176 = vadd.f32 %v7144, %v7080
        %v7177 = vadd.f32 %v7145, %v7081
        %v7178 = vadd.f32 %v7146, %v7082
        %v7179 = vadd.f32 %v7147, %v7083
        %v7180 = vadd.f32 %v7148, %v7084
        %v7181 = vadd.f32 %v7149, %v7085
        %v7182 = vadd.f32 %v7150, %v7086
        %v7183 = vadd.f32 %v7151, %v7087
        %v7184 = vadd.f32 %v7152, %v7088
        %v7185 = vadd.f32 %v7153, %v7089
        %v7186 = vadd.f32 %v7154, %v7090
        %v7187 = vadd.f32 %v7155, %v7091
        %v7188 = vadd.f32 %v7156, %v7092
        %v7189 = vadd.f32 %v7157, %v7093
        %v7190 = vadd.f32 %v7158, %v7094
        %v7191 = vadd.f32 %v7159, %v7095
        %v7192 = vmul.f32 %v7160, 0.25
        %v7193 = vmul.f32 %v7161, 0.25
        %v7194 = vmul.f32 %v7162, 0.25
        %v7195 = vmul.f32 %v7163, 0.25
        %v7196 = vmul.f32 %v7164, 0.25
        %v7197 = vmul.f32 %v7165, 0.25
        %v7198 = vmul.f32 %v7166, 0.25
        %v7199 = vmul.f32 %v7167, 0.25
        %v7200 = vmul.f32 %v7168, 0.25
        %v7201 = vmul.f32 %v7169, 0.25
        %v7202 = vmul.f32 %v7170, 0.25
        %v7203 = vmul.f32 %v7171, 0.25
        %v7204 = vmul.f32 %v7172, 0.25
        %v7205 = vmul.f32 %v7173, 0.25
        %v7206 = vmul.f32 %v7174, 0.25
        %v7207 = vmul.f32 %v7175, 0.25
        %v7208 = vmul.f32 %v7176, 0.25
        %v7209 = vmul.f32 %v7177, 0.25
        %v7210 = vmul.f32 %v7178, 0.25
        %v7211 = vmul.f32 %v7179, 0.25
        %v7212 = vmul.f32 %v7180, 0.25
        %v7213 = vmul.f32 %v7181, 0.25
        %v7214 = vmul.f32 %v7182, 0.25
        %v7215 = vmul.f32 %v7183, 0.25
        %v7216 = vmul.f32 %v7184, 0.25
        %v7217 = vmul.f32 %v7185, 0.25
        %v7218 = vmul.f32 %v7186, 0.25
        %v7219 = vmul.f32 %v7187, 0.25
        %v7220 = vmul.f32 %v7188, 0.25
        %v7221 = vmul.f32 %v7189, 0.25
        %v7222 = vmul.f32 %v7190, 0.25
        %v7223 = vmul.f32 %v7191, 0.25
        %v7224 = vrot.slane %v7192, 7
        %v7225 = vrot.slane %v7193, 7
        %v7226 = vrot.slane %v7194, 7
        %v7227 = vrot.slane %v7195, 7
        %v7228 = vrot.slane %v7196, 7
        %v7229 = vrot.slane %v7197, 7
        %v7230 = vrot.slane %v7198, 7
        %v7231 = vrot.slane %v7199, 7
        %v7232 = vrot.slane %v7200, 7
        %v7233 = vrot.slane %v7201, 7
        %v7234 = vrot.slane %v7202, 7
        %v7235 = vrot.slane %v7203, 7
        %v7236 = vrot.slane %v7204, 7
        %v7237 = vrot.slane %v7205, 7
        %v7238 = vrot.slane %v7206, 7
        %v7239 = vrot.slane %v7207, 7
        %v7240 = vrot.slane %v7208, 7
        %v7241 = vrot.slane %v7209, 7
        %v7242 = vrot.slane %v7210, 7
        %v7243 = vrot.slane %v7211, 7
        %v7244 = vrot.slane %v7212, 7
        %v7245 = vrot.slane %v7213, 7
        %v7246 = vrot.slane %v7214, 7
        %v7247 = vrot.slane %v7215, 7
        %v7248 = vrot.slane %v7216, 7
        %v7249 = vrot.slane %v7217, 7
        %v7250 = vrot.slane %v7218, 7
        %v7251 = vrot.slane %v7219, 7
        %v7252 = vrot.slane %v7220, 7
        %v7253 = vrot.slane %v7221, 7
        %v7254 = vrot.slane %v7222, 7
        %v7255 = vrot.slane %v7223, 7
        %v7256 = vsel %vm995, %v7254, %v7255
        %v7257 = vsel %vm995, %v7253, %v7254
        %v7258 = vsel %vm995, %v7252, %v7253
        %v7259 = vsel %vm995, %v7251, %v7252
        %v7260 = vsel %vm995, %v7250, %v7251
        %v7261 = vsel %vm995, %v7249, %v7250
        %v7262 = vsel %vm995, %v7248, %v7249
        %v7263 = vsel %vm995, %v7247, %v7248
        %v7264 = vsel %vm995, %v7246, %v7247
        %v7265 = vsel %vm995, %v7245, %v7246
        %v7266 = vsel %vm995, %v7244, %v7245
        %v7267 = vsel %vm995, %v7243, %v7244
        %v7268 = vsel %vm995, %v7242, %v7243
        %v7269 = vsel %vm995, %v7241, %v7242
        %v7270 = vsel %vm995, %v7240, %v7241
        %v7271 = vsel %vm995, %v7239, %v7240
        %v7272 = vsel %vm995, %v7238, %v7239
        %v7273 = vsel %vm995, %v7237, %v7238
        %v7274 = vsel %vm995, %v7236, %v7237
        %v7275 = vsel %vm995, %v7235, %v7236
        %v7276 = vsel %vm995, %v7234, %v7235
        %v7277 = vsel %vm995, %v7233, %v7234
        %v7278 = vsel %vm995, %v7232, %v7233
        %v7279 = vsel %vm995, %v7231, %v7232
        %v7280 = vsel %vm995, %v7230, %v7231
        %v7281 = vsel %vm995, %v7229, %v7230
        %v7282 = vsel %vm995, %v7228, %v7229
        %v7283 = vsel %vm995, %v7227, %v7228
        %v7284 = vsel %vm995, %v7226, %v7227
        %v7285 = vsel %vm995, %v7225, %v7226
        %v7286 = vsel %vm995, %v7224, %v7225
        %v7287 = vsel %vm995, %v7255, %v7224
        %v7288 = vmul.f32 %v7287, %v4825
        %v7289 = vmul.f32 %v7286, %v4830
        %v7290 = vmul.f32 %v7285, %v4835
        %v7291 = vmul.f32 %v7284, %v4840
        %v7292 = vmul.f32 %v7283, %v4845
        %v7293 = vmul.f32 %v7282, %v4850
        %v7294 = vmul.f32 %v7281, %v4855
        %v7295 = vmul.f32 %v7280, %v4860
        %v7296 = vmul.f32 %v7279, %v4865
        %v7297 = vmul.f32 %v7278, %v4870
        %v7298 = vmul.f32 %v7277, %v4875
        %v7299 = vmul.f32 %v7276, %v4880
        %v7300 = vmul.f32 %v7275, %v4885
        %v7301 = vmul.f32 %v7274, %v4890
        %v7302 = vmul.f32 %v7273, %v4895
        %v7303 = vmul.f32 %v7272, %v4900
        %v7304 = vmul.f32 %v7271, %v4905
        %v7305 = vmul.f32 %v7270, %v4910
        %v7306 = vmul.f32 %v7269, %v4915
        %v7307 = vmul.f32 %v7268, %v4920
        %v7308 = vmul.f32 %v7267, %v4925
        %v7309 = vmul.f32 %v7266, %v4930
        %v7310 = vmul.f32 %v7265, %v4935
        %v7311 = vmul.f32 %v7264, %v4940
        %v7312 = vmul.f32 %v7263, %v4945
        %v7313 = vmul.f32 %v7262, %v4950
        %v7314 = vmul.f32 %v7261, %v4955
        %v7315 = vmul.f32 %v7260, %v4960
        %v7316 = vmul.f32 %v7259, %v4965
        %v7317 = vmul.f32 %v7258, %v4970
        %v7318 = vmul.f32 %v7257, %v4975
        %v7319 = vmul.f32 %v7256, %v4980
        %v7320 = vrot.slane %v7192, 1
        %v7321 = vrot.slane %v7193, 1
        %v7322 = vrot.slane %v7194, 1
        %v7323 = vrot.slane %v7195, 1
        %v7324 = vrot.slane %v7196, 1
        %v7325 = vrot.slane %v7197, 1
        %v7326 = vrot.slane %v7198, 1
        %v7327 = vrot.slane %v7199, 1
        %v7328 = vrot.slane %v7200, 1
        %v7329 = vrot.slane %v7201, 1
        %v7330 = vrot.slane %v7202, 1
        %v7331 = vrot.slane %v7203, 1
        %v7332 = vrot.slane %v7204, 1
        %v7333 = vrot.slane %v7205, 1
        %v7334 = vrot.slane %v7206, 1
        %v7335 = vrot.slane %v7207, 1
        %v7336 = vrot.slane %v7208, 1
        %v7337 = vrot.slane %v7209, 1
        %v7338 = vrot.slane %v7210, 1
        %v7339 = vrot.slane %v7211, 1
        %v7340 = vrot.slane %v7212, 1
        %v7341 = vrot.slane %v7213, 1
        %v7342 = vrot.slane %v7214, 1
        %v7343 = vrot.slane %v7215, 1
        %v7344 = vrot.slane %v7216, 1
        %v7345 = vrot.slane %v7217, 1
        %v7346 = vrot.slane %v7218, 1
        %v7347 = vrot.slane %v7219, 1
        %v7348 = vrot.slane %v7220, 1
        %v7349 = vrot.slane %v7221, 1
        %v7350 = vrot.slane %v7222, 1
        %v7351 = vrot.slane %v7223, 1
        %v7352 = vsel %vm1017, %v7350, %v7351
        %v7353 = vsel %vm1017, %v7349, %v7350
        %v7354 = vsel %vm1017, %v7348, %v7349
        %v7355 = vsel %vm1017, %v7347, %v7348
        %v7356 = vsel %vm1017, %v7346, %v7347
        %v7357 = vsel %vm1017, %v7345, %v7346
        %v7358 = vsel %vm1017, %v7344, %v7345
        %v7359 = vsel %vm1017, %v7343, %v7344
        %v7360 = vsel %vm1017, %v7342, %v7343
        %v7361 = vsel %vm1017, %v7341, %v7342
        %v7362 = vsel %vm1017, %v7340, %v7341
        %v7363 = vsel %vm1017, %v7339, %v7340
        %v7364 = vsel %vm1017, %v7338, %v7339
        %v7365 = vsel %vm1017, %v7337, %v7338
        %v7366 = vsel %vm1017, %v7336, %v7337
        %v7367 = vsel %vm1017, %v7335, %v7336
        %v7368 = vsel %vm1017, %v7334, %v7335
        %v7369 = vsel %vm1017, %v7333, %v7334
        %v7370 = vsel %vm1017, %v7332, %v7333
        %v7371 = vsel %vm1017, %v7331, %v7332
        %v7372 = vsel %vm1017, %v7330, %v7331
        %v7373 = vsel %vm1017, %v7329, %v7330
        %v7374 = vsel %vm1017, %v7328, %v7329
        %v7375 = vsel %vm1017, %v7327, %v7328
        %v7376 = vsel %vm1017, %v7326, %v7327
        %v7377 = vsel %vm1017, %v7325, %v7326
        %v7378 = vsel %vm1017, %v7324, %v7325
        %v7379 = vsel %vm1017, %v7323, %v7324
        %v7380 = vsel %vm1017, %v7322, %v7323
        %v7381 = vsel %vm1017, %v7321, %v7322
        %v7382 = vsel %vm1017, %v7320, %v7321
        %v7383 = vsel %vm1017, %v7351, %v7320
        %v7384 = vmul.f32 %v7382, %v5082
        %v7385 = vmul.f32 %v7381, %v5087
        %v7386 = vmul.f32 %v7380, %v5092
        %v7387 = vmul.f32 %v7379, %v5097
        %v7388 = vmul.f32 %v7378, %v5102
        %v7389 = vmul.f32 %v7377, %v5107
        %v7390 = vmul.f32 %v7376, %v5112
        %v7391 = vmul.f32 %v7375, %v5117
        %v7392 = vmul.f32 %v7374, %v5122
        %v7393 = vmul.f32 %v7373, %v5127
        %v7394 = vmul.f32 %v7372, %v5132
        %v7395 = vmul.f32 %v7371, %v5137
        %v7396 = vmul.f32 %v7370, %v5142
        %v7397 = vmul.f32 %v7369, %v5147
        %v7398 = vmul.f32 %v7368, %v5152
        %v7399 = vmul.f32 %v7367, %v5157
        %v7400 = vmul.f32 %v7366, %v5162
        %v7401 = vmul.f32 %v7365, %v5167
        %v7402 = vmul.f32 %v7364, %v5172
        %v7403 = vmul.f32 %v7363, %v5177
        %v7404 = vmul.f32 %v7362, %v5182
        %v7405 = vmul.f32 %v7361, %v5187
        %v7406 = vmul.f32 %v7360, %v5192
        %v7407 = vmul.f32 %v7359, %v5197
        %v7408 = vmul.f32 %v7358, %v5202
        %v7409 = vmul.f32 %v7357, %v5207
        %v7410 = vmul.f32 %v7356, %v5212
        %v7411 = vmul.f32 %v7355, %v5217
        %v7412 = vmul.f32 %v7354, %v5222
        %v7413 = vmul.f32 %v7353, %v5227
        %v7414 = vmul.f32 %v7352, %v5232
        %v7415 = vmul.f32 %v7383, %v5237
        %v7416 = vmul.f32 %v7192, 2.0
        %v7417 = vmul.f32 %v7193, 2.0
        %v7418 = vmul.f32 %v7194, 2.0
        %v7419 = vmul.f32 %v7195, 2.0
        %v7420 = vmul.f32 %v7196, 2.0
        %v7421 = vmul.f32 %v7197, 2.0
        %v7422 = vmul.f32 %v7198, 2.0
        %v7423 = vmul.f32 %v7199, 2.0
        %v7424 = vmul.f32 %v7200, 2.0
        %v7425 = vmul.f32 %v7201, 2.0
        %v7426 = vmul.f32 %v7202, 2.0
        %v7427 = vmul.f32 %v7203, 2.0
        %v7428 = vmul.f32 %v7204, 2.0
        %v7429 = vmul.f32 %v7205, 2.0
        %v7430 = vmul.f32 %v7206, 2.0
        %v7431 = vmul.f32 %v7207, 2.0
        %v7432 = vmul.f32 %v7208, 2.0
        %v7433 = vmul.f32 %v7209, 2.0
        %v7434 = vmul.f32 %v7210, 2.0
        %v7435 = vmul.f32 %v7211, 2.0
        %v7436 = vmul.f32 %v7212, 2.0
        %v7437 = vmul.f32 %v7213, 2.0
        %v7438 = vmul.f32 %v7214, 2.0
        %v7439 = vmul.f32 %v7215, 2.0
        %v7440 = vmul.f32 %v7216, 2.0
        %v7441 = vmul.f32 %v7217, 2.0
        %v7442 = vmul.f32 %v7218, 2.0
        %v7443 = vmul.f32 %v7219, 2.0
        %v7444 = vmul.f32 %v7220, 2.0
        %v7445 = vmul.f32 %v7221, 2.0
        %v7446 = vmul.f32 %v7222, 2.0
        %v7447 = vmul.f32 %v7223, 2.0
        %v7448 = vadd.f32 %v7288, %v7416
        %v7449 = vadd.f32 %v7289, %v7417
        %v7450 = vadd.f32 %v7290, %v7418
        %v7451 = vadd.f32 %v7291, %v7419
        %v7452 = vadd.f32 %v7292, %v7420
        %v7453 = vadd.f32 %v7293, %v7421
        %v7454 = vadd.f32 %v7294, %v7422
        %v7455 = vadd.f32 %v7295, %v7423
        %v7456 = vadd.f32 %v7296, %v7424
        %v7457 = vadd.f32 %v7297, %v7425
        %v7458 = vadd.f32 %v7298, %v7426
        %v7459 = vadd.f32 %v7299, %v7427
        %v7460 = vadd.f32 %v7300, %v7428
        %v7461 = vadd.f32 %v7301, %v7429
        %v7462 = vadd.f32 %v7302, %v7430
        %v7463 = vadd.f32 %v7303, %v7431
        %v7464 = vadd.f32 %v7304, %v7432
        %v7465 = vadd.f32 %v7305, %v7433
        %v7466 = vadd.f32 %v7306, %v7434
        %v7467 = vadd.f32 %v7307, %v7435
        %v7468 = vadd.f32 %v7308, %v7436
        %v7469 = vadd.f32 %v7309, %v7437
        %v7470 = vadd.f32 %v7310, %v7438
        %v7471 = vadd.f32 %v7311, %v7439
        %v7472 = vadd.f32 %v7312, %v7440
        %v7473 = vadd.f32 %v7313, %v7441
        %v7474 = vadd.f32 %v7314, %v7442
        %v7475 = vadd.f32 %v7315, %v7443
        %v7476 = vadd.f32 %v7316, %v7444
        %v7477 = vadd.f32 %v7317, %v7445
        %v7478 = vadd.f32 %v7318, %v7446
        %v7479 = vadd.f32 %v7319, %v7447
        %v7480 = vadd.f32 %v7448, %v7384
        %v7481 = vadd.f32 %v7449, %v7385
        %v7482 = vadd.f32 %v7450, %v7386
        %v7483 = vadd.f32 %v7451, %v7387
        %v7484 = vadd.f32 %v7452, %v7388
        %v7485 = vadd.f32 %v7453, %v7389
        %v7486 = vadd.f32 %v7454, %v7390
        %v7487 = vadd.f32 %v7455, %v7391
        %v7488 = vadd.f32 %v7456, %v7392
        %v7489 = vadd.f32 %v7457, %v7393
        %v7490 = vadd.f32 %v7458, %v7394
        %v7491 = vadd.f32 %v7459, %v7395
        %v7492 = vadd.f32 %v7460, %v7396
        %v7493 = vadd.f32 %v7461, %v7397
        %v7494 = vadd.f32 %v7462, %v7398
        %v7495 = vadd.f32 %v7463, %v7399
        %v7496 = vadd.f32 %v7464, %v7400
        %v7497 = vadd.f32 %v7465, %v7401
        %v7498 = vadd.f32 %v7466, %v7402
        %v7499 = vadd.f32 %v7467, %v7403
        %v7500 = vadd.f32 %v7468, %v7404
        %v7501 = vadd.f32 %v7469, %v7405
        %v7502 = vadd.f32 %v7470, %v7406
        %v7503 = vadd.f32 %v7471, %v7407
        %v7504 = vadd.f32 %v7472, %v7408
        %v7505 = vadd.f32 %v7473, %v7409
        %v7506 = vadd.f32 %v7474, %v7410
        %v7507 = vadd.f32 %v7475, %v7411
        %v7508 = vadd.f32 %v7476, %v7412
        %v7509 = vadd.f32 %v7477, %v7413
        %v7510 = vadd.f32 %v7478, %v7414
        %v7511 = vadd.f32 %v7479, %v7415
        %v7512 = vmul.f32 %v7480, 0.25
        %v7513 = vmul.f32 %v7481, 0.25
        %v7514 = vmul.f32 %v7482, 0.25
        %v7515 = vmul.f32 %v7483, 0.25
        %v7516 = vmul.f32 %v7484, 0.25
        %v7517 = vmul.f32 %v7485, 0.25
        %v7518 = vmul.f32 %v7486, 0.25
        %v7519 = vmul.f32 %v7487, 0.25
        %v7520 = vmul.f32 %v7488, 0.25
        %v7521 = vmul.f32 %v7489, 0.25
        %v7522 = vmul.f32 %v7490, 0.25
        %v7523 = vmul.f32 %v7491, 0.25
        %v7524 = vmul.f32 %v7492, 0.25
        %v7525 = vmul.f32 %v7493, 0.25
        %v7526 = vmul.f32 %v7494, 0.25
        %v7527 = vmul.f32 %v7495, 0.25
        %v7528 = vmul.f32 %v7496, 0.25
        %v7529 = vmul.f32 %v7497, 0.25
        %v7530 = vmul.f32 %v7498, 0.25
        %v7531 = vmul.f32 %v7499, 0.25
        %v7532 = vmul.f32 %v7500, 0.25
        %v7533 = vmul.f32 %v7501, 0.25
        %v7534 = vmul.f32 %v7502, 0.25
        %v7535 = vmul.f32 %v7503, 0.25
        %v7536 = vmul.f32 %v7504, 0.25
        %v7537 = vmul.f32 %v7505, 0.25
        %v7538 = vmul.f32 %v7506, 0.25
        %v7539 = vmul.f32 %v7507, 0.25
        %v7540 = vmul.f32 %v7508, 0.25
        %v7541 = vmul.f32 %v7509, 0.25
        %v7542 = vmul.f32 %v7510, 0.25
        %v7543 = vmul.f32 %v7511, 0.25
        %s7544 = scalar_lea.vmem %s8, 3
        %v7545 = vld [vmem:[%s7544] sm:$0x1]
        %v7547 = vlaneseq
        %v7548 = vshrl.u32 %v7547, 7
        %v7549 = vsub.s32 0, %v7548
        %v7550 = vrot.slane %v7545, %v7549
        %v7552 = vadd.f32 %v7512, %v7550
        %v7553 = vadd.f32 %v7513, %v7550
        %v7554 = vadd.f32 %v7514, %v7550
        %v7555 = vadd.f32 %v7515, %v7550
        %v7556 = vadd.f32 %v7516, %v7550
        %v7557 = vadd.f32 %v7517, %v7550
        %v7558 = vadd.f32 %v7518, %v7550
        %v7559 = vadd.f32 %v7519, %v7550
        %v7560 = vadd.f32 %v7520, %v7550
        %v7561 = vadd.f32 %v7521, %v7550
        %v7562 = vadd.f32 %v7522, %v7550
        %v7563 = vadd.f32 %v7523, %v7550
        %v7564 = vadd.f32 %v7524, %v7550
        %v7565 = vadd.f32 %v7525, %v7550
        %v7566 = vadd.f32 %v7526, %v7550
        %v7567 = vadd.f32 %v7527, %v7550
        %v7568 = vadd.f32 %v7528, %v7550
        %v7569 = vadd.f32 %v7529, %v7550
        %v7570 = vadd.f32 %v7530, %v7550
        %v7571 = vadd.f32 %v7531, %v7550
        %v7572 = vadd.f32 %v7532, %v7550
        %v7573 = vadd.f32 %v7533, %v7550
        %v7574 = vadd.f32 %v7534, %v7550
        %v7575 = vadd.f32 %v7535, %v7550
        %v7576 = vadd.f32 %v7536, %v7550
        %v7577 = vadd.f32 %v7537, %v7550
        %v7578 = vadd.f32 %v7538, %v7550
        %v7579 = vadd.f32 %v7539, %v7550
        %v7580 = vadd.f32 %v7540, %v7550
        %v7581 = vadd.f32 %v7541, %v7550
        %v7582 = vadd.f32 %v7542, %v7550
        %v7583 = vadd.f32 %v7543, %v7550
        %v7584 = vld [vmem:[%s807] sm:$0xff]
        %v7585 = vld [vmem:[%s807 + $0x8] sm:$0xff]
        %v7586 = vld [vmem:[%s807 + $0x10] sm:$0xff]
        %v7587 = vld [vmem:[%s807 + $0x18] sm:$0xff]
        %v7588 = vld [vmem:[%s807 + $0x20] sm:$0xff]
        %v7589 = vld [vmem:[%s807 + $0x28] sm:$0xff]
        %v7590 = vld [vmem:[%s807 + $0x30] sm:$0xff]
        %v7591 = vld [vmem:[%s807 + $0x38] sm:$0xff]
        %v7592 = vld [vmem:[%s807 + $0x40] sm:$0xff]
        %v7593 = vld [vmem:[%s807 + $0x48] sm:$0xff]
        %v7594 = vld [vmem:[%s807 + $0x50] sm:$0xff]
        %v7595 = vld [vmem:[%s807 + $0x58] sm:$0xff]
        %v7596 = vld [vmem:[%s807 + $0x60] sm:$0xff]
        %v7597 = vld [vmem:[%s807 + $0x68] sm:$0xff]
        %v7598 = vld [vmem:[%s807 + $0x70] sm:$0xff]
        %v7599 = vld [vmem:[%s807 + $0x78] sm:$0xff]
        %v7600 = vld [vmem:[%s807 + $0x80] sm:$0xff]
        %v7601 = vld [vmem:[%s807 + $0x88] sm:$0xff]
        %v7602 = vld [vmem:[%s807 + $0x90] sm:$0xff]
        %v7603 = vld [vmem:[%s807 + $0x98] sm:$0xff]
        %v7604 = vld [vmem:[%s807 + $0xa0] sm:$0xff]
        %v7605 = vld [vmem:[%s807 + $0xa8] sm:$0xff]
        %v7606 = vld [vmem:[%s807 + $0xb0] sm:$0xff]
        %v7607 = vld [vmem:[%s807 + $0xb8] sm:$0xff]
        %v7608 = vld [vmem:[%s807 + $0xc0] sm:$0xff]
        %v7609 = vld [vmem:[%s807 + $0xc8] sm:$0xff]
        %v7610 = vld [vmem:[%s807 + $0xd0] sm:$0xff]
        %v7611 = vld [vmem:[%s807 + $0xd8] sm:$0xff]
        %v7612 = vld [vmem:[%s807 + $0xe0] sm:$0xff]
        %v7613 = vld [vmem:[%s807 + $0xe8] sm:$0xff]
        %v7614 = vld [vmem:[%s807 + $0xf0] sm:$0xff]
        %v7615 = vld [vmem:[%s807 + $0xf8] sm:$0xff]
        %s7616 = scalar_lea.vmem %s6, 4
        %v7617 = vld [vmem:[%s7616] sm:$0x1]
        %s7618 = scalar_lea.vmem %s788, 4
        %v7619 = vld [vmem:[%s7618] sm:$0x1]
        %s7620 = scalar_lea.vmem %s792, 4
        %v7621 = vld [vmem:[%s7620] sm:$0x1]
        %v7623 = vlaneseq
        %v7624 = vshrl.u32 %v7623, 7
        %v7625 = vsub.s32 0, %v7624
        %v7626 = vrot.slane %v7617, %v7625
        %7629 = vset.pattern.permute.xlu0 0
        %7630 = vperm.xlu0 %7629, %v7584
        %v7631 = vpop.permute.xlu0 %7630
        %7634 = vset.pattern.permute.xlu0 0
        %7635 = vperm.xlu0 %7634, %v7585
        %v7636 = vpop.permute.xlu0 %7635
        %7639 = vset.pattern.permute.xlu0 0
        %7640 = vperm.xlu0 %7639, %v7586
        %v7641 = vpop.permute.xlu0 %7640
        %7644 = vset.pattern.permute.xlu0 0
        %7645 = vperm.xlu0 %7644, %v7587
        %v7646 = vpop.permute.xlu0 %7645
        %7649 = vset.pattern.permute.xlu0 0
        %7650 = vperm.xlu0 %7649, %v7588
        %v7651 = vpop.permute.xlu0 %7650
        %7654 = vset.pattern.permute.xlu0 0
        %7655 = vperm.xlu0 %7654, %v7589
        %v7656 = vpop.permute.xlu0 %7655
        %7659 = vset.pattern.permute.xlu0 0
        %7660 = vperm.xlu0 %7659, %v7590
        %v7661 = vpop.permute.xlu0 %7660
        %7664 = vset.pattern.permute.xlu0 0
        %7665 = vperm.xlu0 %7664, %v7591
        %v7666 = vpop.permute.xlu0 %7665
        %7669 = vset.pattern.permute.xlu0 0
        %7670 = vperm.xlu0 %7669, %v7592
        %v7671 = vpop.permute.xlu0 %7670
        %7674 = vset.pattern.permute.xlu0 0
        %7675 = vperm.xlu0 %7674, %v7593
        %v7676 = vpop.permute.xlu0 %7675
        %7679 = vset.pattern.permute.xlu0 0
        %7680 = vperm.xlu0 %7679, %v7594
        %v7681 = vpop.permute.xlu0 %7680
        %7684 = vset.pattern.permute.xlu0 0
        %7685 = vperm.xlu0 %7684, %v7595
        %v7686 = vpop.permute.xlu0 %7685
        %7689 = vset.pattern.permute.xlu0 0
        %7690 = vperm.xlu0 %7689, %v7596
        %v7691 = vpop.permute.xlu0 %7690
        %7694 = vset.pattern.permute.xlu0 0
        %7695 = vperm.xlu0 %7694, %v7597
        %v7696 = vpop.permute.xlu0 %7695
        %7699 = vset.pattern.permute.xlu0 0
        %7700 = vperm.xlu0 %7699, %v7598
        %v7701 = vpop.permute.xlu0 %7700
        %7704 = vset.pattern.permute.xlu0 0
        %7705 = vperm.xlu0 %7704, %v7599
        %v7706 = vpop.permute.xlu0 %7705
        %7709 = vset.pattern.permute.xlu0 0
        %7710 = vperm.xlu0 %7709, %v7600
        %v7711 = vpop.permute.xlu0 %7710
        %7714 = vset.pattern.permute.xlu0 0
        %7715 = vperm.xlu0 %7714, %v7601
        %v7716 = vpop.permute.xlu0 %7715
        %7719 = vset.pattern.permute.xlu0 0
        %7720 = vperm.xlu0 %7719, %v7602
        %v7721 = vpop.permute.xlu0 %7720
        %7724 = vset.pattern.permute.xlu0 0
        %7725 = vperm.xlu0 %7724, %v7603
        %v7726 = vpop.permute.xlu0 %7725
        %7729 = vset.pattern.permute.xlu0 0
        %7730 = vperm.xlu0 %7729, %v7604
        %v7731 = vpop.permute.xlu0 %7730
        %7734 = vset.pattern.permute.xlu0 0
        %7735 = vperm.xlu0 %7734, %v7605
        %v7736 = vpop.permute.xlu0 %7735
        %7739 = vset.pattern.permute.xlu0 0
        %7740 = vperm.xlu0 %7739, %v7606
        %v7741 = vpop.permute.xlu0 %7740
        %7744 = vset.pattern.permute.xlu0 0
        %7745 = vperm.xlu0 %7744, %v7607
        %v7746 = vpop.permute.xlu0 %7745
        %7749 = vset.pattern.permute.xlu0 0
        %7750 = vperm.xlu0 %7749, %v7608
        %v7751 = vpop.permute.xlu0 %7750
        %7754 = vset.pattern.permute.xlu0 0
        %7755 = vperm.xlu0 %7754, %v7609
        %v7756 = vpop.permute.xlu0 %7755
        %7759 = vset.pattern.permute.xlu0 0
        %7760 = vperm.xlu0 %7759, %v7610
        %v7761 = vpop.permute.xlu0 %7760
        %7764 = vset.pattern.permute.xlu0 0
        %7765 = vperm.xlu0 %7764, %v7611
        %v7766 = vpop.permute.xlu0 %7765
        %7769 = vset.pattern.permute.xlu0 0
        %7770 = vperm.xlu0 %7769, %v7612
        %v7771 = vpop.permute.xlu0 %7770
        %7774 = vset.pattern.permute.xlu0 0
        %7775 = vperm.xlu0 %7774, %v7613
        %v7776 = vpop.permute.xlu0 %7775
        %7779 = vset.pattern.permute.xlu0 0
        %7780 = vperm.xlu0 %7779, %v7614
        %v7781 = vpop.permute.xlu0 %7780
        %7784 = vset.pattern.permute.xlu0 0
        %7785 = vperm.xlu0 %7784, %v7615
        %v7786 = vpop.permute.xlu0 %7785
        %v7788 = vmul.f32 %v7626, %v7631
        %v7789 = vmul.f32 %v7626, %v7636
        %v7790 = vmul.f32 %v7626, %v7641
        %v7791 = vmul.f32 %v7626, %v7646
        %v7792 = vmul.f32 %v7626, %v7651
        %v7793 = vmul.f32 %v7626, %v7656
        %v7794 = vmul.f32 %v7626, %v7661
        %v7795 = vmul.f32 %v7626, %v7666
        %v7796 = vmul.f32 %v7626, %v7671
        %v7797 = vmul.f32 %v7626, %v7676
        %v7798 = vmul.f32 %v7626, %v7681
        %v7799 = vmul.f32 %v7626, %v7686
        %v7800 = vmul.f32 %v7626, %v7691
        %v7801 = vmul.f32 %v7626, %v7696
        %v7802 = vmul.f32 %v7626, %v7701
        %v7803 = vmul.f32 %v7626, %v7706
        %v7804 = vmul.f32 %v7626, %v7711
        %v7805 = vmul.f32 %v7626, %v7716
        %v7806 = vmul.f32 %v7626, %v7721
        %v7807 = vmul.f32 %v7626, %v7726
        %v7808 = vmul.f32 %v7626, %v7731
        %v7809 = vmul.f32 %v7626, %v7736
        %v7810 = vmul.f32 %v7626, %v7741
        %v7811 = vmul.f32 %v7626, %v7746
        %v7812 = vmul.f32 %v7626, %v7751
        %v7813 = vmul.f32 %v7626, %v7756
        %v7814 = vmul.f32 %v7626, %v7761
        %v7815 = vmul.f32 %v7626, %v7766
        %v7816 = vmul.f32 %v7626, %v7771
        %v7817 = vmul.f32 %v7626, %v7776
        %v7818 = vmul.f32 %v7626, %v7781
        %v7819 = vmul.f32 %v7626, %v7786
        %v7820 = vadd.f32 %v7552, %v7788
        %v7821 = vadd.f32 %v7553, %v7789
        %v7822 = vadd.f32 %v7554, %v7790
        %v7823 = vadd.f32 %v7555, %v7791
        %v7824 = vadd.f32 %v7556, %v7792
        %v7825 = vadd.f32 %v7557, %v7793
        %v7826 = vadd.f32 %v7558, %v7794
        %v7827 = vadd.f32 %v7559, %v7795
        %v7828 = vadd.f32 %v7560, %v7796
        %v7829 = vadd.f32 %v7561, %v7797
        %v7830 = vadd.f32 %v7562, %v7798
        %v7831 = vadd.f32 %v7563, %v7799
        %v7832 = vadd.f32 %v7564, %v7800
        %v7833 = vadd.f32 %v7565, %v7801
        %v7834 = vadd.f32 %v7566, %v7802
        %v7835 = vadd.f32 %v7567, %v7803
        %v7836 = vadd.f32 %v7568, %v7804
        %v7837 = vadd.f32 %v7569, %v7805
        %v7838 = vadd.f32 %v7570, %v7806
        %v7839 = vadd.f32 %v7571, %v7807
        %v7840 = vadd.f32 %v7572, %v7808
        %v7841 = vadd.f32 %v7573, %v7809
        %v7842 = vadd.f32 %v7574, %v7810
        %v7843 = vadd.f32 %v7575, %v7811
        %v7844 = vadd.f32 %v7576, %v7812
        %v7845 = vadd.f32 %v7577, %v7813
        %v7846 = vadd.f32 %v7578, %v7814
        %v7847 = vadd.f32 %v7579, %v7815
        %v7848 = vadd.f32 %v7580, %v7816
        %v7849 = vadd.f32 %v7581, %v7817
        %v7850 = vadd.f32 %v7582, %v7818
        %v7851 = vadd.f32 %v7583, %v7819
        %vm7852 = vcmp.ge.f32.partialorder %v7820, 0.0
        %vm7853 = vcmp.ge.f32.partialorder %v7821, 0.0
        %vm7854 = vcmp.ge.f32.partialorder %v7822, 0.0
        %vm7855 = vcmp.ge.f32.partialorder %v7823, 0.0
        %vm7856 = vcmp.ge.f32.partialorder %v7824, 0.0
        %vm7857 = vcmp.ge.f32.partialorder %v7825, 0.0
        %vm7858 = vcmp.ge.f32.partialorder %v7826, 0.0
        %vm7859 = vcmp.ge.f32.partialorder %v7827, 0.0
        %vm7860 = vcmp.ge.f32.partialorder %v7828, 0.0
        %vm7861 = vcmp.ge.f32.partialorder %v7829, 0.0
        %vm7862 = vcmp.ge.f32.partialorder %v7830, 0.0
        %vm7863 = vcmp.ge.f32.partialorder %v7831, 0.0
        %vm7864 = vcmp.ge.f32.partialorder %v7832, 0.0
        %vm7865 = vcmp.ge.f32.partialorder %v7833, 0.0
        %vm7866 = vcmp.ge.f32.partialorder %v7834, 0.0
        %vm7867 = vcmp.ge.f32.partialorder %v7835, 0.0
        %vm7868 = vcmp.ge.f32.partialorder %v7836, 0.0
        %vm7869 = vcmp.ge.f32.partialorder %v7837, 0.0
        %vm7870 = vcmp.ge.f32.partialorder %v7838, 0.0
        %vm7871 = vcmp.ge.f32.partialorder %v7839, 0.0
        %vm7872 = vcmp.ge.f32.partialorder %v7840, 0.0
        %vm7873 = vcmp.ge.f32.partialorder %v7841, 0.0
        %vm7874 = vcmp.ge.f32.partialorder %v7842, 0.0
        %vm7875 = vcmp.ge.f32.partialorder %v7843, 0.0
        %vm7876 = vcmp.ge.f32.partialorder %v7844, 0.0
        %vm7877 = vcmp.ge.f32.partialorder %v7845, 0.0
        %vm7878 = vcmp.ge.f32.partialorder %v7846, 0.0
        %vm7879 = vcmp.ge.f32.partialorder %v7847, 0.0
        %vm7880 = vcmp.ge.f32.partialorder %v7848, 0.0
        %vm7881 = vcmp.ge.f32.partialorder %v7849, 0.0
        %vm7882 = vcmp.ge.f32.partialorder %v7850, 0.0
        %vm7883 = vcmp.ge.f32.partialorder %v7851, 0.0
        %v7884 = vmul.f32 %v7820, 0.2
        %v7885 = vmul.f32 %v7821, 0.2
        %v7886 = vmul.f32 %v7822, 0.2
        %v7887 = vmul.f32 %v7823, 0.2
        %v7888 = vmul.f32 %v7824, 0.2
        %v7889 = vmul.f32 %v7825, 0.2
        %v7890 = vmul.f32 %v7826, 0.2
        %v7891 = vmul.f32 %v7827, 0.2
        %v7892 = vmul.f32 %v7828, 0.2
        %v7893 = vmul.f32 %v7829, 0.2
        %v7894 = vmul.f32 %v7830, 0.2
        %v7895 = vmul.f32 %v7831, 0.2
        %v7896 = vmul.f32 %v7832, 0.2
        %v7897 = vmul.f32 %v7833, 0.2
        %v7898 = vmul.f32 %v7834, 0.2
        %v7899 = vmul.f32 %v7835, 0.2
        %v7900 = vmul.f32 %v7836, 0.2
        %v7901 = vmul.f32 %v7837, 0.2
        %v7902 = vmul.f32 %v7838, 0.2
        %v7903 = vmul.f32 %v7839, 0.2
        %v7904 = vmul.f32 %v7840, 0.2
        %v7905 = vmul.f32 %v7841, 0.2
        %v7906 = vmul.f32 %v7842, 0.2
        %v7907 = vmul.f32 %v7843, 0.2
        %v7908 = vmul.f32 %v7844, 0.2
        %v7909 = vmul.f32 %v7845, 0.2
        %v7910 = vmul.f32 %v7846, 0.2
        %v7911 = vmul.f32 %v7847, 0.2
        %v7912 = vmul.f32 %v7848, 0.2
        %v7913 = vmul.f32 %v7849, 0.2
        %v7914 = vmul.f32 %v7850, 0.2
        %v7915 = vmul.f32 %v7851, 0.2
        %v7916 = vsel %vm7852, %v7820, %v7884
        %v7917 = vsel %vm7853, %v7821, %v7885
        %v7918 = vsel %vm7854, %v7822, %v7886
        %v7919 = vsel %vm7855, %v7823, %v7887
        %v7920 = vsel %vm7856, %v7824, %v7888
        %v7921 = vsel %vm7857, %v7825, %v7889
        %v7922 = vsel %vm7858, %v7826, %v7890
        %v7923 = vsel %vm7859, %v7827, %v7891
        %v7924 = vsel %vm7860, %v7828, %v7892
        %v7925 = vsel %vm7861, %v7829, %v7893
        %v7926 = vsel %vm7862, %v7830, %v7894
        %v7927 = vsel %vm7863, %v7831, %v7895
        %v7928 = vsel %vm7864, %v7832, %v7896
        %v7929 = vsel %vm7865, %v7833, %v7897
        %v7930 = vsel %vm7866, %v7834, %v7898
        %v7931 = vsel %vm7867, %v7835, %v7899
        %v7932 = vsel %vm7868, %v7836, %v7900
        %v7933 = vsel %vm7869, %v7837, %v7901
        %v7934 = vsel %vm7870, %v7838, %v7902
        %v7935 = vsel %vm7871, %v7839, %v7903
        %v7936 = vsel %vm7872, %v7840, %v7904
        %v7937 = vsel %vm7873, %v7841, %v7905
        %v7938 = vsel %vm7874, %v7842, %v7906
        %v7939 = vsel %vm7875, %v7843, %v7907
        %v7940 = vsel %vm7876, %v7844, %v7908
        %v7941 = vsel %vm7877, %v7845, %v7909
        %v7942 = vsel %vm7878, %v7846, %v7910
        %v7943 = vsel %vm7879, %v7847, %v7911
        %v7944 = vsel %vm7880, %v7848, %v7912
        %v7945 = vsel %vm7881, %v7849, %v7913
        %v7946 = vsel %vm7882, %v7850, %v7914
        %v7947 = vsel %vm7883, %v7851, %v7915
        %v7948 = vsel %vm847, %v7916, 0.0
        %v7949 = vsel %vm847, %v7917, 0.0
        %v7950 = vadd.f32 %v7948, %v7949
        %v7951 = vsel %vm847, %v7918, 0.0
        %v7952 = vadd.f32 %v7950, %v7951
        %v7953 = vsel %vm847, %v7919, 0.0
        %v7954 = vadd.f32 %v7952, %v7953
        %v7955 = vsel %vm847, %v7920, 0.0
        %v7956 = vadd.f32 %v7954, %v7955
        %v7957 = vsel %vm847, %v7921, 0.0
        %v7958 = vadd.f32 %v7956, %v7957
        %v7959 = vsel %vm847, %v7922, 0.0
        %v7960 = vadd.f32 %v7958, %v7959
        %v7961 = vsel %vm847, %v7923, 0.0
        %v7962 = vadd.f32 %v7960, %v7961
        %v7963 = vsel %vm847, %v7924, 0.0
        %v7964 = vadd.f32 %v7962, %v7963
        %v7965 = vsel %vm847, %v7925, 0.0
        %v7966 = vadd.f32 %v7964, %v7965
        %v7967 = vsel %vm847, %v7926, 0.0
        %v7968 = vadd.f32 %v7966, %v7967
        %v7969 = vsel %vm847, %v7927, 0.0
        %v7970 = vadd.f32 %v7968, %v7969
        %v7971 = vsel %vm847, %v7928, 0.0
        %v7972 = vadd.f32 %v7970, %v7971
        %v7973 = vsel %vm847, %v7929, 0.0
        %v7974 = vadd.f32 %v7972, %v7973
        %v7975 = vsel %vm847, %v7930, 0.0
        %v7976 = vadd.f32 %v7974, %v7975
        %v7977 = vsel %vm847, %v7931, 0.0
        %v7978 = vadd.f32 %v7976, %v7977
        %v7979 = vsel %vm847, %v7932, 0.0
        %v7980 = vadd.f32 %v7978, %v7979
        %v7981 = vsel %vm847, %v7933, 0.0
        %v7982 = vadd.f32 %v7980, %v7981
        %v7983 = vsel %vm847, %v7934, 0.0
        %v7984 = vadd.f32 %v7982, %v7983
        %v7985 = vsel %vm847, %v7935, 0.0
        %v7986 = vadd.f32 %v7984, %v7985
        %v7987 = vsel %vm847, %v7936, 0.0
        %v7988 = vadd.f32 %v7986, %v7987
        %v7989 = vsel %vm847, %v7937, 0.0
        %v7990 = vadd.f32 %v7988, %v7989
        %v7991 = vsel %vm847, %v7938, 0.0
        %v7992 = vadd.f32 %v7990, %v7991
        %v7993 = vsel %vm847, %v7939, 0.0
        %v7994 = vadd.f32 %v7992, %v7993
        %v7995 = vsel %vm847, %v7940, 0.0
        %v7996 = vadd.f32 %v7994, %v7995
        %v7997 = vsel %vm847, %v7941, 0.0
        %v7998 = vadd.f32 %v7996, %v7997
        %v7999 = vsel %vm847, %v7942, 0.0
        %v8000 = vadd.f32 %v7998, %v7999
        %v8001 = vsel %vm847, %v7943, 0.0
        %v8002 = vadd.f32 %v8000, %v8001
        %v8003 = vsel %vm847, %v7944, 0.0
        %v8004 = vadd.f32 %v8002, %v8003
        %v8005 = vsel %vm847, %v7945, 0.0
        %v8006 = vadd.f32 %v8004, %v8005
        %v8007 = vsel %vm847, %v7946, 0.0
        %v8008 = vadd.f32 %v8006, %v8007
        %v8009 = vsel %vm847, %v7947, 0.0
        %v8010 = vadd.f32 %v8008, %v8009
        %v8011 = vrot.slane %v8010, 4
        %v8012 = vadd.f32 %v8010, %v8011
        %v8013 = vrot.slane %v8012, 2
        %v8014 = vadd.f32 %v8012, %v8013
        %v8015 = vrot.slane %v8014, 1
        %v8016 = vadd.f32 %v8014, %v8015
        %v8017 = vrcp.pop 256.0
        %v8018 = vmul.f32 %v8016, %v8017
        %v8019 = vsub.f32 %v7916, %v8018
        %v8020 = vsub.f32 %v7917, %v8018
        %v8021 = vsub.f32 %v7918, %v8018
        %v8022 = vsub.f32 %v7919, %v8018
        %v8023 = vsub.f32 %v7920, %v8018
        %v8024 = vsub.f32 %v7921, %v8018
        %v8025 = vsub.f32 %v7922, %v8018
        %v8026 = vsub.f32 %v7923, %v8018
        %v8027 = vsub.f32 %v7924, %v8018
        %v8028 = vsub.f32 %v7925, %v8018
        %v8029 = vsub.f32 %v7926, %v8018
        %v8030 = vsub.f32 %v7927, %v8018
        %v8031 = vsub.f32 %v7928, %v8018
        %v8032 = vsub.f32 %v7929, %v8018
        %v8033 = vsub.f32 %v7930, %v8018
        %v8034 = vsub.f32 %v7931, %v8018
        %v8035 = vsub.f32 %v7932, %v8018
        %v8036 = vsub.f32 %v7933, %v8018
        %v8037 = vsub.f32 %v7934, %v8018
        %v8038 = vsub.f32 %v7935, %v8018
        %v8039 = vsub.f32 %v7936, %v8018
        %v8040 = vsub.f32 %v7937, %v8018
        %v8041 = vsub.f32 %v7938, %v8018
        %v8042 = vsub.f32 %v7939, %v8018
        %v8043 = vsub.f32 %v7940, %v8018
        %v8044 = vsub.f32 %v7941, %v8018
        %v8045 = vsub.f32 %v7942, %v8018
        %v8046 = vsub.f32 %v7943, %v8018
        %v8047 = vsub.f32 %v7944, %v8018
        %v8048 = vsub.f32 %v7945, %v8018
        %v8049 = vsub.f32 %v7946, %v8018
        %v8050 = vsub.f32 %v7947, %v8018
        %v8051 = vmul.f32 %v8019, %v8019
        %v8052 = vmul.f32 %v8020, %v8020
        %v8053 = vmul.f32 %v8021, %v8021
        %v8054 = vmul.f32 %v8022, %v8022
        %v8055 = vmul.f32 %v8023, %v8023
        %v8056 = vmul.f32 %v8024, %v8024
        %v8057 = vmul.f32 %v8025, %v8025
        %v8058 = vmul.f32 %v8026, %v8026
        %v8059 = vmul.f32 %v8027, %v8027
        %v8060 = vmul.f32 %v8028, %v8028
        %v8061 = vmul.f32 %v8029, %v8029
        %v8062 = vmul.f32 %v8030, %v8030
        %v8063 = vmul.f32 %v8031, %v8031
        %v8064 = vmul.f32 %v8032, %v8032
        %v8065 = vmul.f32 %v8033, %v8033
        %v8066 = vmul.f32 %v8034, %v8034
        %v8067 = vmul.f32 %v8035, %v8035
        %v8068 = vmul.f32 %v8036, %v8036
        %v8069 = vmul.f32 %v8037, %v8037
        %v8070 = vmul.f32 %v8038, %v8038
        %v8071 = vmul.f32 %v8039, %v8039
        %v8072 = vmul.f32 %v8040, %v8040
        %v8073 = vmul.f32 %v8041, %v8041
        %v8074 = vmul.f32 %v8042, %v8042
        %v8075 = vmul.f32 %v8043, %v8043
        %v8076 = vmul.f32 %v8044, %v8044
        %v8077 = vmul.f32 %v8045, %v8045
        %v8078 = vmul.f32 %v8046, %v8046
        %v8079 = vmul.f32 %v8047, %v8047
        %v8080 = vmul.f32 %v8048, %v8048
        %v8081 = vmul.f32 %v8049, %v8049
        %v8082 = vmul.f32 %v8050, %v8050
        %v8083 = vsel %vm847, %v8051, 0.0
        %v8084 = vsel %vm847, %v8052, 0.0
        %v8085 = vadd.f32 %v8083, %v8084
        %v8086 = vsel %vm847, %v8053, 0.0
        %v8087 = vadd.f32 %v8085, %v8086
        %v8088 = vsel %vm847, %v8054, 0.0
        %v8089 = vadd.f32 %v8087, %v8088
        %v8090 = vsel %vm847, %v8055, 0.0
        %v8091 = vadd.f32 %v8089, %v8090
        %v8092 = vsel %vm847, %v8056, 0.0
        %v8093 = vadd.f32 %v8091, %v8092
        %v8094 = vsel %vm847, %v8057, 0.0
        %v8095 = vadd.f32 %v8093, %v8094
        %v8096 = vsel %vm847, %v8058, 0.0
        %v8097 = vadd.f32 %v8095, %v8096
        %v8098 = vsel %vm847, %v8059, 0.0
        %v8099 = vadd.f32 %v8097, %v8098
        %v8100 = vsel %vm847, %v8060, 0.0
        %v8101 = vadd.f32 %v8099, %v8100
        %v8102 = vsel %vm847, %v8061, 0.0
        %v8103 = vadd.f32 %v8101, %v8102
        %v8104 = vsel %vm847, %v8062, 0.0
        %v8105 = vadd.f32 %v8103, %v8104
        %v8106 = vsel %vm847, %v8063, 0.0
        %v8107 = vadd.f32 %v8105, %v8106
        %v8108 = vsel %vm847, %v8064, 0.0
        %v8109 = vadd.f32 %v8107, %v8108
        %v8110 = vsel %vm847, %v8065, 0.0
        %v8111 = vadd.f32 %v8109, %v8110
        %v8112 = vsel %vm847, %v8066, 0.0
        %v8113 = vadd.f32 %v8111, %v8112
        %v8114 = vsel %vm847, %v8067, 0.0
        %v8115 = vadd.f32 %v8113, %v8114
        %v8116 = vsel %vm847, %v8068, 0.0
        %v8117 = vadd.f32 %v8115, %v8116
        %v8118 = vsel %vm847, %v8069, 0.0
        %v8119 = vadd.f32 %v8117, %v8118
        %v8120 = vsel %vm847, %v8070, 0.0
        %v8121 = vadd.f32 %v8119, %v8120
        %v8122 = vsel %vm847, %v8071, 0.0
        %v8123 = vadd.f32 %v8121, %v8122
        %v8124 = vsel %vm847, %v8072, 0.0
        %v8125 = vadd.f32 %v8123, %v8124
        %v8126 = vsel %vm847, %v8073, 0.0
        %v8127 = vadd.f32 %v8125, %v8126
        %v8128 = vsel %vm847, %v8074, 0.0
        %v8129 = vadd.f32 %v8127, %v8128
        %v8130 = vsel %vm847, %v8075, 0.0
        %v8131 = vadd.f32 %v8129, %v8130
        %v8132 = vsel %vm847, %v8076, 0.0
        %v8133 = vadd.f32 %v8131, %v8132
        %v8134 = vsel %vm847, %v8077, 0.0
        %v8135 = vadd.f32 %v8133, %v8134
        %v8136 = vsel %vm847, %v8078, 0.0
        %v8137 = vadd.f32 %v8135, %v8136
        %v8138 = vsel %vm847, %v8079, 0.0
        %v8139 = vadd.f32 %v8137, %v8138
        %v8140 = vsel %vm847, %v8080, 0.0
        %v8141 = vadd.f32 %v8139, %v8140
        %v8142 = vsel %vm847, %v8081, 0.0
        %v8143 = vadd.f32 %v8141, %v8142
        %v8144 = vsel %vm847, %v8082, 0.0
        %v8145 = vadd.f32 %v8143, %v8144
        %v8146 = vrot.slane %v8145, 4
        %v8147 = vadd.f32 %v8145, %v8146
        %v8148 = vrot.slane %v8147, 2
        %v8149 = vadd.f32 %v8147, %v8148
        %v8150 = vrot.slane %v8149, 1
        %v8151 = vadd.f32 %v8149, %v8150
        %v8152 = vmul.f32 %v8151, %v8017
        %v8153 = vadd.f32 %v8152, 1e-05
        %v8154 = vrsqrt.pop %v8153
        %v8155 = vmul.f32 %v8019, %v8154
        %v8156 = vmul.f32 %v8020, %v8154
        %v8157 = vmul.f32 %v8021, %v8154
        %v8158 = vmul.f32 %v8022, %v8154
        %v8159 = vmul.f32 %v8023, %v8154
        %v8160 = vmul.f32 %v8024, %v8154
        %v8161 = vmul.f32 %v8025, %v8154
        %v8162 = vmul.f32 %v8026, %v8154
        %v8163 = vmul.f32 %v8027, %v8154
        %v8164 = vmul.f32 %v8028, %v8154
        %v8165 = vmul.f32 %v8029, %v8154
        %v8166 = vmul.f32 %v8030, %v8154
        %v8167 = vmul.f32 %v8031, %v8154
        %v8168 = vmul.f32 %v8032, %v8154
        %v8169 = vmul.f32 %v8033, %v8154
        %v8170 = vmul.f32 %v8034, %v8154
        %v8171 = vmul.f32 %v8035, %v8154
        %v8172 = vmul.f32 %v8036, %v8154
        %v8173 = vmul.f32 %v8037, %v8154
        %v8174 = vmul.f32 %v8038, %v8154
        %v8175 = vmul.f32 %v8039, %v8154
        %v8176 = vmul.f32 %v8040, %v8154
        %v8177 = vmul.f32 %v8041, %v8154
        %v8178 = vmul.f32 %v8042, %v8154
        %v8179 = vmul.f32 %v8043, %v8154
        %v8180 = vmul.f32 %v8044, %v8154
        %v8181 = vmul.f32 %v8045, %v8154
        %v8182 = vmul.f32 %v8046, %v8154
        %v8183 = vmul.f32 %v8047, %v8154
        %v8184 = vmul.f32 %v8048, %v8154
        %v8185 = vmul.f32 %v8049, %v8154
        %v8186 = vmul.f32 %v8050, %v8154
        %v8188 = vlaneseq
        %v8189 = vshrl.u32 %v8188, 7
        %v8190 = vsub.s32 0, %v8189
        %v8191 = vrot.slane %v7619, %v8190
        %v8193 = vmul.f32 %v8155, %v8191
        %v8194 = vmul.f32 %v8156, %v8191
        %v8195 = vmul.f32 %v8157, %v8191
        %v8196 = vmul.f32 %v8158, %v8191
        %v8197 = vmul.f32 %v8159, %v8191
        %v8198 = vmul.f32 %v8160, %v8191
        %v8199 = vmul.f32 %v8161, %v8191
        %v8200 = vmul.f32 %v8162, %v8191
        %v8201 = vmul.f32 %v8163, %v8191
        %v8202 = vmul.f32 %v8164, %v8191
        %v8203 = vmul.f32 %v8165, %v8191
        %v8204 = vmul.f32 %v8166, %v8191
        %v8205 = vmul.f32 %v8167, %v8191
        %v8206 = vmul.f32 %v8168, %v8191
        %v8207 = vmul.f32 %v8169, %v8191
        %v8208 = vmul.f32 %v8170, %v8191
        %v8209 = vmul.f32 %v8171, %v8191
        %v8210 = vmul.f32 %v8172, %v8191
        %v8211 = vmul.f32 %v8173, %v8191
        %v8212 = vmul.f32 %v8174, %v8191
        %v8213 = vmul.f32 %v8175, %v8191
        %v8214 = vmul.f32 %v8176, %v8191
        %v8215 = vmul.f32 %v8177, %v8191
        %v8216 = vmul.f32 %v8178, %v8191
        %v8217 = vmul.f32 %v8179, %v8191
        %v8218 = vmul.f32 %v8180, %v8191
        %v8219 = vmul.f32 %v8181, %v8191
        %v8220 = vmul.f32 %v8182, %v8191
        %v8221 = vmul.f32 %v8183, %v8191
        %v8222 = vmul.f32 %v8184, %v8191
        %v8223 = vmul.f32 %v8185, %v8191
        %v8224 = vmul.f32 %v8186, %v8191
        %v8226 = vlaneseq
        %v8227 = vshrl.u32 %v8226, 7
        %v8228 = vsub.s32 0, %v8227
        %v8229 = vrot.slane %v7621, %v8228
        %v8231 = vadd.f32 %v8193, %v8229
        %v8232 = vadd.f32 %v8194, %v8229
        %v8233 = vadd.f32 %v8195, %v8229
        %v8234 = vadd.f32 %v8196, %v8229
        %v8235 = vadd.f32 %v8197, %v8229
        %v8236 = vadd.f32 %v8198, %v8229
        %v8237 = vadd.f32 %v8199, %v8229
        %v8238 = vadd.f32 %v8200, %v8229
        %v8239 = vadd.f32 %v8201, %v8229
        %v8240 = vadd.f32 %v8202, %v8229
        %v8241 = vadd.f32 %v8203, %v8229
        %v8242 = vadd.f32 %v8204, %v8229
        %v8243 = vadd.f32 %v8205, %v8229
        %v8244 = vadd.f32 %v8206, %v8229
        %v8245 = vadd.f32 %v8207, %v8229
        %v8246 = vadd.f32 %v8208, %v8229
        %v8247 = vadd.f32 %v8209, %v8229
        %v8248 = vadd.f32 %v8210, %v8229
        %v8249 = vadd.f32 %v8211, %v8229
        %v8250 = vadd.f32 %v8212, %v8229
        %v8251 = vadd.f32 %v8213, %v8229
        %v8252 = vadd.f32 %v8214, %v8229
        %v8253 = vadd.f32 %v8215, %v8229
        %v8254 = vadd.f32 %v8216, %v8229
        %v8255 = vadd.f32 %v8217, %v8229
        %v8256 = vadd.f32 %v8218, %v8229
        %v8257 = vadd.f32 %v8219, %v8229
        %v8258 = vadd.f32 %v8220, %v8229
        %v8259 = vadd.f32 %v8221, %v8229
        %v8260 = vadd.f32 %v8222, %v8229
        %v8261 = vadd.f32 %v8223, %v8229
        %v8262 = vadd.f32 %v8224, %v8229
        %s8263 = scalar_lea.vmem %s7, 576
        %v8264 = vld [vmem:[%s8263] sm:$0xf]
        %v8265 = vld [vmem:[%s8263 + $0x4] sm:$0xf]
        %v8266 = vld [vmem:[%s8263 + $0x8] sm:$0xf]
        %v8267 = vld [vmem:[%s8263 + $0xc] sm:$0xf]
        %v8268 = vld [vmem:[%s8263 + $0x10] sm:$0xf]
        %v8269 = vld [vmem:[%s8263 + $0x14] sm:$0xf]
        %v8270 = vld [vmem:[%s8263 + $0x18] sm:$0xf]
        %v8271 = vld [vmem:[%s8263 + $0x1c] sm:$0xf]
        %v8272 = vld [vmem:[%s8263 + $0x20] sm:$0xf]
        %v8273 = vld [vmem:[%s8263 + $0x24] sm:$0xf]
        %v8274 = vld [vmem:[%s8263 + $0x28] sm:$0xf]
        %v8275 = vld [vmem:[%s8263 + $0x2c] sm:$0xf]
        %v8276 = vld [vmem:[%s8263 + $0x30] sm:$0xf]
        %v8277 = vld [vmem:[%s8263 + $0x34] sm:$0xf]
        %v8278 = vld [vmem:[%s8263 + $0x38] sm:$0xf]
        %v8279 = vld [vmem:[%s8263 + $0x3c] sm:$0xf]
        %v8280 = vld [vmem:[%s8263 + $0x40] sm:$0xf]
        %v8281 = vld [vmem:[%s8263 + $0x44] sm:$0xf]
        %v8282 = vld [vmem:[%s8263 + $0x48] sm:$0xf]
        %v8283 = vld [vmem:[%s8263 + $0x4c] sm:$0xf]
        %v8284 = vld [vmem:[%s8263 + $0x50] sm:$0xf]
        %v8285 = vld [vmem:[%s8263 + $0x54] sm:$0xf]
        %v8286 = vld [vmem:[%s8263 + $0x58] sm:$0xf]
        %v8287 = vld [vmem:[%s8263 + $0x5c] sm:$0xf]
        %v8288 = vld [vmem:[%s8263 + $0x60] sm:$0xf]
        %v8289 = vld [vmem:[%s8263 + $0x64] sm:$0xf]
        %v8290 = vld [vmem:[%s8263 + $0x68] sm:$0xf]
        %v8291 = vld [vmem:[%s8263 + $0x6c] sm:$0xf]
        %v8292 = vld [vmem:[%s8263 + $0x70] sm:$0xf]
        %v8293 = vld [vmem:[%s8263 + $0x74] sm:$0xf]
        %v8294 = vld [vmem:[%s8263 + $0x78] sm:$0xf]
        %v8295 = vld [vmem:[%s8263 + $0x7c] sm:$0xf]
        %v8296 = vld [vmem:[%s8263 + $0x80] sm:$0xf]
        %v8297 = vld [vmem:[%s8263 + $0x84] sm:$0xf]
        %v8298 = vld [vmem:[%s8263 + $0x88] sm:$0xf]
        %v8299 = vld [vmem:[%s8263 + $0x8c] sm:$0xf]
        %v8300 = vrot.slane %v8231, 7
        %v8301 = vrot.slane %v8232, 7
        %v8302 = vrot.slane %v8233, 7
        %v8303 = vrot.slane %v8234, 7
        %v8304 = vrot.slane %v8235, 7
        %v8305 = vrot.slane %v8236, 7
        %v8306 = vrot.slane %v8237, 7
        %v8307 = vrot.slane %v8238, 7
        %v8308 = vrot.slane %v8239, 7
        %v8309 = vrot.slane %v8240, 7
        %v8310 = vrot.slane %v8241, 7
        %v8311 = vrot.slane %v8242, 7
        %v8312 = vrot.slane %v8243, 7
        %v8313 = vrot.slane %v8244, 7
        %v8314 = vrot.slane %v8245, 7
        %v8315 = vrot.slane %v8246, 7
        %v8316 = vrot.slane %v8247, 7
        %v8317 = vrot.slane %v8248, 7
        %v8318 = vrot.slane %v8249, 7
        %v8319 = vrot.slane %v8250, 7
        %v8320 = vrot.slane %v8251, 7
        %v8321 = vrot.slane %v8252, 7
        %v8322 = vrot.slane %v8253, 7
        %v8323 = vrot.slane %v8254, 7
        %v8324 = vrot.slane %v8255, 7
        %v8325 = vrot.slane %v8256, 7
        %v8326 = vrot.slane %v8257, 7
        %v8327 = vrot.slane %v8258, 7
        %v8328 = vrot.slane %v8259, 7
        %v8329 = vrot.slane %v8260, 7
        %v8330 = vrot.slane %v8261, 7
        %v8331 = vrot.slane %v8262, 7
        %v8332 = vsel %vm995, %v8330, %v8331
        %v8333 = vsel %vm995, %v8329, %v8330
        %v8334 = vsel %vm995, %v8328, %v8329
        %v8335 = vsel %vm995, %v8327, %v8328
        %v8336 = vsel %vm995, %v8326, %v8327
        %v8337 = vsel %vm995, %v8325, %v8326
        %v8338 = vsel %vm995, %v8324, %v8325
        %v8339 = vsel %vm995, %v8323, %v8324
        %v8340 = vsel %vm995, %v8322, %v8323
        %v8341 = vsel %vm995, %v8321, %v8322
        %v8342 = vsel %vm995, %v8320, %v8321
        %v8343 = vsel %vm995, %v8319, %v8320
        %v8344 = vsel %vm995, %v8318, %v8319
        %v8345 = vsel %vm995, %v8317, %v8318
        %v8346 = vsel %vm995, %v8316, %v8317
        %v8347 = vsel %vm995, %v8315, %v8316
        %v8348 = vsel %vm995, %v8314, %v8315
        %v8349 = vsel %vm995, %v8313, %v8314
        %v8350 = vsel %vm995, %v8312, %v8313
        %v8351 = vsel %vm995, %v8311, %v8312
        %v8352 = vsel %vm995, %v8310, %v8311
        %v8353 = vsel %vm995, %v8309, %v8310
        %v8354 = vsel %vm995, %v8308, %v8309
        %v8355 = vsel %vm995, %v8307, %v8308
        %v8356 = vsel %vm995, %v8306, %v8307
        %v8357 = vsel %vm995, %v8305, %v8306
        %v8358 = vsel %vm995, %v8304, %v8305
        %v8359 = vsel %vm995, %v8303, %v8304
        %v8360 = vsel %vm995, %v8302, %v8303
        %v8361 = vsel %vm995, %v8301, %v8302
        %v8362 = vsel %vm995, %v8300, %v8301
        %v8363 = vsel %vm995, %v8331, %v8300
        %v8364 = vmul.f32 %v8333, %v4038
        %v8365 = vmul.f32 %v8332, %v4043
        %v8366 = vmul.f32 %v8363, %v4048
        %v8367 = vmul.f32 %v8362, %v4053
        %v8368 = vmul.f32 %v8361, %v4058
        %v8369 = vmul.f32 %v8360, %v4063
        %v8370 = vmul.f32 %v8359, %v4068
        %v8371 = vmul.f32 %v8358, %v4073
        %v8372 = vmul.f32 %v8357, %v4078
        %v8373 = vmul.f32 %v8356, %v4083
        %v8374 = vmul.f32 %v8355, %v4088
        %v8375 = vmul.f32 %v8354, %v4093
        %v8376 = vmul.f32 %v8353, %v4098
        %v8377 = vmul.f32 %v8352, %v4103
        %v8378 = vmul.f32 %v8351, %v4108
        %v8379 = vmul.f32 %v8350, %v4113
        %v8380 = vmul.f32 %v8349, %v4118
        %v8381 = vmul.f32 %v8348, %v4123
        %v8382 = vmul.f32 %v8347, %v4128
        %v8383 = vmul.f32 %v8346, %v4133
        %v8384 = vmul.f32 %v8345, %v4138
        %v8385 = vmul.f32 %v8344, %v4143
        %v8386 = vmul.f32 %v8343, %v4148
        %v8387 = vmul.f32 %v8342, %v4153
        %v8388 = vmul.f32 %v8341, %v4158
        %v8389 = vmul.f32 %v8340, %v4163
        %v8390 = vmul.f32 %v8339, %v4168
        %v8391 = vmul.f32 %v8338, %v4173
        %v8392 = vmul.f32 %v8337, %v4178
        %v8393 = vmul.f32 %v8336, %v4183
        %v8394 = vmul.f32 %v8335, %v4188
        %v8395 = vmul.f32 %v8334, %v4193
        %v8396 = vpack.c.bf16 %v8365, %v8364
        %v8397 = vpack.c.bf16 %v8367, %v8366
        %v8398 = vpack.c.bf16 %v8369, %v8368
        %v8399 = vpack.c.bf16 %v8371, %v8370
        %v8400 = vpack.c.bf16 %v8373, %v8372
        %v8401 = vpack.c.bf16 %v8375, %v8374
        %v8402 = vpack.c.bf16 %v8377, %v8376
        %v8403 = vpack.c.bf16 %v8379, %v8378
        %v8404 = vpack.c.bf16 %v8381, %v8380
        %v8405 = vpack.c.bf16 %v8383, %v8382
        %v8406 = vpack.c.bf16 %v8385, %v8384
        %v8407 = vpack.c.bf16 %v8387, %v8386
        %v8408 = vpack.c.bf16 %v8389, %v8388
        %v8409 = vpack.c.bf16 %v8391, %v8390
        %v8410 = vpack.c.bf16 %v8393, %v8392
        %v8411 = vpack.c.bf16 %v8395, %v8394
        %v8412 = vmul.f32 %v8261, %v4279
        %v8413 = vmul.f32 %v8262, %v4284
        %v8414 = vmul.f32 %v8231, %v4289
        %v8415 = vmul.f32 %v8232, %v4294
        %v8416 = vmul.f32 %v8233, %v4299
        %v8417 = vmul.f32 %v8234, %v4304
        %v8418 = vmul.f32 %v8235, %v4309
        %v8419 = vmul.f32 %v8236, %v4314
        %v8420 = vmul.f32 %v8237, %v4319
        %v8421 = vmul.f32 %v8238, %v4324
        %v8422 = vmul.f32 %v8239, %v4329
        %v8423 = vmul.f32 %v8240, %v4334
        %v8424 = vmul.f32 %v8241, %v4339
        %v8425 = vmul.f32 %v8242, %v4344
        %v8426 = vmul.f32 %v8243, %v4349
        %v8427 = vmul.f32 %v8244, %v4354
        %v8428 = vmul.f32 %v8245, %v4359
        %v8429 = vmul.f32 %v8246, %v4364
        %v8430 = vmul.f32 %v8247, %v4369
        %v8431 = vmul.f32 %v8248, %v4374
        %v8432 = vmul.f32 %v8249, %v4379
        %v8433 = vmul.f32 %v8250, %v4384
        %v8434 = vmul.f32 %v8251, %v4389
        %v8435 = vmul.f32 %v8252, %v4394
        %v8436 = vmul.f32 %v8253, %v4399
        %v8437 = vmul.f32 %v8254, %v4404
        %v8438 = vmul.f32 %v8255, %v4409
        %v8439 = vmul.f32 %v8256, %v4414
        %v8440 = vmul.f32 %v8257, %v4419
        %v8441 = vmul.f32 %v8258, %v4424
        %v8442 = vmul.f32 %v8259, %v4429
        %v8443 = vmul.f32 %v8260, %v4434
        %v8444 = vpack.c.bf16 %v8413, %v8412
        %v8445 = vpack.c.bf16 %v8415, %v8414
        %v8446 = vpack.c.bf16 %v8417, %v8416
        %v8447 = vpack.c.bf16 %v8419, %v8418
        %v8448 = vpack.c.bf16 %v8421, %v8420
        %v8449 = vpack.c.bf16 %v8423, %v8422
        %v8450 = vpack.c.bf16 %v8425, %v8424
        %v8451 = vpack.c.bf16 %v8427, %v8426
        %v8452 = vpack.c.bf16 %v8429, %v8428
        %v8453 = vpack.c.bf16 %v8431, %v8430
        %v8454 = vpack.c.bf16 %v8433, %v8432
        %v8455 = vpack.c.bf16 %v8435, %v8434
        %v8456 = vpack.c.bf16 %v8437, %v8436
        %v8457 = vpack.c.bf16 %v8439, %v8438
        %v8458 = vpack.c.bf16 %v8441, %v8440
        %v8459 = vpack.c.bf16 %v8443, %v8442
        %v8460 = vrot.slane %v8231, 1
        %v8461 = vrot.slane %v8232, 1
        %v8462 = vrot.slane %v8233, 1
        %v8463 = vrot.slane %v8234, 1
        %v8464 = vrot.slane %v8235, 1
        %v8465 = vrot.slane %v8236, 1
        %v8466 = vrot.slane %v8237, 1
        %v8467 = vrot.slane %v8238, 1
        %v8468 = vrot.slane %v8239, 1
        %v8469 = vrot.slane %v8240, 1
        %v8470 = vrot.slane %v8241, 1
        %v8471 = vrot.slane %v8242, 1
        %v8472 = vrot.slane %v8243, 1
        %v8473 = vrot.slane %v8244, 1
        %v8474 = vrot.slane %v8245, 1
        %v8475 = vrot.slane %v8246, 1
        %v8476 = vrot.slane %v8247, 1
        %v8477 = vrot.slane %v8248, 1
        %v8478 = vrot.slane %v8249, 1
        %v8479 = vrot.slane %v8250, 1
        %v8480 = vrot.slane %v8251, 1
        %v8481 = vrot.slane %v8252, 1
        %v8482 = vrot.slane %v8253, 1
        %v8483 = vrot.slane %v8254, 1
        %v8484 = vrot.slane %v8255, 1
        %v8485 = vrot.slane %v8256, 1
        %v8486 = vrot.slane %v8257, 1
        %v8487 = vrot.slane %v8258, 1
        %v8488 = vrot.slane %v8259, 1
        %v8489 = vrot.slane %v8260, 1
        %v8490 = vrot.slane %v8261, 1
        %v8491 = vrot.slane %v8262, 1
        %v8492 = vsel %vm1017, %v8490, %v8491
        %v8493 = vsel %vm1017, %v8489, %v8490
        %v8494 = vsel %vm1017, %v8488, %v8489
        %v8495 = vsel %vm1017, %v8487, %v8488
        %v8496 = vsel %vm1017, %v8486, %v8487
        %v8497 = vsel %vm1017, %v8485, %v8486
        %v8498 = vsel %vm1017, %v8484, %v8485
        %v8499 = vsel %vm1017, %v8483, %v8484
        %v8500 = vsel %vm1017, %v8482, %v8483
        %v8501 = vsel %vm1017, %v8481, %v8482
        %v8502 = vsel %vm1017, %v8480, %v8481
        %v8503 = vsel %vm1017, %v8479, %v8480
        %v8504 = vsel %vm1017, %v8478, %v8479
        %v8505 = vsel %vm1017, %v8477, %v8478
        %v8506 = vsel %vm1017, %v8476, %v8477
        %v8507 = vsel %vm1017, %v8475, %v8476
        %v8508 = vsel %vm1017, %v8474, %v8475
        %v8509 = vsel %vm1017, %v8473, %v8474
        %v8510 = vsel %vm1017, %v8472, %v8473
        %v8511 = vsel %vm1017, %v8471, %v8472
        %v8512 = vsel %vm1017, %v8470, %v8471
        %v8513 = vsel %vm1017, %v8469, %v8470
        %v8514 = vsel %vm1017, %v8468, %v8469
        %v8515 = vsel %vm1017, %v8467, %v8468
        %v8516 = vsel %vm1017, %v8466, %v8467
        %v8517 = vsel %vm1017, %v8465, %v8466
        %v8518 = vsel %vm1017, %v8464, %v8465
        %v8519 = vsel %vm1017, %v8463, %v8464
        %v8520 = vsel %vm1017, %v8462, %v8463
        %v8521 = vsel %vm1017, %v8461, %v8462
        %v8522 = vsel %vm1017, %v8460, %v8461
        %v8523 = vsel %vm1017, %v8491, %v8460
        %v8524 = vmul.f32 %v8492, %v4584
        %v8525 = vmul.f32 %v8523, %v4589
        %v8526 = vmul.f32 %v8522, %v4594
        %v8527 = vmul.f32 %v8521, %v4599
        %v8528 = vmul.f32 %v8520, %v4604
        %v8529 = vmul.f32 %v8519, %v4609
        %v8530 = vmul.f32 %v8518, %v4614
        %v8531 = vmul.f32 %v8517, %v4619
        %v8532 = vmul.f32 %v8516, %v4624
        %v8533 = vmul.f32 %v8515, %v4629
        %v8534 = vmul.f32 %v8514, %v4634
        %v8535 = vmul.f32 %v8513, %v4639
        %v8536 = vmul.f32 %v8512, %v4644
        %v8537 = vmul.f32 %v8511, %v4649
        %v8538 = vmul.f32 %v8510, %v4654
        %v8539 = vmul.f32 %v8509, %v4659
        %v8540 = vmul.f32 %v8508, %v4664
        %v8541 = vmul.f32 %v8507, %v4669
        %v8542 = vmul.f32 %v8506, %v4674
        %v8543 = vmul.f32 %v8505, %v4679
        %v8544 = vmul.f32 %v8504, %v4684
        %v8545 = vmul.f32 %v8503, %v4689
        %v8546 = vmul.f32 %v8502, %v4694
        %v8547 = vmul.f32 %v8501, %v4699
        %v8548 = vmul.f32 %v8500, %v4704
        %v8549 = vmul.f32 %v8499, %v4709
        %v8550 = vmul.f32 %v8498, %v4714
        %v8551 = vmul.f32 %v8497, %v4719
        %v8552 = vmul.f32 %v8496, %v4724
        %v8553 = vmul.f32 %v8495, %v4729
        %v8554 = vmul.f32 %v8494, %v4734
        %v8555 = vmul.f32 %v8493, %v4739
        %v8556 = vpack.c.bf16 %v8525, %v8524
        %v8557 = vpack.c.bf16 %v8527, %v8526
        %v8558 = vpack.c.bf16 %v8529, %v8528
        %v8559 = vpack.c.bf16 %v8531, %v8530
        %v8560 = vpack.c.bf16 %v8533, %v8532
        %v8561 = vpack.c.bf16 %v8535, %v8534
        %v8562 = vpack.c.bf16 %v8537, %v8536
        %v8563 = vpack.c.bf16 %v8539, %v8538
        %v8564 = vpack.c.bf16 %v8541, %v8540
        %v8565 = vpack.c.bf16 %v8543, %v8542
        %v8566 = vpack.c.bf16 %v8545, %v8544
        %v8567 = vpack.c.bf16 %v8547, %v8546
        %v8568 = vpack.c.bf16 %v8549, %v8548
        %v8569 = vpack.c.bf16 %v8551, %v8550
        %v8570 = vpack.c.bf16 %v8553, %v8552
        %v8571 = vpack.c.bf16 %v8555, %v8554
        %v8572 = vmul.f32 %v8363, %v4825
        %v8573 = vmul.f32 %v8362, %v4830
        %v8574 = vmul.f32 %v8361, %v4835
        %v8575 = vmul.f32 %v8360, %v4840
        %v8576 = vmul.f32 %v8359, %v4845
        %v8577 = vmul.f32 %v8358, %v4850
        %v8578 = vmul.f32 %v8357, %v4855
        %v8579 = vmul.f32 %v8356, %v4860
        %v8580 = vmul.f32 %v8355, %v4865
        %v8581 = vmul.f32 %v8354, %v4870
        %v8582 = vmul.f32 %v8353, %v4875
        %v8583 = vmul.f32 %v8352, %v4880
        %v8584 = vmul.f32 %v8351, %v4885
        %v8585 = vmul.f32 %v8350, %v4890
        %v8586 = vmul.f32 %v8349, %v4895
        %v8587 = vmul.f32 %v8348, %v4900
        %v8588 = vmul.f32 %v8347, %v4905
        %v8589 = vmul.f32 %v8346, %v4910
        %v8590 = vmul.f32 %v8345, %v4915
        %v8591 = vmul.f32 %v8344, %v4920
        %v8592 = vmul.f32 %v8343, %v4925
        %v8593 = vmul.f32 %v8342, %v4930
        %v8594 = vmul.f32 %v8341, %v4935
        %v8595 = vmul.f32 %v8340, %v4940
        %v8596 = vmul.f32 %v8339, %v4945
        %v8597 = vmul.f32 %v8338, %v4950
        %v8598 = vmul.f32 %v8337, %v4955
        %v8599 = vmul.f32 %v8336, %v4960
        %v8600 = vmul.f32 %v8335, %v4965
        %v8601 = vmul.f32 %v8334, %v4970
        %v8602 = vmul.f32 %v8333, %v4975
        %v8603 = vmul.f32 %v8332, %v4980
        %v8604 = vpack.c.bf16 %v8573, %v8572
        %v8605 = vpack.c.bf16 %v8575, %v8574
        %v8606 = vpack.c.bf16 %v8577, %v8576
        %v8607 = vpack.c.bf16 %v8579, %v8578
        %v8608 = vpack.c.bf16 %v8581, %v8580
        %v8609 = vpack.c.bf16 %v8583, %v8582
        %v8610 = vpack.c.bf16 %v8585, %v8584
        %v8611 = vpack.c.bf16 %v8587, %v8586
        %v8612 = vpack.c.bf16 %v8589, %v8588
        %v8613 = vpack.c.bf16 %v8591, %v8590
        %v8614 = vpack.c.bf16 %v8593, %v8592
        %v8615 = vpack.c.bf16 %v8595, %v8594
        %v8616 = vpack.c.bf16 %v8597, %v8596
        %v8617 = vpack.c.bf16 %v8599, %v8598
        %v8618 = vpack.c.bf16 %v8601, %v8600
        %v8619 = vpack.c.bf16 %v8603, %v8602
        %v8620 = vpack.c.bf16 %v8232, %v8231
        %v8621 = vpack.c.bf16 %v8234, %v8233
        %v8622 = vpack.c.bf16 %v8236, %v8235
        %v8623 = vpack.c.bf16 %v8238, %v8237
        %v8624 = vpack.c.bf16 %v8240, %v8239
        %v8625 = vpack.c.bf16 %v8242, %v8241
        %v8626 = vpack.c.bf16 %v8244, %v8243
        %v8627 = vpack.c.bf16 %v8246, %v8245
        %v8628 = vpack.c.bf16 %v8248, %v8247
        %v8629 = vpack.c.bf16 %v8250, %v8249
        %v8630 = vpack.c.bf16 %v8252, %v8251
        %v8631 = vpack.c.bf16 %v8254, %v8253
        %v8632 = vpack.c.bf16 %v8256, %v8255
        %v8633 = vpack.c.bf16 %v8258, %v8257
        %v8634 = vpack.c.bf16 %v8260, %v8259
        %v8635 = vpack.c.bf16 %v8262, %v8261
        %v8636 = vmul.f32 %v8522, %v5082
        %v8637 = vmul.f32 %v8521, %v5087
        %v8638 = vmul.f32 %v8520, %v5092
        %v8639 = vmul.f32 %v8519, %v5097
        %v8640 = vmul.f32 %v8518, %v5102
        %v8641 = vmul.f32 %v8517, %v5107
        %v8642 = vmul.f32 %v8516, %v5112
        %v8643 = vmul.f32 %v8515, %v5117
        %v8644 = vmul.f32 %v8514, %v5122
        %v8645 = vmul.f32 %v8513, %v5127
        %v8646 = vmul.f32 %v8512, %v5132
        %v8647 = vmul.f32 %v8511, %v5137
        %v8648 = vmul.f32 %v8510, %v5142
        %v8649 = vmul.f32 %v8509, %v5147
        %v8650 = vmul.f32 %v8508, %v5152
        %v8651 = vmul.f32 %v8507, %v5157
        %v8652 = vmul.f32 %v8506, %v5162
        %v8653 = vmul.f32 %v8505, %v5167
        %v8654 = vmul.f32 %v8504, %v5172
        %v8655 = vmul.f32 %v8503, %v5177
        %v8656 = vmul.f32 %v8502, %v5182
        %v8657 = vmul.f32 %v8501, %v5187
        %v8658 = vmul.f32 %v8500, %v5192
        %v8659 = vmul.f32 %v8499, %v5197
        %v8660 = vmul.f32 %v8498, %v5202
        %v8661 = vmul.f32 %v8497, %v5207
        %v8662 = vmul.f32 %v8496, %v5212
        %v8663 = vmul.f32 %v8495, %v5217
        %v8664 = vmul.f32 %v8494, %v5222
        %v8665 = vmul.f32 %v8493, %v5227
        %v8666 = vmul.f32 %v8492, %v5232
        %v8667 = vmul.f32 %v8523, %v5237
        %v8668 = vpack.c.bf16 %v8637, %v8636
        %v8669 = vpack.c.bf16 %v8639, %v8638
        %v8670 = vpack.c.bf16 %v8641, %v8640
        %v8671 = vpack.c.bf16 %v8643, %v8642
        %v8672 = vpack.c.bf16 %v8645, %v8644
        %v8673 = vpack.c.bf16 %v8647, %v8646
        %v8674 = vpack.c.bf16 %v8649, %v8648
        %v8675 = vpack.c.bf16 %v8651, %v8650
        %v8676 = vpack.c.bf16 %v8653, %v8652
        %v8677 = vpack.c.bf16 %v8655, %v8654
        %v8678 = vpack.c.bf16 %v8657, %v8656
        %v8679 = vpack.c.bf16 %v8659, %v8658
        %v8680 = vpack.c.bf16 %v8661, %v8660
        %v8681 = vpack.c.bf16 %v8663, %v8662
        %v8682 = vpack.c.bf16 %v8665, %v8664
        %v8683 = vpack.c.bf16 %v8667, %v8666
        %v8684 = vmul.f32 %v8361, %v5323
        %v8685 = vmul.f32 %v8360, %v5328
        %v8686 = vmul.f32 %v8359, %v5333
        %v8687 = vmul.f32 %v8358, %v5338
        %v8688 = vmul.f32 %v8357, %v5343
        %v8689 = vmul.f32 %v8356, %v5348
        %v8690 = vmul.f32 %v8355, %v5353
        %v8691 = vmul.f32 %v8354, %v5358
        %v8692 = vmul.f32 %v8353, %v5363
        %v8693 = vmul.f32 %v8352, %v5368
        %v8694 = vmul.f32 %v8351, %v5373
        %v8695 = vmul.f32 %v8350, %v5378
        %v8696 = vmul.f32 %v8349, %v5383
        %v8697 = vmul.f32 %v8348, %v5388
        %v8698 = vmul.f32 %v8347, %v5393
        %v8699 = vmul.f32 %v8346, %v5398
        %v8700 = vmul.f32 %v8345, %v5403
        %v8701 = vmul.f32 %v8344, %v5408
        %v8702 = vmul.f32 %v8343, %v5413
        %v8703 = vmul.f32 %v8342, %v5418
        %v8704 = vmul.f32 %v8341, %v5423
        %v8705 = vmul.f32 %v8340, %v5428
        %v8706 = vmul.f32 %v8339, %v5433
        %v8707 = vmul.f32 %v8338, %v5438
        %v8708 = vmul.f32 %v8337, %v5443
        %v8709 = vmul.f32 %v8336, %v5448
        %v8710 = vmul.f32 %v8335, %v5453
        %v8711 = vmul.f32 %v8334, %v5458
        %v8712 = vmul.f32 %v8333, %v5463
        %v8713 = vmul.f32 %v8332, %v5468
        %v8714 = vmul.f32 %v8363, %v5473
        %v8715 = vmul.f32 %v8362, %v5478
        %v8716 = vpack.c.bf16 %v8685, %v8684
        %v8717 = vpack.c.bf16 %v8687, %v8686
        %v8718 = vpack.c.bf16 %v8689, %v8688
        %v8719 = vpack.c.bf16 %v8691, %v8690
        %v8720 = vpack.c.bf16 %v8693, %v8692
        %v8721 = vpack.c.bf16 %v8695, %v8694
        %v8722 = vpack.c.bf16 %v8697, %v8696
        %v8723 = vpack.c.bf16 %v8699, %v8698
        %v8724 = vpack.c.bf16 %v8701, %v8700
        %v8725 = vpack.c.bf16 %v8703, %v8702
        %v8726 = vpack.c.bf16 %v8705, %v8704
        %v8727 = vpack.c.bf16 %v8707, %v8706
        %v8728 = vpack.c.bf16 %v8709, %v8708
        %v8729 = vpack.c.bf16 %v8711, %v8710
        %v8730 = vpack.c.bf16 %v8713, %v8712
        %v8731 = vpack.c.bf16 %v8715, %v8714
        %v8732 = vmul.f32 %v8233, %v5564
        %v8733 = vmul.f32 %v8234, %v5569
        %v8734 = vmul.f32 %v8235, %v5574
        %v8735 = vmul.f32 %v8236, %v5579
        %v8736 = vmul.f32 %v8237, %v5584
        %v8737 = vmul.f32 %v8238, %v5589
        %v8738 = vmul.f32 %v8239, %v5594
        %v8739 = vmul.f32 %v8240, %v5599
        %v8740 = vmul.f32 %v8241, %v5604
        %v8741 = vmul.f32 %v8242, %v5609
        %v8742 = vmul.f32 %v8243, %v5614
        %v8743 = vmul.f32 %v8244, %v5619
        %v8744 = vmul.f32 %v8245, %v5624
        %v8745 = vmul.f32 %v8246, %v5629
        %v8746 = vmul.f32 %v8247, %v5634
        %v8747 = vmul.f32 %v8248, %v5639
        %v8748 = vmul.f32 %v8249, %v5644
        %v8749 = vmul.f32 %v8250, %v5649
        %v8750 = vmul.f32 %v8251, %v5654
        %v8751 = vmul.f32 %v8252, %v5659
        %v8752 = vmul.f32 %v8253, %v5664
        %v8753 = vmul.f32 %v8254, %v5669
        %v8754 = vmul.f32 %v8255, %v5674
        %v8755 = vmul.f32 %v8256, %v5679
        %v8756 = vmul.f32 %v8257, %v5684
        %v8757 = vmul.f32 %v8258, %v5689
        %v8758 = vmul.f32 %v8259, %v5694
        %v8759 = vmul.f32 %v8260, %v5699
        %v8760 = vmul.f32 %v8261, %v5704
        %v8761 = vmul.f32 %v8262, %v5709
        %v8762 = vmul.f32 %v8231, %v5714
        %v8763 = vmul.f32 %v8232, %v5719
        %v8764 = vpack.c.bf16 %v8733, %v8732
        %v8765 = vpack.c.bf16 %v8735, %v8734
        %v8766 = vpack.c.bf16 %v8737, %v8736
        %v8767 = vpack.c.bf16 %v8739, %v8738
        %v8768 = vpack.c.bf16 %v8741, %v8740
        %v8769 = vpack.c.bf16 %v8743, %v8742
        %v8770 = vpack.c.bf16 %v8745, %v8744
        %v8771 = vpack.c.bf16 %v8747, %v8746
        %v8772 = vpack.c.bf16 %v8749, %v8748
        %v8773 = vpack.c.bf16 %v8751, %v8750
        %v8774 = vpack.c.bf16 %v8753, %v8752
        %v8775 = vpack.c.bf16 %v8755, %v8754
        %v8776 = vpack.c.bf16 %v8757, %v8756
        %v8777 = vpack.c.bf16 %v8759, %v8758
        %v8778 = vpack.c.bf16 %v8761, %v8760
        %v8779 = vpack.c.bf16 %v8763, %v8762
        %v8780 = vmul.f32 %v8520, %v5805
        %v8781 = vmul.f32 %v8519, %v5810
        %v8782 = vmul.f32 %v8518, %v5815
        %v8783 = vmul.f32 %v8517, %v5820
        %v8784 = vmul.f32 %v8516, %v5825
        %v8785 = vmul.f32 %v8515, %v5830
        %v8786 = vmul.f32 %v8514, %v5835
        %v8787 = vmul.f32 %v8513, %v5840
        %v8788 = vmul.f32 %v8512, %v5845
        %v8789 = vmul.f32 %v8511, %v5850
        %v8790 = vmul.f32 %v8510, %v5855
        %v8791 = vmul.f32 %v8509, %v5860
        %v8792 = vmul.f32 %v8508, %v5865
        %v8793 = vmul.f32 %v8507, %v5870
        %v8794 = vmul.f32 %v8506, %v5875
        %v8795 = vmul.f32 %v8505, %v5880
        %v8796 = vmul.f32 %v8504, %v5885
        %v8797 = vmul.f32 %v8503, %v5890
        %v8798 = vmul.f32 %v8502, %v5895
        %v8799 = vmul.f32 %v8501, %v5900
        %v8800 = vmul.f32 %v8500, %v5905
        %v8801 = vmul.f32 %v8499, %v5910
        %v8802 = vmul.f32 %v8498, %v5915
        %v8803 = vmul.f32 %v8497, %v5920
        %v8804 = vmul.f32 %v8496, %v5925
        %v8805 = vmul.f32 %v8495, %v5930
        %v8806 = vmul.f32 %v8494, %v5935
        %v8807 = vmul.f32 %v8493, %v5940
        %v8808 = vmul.f32 %v8492, %v5945
        %v8809 = vmul.f32 %v8523, %v5950
        %v8810 = vmul.f32 %v8522, %v5955
        %v8811 = vmul.f32 %v8521, %v5960
        %v8812 = vpack.c.bf16 %v8781, %v8780
        %v8813 = vpack.c.bf16 %v8783, %v8782
        %v8814 = vpack.c.bf16 %v8785, %v8784
        %v8815 = vpack.c.bf16 %v8787, %v8786
        %v8816 = vpack.c.bf16 %v8789, %v8788
        %v8817 = vpack.c.bf16 %v8791, %v8790
        %v8818 = vpack.c.bf16 %v8793, %v8792
        %v8819 = vpack.c.bf16 %v8795, %v8794
        %v8820 = vpack.c.bf16 %v8797, %v8796
        %v8821 = vpack.c.bf16 %v8799, %v8798
        %v8822 = vpack.c.bf16 %v8801, %v8800
        %v8823 = vpack.c.bf16 %v8803, %v8802
        %v8824 = vpack.c.bf16 %v8805, %v8804
        %v8825 = vpack.c.bf16 %v8807, %v8806
        %v8826 = vpack.c.bf16 %v8809, %v8808
        %v8827 = vpack.c.bf16 %v8811, %v8810
        %8844 = vrot.lane.b32.xlu0 %v8444, 32
        %v8845 = vpop.permute.xlu0 %8844
        %8846 = vrot.lane.b32.xlu0 %v8445, 32
        %v8847 = vpop.permute.xlu0 %8846
        %8848 = vrot.lane.b32.xlu0 %v8446, 32
        %v8849 = vpop.permute.xlu0 %8848
        %8850 = vrot.lane.b32.xlu0 %v8447, 32
        %v8851 = vpop.permute.xlu0 %8850
        %8852 = vrot.lane.b32.xlu0 %v8448, 32
        %v8853 = vpop.permute.xlu0 %8852
        %8854 = vrot.lane.b32.xlu0 %v8449, 32
        %v8855 = vpop.permute.xlu0 %8854
        %8856 = vrot.lane.b32.xlu0 %v8450, 32
        %v8857 = vpop.permute.xlu0 %8856
        %8858 = vrot.lane.b32.xlu0 %v8451, 32
        %v8859 = vpop.permute.xlu0 %8858
        %8860 = vrot.lane.b32.xlu0 %v8452, 32
        %v8861 = vpop.permute.xlu0 %8860
        %8862 = vrot.lane.b32.xlu0 %v8453, 32
        %v8863 = vpop.permute.xlu0 %8862
        %8864 = vrot.lane.b32.xlu0 %v8454, 32
        %v8865 = vpop.permute.xlu0 %8864
        %8866 = vrot.lane.b32.xlu0 %v8455, 32
        %v8867 = vpop.permute.xlu0 %8866
        %8868 = vrot.lane.b32.xlu0 %v8456, 32
        %v8869 = vpop.permute.xlu0 %8868
        %8870 = vrot.lane.b32.xlu0 %v8457, 32
        %v8871 = vpop.permute.xlu0 %8870
        %8872 = vrot.lane.b32.xlu0 %v8458, 32
        %v8873 = vpop.permute.xlu0 %8872
        %8874 = vrot.lane.b32.xlu0 %v8459, 32
        %v8875 = vpop.permute.xlu0 %8874
        %8892 = vrot.lane.b32.xlu0 %v8556, 64
        %v8893 = vpop.permute.xlu0 %8892
        %8894 = vrot.lane.b32.xlu0 %v8557, 64
        %v8895 = vpop.permute.xlu0 %8894
        %8896 = vrot.lane.b32.xlu0 %v8558, 64
        %v8897 = vpop.permute.xlu0 %8896
        %8898 = vrot.lane.b32.xlu0 %v8559, 64
        %v8899 = vpop.permute.xlu0 %8898
        %8900 = vrot.lane.b32.xlu0 %v8560, 64
        %v8901 = vpop.permute.xlu0 %8900
        %8902 = vrot.lane.b32.xlu0 %v8561, 64
        %v8903 = vpop.permute.xlu0 %8902
        %8904 = vrot.lane.b32.xlu0 %v8562, 64
        %v8905 = vpop.permute.xlu0 %8904
        %8906 = vrot.lane.b32.xlu0 %v8563, 64
        %v8907 = vpop.permute.xlu0 %8906
        %8908 = vrot.lane.b32.xlu0 %v8564, 64
        %v8909 = vpop.permute.xlu0 %8908
        %8910 = vrot.lane.b32.xlu0 %v8565, 64
        %v8911 = vpop.permute.xlu0 %8910
        %8912 = vrot.lane.b32.xlu0 %v8566, 64
        %v8913 = vpop.permute.xlu0 %8912
        %8914 = vrot.lane.b32.xlu0 %v8567, 64
        %v8915 = vpop.permute.xlu0 %8914
        %8916 = vrot.lane.b32.xlu0 %v8568, 64
        %v8917 = vpop.permute.xlu0 %8916
        %8918 = vrot.lane.b32.xlu0 %v8569, 64
        %v8919 = vpop.permute.xlu0 %8918
        %8920 = vrot.lane.b32.xlu0 %v8570, 64
        %v8921 = vpop.permute.xlu0 %8920
        %8922 = vrot.lane.b32.xlu0 %v8571, 64
        %v8923 = vpop.permute.xlu0 %8922
        %8940 = vrot.lane.b32.xlu0 %v8604, 96
        %v8941 = vpop.permute.xlu0 %8940
        %8942 = vrot.lane.b32.xlu0 %v8605, 96
        %v8943 = vpop.permute.xlu0 %8942
        %8944 = vrot.lane.b32.xlu0 %v8606, 96
        %v8945 = vpop.permute.xlu0 %8944
        %8946 = vrot.lane.b32.xlu0 %v8607, 96
        %v8947 = vpop.permute.xlu0 %8946
        %8948 = vrot.lane.b32.xlu0 %v8608, 96
        %v8949 = vpop.permute.xlu0 %8948
        %8950 = vrot.lane.b32.xlu0 %v8609, 96
        %v8951 = vpop.permute.xlu0 %8950
        %8952 = vrot.lane.b32.xlu0 %v8610, 96
        %v8953 = vpop.permute.xlu0 %8952
        %8954 = vrot.lane.b32.xlu0 %v8611, 96
        %v8955 = vpop.permute.xlu0 %8954
        %8956 = vrot.lane.b32.xlu0 %v8612, 96
        %v8957 = vpop.permute.xlu0 %8956
        %8958 = vrot.lane.b32.xlu0 %v8613, 96
        %v8959 = vpop.permute.xlu0 %8958
        %8960 = vrot.lane.b32.xlu0 %v8614, 96
        %v8961 = vpop.permute.xlu0 %8960
        %8962 = vrot.lane.b32.xlu0 %v8615, 96
        %v8963 = vpop.permute.xlu0 %8962
        %8964 = vrot.lane.b32.xlu0 %v8616, 96
        %v8965 = vpop.permute.xlu0 %8964
        %8966 = vrot.lane.b32.xlu0 %v8617, 96
        %v8967 = vpop.permute.xlu0 %8966
        %8968 = vrot.lane.b32.xlu0 %v8618, 96
        %v8969 = vpop.permute.xlu0 %8968
        %8970 = vrot.lane.b32.xlu0 %v8619, 96
        %v8971 = vpop.permute.xlu0 %8970
        %8988 = vrot.lane.b32.xlu0 %v8668, 32
        %v8989 = vpop.permute.xlu0 %8988
        %8990 = vrot.lane.b32.xlu0 %v8669, 32
        %v8991 = vpop.permute.xlu0 %8990
        %8992 = vrot.lane.b32.xlu0 %v8670, 32
        %v8993 = vpop.permute.xlu0 %8992
        %8994 = vrot.lane.b32.xlu0 %v8671, 32
        %v8995 = vpop.permute.xlu0 %8994
        %8996 = vrot.lane.b32.xlu0 %v8672, 32
        %v8997 = vpop.permute.xlu0 %8996
        %8998 = vrot.lane.b32.xlu0 %v8673, 32
        %v8999 = vpop.permute.xlu0 %8998
        %9000 = vrot.lane.b32.xlu0 %v8674, 32
        %v9001 = vpop.permute.xlu0 %9000
        %9002 = vrot.lane.b32.xlu0 %v8675, 32
        %v9003 = vpop.permute.xlu0 %9002
        %9004 = vrot.lane.b32.xlu0 %v8676, 32
        %v9005 = vpop.permute.xlu0 %9004
        %9006 = vrot.lane.b32.xlu0 %v8677, 32
        %v9007 = vpop.permute.xlu0 %9006
        %9008 = vrot.lane.b32.xlu0 %v8678, 32
        %v9009 = vpop.permute.xlu0 %9008
        %9010 = vrot.lane.b32.xlu0 %v8679, 32
        %v9011 = vpop.permute.xlu0 %9010
        %9012 = vrot.lane.b32.xlu0 %v8680, 32
        %v9013 = vpop.permute.xlu0 %9012
        %9014 = vrot.lane.b32.xlu0 %v8681, 32
        %v9015 = vpop.permute.xlu0 %9014
        %9016 = vrot.lane.b32.xlu0 %v8682, 32
        %v9017 = vpop.permute.xlu0 %9016
        %9018 = vrot.lane.b32.xlu0 %v8683, 32
        %v9019 = vpop.permute.xlu0 %9018
        %9036 = vrot.lane.b32.xlu0 %v8716, 64
        %v9037 = vpop.permute.xlu0 %9036
        %9038 = vrot.lane.b32.xlu0 %v8717, 64
        %v9039 = vpop.permute.xlu0 %9038
        %9040 = vrot.lane.b32.xlu0 %v8718, 64
        %v9041 = vpop.permute.xlu0 %9040
        %9042 = vrot.lane.b32.xlu0 %v8719, 64
        %v9043 = vpop.permute.xlu0 %9042
        %9044 = vrot.lane.b32.xlu0 %v8720, 64
        %v9045 = vpop.permute.xlu0 %9044
        %9046 = vrot.lane.b32.xlu0 %v8721, 64
        %v9047 = vpop.permute.xlu0 %9046
        %9048 = vrot.lane.b32.xlu0 %v8722, 64
        %v9049 = vpop.permute.xlu0 %9048
        %9050 = vrot.lane.b32.xlu0 %v8723, 64
        %v9051 = vpop.permute.xlu0 %9050
        %9052 = vrot.lane.b32.xlu0 %v8724, 64
        %v9053 = vpop.permute.xlu0 %9052
        %9054 = vrot.lane.b32.xlu0 %v8725, 64
        %v9055 = vpop.permute.xlu0 %9054
        %9056 = vrot.lane.b32.xlu0 %v8726, 64
        %v9057 = vpop.permute.xlu0 %9056
        %9058 = vrot.lane.b32.xlu0 %v8727, 64
        %v9059 = vpop.permute.xlu0 %9058
        %9060 = vrot.lane.b32.xlu0 %v8728, 64
        %v9061 = vpop.permute.xlu0 %9060
        %9062 = vrot.lane.b32.xlu0 %v8729, 64
        %v9063 = vpop.permute.xlu0 %9062
        %9064 = vrot.lane.b32.xlu0 %v8730, 64
        %v9065 = vpop.permute.xlu0 %9064
        %9066 = vrot.lane.b32.xlu0 %v8731, 64
        %v9067 = vpop.permute.xlu0 %9066
        %9084 = vrot.lane.b32.xlu0 %v8764, 96
        %v9085 = vpop.permute.xlu0 %9084
        %9086 = vrot.lane.b32.xlu0 %v8765, 96
        %v9087 = vpop.permute.xlu0 %9086
        %9088 = vrot.lane.b32.xlu0 %v8766, 96
        %v9089 = vpop.permute.xlu0 %9088
        %9090 = vrot.lane.b32.xlu0 %v8767, 96
        %v9091 = vpop.permute.xlu0 %9090
        %9092 = vrot.lane.b32.xlu0 %v8768, 96
        %v9093 = vpop.permute.xlu0 %9092
        %9094 = vrot.lane.b32.xlu0 %v8769, 96
        %v9095 = vpop.permute.xlu0 %9094
        %9096 = vrot.lane.b32.xlu0 %v8770, 96
        %v9097 = vpop.permute.xlu0 %9096
        %9098 = vrot.lane.b32.xlu0 %v8771, 96
        %v9099 = vpop.permute.xlu0 %9098
        %9100 = vrot.lane.b32.xlu0 %v8772, 96
        %v9101 = vpop.permute.xlu0 %9100
        %9102 = vrot.lane.b32.xlu0 %v8773, 96
        %v9103 = vpop.permute.xlu0 %9102
        %9104 = vrot.lane.b32.xlu0 %v8774, 96
        %v9105 = vpop.permute.xlu0 %9104
        %9106 = vrot.lane.b32.xlu0 %v8775, 96
        %v9107 = vpop.permute.xlu0 %9106
        %9108 = vrot.lane.b32.xlu0 %v8776, 96
        %v9109 = vpop.permute.xlu0 %9108
        %9110 = vrot.lane.b32.xlu0 %v8777, 96
        %v9111 = vpop.permute.xlu0 %9110
        %9112 = vrot.lane.b32.xlu0 %v8778, 96
        %v9113 = vpop.permute.xlu0 %9112
        %9114 = vrot.lane.b32.xlu0 %v8779, 96
        %v9115 = vpop.permute.xlu0 %9114
        %v9118 = vsel %vm847, %v8396, %v8845
        %v9121 = vsel %vm847, %v8397, %v8847
        %v9124 = vsel %vm847, %v8398, %v8849
        %v9127 = vsel %vm847, %v8399, %v8851
        %v9130 = vsel %vm847, %v8400, %v8853
        %v9133 = vsel %vm847, %v8401, %v8855
        %v9136 = vsel %vm847, %v8402, %v8857
        %v9139 = vsel %vm847, %v8403, %v8859
        %v9142 = vsel %vm847, %v8404, %v8861
        %v9145 = vsel %vm847, %v8405, %v8863
        %v9148 = vsel %vm847, %v8406, %v8865
        %v9151 = vsel %vm847, %v8407, %v8867
        %v9154 = vsel %vm847, %v8408, %v8869
        %v9157 = vsel %vm847, %v8409, %v8871
        %v9160 = vsel %vm847, %v8410, %v8873
        %v9163 = vsel %vm847, %v8411, %v8875
        %v9165 = vsel %vm1105, %v9118, %v8893
        %v9167 = vsel %vm1105, %v9121, %v8895
        %v9169 = vsel %vm1105, %v9124, %v8897
        %v9171 = vsel %vm1105, %v9127, %v8899
        %v9173 = vsel %vm1105, %v9130, %v8901
        %v9175 = vsel %vm1105, %v9133, %v8903
        %v9177 = vsel %vm1105, %v9136, %v8905
        %v9179 = vsel %vm1105, %v9139, %v8907
        %v9181 = vsel %vm1105, %v9142, %v8909
        %v9183 = vsel %vm1105, %v9145, %v8911
        %v9185 = vsel %vm1105, %v9148, %v8913
        %v9187 = vsel %vm1105, %v9151, %v8915
        %v9189 = vsel %vm1105, %v9154, %v8917
        %v9191 = vsel %vm1105, %v9157, %v8919
        %v9193 = vsel %vm1105, %v9160, %v8921
        %v9195 = vsel %vm1105, %v9163, %v8923
        %v9197 = vsel %vm1108, %v9165, %v8941
        %v9200 = vsel %vm1108, %v9167, %v8943
        %v9203 = vsel %vm1108, %v9169, %v8945
        %v9206 = vsel %vm1108, %v9171, %v8947
        %v9209 = vsel %vm1108, %v9173, %v8949
        %v9212 = vsel %vm1108, %v9175, %v8951
        %v9215 = vsel %vm1108, %v9177, %v8953
        %v9218 = vsel %vm1108, %v9179, %v8955
        %v9221 = vsel %vm1108, %v9181, %v8957
        %v9224 = vsel %vm1108, %v9183, %v8959
        %v9227 = vsel %vm1108, %v9185, %v8961
        %v9230 = vsel %vm1108, %v9187, %v8963
        %v9233 = vsel %vm1108, %v9189, %v8965
        %v9236 = vsel %vm1108, %v9191, %v8967
        %v9239 = vsel %vm1108, %v9193, %v8969
        %v9242 = vsel %vm1108, %v9195, %v8971
        %v9246 = vsel %vm847, %v8620, %v8989
        %v9249 = vsel %vm847, %v8621, %v8991
        %v9252 = vsel %vm847, %v8622, %v8993
        %v9255 = vsel %vm847, %v8623, %v8995
        %v9258 = vsel %vm847, %v8624, %v8997
        %v9261 = vsel %vm847, %v8625, %v8999
        %v9264 = vsel %vm847, %v8626, %v9001
        %v9267 = vsel %vm847, %v8627, %v9003
        %v9270 = vsel %vm847, %v8628, %v9005
        %v9273 = vsel %vm847, %v8629, %v9007
        %v9276 = vsel %vm847, %v8630, %v9009
        %v9279 = vsel %vm847, %v8631, %v9011
        %v9282 = vsel %vm847, %v8632, %v9013
        %v9285 = vsel %vm847, %v8633, %v9015
        %v9288 = vsel %vm847, %v8634, %v9017
        %v9291 = vsel %vm847, %v8635, %v9019
        %v9293 = vsel %vm1105, %v9246, %v9037
        %v9295 = vsel %vm1105, %v9249, %v9039
        %v9297 = vsel %vm1105, %v9252, %v9041
        %v9299 = vsel %vm1105, %v9255, %v9043
        %v9301 = vsel %vm1105, %v9258, %v9045
        %v9303 = vsel %vm1105, %v9261, %v9047
        %v9305 = vsel %vm1105, %v9264, %v9049
        %v9307 = vsel %vm1105, %v9267, %v9051
        %v9309 = vsel %vm1105, %v9270, %v9053
        %v9311 = vsel %vm1105, %v9273, %v9055
        %v9313 = vsel %vm1105, %v9276, %v9057
        %v9315 = vsel %vm1105, %v9279, %v9059
        %v9317 = vsel %vm1105, %v9282, %v9061
        %v9319 = vsel %vm1105, %v9285, %v9063
        %v9321 = vsel %vm1105, %v9288, %v9065
        %v9323 = vsel %vm1105, %v9291, %v9067
        %v9325 = vsel %vm1108, %v9293, %v9085
        %v9328 = vsel %vm1108, %v9295, %v9087
        %v9331 = vsel %vm1108, %v9297, %v9089
        %v9334 = vsel %vm1108, %v9299, %v9091
        %v9337 = vsel %vm1108, %v9301, %v9093
        %v9340 = vsel %vm1108, %v9303, %v9095
        %v9343 = vsel %vm1108, %v9305, %v9097
        %v9346 = vsel %vm1108, %v9307, %v9099
        %v9349 = vsel %vm1108, %v9309, %v9101
        %v9352 = vsel %vm1108, %v9311, %v9103
        %v9355 = vsel %vm1108, %v9313, %v9105
        %v9358 = vsel %vm1108, %v9315, %v9107
        %v9361 = vsel %vm1108, %v9317, %v9109
        %v9364 = vsel %vm1108, %v9319, %v9111
        %v9367 = vsel %vm1108, %v9321, %v9113
        %v9370 = vsel %vm1108, %v9323, %v9115
        %s9372 = scalar_lea.vmem %s8, 4
        %v9373 = vld [vmem:[%s9372] sm:$0x1]
        %v9375 = vlaneseq
        %v9376 = vshrl.u32 %v9375, 7
        %v9377 = vsub.s32 0, %v9376
        %v9378 = vrot.slane %v9373, %v9377
        %v9416 = vunpack.c.l.b16 %v8264
        %v9417 = vunpack.c.l.b16 %v8265
        %v9418 = vunpack.c.l.b16 %v8266
        %v9419 = vunpack.c.l.b16 %v8267
        %v9420 = vunpack.c.l.b16 %v8268
        %v9421 = vunpack.c.l.b16 %v8269
        %v9422 = vunpack.c.l.b16 %v8270
        %v9423 = vunpack.c.l.b16 %v8271
        %v9424 = vunpack.c.l.b16 %v8272
        %v9425 = vunpack.c.l.b16 %v8273
        %v9426 = vunpack.c.l.b16 %v8274
        %v9427 = vunpack.c.l.b16 %v8275
        %v9428 = vunpack.c.l.b16 %v8276
        %v9429 = vunpack.c.l.b16 %v8277
        %v9430 = vunpack.c.l.b16 %v8278
        %v9431 = vunpack.c.l.b16 %v8279
        %v9432 = vunpack.c.l.b16 %v8280
        %v9433 = vunpack.c.l.b16 %v8281
        %v9434 = vunpack.c.l.b16 %v8282
        %v9435 = vunpack.c.l.b16 %v8283
        %v9436 = vunpack.c.l.b16 %v8284
        %v9437 = vunpack.c.l.b16 %v8285
        %v9438 = vunpack.c.l.b16 %v8286
        %v9439 = vunpack.c.l.b16 %v8287
        %v9440 = vunpack.c.l.b16 %v8288
        %v9441 = vunpack.c.l.b16 %v8289
        %v9442 = vunpack.c.l.b16 %v8290
        %v9443 = vunpack.c.l.b16 %v8291
        %v9444 = vunpack.c.l.b16 %v8292
        %v9445 = vunpack.c.l.b16 %v8293
        %v9446 = vunpack.c.l.b16 %v8294
        %v9447 = vunpack.c.l.b16 %v8295
        %v9448 = vunpack.c.l.b16 %v8296
        %v9449 = vunpack.c.l.b16 %v8297
        %v9450 = vunpack.c.l.b16 %v8298
        %v9451 = vunpack.c.l.b16 %v8299
        %v9452 = vpack.c.b16 %v9417, %v9416
        %v9453 = vpack.c.b16 %v9419, %v9418
        %v9454 = vpack.c.b16 %v9421, %v9420
        %v9455 = vpack.c.b16 %v9423, %v9422
        %v9456 = vpack.c.b16 %v9425, %v9424
        %v9457 = vpack.c.b16 %v9427, %v9426
        %v9458 = vpack.c.b16 %v9429, %v9428
        %v9459 = vpack.c.b16 %v9431, %v9430
        %v9460 = vpack.c.b16 %v9433, %v9432
        %v9461 = vpack.c.b16 %v9435, %v9434
        %v9462 = vpack.c.b16 %v9437, %v9436
        %v9463 = vpack.c.b16 %v9439, %v9438
        %v9464 = vpack.c.b16 %v9441, %v9440
        %v9465 = vpack.c.b16 %v9443, %v9442
        %v9466 = vpack.c.b16 %v9445, %v9444
        %v9467 = vpack.c.b16 %v9447, %v9446
        %v9468 = vpack.c.b16 %v9449, %v9448
        %v9469 = vpack.c.b16 %v9451, %v9450
        %v9489 = vsel %vm847, %v8812, 0
        %v9492 = vsel %vm847, %v8813, 0
        %v9495 = vsel %vm847, %v8814, 0
        %v9498 = vsel %vm847, %v8815, 0
        %v9501 = vsel %vm847, %v8816, 0
        %v9504 = vsel %vm847, %v8817, 0
        %v9507 = vsel %vm847, %v8818, 0
        %v9510 = vsel %vm847, %v8819, 0
        %v9513 = vsel %vm847, %v8820, 0
        %v9516 = vsel %vm847, %v8821, 0
        %v9519 = vsel %vm847, %v8822, 0
        %v9522 = vsel %vm847, %v8823, 0
        %v9525 = vsel %vm847, %v8824, 0
        %v9528 = vsel %vm847, %v8825, 0
        %v9531 = vsel %vm847, %v8826, 0
        %v9534 = vsel %vm847, %v8827, 0
        %9536 = vmatprep.subr.bf16.mxu0 0
        %9537 = vmatpush1.bf16.msra.mxu0 %v9459
        %9538 = vmatprep.subr.bf16.mxu0 0
        %9539 = vmatpush1.bf16.msra.mxu0 %v9458
        %9540 = vmatprep.subr.bf16.mxu0 0
        %9541 = vmatpush1.bf16.msra.mxu0 %v9457
        %9542 = vmatprep.subr.bf16.mxu0 0
        %9543 = vmatpush1.bf16.msra.mxu0 %v9456
        %9544 = vmatprep.subr.bf16.mxu0 0
        %9545 = vmatpush1.bf16.msra.mxu0 %v9455
        %9546 = vmatprep.subr.bf16.mxu0 0
        %9547 = vmatpush1.bf16.msra.mxu0 %v9454
        %9548 = vmatprep.subr.bf16.mxu0 0
        %9549 = vmatpush1.bf16.msra.mxu0 %v9453
        %9550 = vmatprep.subr.bf16.mxu0 0
        %9551 = vmatpush1.bf16.msra.mxu0 %v9452
        %9552 = vmatprep.subr.bf16.mxu0 0
        %9553 = vmatpush2.bf16.msra.mxu0 %v9467
        %9554 = vmatprep.subr.bf16.mxu0 0
        %9555 = vmatpush2.bf16.msra.mxu0 %v9466
        %9556 = vmatprep.subr.bf16.mxu0 0
        %9557 = vmatpush2.bf16.msra.mxu0 %v9465
        %9558 = vmatprep.subr.bf16.mxu0 0
        %9559 = vmatpush2.bf16.msra.mxu0 %v9464
        %9560 = vmatprep.subr.bf16.mxu0 0
        %9561 = vmatpush2.bf16.msra.mxu0 %v9463
        %9562 = vmatprep.subr.bf16.mxu0 0
        %9563 = vmatpush2.bf16.msra.mxu0 %v9462
        %9564 = vmatprep.subr.bf16.mxu0 0
        %9565 = vmatpush2.bf16.msra.mxu0 %v9461
        %9566 = vmatprep.subr.bf16.mxu0 0
        %9567 = vmatpush2.bf16.msra.mxu0 %v9460
        %9568 = vmatprep.mubr.bf16.mxu0 %v9325
        %9569 = vmatmul.mubr.bf16.gmra.mxu0 %v9197
        %v9570 = vpop.f32.mrf.mxu0
        %v9571 = vadd.f32 %v9378, %v9570
        %v9572 = vpop.f32.mrf.mxu0
        %v9573 = vpop.f32.mrf.mxu0
        %v9574 = vadd.f32 %v9378, %v9573
        %v9575 = vpop.f32.mrf.mxu0
        %9576 = vmatprep.mubr.bf16.mxu0 %v9328
        %9577 = vmatmul.mubr.bf16.gmra.mxu0 %v9200
        %v9578 = vpop.f32.mrf.mxu0
        %v9579 = vadd.f32 %v9378, %v9578
        %v9580 = vpop.f32.mrf.mxu0
        %v9581 = vpop.f32.mrf.mxu0
        %v9582 = vadd.f32 %v9378, %v9581
        %v9583 = vpop.f32.mrf.mxu0
        %9584 = vmatprep.mubr.bf16.mxu0 %v9331
        %9585 = vmatmul.mubr.bf16.gmra.mxu0 %v9203
        %v9586 = vpop.f32.mrf.mxu0
        %v9587 = vadd.f32 %v9378, %v9586
        %v9588 = vpop.f32.mrf.mxu0
        %v9589 = vpop.f32.mrf.mxu0
        %v9590 = vadd.f32 %v9378, %v9589
        %v9591 = vpop.f32.mrf.mxu0
        %9592 = vmatprep.mubr.bf16.mxu0 %v9334
        %9593 = vmatmul.mubr.bf16.gmra.mxu0 %v9206
        %v9594 = vpop.f32.mrf.mxu0
        %v9595 = vadd.f32 %v9378, %v9594
        %v9596 = vpop.f32.mrf.mxu0
        %v9597 = vpop.f32.mrf.mxu0
        %v9598 = vadd.f32 %v9378, %v9597
        %v9599 = vpop.f32.mrf.mxu0
        %9600 = vmatprep.mubr.bf16.mxu0 %v9337
        %9601 = vmatmul.mubr.bf16.gmra.mxu0 %v9209
        %v9602 = vpop.f32.mrf.mxu0
        %v9603 = vadd.f32 %v9378, %v9602
        %v9604 = vpop.f32.mrf.mxu0
        %v9605 = vpop.f32.mrf.mxu0
        %v9606 = vadd.f32 %v9378, %v9605
        %v9607 = vpop.f32.mrf.mxu0
        %9608 = vmatprep.mubr.bf16.mxu0 %v9340
        %9609 = vmatmul.mubr.bf16.gmra.mxu0 %v9212
        %v9610 = vpop.f32.mrf.mxu0
        %v9611 = vadd.f32 %v9378, %v9610
        %v9612 = vpop.f32.mrf.mxu0
        %v9613 = vpop.f32.mrf.mxu0
        %v9614 = vadd.f32 %v9378, %v9613
        %v9615 = vpop.f32.mrf.mxu0
        %9616 = vmatprep.mubr.bf16.mxu0 %v9343
        %9617 = vmatmul.mubr.bf16.gmra.mxu0 %v9215
        %v9618 = vpop.f32.mrf.mxu0
        %v9619 = vadd.f32 %v9378, %v9618
        %v9620 = vpop.f32.mrf.mxu0
        %v9621 = vpop.f32.mrf.mxu0
        %v9622 = vadd.f32 %v9378, %v9621
        %v9623 = vpop.f32.mrf.mxu0
        %9624 = vmatprep.mubr.bf16.mxu0 %v9346
        %9625 = vmatmul.mubr.bf16.gmra.mxu0 %v9218
        %v9626 = vpop.f32.mrf.mxu0
        %v9627 = vadd.f32 %v9378, %v9626
        %v9628 = vpop.f32.mrf.mxu0
        %v9629 = vpop.f32.mrf.mxu0
        %v9630 = vadd.f32 %v9378, %v9629
        %v9631 = vpop.f32.mrf.mxu0
        %9632 = vmatprep.mubr.bf16.mxu0 %v9349
        %9633 = vmatmul.mubr.bf16.gmra.mxu0 %v9221
        %v9634 = vpop.f32.mrf.mxu0
        %v9635 = vadd.f32 %v9378, %v9634
        %v9636 = vpop.f32.mrf.mxu0
        %v9637 = vpop.f32.mrf.mxu0
        %v9638 = vadd.f32 %v9378, %v9637
        %v9639 = vpop.f32.mrf.mxu0
        %9640 = vmatprep.mubr.bf16.mxu0 %v9352
        %9641 = vmatmul.mubr.bf16.gmra.mxu0 %v9224
        %v9642 = vpop.f32.mrf.mxu0
        %v9643 = vadd.f32 %v9378, %v9642
        %v9644 = vpop.f32.mrf.mxu0
        %v9645 = vpop.f32.mrf.mxu0
        %v9646 = vadd.f32 %v9378, %v9645
        %v9647 = vpop.f32.mrf.mxu0
        %9648 = vmatprep.mubr.bf16.mxu0 %v9355
        %9649 = vmatmul.mubr.bf16.gmra.mxu0 %v9227
        %v9650 = vpop.f32.mrf.mxu0
        %v9651 = vadd.f32 %v9378, %v9650
        %v9652 = vpop.f32.mrf.mxu0
        %v9653 = vpop.f32.mrf.mxu0
        %v9654 = vadd.f32 %v9378, %v9653
        %v9655 = vpop.f32.mrf.mxu0
        %9656 = vmatprep.mubr.bf16.mxu0 %v9358
        %9657 = vmatmul.mubr.bf16.gmra.mxu0 %v9230
        %v9658 = vpop.f32.mrf.mxu0
        %v9659 = vadd.f32 %v9378, %v9658
        %v9660 = vpop.f32.mrf.mxu0
        %v9661 = vpop.f32.mrf.mxu0
        %v9662 = vadd.f32 %v9378, %v9661
        %v9663 = vpop.f32.mrf.mxu0
        %9664 = vmatprep.mubr.bf16.mxu0 %v9361
        %9665 = vmatmul.mubr.bf16.gmra.mxu0 %v9233
        %v9666 = vpop.f32.mrf.mxu0
        %v9667 = vadd.f32 %v9378, %v9666
        %v9668 = vpop.f32.mrf.mxu0
        %v9669 = vpop.f32.mrf.mxu0
        %v9670 = vadd.f32 %v9378, %v9669
        %v9671 = vpop.f32.mrf.mxu0
        %9672 = vmatprep.mubr.bf16.mxu0 %v9364
        %9673 = vmatmul.mubr.bf16.gmra.mxu0 %v9236
        %v9674 = vpop.f32.mrf.mxu0
        %v9675 = vadd.f32 %v9378, %v9674
        %v9676 = vpop.f32.mrf.mxu0
        %v9677 = vpop.f32.mrf.mxu0
        %v9678 = vadd.f32 %v9378, %v9677
        %v9679 = vpop.f32.mrf.mxu0
        %9680 = vmatprep.mubr.bf16.mxu0 %v9367
        %9681 = vmatmul.mubr.bf16.gmra.mxu0 %v9239
        %v9682 = vpop.f32.mrf.mxu0
        %v9683 = vadd.f32 %v9378, %v9682
        %v9684 = vpop.f32.mrf.mxu0
        %v9685 = vpop.f32.mrf.mxu0
        %v9686 = vadd.f32 %v9378, %v9685
        %v9687 = vpop.f32.mrf.mxu0
        %9688 = vmatprep.mubr.bf16.mxu0 %v9370
        %9689 = vmatmul.mubr.bf16.gmra.mxu0 %v9242
        %v9690 = vpop.f32.mrf.mxu0
        %v9691 = vadd.f32 %v9378, %v9690
        %v9692 = vpop.f32.mrf.mxu0
        %v9693 = vpop.f32.mrf.mxu0
        %v9694 = vadd.f32 %v9378, %v9693
        %v9695 = vpop.f32.mrf.mxu0
        %9696 = vdwg.mxu0
        %9697 = vmatprep.subr.bf16.mxu0 0
        %9698 = vmatpush1.bf16.msra.mxu0 0
        %9699 = vmatprep.subr.bf16.mxu0 0
        %9700 = vmatpush1.bf16.msra.mxu0 0
        %9701 = vmatprep.subr.bf16.mxu0 0
        %9702 = vmatpush1.bf16.msra.mxu0 0
        %9703 = vmatprep.subr.bf16.mxu0 0
        %9704 = vmatpush1.bf16.msra.mxu0 0
        %9705 = vmatprep.subr.bf16.mxu0 0
        %9706 = vmatpush1.bf16.msra.mxu0 0
        %9707 = vmatprep.subr.bf16.mxu0 0
        %9708 = vmatpush1.bf16.msra.mxu0 0
        %9709 = vmatprep.subr.bf16.mxu0 0
        %9710 = vmatpush1.bf16.msra.mxu0 %v9469
        %9711 = vmatprep.subr.bf16.mxu0 0
        %9712 = vmatpush1.bf16.msra.mxu0 %v9468
        %9713 = vmatprep.subr.bf16.mxu0 0
        %9714 = vmatpush2.bf16.msra.mxu0 0
        %9715 = vmatprep.subr.bf16.mxu0 0
        %9716 = vmatpush2.bf16.msra.mxu0 0
        %9717 = vmatprep.subr.bf16.mxu0 0
        %9718 = vmatpush2.bf16.msra.mxu0 0
        %9719 = vmatprep.subr.bf16.mxu0 0
        %9720 = vmatpush2.bf16.msra.mxu0 0
        %9721 = vmatprep.subr.bf16.mxu0 0
        %9722 = vmatpush2.bf16.msra.mxu0 0
        %9723 = vmatprep.subr.bf16.mxu0 0
        %9724 = vmatpush2.bf16.msra.mxu0 0
        %9725 = vmatprep.subr.bf16.mxu0 0
        %9726 = vmatpush2.bf16.msra.mxu0 0
        %9727 = vmatprep.subr.bf16.mxu0 0
        %9728 = vmatpush2.bf16.msra.mxu0 0
        %9729 = vmatprep.mubr.bf16.mxu0 0
        %9730 = vmatmul.mubr.bf16.gmra.mxu0 %v9489
        %v9731 = vpop.f32.mrf.mxu0
        %v9732 = vadd.f32 %v9571, %v9731
        %v9733 = vpop.f32.mrf.mxu0
        %v9734 = vpop.f32.mrf.mxu0
        %v9735 = vadd.f32 %v9574, %v9734
        %v9736 = vpop.f32.mrf.mxu0
        %9737 = vmatprep.mubr.bf16.mxu0 0
        %9738 = vmatmul.mubr.bf16.gmra.mxu0 %v9492
        %v9739 = vpop.f32.mrf.mxu0
        %v9740 = vadd.f32 %v9579, %v9739
        %v9741 = vpop.f32.mrf.mxu0
        %v9742 = vpop.f32.mrf.mxu0
        %v9743 = vadd.f32 %v9582, %v9742
        %v9744 = vpop.f32.mrf.mxu0
        %9745 = vmatprep.mubr.bf16.mxu0 0
        %9746 = vmatmul.mubr.bf16.gmra.mxu0 %v9495
        %v9747 = vpop.f32.mrf.mxu0
        %v9748 = vadd.f32 %v9587, %v9747
        %v9749 = vpop.f32.mrf.mxu0
        %v9750 = vpop.f32.mrf.mxu0
        %v9751 = vadd.f32 %v9590, %v9750
        %v9752 = vpop.f32.mrf.mxu0
        %9753 = vmatprep.mubr.bf16.mxu0 0
        %9754 = vmatmul.mubr.bf16.gmra.mxu0 %v9498
        %v9755 = vpop.f32.mrf.mxu0
        %v9756 = vadd.f32 %v9595, %v9755
        %v9757 = vpop.f32.mrf.mxu0
        %v9758 = vpop.f32.mrf.mxu0
        %v9759 = vadd.f32 %v9598, %v9758
        %v9760 = vpop.f32.mrf.mxu0
        %9761 = vmatprep.mubr.bf16.mxu0 0
        %9762 = vmatmul.mubr.bf16.gmra.mxu0 %v9501
        %v9763 = vpop.f32.mrf.mxu0
        %v9764 = vadd.f32 %v9603, %v9763
        %v9765 = vpop.f32.mrf.mxu0
        %v9766 = vpop.f32.mrf.mxu0
        %v9767 = vadd.f32 %v9606, %v9766
        %v9768 = vpop.f32.mrf.mxu0
        %9769 = vmatprep.mubr.bf16.mxu0 0
        %9770 = vmatmul.mubr.bf16.gmra.mxu0 %v9504
        %v9771 = vpop.f32.mrf.mxu0
        %v9772 = vadd.f32 %v9611, %v9771
        %v9773 = vpop.f32.mrf.mxu0
        %v9774 = vpop.f32.mrf.mxu0
        %v9775 = vadd.f32 %v9614, %v9774
        %v9776 = vpop.f32.mrf.mxu0
        %9777 = vmatprep.mubr.bf16.mxu0 0
        %9778 = vmatmul.mubr.bf16.gmra.mxu0 %v9507
        %v9779 = vpop.f32.mrf.mxu0
        %v9780 = vadd.f32 %v9619, %v9779
        %v9781 = vpop.f32.mrf.mxu0
        %v9782 = vpop.f32.mrf.mxu0
        %v9783 = vadd.f32 %v9622, %v9782
        %v9784 = vpop.f32.mrf.mxu0
        %9785 = vmatprep.mubr.bf16.mxu0 0
        %9786 = vmatmul.mubr.bf16.gmra.mxu0 %v9510
        %v9787 = vpop.f32.mrf.mxu0
        %v9788 = vadd.f32 %v9627, %v9787
        %v9789 = vpop.f32.mrf.mxu0
        %v9790 = vpop.f32.mrf.mxu0
        %v9791 = vadd.f32 %v9630, %v9790
        %v9792 = vpop.f32.mrf.mxu0
        %9793 = vmatprep.mubr.bf16.mxu0 0
        %9794 = vmatmul.mubr.bf16.gmra.mxu0 %v9513
        %v9795 = vpop.f32.mrf.mxu0
        %v9796 = vadd.f32 %v9635, %v9795
        %v9797 = vpop.f32.mrf.mxu0
        %v9798 = vpop.f32.mrf.mxu0
        %v9799 = vadd.f32 %v9638, %v9798
        %v9800 = vpop.f32.mrf.mxu0
        %9801 = vmatprep.mubr.bf16.mxu0 0
        %9802 = vmatmul.mubr.bf16.gmra.mxu0 %v9516
        %v9803 = vpop.f32.mrf.mxu0
        %v9804 = vadd.f32 %v9643, %v9803
        %v9805 = vpop.f32.mrf.mxu0
        %v9806 = vpop.f32.mrf.mxu0
        %v9807 = vadd.f32 %v9646, %v9806
        %v9808 = vpop.f32.mrf.mxu0
        %9809 = vmatprep.mubr.bf16.mxu0 0
        %9810 = vmatmul.mubr.bf16.gmra.mxu0 %v9519
        %v9811 = vpop.f32.mrf.mxu0
        %v9812 = vadd.f32 %v9651, %v9811
        %v9813 = vpop.f32.mrf.mxu0
        %v9814 = vpop.f32.mrf.mxu0
        %v9815 = vadd.f32 %v9654, %v9814
        %v9816 = vpop.f32.mrf.mxu0
        %9817 = vmatprep.mubr.bf16.mxu0 0
        %9818 = vmatmul.mubr.bf16.gmra.mxu0 %v9522
        %v9819 = vpop.f32.mrf.mxu0
        %v9820 = vadd.f32 %v9659, %v9819
        %v9821 = vpop.f32.mrf.mxu0
        %v9822 = vpop.f32.mrf.mxu0
        %v9823 = vadd.f32 %v9662, %v9822
        %v9824 = vpop.f32.mrf.mxu0
        %9825 = vmatprep.mubr.bf16.mxu0 0
        %9826 = vmatmul.mubr.bf16.gmra.mxu0 %v9525
        %v9827 = vpop.f32.mrf.mxu0
        %v9828 = vadd.f32 %v9667, %v9827
        %v9829 = vpop.f32.mrf.mxu0
        %v9830 = vpop.f32.mrf.mxu0
        %v9831 = vadd.f32 %v9670, %v9830
        %v9832 = vpop.f32.mrf.mxu0
        %9833 = vmatprep.mubr.bf16.mxu0 0
        %9834 = vmatmul.mubr.bf16.gmra.mxu0 %v9528
        %v9835 = vpop.f32.mrf.mxu0
        %v9836 = vadd.f32 %v9675, %v9835
        %v9837 = vpop.f32.mrf.mxu0
        %v9838 = vpop.f32.mrf.mxu0
        %v9839 = vadd.f32 %v9678, %v9838
        %v9840 = vpop.f32.mrf.mxu0
        %9841 = vmatprep.mubr.bf16.mxu0 0
        %9842 = vmatmul.mubr.bf16.gmra.mxu0 %v9531
        %v9843 = vpop.f32.mrf.mxu0
        %v9844 = vadd.f32 %v9683, %v9843
        %v9845 = vpop.f32.mrf.mxu0
        %v9846 = vpop.f32.mrf.mxu0
        %v9847 = vadd.f32 %v9686, %v9846
        %v9848 = vpop.f32.mrf.mxu0
        %9849 = vmatprep.mubr.bf16.mxu0 0
        %9850 = vmatmul.mubr.bf16.gmra.mxu0 %v9534
        %v9851 = vpop.f32.mrf.mxu0
        %v9852 = vadd.f32 %v9691, %v9851
        %v9853 = vpop.f32.mrf.mxu0
        %v9854 = vpop.f32.mrf.mxu0
        %v9855 = vadd.f32 %v9694, %v9854
        %v9856 = vpop.f32.mrf.mxu0
        %9857 = vdwg.mxu0
        %9858 = vst.msk [vmem:[%s777] sm:$0xff] %vm847, %v9732
        %9859 = vst.msk [vmem:[%s777 + $0x8] sm:$0xff] %vm847, %v9735
        %9860 = vst.msk [vmem:[%s777 + $0x10] sm:$0xff] %vm847, %v9740
        %9861 = vst.msk [vmem:[%s777 + $0x18] sm:$0xff] %vm847, %v9743
        %9862 = vst.msk [vmem:[%s777 + $0x20] sm:$0xff] %vm847, %v9748
        %9863 = vst.msk [vmem:[%s777 + $0x28] sm:$0xff] %vm847, %v9751
        %9864 = vst.msk [vmem:[%s777 + $0x30] sm:$0xff] %vm847, %v9756
        %9865 = vst.msk [vmem:[%s777 + $0x38] sm:$0xff] %vm847, %v9759
        %9866 = vst.msk [vmem:[%s777 + $0x40] sm:$0xff] %vm847, %v9764
        %9867 = vst.msk [vmem:[%s777 + $0x48] sm:$0xff] %vm847, %v9767
        %9868 = vst.msk [vmem:[%s777 + $0x50] sm:$0xff] %vm847, %v9772
        %9869 = vst.msk [vmem:[%s777 + $0x58] sm:$0xff] %vm847, %v9775
        %9870 = vst.msk [vmem:[%s777 + $0x60] sm:$0xff] %vm847, %v9780
        %9871 = vst.msk [vmem:[%s777 + $0x68] sm:$0xff] %vm847, %v9783
        %9872 = vst.msk [vmem:[%s777 + $0x70] sm:$0xff] %vm847, %v9788
        %9873 = vst.msk [vmem:[%s777 + $0x78] sm:$0xff] %vm847, %v9791
        %9874 = vst.msk [vmem:[%s777 + $0x80] sm:$0xff] %vm847, %v9796
        %9875 = vst.msk [vmem:[%s777 + $0x88] sm:$0xff] %vm847, %v9799
        %9876 = vst.msk [vmem:[%s777 + $0x90] sm:$0xff] %vm847, %v9804
        %9877 = vst.msk [vmem:[%s777 + $0x98] sm:$0xff] %vm847, %v9807
        %9878 = vst.msk [vmem:[%s777 + $0xa0] sm:$0xff] %vm847, %v9812
        %9879 = vst.msk [vmem:[%s777 + $0xa8] sm:$0xff] %vm847, %v9815
        %9880 = vst.msk [vmem:[%s777 + $0xb0] sm:$0xff] %vm847, %v9820
        %9881 = vst.msk [vmem:[%s777 + $0xb8] sm:$0xff] %vm847, %v9823
        %9882 = vst.msk [vmem:[%s777 + $0xc0] sm:$0xff] %vm847, %v9828
        %9883 = vst.msk [vmem:[%s777 + $0xc8] sm:$0xff] %vm847, %v9831
        %9884 = vst.msk [vmem:[%s777 + $0xd0] sm:$0xff] %vm847, %v9836
        %9885 = vst.msk [vmem:[%s777 + $0xd8] sm:$0xff] %vm847, %v9839
        %9886 = vst.msk [vmem:[%s777 + $0xe0] sm:$0xff] %vm847, %v9844
        %9887 = vst.msk [vmem:[%s777 + $0xe8] sm:$0xff] %vm847, %v9847
        %9888 = vst.msk [vmem:[%s777 + $0xf0] sm:$0xff] %vm847, %v9852
        %9889 = vst.msk [vmem:[%s777 + $0xf8] sm:$0xff] %vm847, %v9855
        %s9890 = scalar_lea.vmem %s807, 256
        %v9891 = vld [vmem:[%s9890] sm:$0xff]
        %v9892 = vld [vmem:[%s9890 + $0x8] sm:$0xff]
        %v9893 = vld [vmem:[%s9890 + $0x10] sm:$0xff]
        %v9894 = vld [vmem:[%s9890 + $0x18] sm:$0xff]
        %v9895 = vld [vmem:[%s9890 + $0x20] sm:$0xff]
        %v9896 = vld [vmem:[%s9890 + $0x28] sm:$0xff]
        %v9897 = vld [vmem:[%s9890 + $0x30] sm:$0xff]
        %v9898 = vld [vmem:[%s9890 + $0x38] sm:$0xff]
        %v9899 = vld [vmem:[%s9890 + $0x40] sm:$0xff]
        %v9900 = vld [vmem:[%s9890 + $0x48] sm:$0xff]
        %v9901 = vld [vmem:[%s9890 + $0x50] sm:$0xff]
        %v9902 = vld [vmem:[%s9890 + $0x58] sm:$0xff]
        %v9903 = vld [vmem:[%s9890 + $0x60] sm:$0xff]
        %v9904 = vld [vmem:[%s9890 + $0x68] sm:$0xff]
        %v9905 = vld [vmem:[%s9890 + $0x70] sm:$0xff]
        %v9906 = vld [vmem:[%s9890 + $0x78] sm:$0xff]
        %v9907 = vld [vmem:[%s9890 + $0x80] sm:$0xff]
        %v9908 = vld [vmem:[%s9890 + $0x88] sm:$0xff]
        %v9909 = vld [vmem:[%s9890 + $0x90] sm:$0xff]
        %v9910 = vld [vmem:[%s9890 + $0x98] sm:$0xff]
        %v9911 = vld [vmem:[%s9890 + $0xa0] sm:$0xff]
        %v9912 = vld [vmem:[%s9890 + $0xa8] sm:$0xff]
        %v9913 = vld [vmem:[%s9890 + $0xb0] sm:$0xff]
        %v9914 = vld [vmem:[%s9890 + $0xb8] sm:$0xff]
        %v9915 = vld [vmem:[%s9890 + $0xc0] sm:$0xff]
        %v9916 = vld [vmem:[%s9890 + $0xc8] sm:$0xff]
        %v9917 = vld [vmem:[%s9890 + $0xd0] sm:$0xff]
        %v9918 = vld [vmem:[%s9890 + $0xd8] sm:$0xff]
        %v9919 = vld [vmem:[%s9890 + $0xe0] sm:$0xff]
        %v9920 = vld [vmem:[%s9890 + $0xe8] sm:$0xff]
        %v9921 = vld [vmem:[%s9890 + $0xf0] sm:$0xff]
        %v9922 = vld [vmem:[%s9890 + $0xf8] sm:$0xff]
        %s9923 = scalar_lea.vmem %s6, 5
        %v9924 = vld [vmem:[%s9923] sm:$0x1]
        %s9925 = scalar_lea.vmem %s788, 5
        %v9926 = vld [vmem:[%s9925] sm:$0x1]
        %s9927 = scalar_lea.vmem %s792, 5
        %v9928 = vld [vmem:[%s9927] sm:$0x1]
        %v9930 = vlaneseq
        %v9931 = vshrl.u32 %v9930, 7
        %v9932 = vsub.s32 0, %v9931
        %v9933 = vrot.slane %v9924, %v9932
        %9936 = vset.pattern.permute.xlu0 0
        %9937 = vperm.xlu0 %9936, %v9891
        %v9938 = vpop.permute.xlu0 %9937
        %9941 = vset.pattern.permute.xlu0 0
        %9942 = vperm.xlu0 %9941, %v9892
        %v9943 = vpop.permute.xlu0 %9942
        %9946 = vset.pattern.permute.xlu0 0
        %9947 = vperm.xlu0 %9946, %v9893
        %v9948 = vpop.permute.xlu0 %9947
        %9951 = vset.pattern.permute.xlu0 0
        %9952 = vperm.xlu0 %9951, %v9894
        %v9953 = vpop.permute.xlu0 %9952
        %9956 = vset.pattern.permute.xlu0 0
        %9957 = vperm.xlu0 %9956, %v9895
        %v9958 = vpop.permute.xlu0 %9957
        %9961 = vset.pattern.permute.xlu0 0
        %9962 = vperm.xlu0 %9961, %v9896
        %v9963 = vpop.permute.xlu0 %9962
        %9966 = vset.pattern.permute.xlu0 0
        %9967 = vperm.xlu0 %9966, %v9897
        %v9968 = vpop.permute.xlu0 %9967
        %9971 = vset.pattern.permute.xlu0 0
        %9972 = vperm.xlu0 %9971, %v9898
        %v9973 = vpop.permute.xlu0 %9972
        %9976 = vset.pattern.permute.xlu0 0
        %9977 = vperm.xlu0 %9976, %v9899
        %v9978 = vpop.permute.xlu0 %9977
        %9981 = vset.pattern.permute.xlu0 0
        %9982 = vperm.xlu0 %9981, %v9900
        %v9983 = vpop.permute.xlu0 %9982
        %9986 = vset.pattern.permute.xlu0 0
        %9987 = vperm.xlu0 %9986, %v9901
        %v9988 = vpop.permute.xlu0 %9987
        %9991 = vset.pattern.permute.xlu0 0
        %9992 = vperm.xlu0 %9991, %v9902
        %v9993 = vpop.permute.xlu0 %9992
        %9996 = vset.pattern.permute.xlu0 0
        %9997 = vperm.xlu0 %9996, %v9903
        %v9998 = vpop.permute.xlu0 %9997
        %10001 = vset.pattern.permute.xlu0 0
        %10002 = vperm.xlu0 %10001, %v9904
        %v10003 = vpop.permute.xlu0 %10002
        %10006 = vset.pattern.permute.xlu0 0
        %10007 = vperm.xlu0 %10006, %v9905
        %v10008 = vpop.permute.xlu0 %10007
        %10011 = vset.pattern.permute.xlu0 0
        %10012 = vperm.xlu0 %10011, %v9906
        %v10013 = vpop.permute.xlu0 %10012
        %10016 = vset.pattern.permute.xlu0 0
        %10017 = vperm.xlu0 %10016, %v9907
        %v10018 = vpop.permute.xlu0 %10017
        %10021 = vset.pattern.permute.xlu0 0
        %10022 = vperm.xlu0 %10021, %v9908
        %v10023 = vpop.permute.xlu0 %10022
        %10026 = vset.pattern.permute.xlu0 0
        %10027 = vperm.xlu0 %10026, %v9909
        %v10028 = vpop.permute.xlu0 %10027
        %10031 = vset.pattern.permute.xlu0 0
        %10032 = vperm.xlu0 %10031, %v9910
        %v10033 = vpop.permute.xlu0 %10032
        %10036 = vset.pattern.permute.xlu0 0
        %10037 = vperm.xlu0 %10036, %v9911
        %v10038 = vpop.permute.xlu0 %10037
        %10041 = vset.pattern.permute.xlu0 0
        %10042 = vperm.xlu0 %10041, %v9912
        %v10043 = vpop.permute.xlu0 %10042
        %10046 = vset.pattern.permute.xlu0 0
        %10047 = vperm.xlu0 %10046, %v9913
        %v10048 = vpop.permute.xlu0 %10047
        %10051 = vset.pattern.permute.xlu0 0
        %10052 = vperm.xlu0 %10051, %v9914
        %v10053 = vpop.permute.xlu0 %10052
        %10056 = vset.pattern.permute.xlu0 0
        %10057 = vperm.xlu0 %10056, %v9915
        %v10058 = vpop.permute.xlu0 %10057
        %10061 = vset.pattern.permute.xlu0 0
        %10062 = vperm.xlu0 %10061, %v9916
        %v10063 = vpop.permute.xlu0 %10062
        %10066 = vset.pattern.permute.xlu0 0
        %10067 = vperm.xlu0 %10066, %v9917
        %v10068 = vpop.permute.xlu0 %10067
        %10071 = vset.pattern.permute.xlu0 0
        %10072 = vperm.xlu0 %10071, %v9918
        %v10073 = vpop.permute.xlu0 %10072
        %10076 = vset.pattern.permute.xlu0 0
        %10077 = vperm.xlu0 %10076, %v9919
        %v10078 = vpop.permute.xlu0 %10077
        %10081 = vset.pattern.permute.xlu0 0
        %10082 = vperm.xlu0 %10081, %v9920
        %v10083 = vpop.permute.xlu0 %10082
        %10086 = vset.pattern.permute.xlu0 0
        %10087 = vperm.xlu0 %10086, %v9921
        %v10088 = vpop.permute.xlu0 %10087
        %10091 = vset.pattern.permute.xlu0 0
        %10092 = vperm.xlu0 %10091, %v9922
        %v10093 = vpop.permute.xlu0 %10092
        %v10095 = vmul.f32 %v9933, %v9938
        %v10096 = vmul.f32 %v9933, %v9943
        %v10097 = vmul.f32 %v9933, %v9948
        %v10098 = vmul.f32 %v9933, %v9953
        %v10099 = vmul.f32 %v9933, %v9958
        %v10100 = vmul.f32 %v9933, %v9963
        %v10101 = vmul.f32 %v9933, %v9968
        %v10102 = vmul.f32 %v9933, %v9973
        %v10103 = vmul.f32 %v9933, %v9978
        %v10104 = vmul.f32 %v9933, %v9983
        %v10105 = vmul.f32 %v9933, %v9988
        %v10106 = vmul.f32 %v9933, %v9993
        %v10107 = vmul.f32 %v9933, %v9998
        %v10108 = vmul.f32 %v9933, %v10003
        %v10109 = vmul.f32 %v9933, %v10008
        %v10110 = vmul.f32 %v9933, %v10013
        %v10111 = vmul.f32 %v9933, %v10018
        %v10112 = vmul.f32 %v9933, %v10023
        %v10113 = vmul.f32 %v9933, %v10028
        %v10114 = vmul.f32 %v9933, %v10033
        %v10115 = vmul.f32 %v9933, %v10038
        %v10116 = vmul.f32 %v9933, %v10043
        %v10117 = vmul.f32 %v9933, %v10048
        %v10118 = vmul.f32 %v9933, %v10053
        %v10119 = vmul.f32 %v9933, %v10058
        %v10120 = vmul.f32 %v9933, %v10063
        %v10121 = vmul.f32 %v9933, %v10068
        %v10122 = vmul.f32 %v9933, %v10073
        %v10123 = vmul.f32 %v9933, %v10078
        %v10124 = vmul.f32 %v9933, %v10083
        %v10125 = vmul.f32 %v9933, %v10088
        %v10126 = vmul.f32 %v9933, %v10093
        %v10127 = vadd.f32 %v9732, %v10095
        %v10128 = vadd.f32 %v9735, %v10096
        %v10129 = vadd.f32 %v9740, %v10097
        %v10130 = vadd.f32 %v9743, %v10098
        %v10131 = vadd.f32 %v9748, %v10099
        %v10132 = vadd.f32 %v9751, %v10100
        %v10133 = vadd.f32 %v9756, %v10101
        %v10134 = vadd.f32 %v9759, %v10102
        %v10135 = vadd.f32 %v9764, %v10103
        %v10136 = vadd.f32 %v9767, %v10104
        %v10137 = vadd.f32 %v9772, %v10105
        %v10138 = vadd.f32 %v9775, %v10106
        %v10139 = vadd.f32 %v9780, %v10107
        %v10140 = vadd.f32 %v9783, %v10108
        %v10141 = vadd.f32 %v9788, %v10109
        %v10142 = vadd.f32 %v9791, %v10110
        %v10143 = vadd.f32 %v9796, %v10111
        %v10144 = vadd.f32 %v9799, %v10112
        %v10145 = vadd.f32 %v9804, %v10113
        %v10146 = vadd.f32 %v9807, %v10114
        %v10147 = vadd.f32 %v9812, %v10115
        %v10148 = vadd.f32 %v9815, %v10116
        %v10149 = vadd.f32 %v9820, %v10117
        %v10150 = vadd.f32 %v9823, %v10118
        %v10151 = vadd.f32 %v9828, %v10119
        %v10152 = vadd.f32 %v9831, %v10120
        %v10153 = vadd.f32 %v9836, %v10121
        %v10154 = vadd.f32 %v9839, %v10122
        %v10155 = vadd.f32 %v9844, %v10123
        %v10156 = vadd.f32 %v9847, %v10124
        %v10157 = vadd.f32 %v9852, %v10125
        %v10158 = vadd.f32 %v9855, %v10126
        %vm10159 = vcmp.ge.f32.partialorder %v10127, 0.0
        %vm10160 = vcmp.ge.f32.partialorder %v10128, 0.0
        %vm10161 = vcmp.ge.f32.partialorder %v10129, 0.0
        %vm10162 = vcmp.ge.f32.partialorder %v10130, 0.0
        %vm10163 = vcmp.ge.f32.partialorder %v10131, 0.0
        %vm10164 = vcmp.ge.f32.partialorder %v10132, 0.0
        %vm10165 = vcmp.ge.f32.partialorder %v10133, 0.0
        %vm10166 = vcmp.ge.f32.partialorder %v10134, 0.0
        %vm10167 = vcmp.ge.f32.partialorder %v10135, 0.0
        %vm10168 = vcmp.ge.f32.partialorder %v10136, 0.0
        %vm10169 = vcmp.ge.f32.partialorder %v10137, 0.0
        %vm10170 = vcmp.ge.f32.partialorder %v10138, 0.0
        %vm10171 = vcmp.ge.f32.partialorder %v10139, 0.0
        %vm10172 = vcmp.ge.f32.partialorder %v10140, 0.0
        %vm10173 = vcmp.ge.f32.partialorder %v10141, 0.0
        %vm10174 = vcmp.ge.f32.partialorder %v10142, 0.0
        %vm10175 = vcmp.ge.f32.partialorder %v10143, 0.0
        %vm10176 = vcmp.ge.f32.partialorder %v10144, 0.0
        %vm10177 = vcmp.ge.f32.partialorder %v10145, 0.0
        %vm10178 = vcmp.ge.f32.partialorder %v10146, 0.0
        %vm10179 = vcmp.ge.f32.partialorder %v10147, 0.0
        %vm10180 = vcmp.ge.f32.partialorder %v10148, 0.0
        %vm10181 = vcmp.ge.f32.partialorder %v10149, 0.0
        %vm10182 = vcmp.ge.f32.partialorder %v10150, 0.0
        %vm10183 = vcmp.ge.f32.partialorder %v10151, 0.0
        %vm10184 = vcmp.ge.f32.partialorder %v10152, 0.0
        %vm10185 = vcmp.ge.f32.partialorder %v10153, 0.0
        %vm10186 = vcmp.ge.f32.partialorder %v10154, 0.0
        %vm10187 = vcmp.ge.f32.partialorder %v10155, 0.0
        %vm10188 = vcmp.ge.f32.partialorder %v10156, 0.0
        %vm10189 = vcmp.ge.f32.partialorder %v10157, 0.0
        %vm10190 = vcmp.ge.f32.partialorder %v10158, 0.0
        %v10191 = vmul.f32 %v10127, 0.2
        %v10192 = vmul.f32 %v10128, 0.2
        %v10193 = vmul.f32 %v10129, 0.2
        %v10194 = vmul.f32 %v10130, 0.2
        %v10195 = vmul.f32 %v10131, 0.2
        %v10196 = vmul.f32 %v10132, 0.2
        %v10197 = vmul.f32 %v10133, 0.2
        %v10198 = vmul.f32 %v10134, 0.2
        %v10199 = vmul.f32 %v10135, 0.2
        %v10200 = vmul.f32 %v10136, 0.2
        %v10201 = vmul.f32 %v10137, 0.2
        %v10202 = vmul.f32 %v10138, 0.2
        %v10203 = vmul.f32 %v10139, 0.2
        %v10204 = vmul.f32 %v10140, 0.2
        %v10205 = vmul.f32 %v10141, 0.2
        %v10206 = vmul.f32 %v10142, 0.2
        %v10207 = vmul.f32 %v10143, 0.2
        %v10208 = vmul.f32 %v10144, 0.2
        %v10209 = vmul.f32 %v10145, 0.2
        %v10210 = vmul.f32 %v10146, 0.2
        %v10211 = vmul.f32 %v10147, 0.2
        %v10212 = vmul.f32 %v10148, 0.2
        %v10213 = vmul.f32 %v10149, 0.2
        %v10214 = vmul.f32 %v10150, 0.2
        %v10215 = vmul.f32 %v10151, 0.2
        %v10216 = vmul.f32 %v10152, 0.2
        %v10217 = vmul.f32 %v10153, 0.2
        %v10218 = vmul.f32 %v10154, 0.2
        %v10219 = vmul.f32 %v10155, 0.2
        %v10220 = vmul.f32 %v10156, 0.2
        %v10221 = vmul.f32 %v10157, 0.2
        %v10222 = vmul.f32 %v10158, 0.2
        %v10223 = vsel %vm10159, %v10127, %v10191
        %v10224 = vsel %vm10160, %v10128, %v10192
        %v10225 = vsel %vm10161, %v10129, %v10193
        %v10226 = vsel %vm10162, %v10130, %v10194
        %v10227 = vsel %vm10163, %v10131, %v10195
        %v10228 = vsel %vm10164, %v10132, %v10196
        %v10229 = vsel %vm10165, %v10133, %v10197
        %v10230 = vsel %vm10166, %v10134, %v10198
        %v10231 = vsel %vm10167, %v10135, %v10199
        %v10232 = vsel %vm10168, %v10136, %v10200
        %v10233 = vsel %vm10169, %v10137, %v10201
        %v10234 = vsel %vm10170, %v10138, %v10202
        %v10235 = vsel %vm10171, %v10139, %v10203
        %v10236 = vsel %vm10172, %v10140, %v10204
        %v10237 = vsel %vm10173, %v10141, %v10205
        %v10238 = vsel %vm10174, %v10142, %v10206
        %v10239 = vsel %vm10175, %v10143, %v10207
        %v10240 = vsel %vm10176, %v10144, %v10208
        %v10241 = vsel %vm10177, %v10145, %v10209
        %v10242 = vsel %vm10178, %v10146, %v10210
        %v10243 = vsel %vm10179, %v10147, %v10211
        %v10244 = vsel %vm10180, %v10148, %v10212
        %v10245 = vsel %vm10181, %v10149, %v10213
        %v10246 = vsel %vm10182, %v10150, %v10214
        %v10247 = vsel %vm10183, %v10151, %v10215
        %v10248 = vsel %vm10184, %v10152, %v10216
        %v10249 = vsel %vm10185, %v10153, %v10217
        %v10250 = vsel %vm10186, %v10154, %v10218
        %v10251 = vsel %vm10187, %v10155, %v10219
        %v10252 = vsel %vm10188, %v10156, %v10220
        %v10253 = vsel %vm10189, %v10157, %v10221
        %v10254 = vsel %vm10190, %v10158, %v10222
        %v10255 = vsel %vm847, %v10223, 0.0
        %v10256 = vsel %vm847, %v10224, 0.0
        %v10257 = vadd.f32 %v10255, %v10256
        %v10258 = vsel %vm847, %v10225, 0.0
        %v10259 = vadd.f32 %v10257, %v10258
        %v10260 = vsel %vm847, %v10226, 0.0
        %v10261 = vadd.f32 %v10259, %v10260
        %v10262 = vsel %vm847, %v10227, 0.0
        %v10263 = vadd.f32 %v10261, %v10262
        %v10264 = vsel %vm847, %v10228, 0.0
        %v10265 = vadd.f32 %v10263, %v10264
        %v10266 = vsel %vm847, %v10229, 0.0
        %v10267 = vadd.f32 %v10265, %v10266
        %v10268 = vsel %vm847, %v10230, 0.0
        %v10269 = vadd.f32 %v10267, %v10268
        %v10270 = vsel %vm847, %v10231, 0.0
        %v10271 = vadd.f32 %v10269, %v10270
        %v10272 = vsel %vm847, %v10232, 0.0
        %v10273 = vadd.f32 %v10271, %v10272
        %v10274 = vsel %vm847, %v10233, 0.0
        %v10275 = vadd.f32 %v10273, %v10274
        %v10276 = vsel %vm847, %v10234, 0.0
        %v10277 = vadd.f32 %v10275, %v10276
        %v10278 = vsel %vm847, %v10235, 0.0
        %v10279 = vadd.f32 %v10277, %v10278
        %v10280 = vsel %vm847, %v10236, 0.0
        %v10281 = vadd.f32 %v10279, %v10280
        %v10282 = vsel %vm847, %v10237, 0.0
        %v10283 = vadd.f32 %v10281, %v10282
        %v10284 = vsel %vm847, %v10238, 0.0
        %v10285 = vadd.f32 %v10283, %v10284
        %v10286 = vsel %vm847, %v10239, 0.0
        %v10287 = vadd.f32 %v10285, %v10286
        %v10288 = vsel %vm847, %v10240, 0.0
        %v10289 = vadd.f32 %v10287, %v10288
        %v10290 = vsel %vm847, %v10241, 0.0
        %v10291 = vadd.f32 %v10289, %v10290
        %v10292 = vsel %vm847, %v10242, 0.0
        %v10293 = vadd.f32 %v10291, %v10292
        %v10294 = vsel %vm847, %v10243, 0.0
        %v10295 = vadd.f32 %v10293, %v10294
        %v10296 = vsel %vm847, %v10244, 0.0
        %v10297 = vadd.f32 %v10295, %v10296
        %v10298 = vsel %vm847, %v10245, 0.0
        %v10299 = vadd.f32 %v10297, %v10298
        %v10300 = vsel %vm847, %v10246, 0.0
        %v10301 = vadd.f32 %v10299, %v10300
        %v10302 = vsel %vm847, %v10247, 0.0
        %v10303 = vadd.f32 %v10301, %v10302
        %v10304 = vsel %vm847, %v10248, 0.0
        %v10305 = vadd.f32 %v10303, %v10304
        %v10306 = vsel %vm847, %v10249, 0.0
        %v10307 = vadd.f32 %v10305, %v10306
        %v10308 = vsel %vm847, %v10250, 0.0
        %v10309 = vadd.f32 %v10307, %v10308
        %v10310 = vsel %vm847, %v10251, 0.0
        %v10311 = vadd.f32 %v10309, %v10310
        %v10312 = vsel %vm847, %v10252, 0.0
        %v10313 = vadd.f32 %v10311, %v10312
        %v10314 = vsel %vm847, %v10253, 0.0
        %v10315 = vadd.f32 %v10313, %v10314
        %v10316 = vsel %vm847, %v10254, 0.0
        %v10317 = vadd.f32 %v10315, %v10316
        %v10318 = vrot.slane %v10317, 4
        %v10319 = vadd.f32 %v10317, %v10318
        %v10320 = vrot.slane %v10319, 2
        %v10321 = vadd.f32 %v10319, %v10320
        %v10322 = vrot.slane %v10321, 1
        %v10323 = vadd.f32 %v10321, %v10322
        %v10324 = vmul.f32 %v10323, %v8017
        %v10325 = vsub.f32 %v10223, %v10324
        %v10326 = vsub.f32 %v10224, %v10324
        %v10327 = vsub.f32 %v10225, %v10324
        %v10328 = vsub.f32 %v10226, %v10324
        %v10329 = vsub.f32 %v10227, %v10324
        %v10330 = vsub.f32 %v10228, %v10324
        %v10331 = vsub.f32 %v10229, %v10324
        %v10332 = vsub.f32 %v10230, %v10324
        %v10333 = vsub.f32 %v10231, %v10324
        %v10334 = vsub.f32 %v10232, %v10324
        %v10335 = vsub.f32 %v10233, %v10324
        %v10336 = vsub.f32 %v10234, %v10324
        %v10337 = vsub.f32 %v10235, %v10324
        %v10338 = vsub.f32 %v10236, %v10324
        %v10339 = vsub.f32 %v10237, %v10324
        %v10340 = vsub.f32 %v10238, %v10324
        %v10341 = vsub.f32 %v10239, %v10324
        %v10342 = vsub.f32 %v10240, %v10324
        %v10343 = vsub.f32 %v10241, %v10324
        %v10344 = vsub.f32 %v10242, %v10324
        %v10345 = vsub.f32 %v10243, %v10324
        %v10346 = vsub.f32 %v10244, %v10324
        %v10347 = vsub.f32 %v10245, %v10324
        %v10348 = vsub.f32 %v10246, %v10324
        %v10349 = vsub.f32 %v10247, %v10324
        %v10350 = vsub.f32 %v10248, %v10324
        %v10351 = vsub.f32 %v10249, %v10324
        %v10352 = vsub.f32 %v10250, %v10324
        %v10353 = vsub.f32 %v10251, %v10324
        %v10354 = vsub.f32 %v10252, %v10324
        %v10355 = vsub.f32 %v10253, %v10324
        %v10356 = vsub.f32 %v10254, %v10324
        %v10357 = vmul.f32 %v10325, %v10325
        %v10358 = vmul.f32 %v10326, %v10326
        %v10359 = vmul.f32 %v10327, %v10327
        %v10360 = vmul.f32 %v10328, %v10328
        %v10361 = vmul.f32 %v10329, %v10329
        %v10362 = vmul.f32 %v10330, %v10330
        %v10363 = vmul.f32 %v10331, %v10331
        %v10364 = vmul.f32 %v10332, %v10332
        %v10365 = vmul.f32 %v10333, %v10333
        %v10366 = vmul.f32 %v10334, %v10334
        %v10367 = vmul.f32 %v10335, %v10335
        %v10368 = vmul.f32 %v10336, %v10336
        %v10369 = vmul.f32 %v10337, %v10337
        %v10370 = vmul.f32 %v10338, %v10338
        %v10371 = vmul.f32 %v10339, %v10339
        %v10372 = vmul.f32 %v10340, %v10340
        %v10373 = vmul.f32 %v10341, %v10341
        %v10374 = vmul.f32 %v10342, %v10342
        %v10375 = vmul.f32 %v10343, %v10343
        %v10376 = vmul.f32 %v10344, %v10344
        %v10377 = vmul.f32 %v10345, %v10345
        %v10378 = vmul.f32 %v10346, %v10346
        %v10379 = vmul.f32 %v10347, %v10347
        %v10380 = vmul.f32 %v10348, %v10348
        %v10381 = vmul.f32 %v10349, %v10349
        %v10382 = vmul.f32 %v10350, %v10350
        %v10383 = vmul.f32 %v10351, %v10351
        %v10384 = vmul.f32 %v10352, %v10352
        %v10385 = vmul.f32 %v10353, %v10353
        %v10386 = vmul.f32 %v10354, %v10354
        %v10387 = vmul.f32 %v10355, %v10355
        %v10388 = vmul.f32 %v10356, %v10356
        %v10389 = vsel %vm847, %v10357, 0.0
        %v10390 = vsel %vm847, %v10358, 0.0
        %v10391 = vadd.f32 %v10389, %v10390
        %v10392 = vsel %vm847, %v10359, 0.0
        %v10393 = vadd.f32 %v10391, %v10392
        %v10394 = vsel %vm847, %v10360, 0.0
        %v10395 = vadd.f32 %v10393, %v10394
        %v10396 = vsel %vm847, %v10361, 0.0
        %v10397 = vadd.f32 %v10395, %v10396
        %v10398 = vsel %vm847, %v10362, 0.0
        %v10399 = vadd.f32 %v10397, %v10398
        %v10400 = vsel %vm847, %v10363, 0.0
        %v10401 = vadd.f32 %v10399, %v10400
        %v10402 = vsel %vm847, %v10364, 0.0
        %v10403 = vadd.f32 %v10401, %v10402
        %v10404 = vsel %vm847, %v10365, 0.0
        %v10405 = vadd.f32 %v10403, %v10404
        %v10406 = vsel %vm847, %v10366, 0.0
        %v10407 = vadd.f32 %v10405, %v10406
        %v10408 = vsel %vm847, %v10367, 0.0
        %v10409 = vadd.f32 %v10407, %v10408
        %v10410 = vsel %vm847, %v10368, 0.0
        %v10411 = vadd.f32 %v10409, %v10410
        %v10412 = vsel %vm847, %v10369, 0.0
        %v10413 = vadd.f32 %v10411, %v10412
        %v10414 = vsel %vm847, %v10370, 0.0
        %v10415 = vadd.f32 %v10413, %v10414
        %v10416 = vsel %vm847, %v10371, 0.0
        %v10417 = vadd.f32 %v10415, %v10416
        %v10418 = vsel %vm847, %v10372, 0.0
        %v10419 = vadd.f32 %v10417, %v10418
        %v10420 = vsel %vm847, %v10373, 0.0
        %v10421 = vadd.f32 %v10419, %v10420
        %v10422 = vsel %vm847, %v10374, 0.0
        %v10423 = vadd.f32 %v10421, %v10422
        %v10424 = vsel %vm847, %v10375, 0.0
        %v10425 = vadd.f32 %v10423, %v10424
        %v10426 = vsel %vm847, %v10376, 0.0
        %v10427 = vadd.f32 %v10425, %v10426
        %v10428 = vsel %vm847, %v10377, 0.0
        %v10429 = vadd.f32 %v10427, %v10428
        %v10430 = vsel %vm847, %v10378, 0.0
        %v10431 = vadd.f32 %v10429, %v10430
        %v10432 = vsel %vm847, %v10379, 0.0
        %v10433 = vadd.f32 %v10431, %v10432
        %v10434 = vsel %vm847, %v10380, 0.0
        %v10435 = vadd.f32 %v10433, %v10434
        %v10436 = vsel %vm847, %v10381, 0.0
        %v10437 = vadd.f32 %v10435, %v10436
        %v10438 = vsel %vm847, %v10382, 0.0
        %v10439 = vadd.f32 %v10437, %v10438
        %v10440 = vsel %vm847, %v10383, 0.0
        %v10441 = vadd.f32 %v10439, %v10440
        %v10442 = vsel %vm847, %v10384, 0.0
        %v10443 = vadd.f32 %v10441, %v10442
        %v10444 = vsel %vm847, %v10385, 0.0
        %v10445 = vadd.f32 %v10443, %v10444
        %v10446 = vsel %vm847, %v10386, 0.0
        %v10447 = vadd.f32 %v10445, %v10446
        %v10448 = vsel %vm847, %v10387, 0.0
        %v10449 = vadd.f32 %v10447, %v10448
        %v10450 = vsel %vm847, %v10388, 0.0
        %v10451 = vadd.f32 %v10449, %v10450
        %v10452 = vrot.slane %v10451, 4
        %v10453 = vadd.f32 %v10451, %v10452
        %v10454 = vrot.slane %v10453, 2
        %v10455 = vadd.f32 %v10453, %v10454
        %v10456 = vrot.slane %v10455, 1
        %v10457 = vadd.f32 %v10455, %v10456
        %v10458 = vmul.f32 %v10457, %v8017
        %v10459 = vadd.f32 %v10458, 1e-05
        %v10460 = vrsqrt.pop %v10459
        %v10461 = vmul.f32 %v10325, %v10460
        %v10462 = vmul.f32 %v10326, %v10460
        %v10463 = vmul.f32 %v10327, %v10460
        %v10464 = vmul.f32 %v10328, %v10460
        %v10465 = vmul.f32 %v10329, %v10460
        %v10466 = vmul.f32 %v10330, %v10460
        %v10467 = vmul.f32 %v10331, %v10460
        %v10468 = vmul.f32 %v10332, %v10460
        %v10469 = vmul.f32 %v10333, %v10460
        %v10470 = vmul.f32 %v10334, %v10460
        %v10471 = vmul.f32 %v10335, %v10460
        %v10472 = vmul.f32 %v10336, %v10460
        %v10473 = vmul.f32 %v10337, %v10460
        %v10474 = vmul.f32 %v10338, %v10460
        %v10475 = vmul.f32 %v10339, %v10460
        %v10476 = vmul.f32 %v10340, %v10460
        %v10477 = vmul.f32 %v10341, %v10460
        %v10478 = vmul.f32 %v10342, %v10460
        %v10479 = vmul.f32 %v10343, %v10460
        %v10480 = vmul.f32 %v10344, %v10460
        %v10481 = vmul.f32 %v10345, %v10460
        %v10482 = vmul.f32 %v10346, %v10460
        %v10483 = vmul.f32 %v10347, %v10460
        %v10484 = vmul.f32 %v10348, %v10460
        %v10485 = vmul.f32 %v10349, %v10460
        %v10486 = vmul.f32 %v10350, %v10460
        %v10487 = vmul.f32 %v10351, %v10460
        %v10488 = vmul.f32 %v10352, %v10460
        %v10489 = vmul.f32 %v10353, %v10460
        %v10490 = vmul.f32 %v10354, %v10460
        %v10491 = vmul.f32 %v10355, %v10460
        %v10492 = vmul.f32 %v10356, %v10460
        %v10494 = vlaneseq
        %v10495 = vshrl.u32 %v10494, 7
        %v10496 = vsub.s32 0, %v10495
        %v10497 = vrot.slane %v9926, %v10496
        %v10499 = vmul.f32 %v10461, %v10497
        %v10500 = vmul.f32 %v10462, %v10497
        %v10501 = vmul.f32 %v10463, %v10497
        %v10502 = vmul.f32 %v10464, %v10497
        %v10503 = vmul.f32 %v10465, %v10497
        %v10504 = vmul.f32 %v10466, %v10497
        %v10505 = vmul.f32 %v10467, %v10497
        %v10506 = vmul.f32 %v10468, %v10497
        %v10507 = vmul.f32 %v10469, %v10497
        %v10508 = vmul.f32 %v10470, %v10497
        %v10509 = vmul.f32 %v10471, %v10497
        %v10510 = vmul.f32 %v10472, %v10497
        %v10511 = vmul.f32 %v10473, %v10497
        %v10512 = vmul.f32 %v10474, %v10497
        %v10513 = vmul.f32 %v10475, %v10497
        %v10514 = vmul.f32 %v10476, %v10497
        %v10515 = vmul.f32 %v10477, %v10497
        %v10516 = vmul.f32 %v10478, %v10497
        %v10517 = vmul.f32 %v10479, %v10497
        %v10518 = vmul.f32 %v10480, %v10497
        %v10519 = vmul.f32 %v10481, %v10497
        %v10520 = vmul.f32 %v10482, %v10497
        %v10521 = vmul.f32 %v10483, %v10497
        %v10522 = vmul.f32 %v10484, %v10497
        %v10523 = vmul.f32 %v10485, %v10497
        %v10524 = vmul.f32 %v10486, %v10497
        %v10525 = vmul.f32 %v10487, %v10497
        %v10526 = vmul.f32 %v10488, %v10497
        %v10527 = vmul.f32 %v10489, %v10497
        %v10528 = vmul.f32 %v10490, %v10497
        %v10529 = vmul.f32 %v10491, %v10497
        %v10530 = vmul.f32 %v10492, %v10497
        %v10532 = vlaneseq
        %v10533 = vshrl.u32 %v10532, 7
        %v10534 = vsub.s32 0, %v10533
        %v10535 = vrot.slane %v9928, %v10534
        %v10537 = vadd.f32 %v10499, %v10535
        %v10538 = vadd.f32 %v10500, %v10535
        %v10539 = vadd.f32 %v10501, %v10535
        %v10540 = vadd.f32 %v10502, %v10535
        %v10541 = vadd.f32 %v10503, %v10535
        %v10542 = vadd.f32 %v10504, %v10535
        %v10543 = vadd.f32 %v10505, %v10535
        %v10544 = vadd.f32 %v10506, %v10535
        %v10545 = vadd.f32 %v10507, %v10535
        %v10546 = vadd.f32 %v10508, %v10535
        %v10547 = vadd.f32 %v10509, %v10535
        %v10548 = vadd.f32 %v10510, %v10535
        %v10549 = vadd.f32 %v10511, %v10535
        %v10550 = vadd.f32 %v10512, %v10535
        %v10551 = vadd.f32 %v10513, %v10535
        %v10552 = vadd.f32 %v10514, %v10535
        %v10553 = vadd.f32 %v10515, %v10535
        %v10554 = vadd.f32 %v10516, %v10535
        %v10555 = vadd.f32 %v10517, %v10535
        %v10556 = vadd.f32 %v10518, %v10535
        %v10557 = vadd.f32 %v10519, %v10535
        %v10558 = vadd.f32 %v10520, %v10535
        %v10559 = vadd.f32 %v10521, %v10535
        %v10560 = vadd.f32 %v10522, %v10535
        %v10561 = vadd.f32 %v10523, %v10535
        %v10562 = vadd.f32 %v10524, %v10535
        %v10563 = vadd.f32 %v10525, %v10535
        %v10564 = vadd.f32 %v10526, %v10535
        %v10565 = vadd.f32 %v10527, %v10535
        %v10566 = vadd.f32 %v10528, %v10535
        %v10567 = vadd.f32 %v10529, %v10535
        %v10568 = vadd.f32 %v10530, %v10535
        %10569 = vst.msk [vmem:[%s770] sm:$0xff] %vm847, %v10537
        %10570 = vst.msk [vmem:[%s770 + $0x8] sm:$0xff] %vm847, %v10538
        %10571 = vst.msk [vmem:[%s770 + $0x10] sm:$0xff] %vm847, %v10539
        %10572 = vst.msk [vmem:[%s770 + $0x18] sm:$0xff] %vm847, %v10540
        %10573 = vst.msk [vmem:[%s770 + $0x20] sm:$0xff] %vm847, %v10541
        %10574 = vst.msk [vmem:[%s770 + $0x28] sm:$0xff] %vm847, %v10542
        %10575 = vst.msk [vmem:[%s770 + $0x30] sm:$0xff] %vm847, %v10543
        %10576 = vst.msk [vmem:[%s770 + $0x38] sm:$0xff] %vm847, %v10544
        %10577 = vst.msk [vmem:[%s770 + $0x40] sm:$0xff] %vm847, %v10545
        %10578 = vst.msk [vmem:[%s770 + $0x48] sm:$0xff] %vm847, %v10546
        %10579 = vst.msk [vmem:[%s770 + $0x50] sm:$0xff] %vm847, %v10547
        %10580 = vst.msk [vmem:[%s770 + $0x58] sm:$0xff] %vm847, %v10548
        %10581 = vst.msk [vmem:[%s770 + $0x60] sm:$0xff] %vm847, %v10549
        %10582 = vst.msk [vmem:[%s770 + $0x68] sm:$0xff] %vm847, %v10550
        %10583 = vst.msk [vmem:[%s770 + $0x70] sm:$0xff] %vm847, %v10551
        %10584 = vst.msk [vmem:[%s770 + $0x78] sm:$0xff] %vm847, %v10552
        %10585 = vst.msk [vmem:[%s770 + $0x80] sm:$0xff] %vm847, %v10553
        %10586 = vst.msk [vmem:[%s770 + $0x88] sm:$0xff] %vm847, %v10554
        %10587 = vst.msk [vmem:[%s770 + $0x90] sm:$0xff] %vm847, %v10555
        %10588 = vst.msk [vmem:[%s770 + $0x98] sm:$0xff] %vm847, %v10556
        %10589 = vst.msk [vmem:[%s770 + $0xa0] sm:$0xff] %vm847, %v10557
        %10590 = vst.msk [vmem:[%s770 + $0xa8] sm:$0xff] %vm847, %v10558
        %10591 = vst.msk [vmem:[%s770 + $0xb0] sm:$0xff] %vm847, %v10559
        %10592 = vst.msk [vmem:[%s770 + $0xb8] sm:$0xff] %vm847, %v10560
        %10593 = vst.msk [vmem:[%s770 + $0xc0] sm:$0xff] %vm847, %v10561
        %10594 = vst.msk [vmem:[%s770 + $0xc8] sm:$0xff] %vm847, %v10562
        %10595 = vst.msk [vmem:[%s770 + $0xd0] sm:$0xff] %vm847, %v10563
        %10596 = vst.msk [vmem:[%s770 + $0xd8] sm:$0xff] %vm847, %v10564
        %10597 = vst.msk [vmem:[%s770 + $0xe0] sm:$0xff] %vm847, %v10565
        %10598 = vst.msk [vmem:[%s770 + $0xe8] sm:$0xff] %vm847, %v10566
        %10599 = vst.msk [vmem:[%s770 + $0xf0] sm:$0xff] %vm847, %v10567
        %10600 = vst.msk [vmem:[%s770 + $0xf8] sm:$0xff] %vm847, %v10568
        %v10601 = vpack.c.bf16 %v10538, %v10537
        %v10602 = vpack.c.bf16 %v10540, %v10539
        %v10603 = vpack.c.bf16 %v10542, %v10541
        %v10604 = vpack.c.bf16 %v10544, %v10543
        %v10605 = vpack.c.bf16 %v10546, %v10545
        %v10606 = vpack.c.bf16 %v10548, %v10547
        %v10607 = vpack.c.bf16 %v10550, %v10549
        %v10608 = vpack.c.bf16 %v10552, %v10551
        %v10609 = vpack.c.bf16 %v10554, %v10553
        %v10610 = vpack.c.bf16 %v10556, %v10555
        %v10611 = vpack.c.bf16 %v10558, %v10557
        %v10612 = vpack.c.bf16 %v10560, %v10559
        %v10613 = vpack.c.bf16 %v10562, %v10561
        %v10614 = vpack.c.bf16 %v10564, %v10563
        %v10615 = vpack.c.bf16 %v10566, %v10565
        %v10616 = vpack.c.bf16 %v10568, %v10567
        %v10617 = vld [vmem:[%s9] sm:$0xf]
        %v10618 = vld [vmem:[%s9 + $0x4] sm:$0xf]
        %v10619 = vld [vmem:[%s9 + $0x8] sm:$0xf]
        %v10620 = vld [vmem:[%s9 + $0xc] sm:$0xf]
        %v10621 = vld [vmem:[%s10] sm:$0x1]
        %v10623 = vlaneseq
        %v10624 = vshrl.u32 %v10623, 7
        %v10625 = vsub.s32 0, %v10624
        %v10626 = vrot.slane %v10621, %v10625
        %v10632 = vunpack.c.l.b16 %v10617
        %v10633 = vunpack.c.l.b16 %v10618
        %v10634 = vunpack.c.l.b16 %v10619
        %v10635 = vunpack.c.l.b16 %v10620
        %v10636 = vpack.c.b16 %v10633, %v10632
        %v10637 = vpack.c.b16 %v10635, %v10634
        %v10641 = vsel %vm847, %v10601, 0
        %v10644 = vsel %vm847, %v10602, 0
        %v10647 = vsel %vm847, %v10603, 0
        %v10650 = vsel %vm847, %v10604, 0
        %v10653 = vsel %vm847, %v10605, 0
        %v10656 = vsel %vm847, %v10606, 0
        %v10659 = vsel %vm847, %v10607, 0
        %v10662 = vsel %vm847, %v10608, 0
        %v10665 = vsel %vm847, %v10609, 0
        %v10668 = vsel %vm847, %v10610, 0
        %v10671 = vsel %vm847, %v10611, 0
        %v10674 = vsel %vm847, %v10612, 0
        %v10677 = vsel %vm847, %v10613, 0
        %v10680 = vsel %vm847, %v10614, 0
        %v10683 = vsel %vm847, %v10615, 0
        %v10686 = vsel %vm847, %v10616, 0
        %10688 = vmatprep.subr.bf16.mxu0 0
        %10689 = vmatpush1.bf16.msra.mxu0 0
        %10690 = vmatprep.subr.bf16.mxu0 0
        %10691 = vmatpush1.bf16.msra.mxu0 0
        %10692 = vmatprep.subr.bf16.mxu0 0
        %10693 = vmatpush1.bf16.msra.mxu0 0
        %10694 = vmatprep.subr.bf16.mxu0 0
        %10695 = vmatpush1.bf16.msra.mxu0 0
        %10696 = vmatprep.subr.bf16.mxu0 0
        %10697 = vmatpush1.bf16.msra.mxu0 0
        %10698 = vmatprep.subr.bf16.mxu0 0
        %10699 = vmatpush1.bf16.msra.mxu0 0
        %10700 = vmatprep.subr.bf16.mxu0 0
        %10701 = vmatpush1.bf16.msra.mxu0 %v10637
        %10702 = vmatprep.subr.bf16.mxu0 0
        %10703 = vmatpush1.bf16.msra.mxu0 %v10636
        %10704 = vmatprep.subr.bf16.mxu0 0
        %10705 = vmatpush2.bf16.msra.mxu0 0
        %10706 = vmatprep.subr.bf16.mxu0 0
        %10707 = vmatpush2.bf16.msra.mxu0 0
        %10708 = vmatprep.subr.bf16.mxu0 0
        %10709 = vmatpush2.bf16.msra.mxu0 0
        %10710 = vmatprep.subr.bf16.mxu0 0
        %10711 = vmatpush2.bf16.msra.mxu0 0
        %10712 = vmatprep.subr.bf16.mxu0 0
        %10713 = vmatpush2.bf16.msra.mxu0 0
        %10714 = vmatprep.subr.bf16.mxu0 0
        %10715 = vmatpush2.bf16.msra.mxu0 0
        %10716 = vmatprep.subr.bf16.mxu0 0
        %10717 = vmatpush2.bf16.msra.mxu0 0
        %10718 = vmatprep.subr.bf16.mxu0 0
        %10719 = vmatpush2.bf16.msra.mxu0 0
        %10720 = vmatprep.mubr.bf16.mxu0 0
        %10721 = vmatmul.mubr.bf16.gmra.mxu0 %v10641
        %v10722 = vpop.f32.mrf.mxu0
        %v10723 = vadd.f32 %v10626, %v10722
        %v10724 = vpop.f32.mrf.mxu0
        %v10725 = vpop.f32.mrf.mxu0
        %v10726 = vadd.f32 %v10626, %v10725
        %v10727 = vpop.f32.mrf.mxu0
        %10728 = vmatprep.mubr.bf16.mxu0 0
        %10729 = vmatmul.mubr.bf16.gmra.mxu0 %v10644
        %v10730 = vpop.f32.mrf.mxu0
        %v10731 = vadd.f32 %v10626, %v10730
        %v10732 = vpop.f32.mrf.mxu0
        %v10733 = vpop.f32.mrf.mxu0
        %v10734 = vadd.f32 %v10626, %v10733
        %v10735 = vpop.f32.mrf.mxu0
        %10736 = vmatprep.mubr.bf16.mxu0 0
        %10737 = vmatmul.mubr.bf16.gmra.mxu0 %v10647
        %v10738 = vpop.f32.mrf.mxu0
        %v10739 = vadd.f32 %v10626, %v10738
        %v10740 = vpop.f32.mrf.mxu0
        %v10741 = vpop.f32.mrf.mxu0
        %v10742 = vadd.f32 %v10626, %v10741
        %v10743 = vpop.f32.mrf.mxu0
        %10744 = vmatprep.mubr.bf16.mxu0 0
        %10745 = vmatmul.mubr.bf16.gmra.mxu0 %v10650
        %v10746 = vpop.f32.mrf.mxu0
        %v10747 = vadd.f32 %v10626, %v10746
        %v10748 = vpop.f32.mrf.mxu0
        %v10749 = vpop.f32.mrf.mxu0
        %v10750 = vadd.f32 %v10626, %v10749
        %v10751 = vpop.f32.mrf.mxu0
        %10752 = vmatprep.mubr.bf16.mxu0 0
        %10753 = vmatmul.mubr.bf16.gmra.mxu0 %v10653
        %v10754 = vpop.f32.mrf.mxu0
        %v10755 = vadd.f32 %v10626, %v10754
        %v10756 = vpop.f32.mrf.mxu0
        %v10757 = vpop.f32.mrf.mxu0
        %v10758 = vadd.f32 %v10626, %v10757
        %v10759 = vpop.f32.mrf.mxu0
        %10760 = vmatprep.mubr.bf16.mxu0 0
        %10761 = vmatmul.mubr.bf16.gmra.mxu0 %v10656
        %v10762 = vpop.f32.mrf.mxu0
        %v10763 = vadd.f32 %v10626, %v10762
        %v10764 = vpop.f32.mrf.mxu0
        %v10765 = vpop.f32.mrf.mxu0
        %v10766 = vadd.f32 %v10626, %v10765
        %v10767 = vpop.f32.mrf.mxu0
        %10768 = vmatprep.mubr.bf16.mxu0 0
        %10769 = vmatmul.mubr.bf16.gmra.mxu0 %v10659
        %v10770 = vpop.f32.mrf.mxu0
        %v10771 = vadd.f32 %v10626, %v10770
        %v10772 = vpop.f32.mrf.mxu0
        %v10773 = vpop.f32.mrf.mxu0
        %v10774 = vadd.f32 %v10626, %v10773
        %v10775 = vpop.f32.mrf.mxu0
        %10776 = vmatprep.mubr.bf16.mxu0 0
        %10777 = vmatmul.mubr.bf16.gmra.mxu0 %v10662
        %v10778 = vpop.f32.mrf.mxu0
        %v10779 = vadd.f32 %v10626, %v10778
        %v10780 = vpop.f32.mrf.mxu0
        %v10781 = vpop.f32.mrf.mxu0
        %v10782 = vadd.f32 %v10626, %v10781
        %v10783 = vpop.f32.mrf.mxu0
        %10784 = vmatprep.mubr.bf16.mxu0 0
        %10785 = vmatmul.mubr.bf16.gmra.mxu0 %v10665
        %v10786 = vpop.f32.mrf.mxu0
        %v10787 = vadd.f32 %v10626, %v10786
        %v10788 = vpop.f32.mrf.mxu0
        %v10789 = vpop.f32.mrf.mxu0
        %v10790 = vadd.f32 %v10626, %v10789
        %v10791 = vpop.f32.mrf.mxu0
        %10792 = vmatprep.mubr.bf16.mxu0 0
        %10793 = vmatmul.mubr.bf16.gmra.mxu0 %v10668
        %v10794 = vpop.f32.mrf.mxu0
        %v10795 = vadd.f32 %v10626, %v10794
        %v10796 = vpop.f32.mrf.mxu0
        %v10797 = vpop.f32.mrf.mxu0
        %v10798 = vadd.f32 %v10626, %v10797
        %v10799 = vpop.f32.mrf.mxu0
        %10800 = vmatprep.mubr.bf16.mxu0 0
        %10801 = vmatmul.mubr.bf16.gmra.mxu0 %v10671
        %v10802 = vpop.f32.mrf.mxu0
        %v10803 = vadd.f32 %v10626, %v10802
        %v10804 = vpop.f32.mrf.mxu0
        %v10805 = vpop.f32.mrf.mxu0
        %v10806 = vadd.f32 %v10626, %v10805
        %v10807 = vpop.f32.mrf.mxu0
        %10808 = vmatprep.mubr.bf16.mxu0 0
        %10809 = vmatmul.mubr.bf16.gmra.mxu0 %v10674
        %v10810 = vpop.f32.mrf.mxu0
        %v10811 = vadd.f32 %v10626, %v10810
        %v10812 = vpop.f32.mrf.mxu0
        %v10813 = vpop.f32.mrf.mxu0
        %v10814 = vadd.f32 %v10626, %v10813
        %v10815 = vpop.f32.mrf.mxu0
        %10816 = vmatprep.mubr.bf16.mxu0 0
        %10817 = vmatmul.mubr.bf16.gmra.mxu0 %v10677
        %v10818 = vpop.f32.mrf.mxu0
        %v10819 = vadd.f32 %v10626, %v10818
        %v10820 = vpop.f32.mrf.mxu0
        %v10821 = vpop.f32.mrf.mxu0
        %v10822 = vadd.f32 %v10626, %v10821
        %v10823 = vpop.f32.mrf.mxu0
        %10824 = vmatprep.mubr.bf16.mxu0 0
        %10825 = vmatmul.mubr.bf16.gmra.mxu0 %v10680
        %v10826 = vpop.f32.mrf.mxu0
        %v10827 = vadd.f32 %v10626, %v10826
        %v10828 = vpop.f32.mrf.mxu0
        %v10829 = vpop.f32.mrf.mxu0
        %v10830 = vadd.f32 %v10626, %v10829
        %v10831 = vpop.f32.mrf.mxu0
        %10832 = vmatprep.mubr.bf16.mxu0 0
        %10833 = vmatmul.mubr.bf16.gmra.mxu0 %v10683
        %v10834 = vpop.f32.mrf.mxu0
        %v10835 = vadd.f32 %v10626, %v10834
        %v10836 = vpop.f32.mrf.mxu0
        %v10837 = vpop.f32.mrf.mxu0
        %v10838 = vadd.f32 %v10626, %v10837
        %v10839 = vpop.f32.mrf.mxu0
        %10840 = vmatprep.mubr.bf16.mxu0 0
        %10841 = vmatmul.mubr.bf16.gmra.mxu0 %v10686
        %v10842 = vpop.f32.mrf.mxu0
        %v10843 = vadd.f32 %v10626, %v10842
        %v10844 = vpop.f32.mrf.mxu0
        %v10845 = vpop.f32.mrf.mxu0
        %v10846 = vadd.f32 %v10626, %v10845
        %v10847 = vpop.f32.mrf.mxu0
        %10848 = vdwg.mxu0
        %vm10849 = vcmask 23552
        %10850 = vst.msk [vmem:[%s812] sm:$0xff] %vm10849, %v10723
        %10851 = vst.msk [vmem:[%s812 + $0x8] sm:$0xff] %vm10849, %v10726
        %10852 = vst.msk [vmem:[%s812 + $0x10] sm:$0xff] %vm10849, %v10731
        %10853 = vst.msk [vmem:[%s812 + $0x18] sm:$0xff] %vm10849, %v10734
        %10854 = vst.msk [vmem:[%s812 + $0x20] sm:$0xff] %vm10849, %v10739
        %10855 = vst.msk [vmem:[%s812 + $0x28] sm:$0xff] %vm10849, %v10742
        %10856 = vst.msk [vmem:[%s812 + $0x30] sm:$0xff] %vm10849, %v10747
        %10857 = vst.msk [vmem:[%s812 + $0x38] sm:$0xff] %vm10849, %v10750
        %10858 = vst.msk [vmem:[%s812 + $0x40] sm:$0xff] %vm10849, %v10755
        %10859 = vst.msk [vmem:[%s812 + $0x48] sm:$0xff] %vm10849, %v10758
        %10860 = vst.msk [vmem:[%s812 + $0x50] sm:$0xff] %vm10849, %v10763
        %10861 = vst.msk [vmem:[%s812 + $0x58] sm:$0xff] %vm10849, %v10766
        %10862 = vst.msk [vmem:[%s812 + $0x60] sm:$0xff] %vm10849, %v10771
        %10863 = vst.msk [vmem:[%s812 + $0x68] sm:$0xff] %vm10849, %v10774
        %10864 = vst.msk [vmem:[%s812 + $0x70] sm:$0xff] %vm10849, %v10779
        %10865 = vst.msk [vmem:[%s812 + $0x78] sm:$0xff] %vm10849, %v10782
        %10866 = vst.msk [vmem:[%s812 + $0x80] sm:$0xff] %vm10849, %v10787
        %10867 = vst.msk [vmem:[%s812 + $0x88] sm:$0xff] %vm10849, %v10790
        %10868 = vst.msk [vmem:[%s812 + $0x90] sm:$0xff] %vm10849, %v10795
        %10869 = vst.msk [vmem:[%s812 + $0x98] sm:$0xff] %vm10849, %v10798
        %10870 = vst.msk [vmem:[%s812 + $0xa0] sm:$0xff] %vm10849, %v10803
        %10871 = vst.msk [vmem:[%s812 + $0xa8] sm:$0xff] %vm10849, %v10806
        %10872 = vst.msk [vmem:[%s812 + $0xb0] sm:$0xff] %vm10849, %v10811
        %10873 = vst.msk [vmem:[%s812 + $0xb8] sm:$0xff] %vm10849, %v10814
        %10874 = vst.msk [vmem:[%s812 + $0xc0] sm:$0xff] %vm10849, %v10819
        %10875 = vst.msk [vmem:[%s812 + $0xc8] sm:$0xff] %vm10849, %v10822
        %10876 = vst.msk [vmem:[%s812 + $0xd0] sm:$0xff] %vm10849, %v10827
        %10877 = vst.msk [vmem:[%s812 + $0xd8] sm:$0xff] %vm10849, %v10830
        %10878 = vst.msk [vmem:[%s812 + $0xe0] sm:$0xff] %vm10849, %v10835
        %10879 = vst.msk [vmem:[%s812 + $0xe8] sm:$0xff] %vm10849, %v10838
        %10880 = vst.msk [vmem:[%s812 + $0xf0] sm:$0xff] %vm10849, %v10843
        %10881 = vst.msk [vmem:[%s812 + $0xf8] sm:$0xff] %vm10849, %v10846
        %s10882 = sand.u32 %s415, 1
        %s10883 = scalar_lea.sflag [#allocation3], %s10882
        %s10884 = sand.u32 %s415, 1
        %s10885 = smul.addr %s10884, 16
        %s10886 = scalar_lea.vmem [#allocation2], %s10885
        %s10887 = sand.u32 %s46, 1
        %s10888 = scalar_lea.sflag [#allocation5], %s10887
        %s10889 = sand.u32 %s441, 1
        %s10890 = smul.addr %s10889, 16
        %s10891 = scalar_lea.vmem [#allocation4], %s10890
        %s10892 = sand.u32 %s46, 1
        %s10893 = scalar_lea.sflag [#allocation5], %s10892
        %s10894 = sand.u32 %s467, 1
        %s10895 = smul.addr %s10894, 64
        %s10896 = scalar_lea.vmem [#allocation6], %s10895
        %s10897 = sand.u32 %s46, 1
        %s10898 = scalar_lea.sflag [#allocation8], %s10897
        %s10899 = sand.u32 %s493, 1
        %s10900 = smul.addr %s10899, 64
        %s10901 = scalar_lea.vmem [#allocation7], %s10900
        %s10902 = sand.u32 %s46, 1
        %s10903 = scalar_lea.sflag [#allocation8], %s10902
        %s10904 = sand.u32 %s519, 1
        %s10905 = smul.addr %s10904, 256
        %s10906 = scalar_lea.vmem [#allocation9], %s10905
        %s10907 = sand.u32 %s545, 1
        %s10908 = scalar_lea.sflag [#allocation11], %s10907
        %s10909 = sand.u32 %s545, 1
        %s10910 = smul.addr %s10909, 256
        %s10911 = scalar_lea.vmem [#allocation10], %s10910
        %p10912 = scmp.lt.s32.totalorder %s46, 1
        %s10913 = scalar_select %p10912, %s46, 1
        %s10914 = smul.addr %s10913, 32
        %s10915 = smul.addr %s10914, 8
        %s10916 = scalar_lea.vmem %s22, %s10915
        // Predicated region
        $region85: #{g_synthesis_forward.1} parent=83 // pred_check
          %p10917 = pneg %p425
        $region86: #{g_synthesis_forward.1} parent=83 // pred_check_branch
          %10919 = sbr.rel (%p10917) target = $region88
        $region87: #{g_synthesis_forward.1} parent=83 // pred_region
          %s10921 = ssub.s32 256, 256
          %10922 = vsyncadd %s10883, %s10921
          %s10923 = smul.addr %s46, 2
          %s10924 = smul.addr %s10923, 128
          %s10925 = scalar_lea.hbm %s16, %s10924
          %s10926 = sshll.u32 %s10886, 4
          %s10927 = int_to_ptr.vmem [resolvable:$true] %s10926
          %10932 = dma.vmem_to_hbm [thread:$0]  %s10927, 256, %s10925, %s10883, 128, 128, 8
        $region88: #{g_synthesis_forward.1} parent=83 // pred_fallthru
          _
        // Predicated region
        $region89: #{g_synthesis_forward.1} parent=83 // pred_check
          %p10933 = pneg %p451
        $region90: #{g_synthesis_forward.1} parent=83 // pred_check_branch
          %10935 = sbr.rel (%p10933) target = $region92
        $region91: #{g_synthesis_forward.1} parent=83 // pred_region
          %s10937 = ssub.s32 256, 256
          %10938 = vsyncadd %s10888, %s10937
          %s10939 = smul.addr %s46, 2
          %s10940 = smul.addr %s10939, 128
          %s10941 = scalar_lea.hbm %s17, %s10940
          %s10942 = sshll.u32 %s10891, 4
          %s10943 = int_to_ptr.vmem [resolvable:$true] %s10942
          %10948 = dma.vmem_to_hbm [thread:$0]  %s10943, 256, %s10941, %s10888, 128, 128, 8
        $region92: #{g_synthesis_forward.1} parent=83 // pred_fallthru
          _
        // Predicated region
        $region93: #{g_synthesis_forward.1} parent=83 // pred_check
          %p10949 = pneg %p477
        $region94: #{g_synthesis_forward.1} parent=83 // pred_check_branch
          %10951 = sbr.rel (%p10949) target = $region96
        $region95: #{g_synthesis_forward.1} parent=83 // pred_region
          %s10953 = ssub.s32 1024, 1024
          %10954 = vsyncadd %s10893, %s10953
          %s10955 = smul.addr %s46, 8
          %s10956 = smul.addr %s10955, 128
          %s10957 = scalar_lea.hbm %s18, %s10956
          %s10958 = sshll.u32 %s10896, 4
          %s10959 = int_to_ptr.vmem [resolvable:$true] %s10958
          %10964 = dma.vmem_to_hbm [thread:$0]  %s10959, 1024, %s10957, %s10893, 128, 128, 8
        $region96: #{g_synthesis_forward.1} parent=83 // pred_fallthru
          _
        // Predicated region
        $region97: #{g_synthesis_forward.1} parent=83 // pred_check
          %p10965 = pneg %p503
        $region98: #{g_synthesis_forward.1} parent=83 // pred_check_branch
          %10967 = sbr.rel (%p10965) target = $region100
        $region99: #{g_synthesis_forward.1} parent=83 // pred_region
          %s10969 = ssub.s32 1024, 1024
          %10970 = vsyncadd %s10898, %s10969
          %s10971 = smul.addr %s46, 8
          %s10972 = smul.addr %s10971, 128
          %s10973 = scalar_lea.hbm %s19, %s10972
          %s10974 = sshll.u32 %s10901, 4
          %s10975 = int_to_ptr.vmem [resolvable:$true] %s10974
          %10980 = dma.vmem_to_hbm [thread:$0]  %s10975, 1024, %s10973, %s10898, 128, 128, 8
        $region100: #{g_synthesis_forward.1} parent=83 // pred_fallthru
          _
        // Predicated region
        $region101: #{g_synthesis_forward.1} parent=83 // pred_check
          %p10981 = pneg %p529
        $region102: #{g_synthesis_forward.1} parent=83 // pred_check_branch
          %10983 = sbr.rel (%p10981) target = $region104
        $region103: #{g_synthesis_forward.1} parent=83 // pred_region
          %s10985 = ssub.s32 4096, 4096
          %10986 = vsyncadd %s10903, %s10985
          %s10987 = smul.addr %s46, 32
          %s10988 = smul.addr %s10987, 128
          %s10989 = scalar_lea.hbm %s20, %s10988
          %s10990 = sshll.u32 %s10906, 4
          %s10991 = int_to_ptr.vmem [resolvable:$true] %s10990
          %10996 = dma.vmem_to_hbm [thread:$0]  %s10991, 4096, %s10989, %s10903, 128, 128, 8
        $region104: #{g_synthesis_forward.1} parent=83 // pred_fallthru
          _
        // Predicated region
        $region105: #{g_synthesis_forward.1} parent=83 // pred_check
          %p10997 = pneg %p555
        $region106: #{g_synthesis_forward.1} parent=83 // pred_check_branch
          %10999 = sbr.rel (%p10997) target = $region108
        $region107: #{g_synthesis_forward.1} parent=83 // pred_region
          %s11001 = ssub.s32 4096, 4096
          %11002 = vsyncadd %s10908, %s11001
          %s11003 = smul.addr %s46, 32
          %s11004 = smul.addr %s11003, 128
          %s11005 = scalar_lea.hbm %s21, %s11004
          %s11006 = sshll.u32 %s10911, 4
          %s11007 = int_to_ptr.vmem [resolvable:$true] %s11006
          %11012 = dma.vmem_to_hbm [thread:$0]  %s11007, 4096, %s11005, %s10908, 128, 128, 8
        $region108: #{g_synthesis_forward.1} parent=83 // pred_fallthru
          _
        // Predicated region
        $region109: #{g_synthesis_forward.1} parent=83 // pred_check
          %p11013 = pneg %p581
        $region110: #{g_synthesis_forward.1} parent=83 // pred_check_branch
          %11015 = sbr.rel (%p11013) target = $region112
        $region111: #{g_synthesis_forward.1} parent=83 // pred_region
          _
        $region112: #{g_synthesis_forward.1} parent=83 // pred_fallthru
          _
      $region84: #{g_synthesis_forward.1} parent=5 // pred_fallthru
        _
      %p11016 = scmp.le.s32.totalorder 2, %s41
      // Predicated region
      $region113: #{g_synthesis_forward.1} parent=5 // pred_check
        %p11017 = pneg %p11016
      $region114: #{g_synthesis_forward.1} parent=5 // pred_check_branch
        %11019 = sbr.rel (%p11017) target = $region116
      $region115: #{g_synthesis_forward.1} parent=5 // pred_region
        %s11020 = ssub.s32 %s41, 2
        // Predicated region
        $region117: #{g_synthesis_forward.1} parent=115 // pred_check
          %p11021 = pneg %p431
        $region118: #{g_synthesis_forward.1} parent=115 // pred_check_branch
          %11023 = sbr.rel (%p11021) target = $region120
        $region119: #{g_synthesis_forward.1} parent=115 // pred_region
          %s11024 = sand.u32 %s416, 1
          %s11025 = scalar_lea.sflag [#allocation3], %s11024
          %s11026 = sand.u32 %s416, 1
          %s11027 = smul.addr %s11026, 16
          %s11028 = scalar_lea.vmem [#allocation2], %s11027
          %11029 = dma.done %s11025, 256
        $region120: #{g_synthesis_forward.1} parent=115 // pred_fallthru
          _
        // Predicated region
        $region121: #{g_synthesis_forward.1} parent=115 // pred_check
          %p11030 = pneg %p457
        $region122: #{g_synthesis_forward.1} parent=115 // pred_check_branch
          %11032 = sbr.rel (%p11030) target = $region124
        $region123: #{g_synthesis_forward.1} parent=115 // pred_region
          %s11033 = sand.u32 %s47, 1
          %s11034 = scalar_lea.sflag [#allocation5], %s11033
          %s11035 = sand.u32 %s442, 1
          %s11036 = smul.addr %s11035, 16
          %s11037 = scalar_lea.vmem [#allocation4], %s11036
          %11038 = dma.done %s11034, 256
        $region124: #{g_synthesis_forward.1} parent=115 // pred_fallthru
          _
        // Predicated region
        $region125: #{g_synthesis_forward.1} parent=115 // pred_check
          %p11039 = pneg %p483
        $region126: #{g_synthesis_forward.1} parent=115 // pred_check_branch
          %11041 = sbr.rel (%p11039) target = $region128
        $region127: #{g_synthesis_forward.1} parent=115 // pred_region
          %s11042 = sand.u32 %s47, 1
          %s11043 = scalar_lea.sflag [#allocation5], %s11042
          %s11044 = sand.u32 %s468, 1
          %s11045 = smul.addr %s11044, 64
          %s11046 = scalar_lea.vmem [#allocation6], %s11045
          %11047 = dma.done %s11043, 1024
        $region128: #{g_synthesis_forward.1} parent=115 // pred_fallthru
          _
        // Predicated region
        $region129: #{g_synthesis_forward.1} parent=115 // pred_check
          %p11048 = pneg %p509
        $region130: #{g_synthesis_forward.1} parent=115 // pred_check_branch
          %11050 = sbr.rel (%p11048) target = $region132
        $region131: #{g_synthesis_forward.1} parent=115 // pred_region
          %s11051 = sand.u32 %s47, 1
          %s11052 = scalar_lea.sflag [#allocation8], %s11051
          %s11053 = sand.u32 %s494, 1
          %s11054 = smul.addr %s11053, 64
          %s11055 = scalar_lea.vmem [#allocation7], %s11054
          %11056 = dma.done %s11052, 1024
        $region132: #{g_synthesis_forward.1} parent=115 // pred_fallthru
          _
        // Predicated region
        $region133: #{g_synthesis_forward.1} parent=115 // pred_check
          %p11057 = pneg %p535
        $region134: #{g_synthesis_forward.1} parent=115 // pred_check_branch
          %11059 = sbr.rel (%p11057) target = $region136
        $region135: #{g_synthesis_forward.1} parent=115 // pred_region
          %s11060 = sand.u32 %s47, 1
          %s11061 = scalar_lea.sflag [#allocation8], %s11060
          %s11062 = sand.u32 %s520, 1
          %s11063 = smul.addr %s11062, 256
          %s11064 = scalar_lea.vmem [#allocation9], %s11063
          %11065 = dma.done %s11061, 4096
        $region136: #{g_synthesis_forward.1} parent=115 // pred_fallthru
          _
        // Predicated region
        $region137: #{g_synthesis_forward.1} parent=115 // pred_check
          %p11066 = pneg %p561
        $region138: #{g_synthesis_forward.1} parent=115 // pred_check_branch
          %11068 = sbr.rel (%p11066) target = $region140
        $region139: #{g_synthesis_forward.1} parent=115 // pred_region
          %s11069 = sand.u32 %s546, 1
          %s11070 = scalar_lea.sflag [#allocation11], %s11069
          %s11071 = sand.u32 %s546, 1
          %s11072 = smul.addr %s11071, 256
          %s11073 = scalar_lea.vmem [#allocation10], %s11072
          %11074 = dma.done %s11070, 4096
        $region140: #{g_synthesis_forward.1} parent=115 // pred_fallthru
          _
        // Predicated region
        $region141: #{g_synthesis_forward.1} parent=115 // pred_check
          %p11075 = pneg %p587
        $region142: #{g_synthesis_forward.1} parent=115 // pred_check_branch
          %11077 = sbr.rel (%p11075) target = $region144
        $region143: #{g_synthesis_forward.1} parent=115 // pred_region
          %p11078 = scmp.lt.s32.totalorder %s47, 1
          %s11079 = scalar_select %p11078, %s47, 1
          %s11080 = smul.addr %s11079, 32
          %s11081 = smul.addr %s11080, 8
          %s11082 = scalar_lea.vmem %s22, %s11081
        $region144: #{g_synthesis_forward.1} parent=115 // pred_fallthru
          _
      $region116: #{g_synthesis_forward.1} parent=5 // pred_fallthru
        _
    $region6: #{g_synthesis_forward.1} parent=1 // loop_footer
      %s45 = sadd.s32 1, %s41
    $region7: #{g_synthesis_forward.1} parent=1 // loop_footer_branch
      %40 = sbr.rel target = $region3
    $region8: #{g_synthesis_forward.1} parent=1 // loop_exit
      _
    %11083 = vsyncpa [#allocation3], 1
    %s11084 = scalar_lea.sflag [#allocation3], 1
    %11085 = vsyncpa %s11084, 1
    %11086 = vsyncpa [#allocation5], 1
    %s11087 = scalar_lea.sflag [#allocation5], 1
    %11088 = vsyncpa %s11087, 1
    %11089 = vsyncpa [#allocation8], 1
    %s11090 = scalar_lea.sflag [#allocation8], 1
    %11091 = vsyncpa %s11090, 1
    %11092 = vsyncpa [#allocation11], 1
    %s11093 = scalar_lea.sflag [#allocation11], 1
    %11094 = vsyncpa %s11093, 1

</llo_original>
